<compile_context>
chip_gen: v7x
topology: tpu7x:2x2x1
jax: 0.10.0
libtpu: 0.0.40
codegen_flags: <defaults>
</compile_context>

<pallas_src>
import jax
import jax.numpy as jnp
from jax.experimental import pallas as pl
from jax.experimental.pallas import tpu as pltpu


# ---------------------------------------------------------------------------
# Pallas kernels
# ---------------------------------------------------------------------------

def _conv1_pool_kernel(v_ref, w_ref, b_ref, o_ref):
    """Conv1 + bias + ReLU + 2x2 max-pool (K folded to 3*3*3 = 27).

    v_ref: (1, 2, 2, M, 27)  per-pool-corner patch matrices
    w_ref: (27, Cout); b_ref: (1, Cout); o_ref: (1, M, Cout)
    """
    best = None
    for dy in range(2):
        for dx in range(2):
            acc = jnp.dot(v_ref[0, dy, dx, :, :], w_ref[...],
                          preferred_element_type=jnp.float32)
            best = acc if best is None else jnp.maximum(best, acc)
    o_ref[0, :, :] = jnp.maximum(best + b_ref[...], 0.0)


def _conv_pool_kernel(v_ref, w_ref, b_ref, o_ref):
    """Generic conv3x3 + bias + ReLU + 2x2 max-pool via shifted-view matmuls.

    v_ref: (1, 4, 4, M, Cin)  views: v[u, w][yp*Wp+xp, c] = x[2*yp+u, 2*xp+w, c]
    w_ref: (9, Cin, Cout)     conv weight per kernel position p = i*3 + j
    b_ref: (1, Cout); o_ref: (1, M, Cout)
    """
    best = None
    for dy in range(2):
        for dx in range(2):
            acc = None
            for i in range(3):
                for j in range(3):
                    contrib = jnp.dot(v_ref[0, dy + i, dx + j, :, :],
                                      w_ref[i * 3 + j, :, :],
                                      preferred_element_type=jnp.float32)
                    acc = contrib if acc is None else acc + contrib
            best = acc if best is None else jnp.maximum(best, acc)
    o_ref[0, :, :] = jnp.maximum(best + b_ref[...], 0.0)


def _conv3_pool_mlp_kernel(v_ref, w_ref, b_ref, w1_ref, b1_ref, w2_ref, b2_ref,
                           w3_ref, b3_ref, exit_ref, logits_ref):
    """conv3 + bias + ReLU + pool, then the activation-free fc1->fc2->fc3 head.

    v_ref:  (1, 4, 4, M, Cin)   (M = 4 pooled positions, Cin = 128)
    w_ref:  (9, Cin, Cout)      (Cout = 64);  b_ref: (1, Cout)
    w1_ref: (M, Cout, D1)       fc1 weight permuted to (h*Wp+w, c, out) order
    b1_ref: (1, D1); w2_ref: (D1, D2); b2_ref: (1, D2); w3_ref: (D2, D3); b3_ref: (1, D3)
    exit_ref: (1, M, Cout);  logits_ref: (1, 1, D3)
    """
    m = v_ref.shape[3]
    cout = w_ref.shape[2]
    best = None
    for dy in range(2):
        for dx in range(2):
            acc = None
            for i in range(3):
                for j in range(3):
                    contrib = jnp.dot(v_ref[0, dy + i, dx + j, :, :],
                                      w_ref[i * 3 + j, :, :],
                                      preferred_element_type=jnp.float32)
                    acc = contrib if acc is None else acc + contrib
            best = acc if best is None else jnp.maximum(best, acc)
    pooled = jnp.maximum(best + b_ref[...], 0.0)          # (M, Cout), rows = h*Wp+w
    exit_ref[0, :, :] = pooled

    # fc1 consumes pooled row-by-row (mask+reduce row extraction keeps ops in the
    # safest Mosaic subset); w1_ref is pre-permuted so ordering matches PyTorch's
    # NCHW flatten.  fc1/fc2/fc3 have no activations in the reference module.
    row_ids = jax.lax.broadcasted_iota(jnp.int32, (m, cout), 0)
    h1 = b1_ref[...]
    for hw in range(m):
        row = jnp.sum(jnp.where(row_ids == hw, pooled, 0.0), axis=0, keepdims=True)
        h1 = h1 + jnp.dot(row, w1_ref[hw, :, :], preferred_element_type=jnp.float32)
    h2 = jnp.dot(h1, w2_ref[...], preferred_element_type=jnp.float32) + b2_ref[...]
    logits_ref[0, :, :] = (jnp.dot(h2, w3_ref[...], preferred_element_type=jnp.float32)
                           + b3_ref[...])


# ---------------------------------------------------------------------------
# Tiny XLA-side staging: lane-dense shifted views of the (small) feature maps
# ---------------------------------------------------------------------------

def _corner_views(x_nhwc):
    """T[b, u, v, yp*Wp+xp, c] = x[b, 2*yp+u, 2*xp+v, c], for u, v in 0..3."""
    B, H, W, C = x_nhwc.shape
    Hp, Wp = (H - 2) // 2, (W - 2) // 2
    rows = []
    for u in range(4):
        cols = []
        for v in range(4):
            s = jax.lax.slice(x_nhwc, (0, u, v, 0),
                              (B, u + 2 * Hp - 1, v + 2 * Wp - 1, C),
                              (1, 2, 2, 1))                  # (B, Hp, Wp, C)
            cols.append(s.reshape(B, Hp * Wp, C))
        rows.append(jnp.stack(cols, axis=1))
    return jnp.stack(rows, axis=1), Hp, Wp                   # (B, 4, 4, Hp*Wp, C)


def _conv1_corner_patches(x_nhwc):
    """Folded-K (9*Cin = 27) patch matrices for conv1, one per pool corner."""
    B, H, W, C = x_nhwc.shape
    Hp, Wp = (H - 2) // 2, (W - 2) // 2
    corners = []
    for dy in range(2):
        row = []
        for dx in range(2):
            pats = []
            for i in range(3):
                for j in range(3):
                    pats.append(jax.lax.slice(
                        x_nhwc, (0, dy + i, dx + j, 0),
                        (B, dy + i + 2 * Hp - 1, dx + j + 2 * Wp - 1, C),
                        (1, 2, 2, 1)))
            p = jnp.concatenate(pats, axis=-1)               # (B, Hp, Wp, 9*C)
            row.append(p.reshape(B, Hp * Wp, 9 * C))
        corners.append(jnp.stack(row, axis=1))
    return jnp.stack(corners, axis=1), Hp, Wp                # (B, 2, 2, Hp*Wp, 27)


# ---------------------------------------------------------------------------
# Stage wrappers (one pallas_call each)
# ---------------------------------------------------------------------------

def conv1_stage(x_nhwc, w_oihw, b):
    B = x_nhwc.shape[0]
    cout = w_oihw.shape[0]
    views, Hp, Wp = _conv1_corner_patches(x_nhwc)
    M = Hp * Wp
    K = views.shape[-1]
    w_mat = w_oihw.transpose(2, 3, 1, 0).reshape(K, cout)    # rows ordered (i, j, cin)
    bias = b.reshape(1, cout)
    cost = pl.CostEstimate(flops=2 * B * 4 * M * K * cout, transcendentals=0,
                           bytes_accessed=4 * (views.size + w_mat.size + bias.size
                                               + B * M * cout))
    out = pl.pallas_call(
        _conv1_pool_kernel,
        out_shape=jax.ShapeDtypeStruct((B, M, cout), jnp.float32),
        grid=(B,),
        in_specs=[
            pl.BlockSpec((1, 2, 2, M, K), lambda bb: (bb, 0, 0, 0, 0)),
            pl.BlockSpec((K, cout), lambda bb: (0, 0)),
            pl.BlockSpec((1, cout), lambda bb: (0, 0)),
        ],
        out_specs=pl.BlockSpec((1, M, cout), lambda bb: (bb, 0, 0)),
        compiler_params=pltpu.CompilerParams(dimension_semantics=("parallel",)),
        cost_estimate=cost,
    )(views, w_mat, bias)
    return out, Hp, Wp


def conv_stage(x_nhwc, w_oihw, b):
    B, H, W, cin = x_nhwc.shape
    cout = w_oihw.shape[0]
    views, Hp, Wp = _corner_views(x_nhwc)
    M = Hp * Wp
    w_pos = w_oihw.transpose(2, 3, 1, 0).reshape(9, cin, cout)
    bias = b.reshape(1, cout)
    cost = pl.CostEstimate(flops=2 * B * 4 * 9 * M * cin * cout, transcendentals=0,
                           bytes_accessed=4 * (views.size + w_pos.size + bias.size
                                               + B * M * cout))
    out = pl.pallas_call(
        _conv_pool_kernel,
        out_shape=jax.ShapeDtypeStruct((B, M, cout), jnp.float32),
        grid=(B,),
        in_specs=[
            pl.BlockSpec((1, 4, 4, M, cin), lambda bb: (bb, 0, 0, 0, 0)),
            pl.BlockSpec((9, cin, cout), lambda bb: (0, 0, 0)),
            pl.BlockSpec((1, cout), lambda bb: (0, 0)),
        ],
        out_specs=pl.BlockSpec((1, M, cout), lambda bb: (bb, 0, 0)),
        compiler_params=pltpu.CompilerParams(dimension_semantics=("parallel",)),
        cost_estimate=cost,
    )(views, w_pos, bias)
    return out, Hp, Wp


def conv3_mlp_stage(x_nhwc, params):
    B, H, W, cin = x_nhwc.shape
    w_oihw, b = params["conv3_w"], params["conv3_b"]
    cout = w_oihw.shape[0]
    views, Hp, Wp = _corner_views(x_nhwc)
    M = Hp * Wp
    w_pos = w_oihw.transpose(2, 3, 1, 0).reshape(9, cin, cout)
    bias = b.reshape(1, cout)

    d1 = params["fc1_w"].shape[0]
    d2 = params["fc2_w"].shape[0]
    d3 = params["fc3_w"].shape[0]
    # PyTorch flattens the NCHW exit (c, h, w); permute fc1's rows to (h*Wp+w, c)
    # so the kernel consumes the pooled NHWC features directly.
    w1p = (params["fc1_w"].T.reshape(cout, Hp, Wp, d1)
           .transpose(1, 2, 0, 3).reshape(M, cout, d1))
    b1 = params["fc1_b"].reshape(1, d1)
    w2 = params["fc2_w"].T
    b2 = params["fc2_b"].reshape(1, d2)
    w3 = params["fc3_w"].T
    b3 = params["fc3_b"].reshape(1, d3)

    flops = 2 * B * (4 * 9 * M * cin * cout + M * cout * d1 + d1 * d2 + d2 * d3)
    bytes_acc = 4 * (views.size + w_pos.size + w1p.size + w2.size + w3.size
                     + B * (M * cout + d3))
    cost = pl.CostEstimate(flops=flops, transcendentals=0, bytes_accessed=bytes_acc)

    exit3, logits = pl.pallas_call(
        _conv3_pool_mlp_kernel,
        out_shape=(jax.ShapeDtypeStruct((B, M, cout), jnp.float32),
                   jax.ShapeDtypeStruct((B, 1, d3), jnp.float32)),
        grid=(B,),
        in_specs=[
            pl.BlockSpec((1, 4, 4, M, cin), lambda bb: (bb, 0, 0, 0, 0)),
            pl.BlockSpec((9, cin, cout), lambda bb: (0, 0, 0)),
            pl.BlockSpec((1, cout), lambda bb: (0, 0)),
            pl.BlockSpec((M, cout, d1), lambda bb: (0, 0, 0)),
            pl.BlockSpec((1, d1), lambda bb: (0, 0)),
            pl.BlockSpec((d1, d2), lambda bb: (0, 0)),
            pl.BlockSpec((1, d2), lambda bb: (0, 0)),
            pl.BlockSpec((d2, d3), lambda bb: (0, 0)),
            pl.BlockSpec((1, d3), lambda bb: (0, 0)),
        ],
        out_specs=(pl.BlockSpec((1, M, cout), lambda bb: (bb, 0, 0)),
                   pl.BlockSpec((1, 1, d3), lambda bb: (bb, 0, 0))),
        compiler_params=pltpu.CompilerParams(dimension_semantics=("parallel",)),
        cost_estimate=cost,
    )(views, w_pos, bias, w1p, b1, w2, b2, w3, b3)
    return exit3, logits, Hp, Wp


# ---------------------------------------------------------------------------
# Full forward (interface identical to the PyTorch module)
# ---------------------------------------------------------------------------

def baseline_forward(params, x_nchw):
    B = x_nchw.shape[0]
    x = jnp.transpose(x_nchw, (0, 2, 3, 1))                  # NHWC, lane-dense C

    p1, H1, W1 = conv1_stage(x, params["conv1_w"], params["conv1_b"])
    c1 = params["conv1_w"].shape[0]
    exit1 = jnp.transpose(p1.reshape(B, H1, W1, c1), (0, 3, 1, 2))

    p2, H2, W2 = conv_stage(p1.reshape(B, H1, W1, c1),
                            params["conv2_w"], params["conv2_b"])
    c2 = params["conv2_w"].shape[0]
    exit2 = jnp.transpose(p2.reshape(B, H2, W2, c2), (0, 3, 1, 2))

    exit3_flat, logits, H3, W3 = conv3_mlp_stage(p2.reshape(B, H2, W2, c2), params)
    c3 = params["conv3_w"].shape[0]
    exit3 = jnp.transpose(exit3_flat.reshape(B, H3, W3, c3), (0, 3, 1, 2))

    return logits.reshape(B, -1), [exit1, exit2, exit3]


# ---------------------------------------------------------------------------
# Plain-XLA reference (for numerical parity check)
# ---------------------------------------------------------------------------

def reference_forward(params, x):
    hp = jax.lax.Precision.HIGHEST

    def conv(x, w, b):
        y = jax.lax.conv_general_dilated(
            x, w, window_strides=(1, 1), padding="VALID",
            dimension_numbers=("NCHW", "OIHW", "NCHW"), precision=hp)
        return y + b[None, :, None, None]

    def pool(x):
        B, C, H, W = x.shape
        Hp, Wp = H // 2, W // 2
        x = x[:, :, :2 * Hp, :2 * Wp].reshape(B, C, Hp, 2, Wp, 2)
        return jnp.max(x, axis=(3, 5))

    exits = []
    h = pool(jax.nn.relu(conv(x, params["conv1_w"], params["conv1_b"])))
    exits.append(h)
    h = pool(jax.nn.relu(conv(h, params["conv2_w"], params["conv2_b"])))
    exits.append(h)
    h = pool(jax.nn.relu(conv(h, params["conv3_w"], params["conv3_b"])))
    exits.append(h)
    f = h.reshape(h.shape[0], -1)
    f = jnp.dot(f, params["fc1_w"].T, precision=hp) + params["fc1_b"]
    f = jnp.dot(f, params["fc2_w"].T, precision=hp) + params["fc2_b"]
    f = jnp.dot(f, params["fc3_w"].T, precision=hp) + params["fc3_b"]
    return f, exits


# ---------------------------------------------------------------------------
# Deterministic parameter init (PyTorch shapes: conv OIHW, linear (out, in))
# ---------------------------------------------------------------------------

def init_params(key):
    ks = jax.random.split(key, 12)

    def conv(kw, kb, cout, cin):
        return (jax.random.normal(kw, (cout, cin, 3, 3), jnp.float32) * 0.05,
                jax.random.normal(kb, (cout,), jnp.float32) * 0.01)

    def lin(kw, kb, dout, din):
        return (jax.random.normal(kw, (dout, din), jnp.float32) * 0.05,
                jax.random.normal(kb, (dout,), jnp.float32) * 0.01)

    p = {}
    p["conv1_w"], p["conv1_b"] = conv(ks[0], ks[1], 64, 3)
    p["conv2_w"], p["conv2_b"] = conv(ks[2], ks[3], 128, 64)
    p["conv3_w"], p["conv3_b"] = conv(ks[4], ks[5], 64, 128)
    p["fc1_w"], p["fc1_b"] = lin(ks[6], ks[7], 256, 256)
    p["fc2_w"], p["fc2_b"] = lin(ks[8], ks[9], 64, 256)
    p["fc3_w"], p["fc3_b"] = lin(ks[10], ks[11], 10, 64)
    return p


if __name__ == "__main__":
    key = jax.random.PRNGKey(0)
    pkey, xkey = jax.random.split(key)
    params = init_params(pkey)

    # fc1 expects 256 = 64*2*2 flattened features => 32x32 spatial input.
    x = jax.random.normal(xkey, (2, 3, 32, 32), jnp.float32)

    fwd = jax.jit(baseline_forward)
    logits, exits = fwd(params, x)
    logits = jax.block_until_ready(logits)
    exits = [jax.block_until_ready(e) for e in exits]

    assert logits.shape == (2, 10)
    assert exits[0].shape == (2, 64, 15, 15)
    assert exits[1].shape == (2, 128, 6, 6)
    assert exits[2].shape == (2, 64, 2, 2)
    assert bool(jnp.all(jnp.isfinite(logits)))

    # Numerical parity with a plain-XLA version of the same module.
    ref_logits, ref_exits = jax.jit(reference_forward)(params, x)
    assert bool(jnp.allclose(logits, ref_logits, rtol=1e-1, atol=1e-2)), "logits mismatch"
    for got, ref in zip(exits, ref_exits):
        assert bool(jnp.allclose(got, ref, rtol=1e-1, atol=1e-2)), "exit mismatch"

    print("KERNEL_OK")
</pallas_src>

<mosaic_0001>
module attributes {stable_mosaic.version = 11 : i64} {
  func.func @_conv1_pool_kernel(%arg0: i32, %arg1: memref<1x2x2x225x27xf32, #tpu.memory_space<vmem>>, %arg2: memref<27x64xf32, #tpu.memory_space<vmem>>, %arg3: memref<1x64xf32, #tpu.memory_space<vmem>>, %arg4: memref<1x225x64xf32, #tpu.memory_space<vmem>>) attributes {dimension_semantics = [#tpu.dimension_semantics<parallel>], iteration_bounds = array<i64: 2>, scalar_prefetch = 0 : i64, scratch_operands = 0 : i64, tpu.core_type = #tpu.core_type<tc>, window_params = [{transform_indices = @transform_0, window_bounds = array<i64: 1, 2, 2, 225, 27>}, {pipeline_mode = #tpu.pipeline_mode<synchronous>, transform_indices = @transform_1, window_bounds = array<i64: 27, 64>}, {pipeline_mode = #tpu.pipeline_mode<synchronous>, transform_indices = @transform_2, window_bounds = array<i64: 1, 64>}, {transform_indices = @transform_3, window_bounds = array<i64: 1, 225, 64>}]} {
    %c0 = arith.constant 0 : index
    %c0_0 = arith.constant 0 : index
    %c0_1 = arith.constant 0 : index
    %c0_2 = arith.constant 0 : index
    %c0_3 = arith.constant 0 : index
    %0 = vector.load %arg1[%c0, %c0_0, %c0_1, %c0_2, %c0_3] : memref<1x2x2x225x27xf32, #tpu.memory_space<vmem>>, vector<1x1x1x225x27xf32>
    %1 = vector.shape_cast %0 : vector<1x1x1x225x27xf32> to vector<225x27xf32>
    %c0_4 = arith.constant 0 : index
    %c0_5 = arith.constant 0 : index
    %2 = vector.load %arg2[%c0_4, %c0_5] : memref<27x64xf32, #tpu.memory_space<vmem>>, vector<27x64xf32>
    %cst = arith.constant dense<0.000000e+00> : vector<225x64xf32>
    %3 = tpu.matmul %1, %2, %cst {dimension_numbers = #tpu.dot_dimension_numbers<[1], [0], [0], [1], [0, 0, 1, 1], [], []>} : vector<225x27xf32>, vector<27x64xf32>, vector<225x64xf32> -> vector<225x64xf32>
    %c0_6 = arith.constant 0 : index
    %c0_7 = arith.constant 0 : index
    %c1 = arith.constant 1 : index
    %c0_8 = arith.constant 0 : index
    %c0_9 = arith.constant 0 : index
    %4 = vector.load %arg1[%c0_6, %c0_7, %c1, %c0_8, %c0_9] : memref<1x2x2x225x27xf32, #tpu.memory_space<vmem>>, vector<1x1x1x225x27xf32>
    %5 = vector.shape_cast %4 : vector<1x1x1x225x27xf32> to vector<225x27xf32>
    %c0_10 = arith.constant 0 : index
    %c0_11 = arith.constant 0 : index
    %6 = vector.load %arg2[%c0_10, %c0_11] : memref<27x64xf32, #tpu.memory_space<vmem>>, vector<27x64xf32>
    %cst_12 = arith.constant dense<0.000000e+00> : vector<225x64xf32>
    %7 = tpu.matmul %5, %6, %cst_12 {dimension_numbers = #tpu.dot_dimension_numbers<[1], [0], [0], [1], [0, 0, 1, 1], [], []>} : vector<225x27xf32>, vector<27x64xf32>, vector<225x64xf32> -> vector<225x64xf32>
    %8 = arith.maximumf %3, %7 : vector<225x64xf32>
    %c0_13 = arith.constant 0 : index
    %c1_14 = arith.constant 1 : index
    %c0_15 = arith.constant 0 : index
    %c0_16 = arith.constant 0 : index
    %c0_17 = arith.constant 0 : index
    %9 = vector.load %arg1[%c0_13, %c1_14, %c0_15, %c0_16, %c0_17] : memref<1x2x2x225x27xf32, #tpu.memory_space<vmem>>, vector<1x1x1x225x27xf32>
    %10 = vector.shape_cast %9 : vector<1x1x1x225x27xf32> to vector<225x27xf32>
    %c0_18 = arith.constant 0 : index
    %c0_19 = arith.constant 0 : index
    %11 = vector.load %arg2[%c0_18, %c0_19] : memref<27x64xf32, #tpu.memory_space<vmem>>, vector<27x64xf32>
    %cst_20 = arith.constant dense<0.000000e+00> : vector<225x64xf32>
    %12 = tpu.matmul %10, %11, %cst_20 {dimension_numbers = #tpu.dot_dimension_numbers<[1], [0], [0], [1], [0, 0, 1, 1], [], []>} : vector<225x27xf32>, vector<27x64xf32>, vector<225x64xf32> -> vector<225x64xf32>
    %13 = arith.maximumf %8, %12 : vector<225x64xf32>
    %c0_21 = arith.constant 0 : index
    %c1_22 = arith.constant 1 : index
    %c1_23 = arith.constant 1 : index
    %c0_24 = arith.constant 0 : index
    %c0_25 = arith.constant 0 : index
    %14 = vector.load %arg1[%c0_21, %c1_22, %c1_23, %c0_24, %c0_25] : memref<1x2x2x225x27xf32, #tpu.memory_space<vmem>>, vector<1x1x1x225x27xf32>
    %15 = vector.shape_cast %14 : vector<1x1x1x225x27xf32> to vector<225x27xf32>
    %c0_26 = arith.constant 0 : index
    %c0_27 = arith.constant 0 : index
    %16 = vector.load %arg2[%c0_26, %c0_27] : memref<27x64xf32, #tpu.memory_space<vmem>>, vector<27x64xf32>
    %cst_28 = arith.constant dense<0.000000e+00> : vector<225x64xf32>
    %17 = tpu.matmul %15, %16, %cst_28 {dimension_numbers = #tpu.dot_dimension_numbers<[1], [0], [0], [1], [0, 0, 1, 1], [], []>} : vector<225x27xf32>, vector<27x64xf32>, vector<225x64xf32> -> vector<225x64xf32>
    %18 = arith.maximumf %13, %17 : vector<225x64xf32>
    %c0_29 = arith.constant 0 : index
    %c0_30 = arith.constant 0 : index
    %19 = vector.load %arg3[%c0_29, %c0_30] : memref<1x64xf32, #tpu.memory_space<vmem>>, vector<1x64xf32>
    %20 = vector.broadcast %19 : vector<1x64xf32> to vector<225x64xf32>
    %21 = arith.addf %18, %20 : vector<225x64xf32>
    %cst_31 = arith.constant 0.000000e+00 : f32
    %22 = vector.broadcast %cst_31 : f32 to vector<225x64xf32>
    %23 = arith.maximumf %21, %22 : vector<225x64xf32>
    %c0_32 = arith.constant 0 : index
    %c0_33 = arith.constant 0 : index
    %c0_34 = arith.constant 0 : index
    %24 = vector.load %arg4[%c0_32, %c0_33, %c0_34] : memref<1x225x64xf32, #tpu.memory_space<vmem>>, vector<1x225x64xf32>
    %25 = vector.shape_cast %24 : vector<1x225x64xf32> to vector<225x64xf32>
    %26 = vector.shape_cast %23 : vector<225x64xf32> to vector<1x225x64xf32>
    tpu.vector_store %arg4[%c0_32, %c0_33, %c0_34], %26 {strides = array<i32>} : memref<1x225x64xf32, #tpu.memory_space<vmem>>, vector<1x225x64xf32>,
    return
  }
  func.func @transform_0(%arg0: i32) -> (i32, i32, i32, i32, i32) {
    %c0_i32 = arith.constant 0 : i32
    %c0_i32_0 = arith.constant 0 : i32
    %c0_i32_1 = arith.constant 0 : i32
    %c0_i32_2 = arith.constant 0 : i32
    %c0_i32_3 = arith.constant 0 : i32
    return %arg0, %c0_i32, %c0_i32_0, %c0_i32_1, %c0_i32_2 : i32, i32, i32, i32, i32
  }
  func.func @transform_1(%arg0: i32) -> (i32, i32) {
    %c0_i32 = arith.constant 0 : i32
    %c0_i32_0 = arith.constant 0 : i32
    %c0_i32_1 = arith.constant 0 : i32
    return %c0_i32, %c0_i32_0 : i32, i32
  }
  func.func @transform_2(%arg0: i32) -> (i32, i32) {
    %c0_i32 = arith.constant 0 : i32
    %c0_i32_0 = arith.constant 0 : i32
    %c0_i32_1 = arith.constant 0 : i32
    return %c0_i32, %c0_i32_0 : i32, i32
  }
  func.func @transform_3(%arg0: i32) -> (i32, i32, i32) {
    %c0_i32 = arith.constant 0 : i32
    %c0_i32_0 = arith.constant 0 : i32
    %c0_i32_1 = arith.constant 0 : i32
    return %arg0, %c0_i32, %c0_i32_0 : i32, i32, i32
  }
}

module attributes {stable_mosaic.version = 11 : i64} {
  func.func @_conv_pool_kernel(%arg0: i32, %arg1: memref<1x4x4x36x64xf32, #tpu.memory_space<vmem>>, %arg2: memref<9x64x128xf32, #tpu.memory_space<vmem>>, %arg3: memref<1x128xf32, #tpu.memory_space<vmem>>, %arg4: memref<1x36x128xf32, #tpu.memory_space<vmem>>) attributes {dimension_semantics = [#tpu.dimension_semantics<parallel>], iteration_bounds = array<i64: 2>, scalar_prefetch = 0 : i64, scratch_operands = 0 : i64, tpu.core_type = #tpu.core_type<tc>, window_params = [{transform_indices = @transform_0, window_bounds = array<i64: 1, 4, 4, 36, 64>}, {pipeline_mode = #tpu.pipeline_mode<synchronous>, transform_indices = @transform_1, window_bounds = array<i64: 9, 64, 128>}, {pipeline_mode = #tpu.pipeline_mode<synchronous>, transform_indices = @transform_2, window_bounds = array<i64: 1, 128>}, {transform_indices = @transform_3, window_bounds = array<i64: 1, 36, 128>}]} {
    %c0 = arith.constant 0 : index
    %c0_0 = arith.constant 0 : index
    %c0_1 = arith.constant 0 : index
    %c0_2 = arith.constant 0 : index
    %c0_3 = arith.constant 0 : index
    %0 = vector.load %arg1[%c0, %c0_0, %c0_1, %c0_2, %c0_3] : memref<1x4x4x36x64xf32, #tpu.memory_space<vmem>>, vector<1x1x1x36x64xf32>
    %1 = vector.shape_cast %0 : vector<1x1x1x36x64xf32> to vector<36x64xf32>
    %c0_4 = arith.constant 0 : index
    %c0_5 = arith.constant 0 : index
    %c0_6 = arith.constant 0 : index
    %2 = vector.load %arg2[%c0_4, %c0_5, %c0_6] : memref<9x64x128xf32, #tpu.memory_space<vmem>>, vector<1x64x128xf32>
    %3 = vector.shape_cast %2 : vector<1x64x128xf32> to vector<64x128xf32>
    %cst = arith.constant dense<0.000000e+00> : vector<36x128xf32>
    %4 = tpu.matmul %1, %3, %cst {dimension_numbers = #tpu.dot_dimension_numbers<[1], [0], [0], [1], [0, 0, 1, 1], [], []>} : vector<36x64xf32>, vector<64x128xf32>, vector<36x128xf32> -> vector<36x128xf32>
    %c0_7 = arith.constant 0 : index
    %c0_8 = arith.constant 0 : index
    %c1 = arith.constant 1 : index
    %c0_9 = arith.constant 0 : index
    %c0_10 = arith.constant 0 : index
    %5 = vector.load %arg1[%c0_7, %c0_8, %c1, %c0_9, %c0_10] : memref<1x4x4x36x64xf32, #tpu.memory_space<vmem>>, vector<1x1x1x36x64xf32>
    %6 = vector.shape_cast %5 : vector<1x1x1x36x64xf32> to vector<36x64xf32>
    %c1_11 = arith.constant 1 : index
    %c0_12 = arith.constant 0 : index
    %c0_13 = arith.constant 0 : index
    %7 = vector.load %arg2[%c1_11, %c0_12, %c0_13] : memref<9x64x128xf32, #tpu.memory_space<vmem>>, vector<1x64x128xf32>
    %8 = vector.shape_cast %7 : vector<1x64x128xf32> to vector<64x128xf32>
    %cst_14 = arith.constant dense<0.000000e+00> : vector<36x128xf32>
    %9 = tpu.matmul %6, %8, %cst_14 {dimension_numbers = #tpu.dot_dimension_numbers<[1], [0], [0], [1], [0, 0, 1, 1], [], []>} : vector<36x64xf32>, vector<64x128xf32>, vector<36x128xf32> -> vector<36x128xf32>
    %10 = arith.addf %4, %9 : vector<36x128xf32>
    %c0_15 = arith.constant 0 : index
    %c0_16 = arith.constant 0 : index
    %c2 = arith.constant 2 : index
    %c0_17 = arith.constant 0 : index
    %c0_18 = arith.constant 0 : index
    %11 = vector.load %arg1[%c0_15, %c0_16, %c2, %c0_17, %c0_18] : memref<1x4x4x36x64xf32, #tpu.memory_space<vmem>>, vector<1x1x1x36x64xf32>
    %12 = vector.shape_cast %11 : vector<1x1x1x36x64xf32> to vector<36x64xf32>
    %c2_19 = arith.constant 2 : index
    %c0_20 = arith.constant 0 : index
    %c0_21 = arith.constant 0 : index
    %13 = vector.load %arg2[%c2_19, %c0_20, %c0_21] : memref<9x64x128xf32, #tpu.memory_space<vmem>>, vector<1x64x128xf32>
    %14 = vector.shape_cast %13 : vector<1x64x128xf32> to vector<64x128xf32>
    %cst_22 = arith.constant dense<0.000000e+00> : vector<36x128xf32>
    %15 = tpu.matmul %12, %14, %cst_22 {dimension_numbers = #tpu.dot_dimension_numbers<[1], [0], [0], [1], [0, 0, 1, 1], [], []>} : vector<36x64xf32>, vector<64x128xf32>, vector<36x128xf32> -> vector<36x128xf32>
    %16 = arith.addf %10, %15 : vector<36x128xf32>
    %c0_23 = arith.constant 0 : index
    %c1_24 = arith.constant 1 : index
    %c0_25 = arith.constant 0 : index
    %c0_26 = arith.constant 0 : index
    %c0_27 = arith.constant 0 : index
    %17 = vector.load %arg1[%c0_23, %c1_24, %c0_25, %c0_26, %c0_27] : memref<1x4x4x36x64xf32, #tpu.memory_space<vmem>>, vector<1x1x1x36x64xf32>
    %18 = vector.shape_cast %17 : vector<1x1x1x36x64xf32> to vector<36x64xf32>
    %c3 = arith.constant 3 : index
    %c0_28 = arith.constant 0 : index
    %c0_29 = arith.constant 0 : index
    %19 = vector.load %arg2[%c3, %c0_28, %c0_29] : memref<9x64x128xf32, #tpu.memory_space<vmem>>, vector<1x64x128xf32>
    %20 = vector.shape_cast %19 : vector<1x64x128xf32> to vector<64x128xf32>
    %cst_30 = arith.constant dense<0.000000e+00> : vector<36x128xf32>
    %21 = tpu.matmul %18, %20, %cst_30 {dimension_numbers = #tpu.dot_dimension_numbers<[1], [0], [0], [1], [0, 0, 1, 1], [], []>} : vector<36x64xf32>, vector<64x128xf32>, vector<36x128xf32> -> vector<36x128xf32>
    %22 = arith.addf %16, %21 : vector<36x128xf32>
    %c0_31 = arith.constant 0 : index
    %c1_32 = arith.constant 1 : index
    %c1_33 = arith.constant 1 : index
    %c0_34 = arith.constant 0 : index
    %c0_35 = arith.constant 0 : index
    %23 = vector.load %arg1[%c0_31, %c1_32, %c1_33, %c0_34, %c0_35] : memref<1x4x4x36x64xf32, #tpu.memory_space<vmem>>, vector<1x1x1x36x64xf32>
    %24 = vector.shape_cast %23 : vector<1x1x1x36x64xf32> to vector<36x64xf32>
    %c4 = arith.constant 4 : index
    %c0_36 = arith.constant 0 : index
    %c0_37 = arith.constant 0 : index
    %25 = vector.load %arg2[%c4, %c0_36, %c0_37] : memref<9x64x128xf32, #tpu.memory_space<vmem>>, vector<1x64x128xf32>
    %26 = vector.shape_cast %25 : vector<1x64x128xf32> to vector<64x128xf32>
    %cst_38 = arith.constant dense<0.000000e+00> : vector<36x128xf32>
    %27 = tpu.matmul %24, %26, %cst_38 {dimension_numbers = #tpu.dot_dimension_numbers<[1], [0], [0], [1], [0, 0, 1, 1], [], []>} : vector<36x64xf32>, vector<64x128xf32>, vector<36x128xf32> -> vector<36x128xf32>
    %28 = arith.addf %22, %27 : vector<36x128xf32>
    %c0_39 = arith.constant 0 : index
    %c1_40 = arith.constant 1 : index
    %c2_41 = arith.constant 2 : index
    %c0_42 = arith.constant 0 : index
    %c0_43 = arith.constant 0 : index
    %29 = vector.load %arg1[%c0_39, %c1_40, %c2_41, %c0_42, %c0_43] : memref<1x4x4x36x64xf32, #tpu.memory_space<vmem>>, vector<1x1x1x36x64xf32>
    %30 = vector.shape_cast %29 : vector<1x1x1x36x64xf32> to vector<36x64xf32>
    %c5 = arith.constant 5 : index
    %c0_44 = arith.constant 0 : index
    %c0_45 = arith.constant 0 : index
    %31 = vector.load %arg2[%c5, %c0_44, %c0_45] : memref<9x64x128xf32, #tpu.memory_space<vmem>>, vector<1x64x128xf32>
    %32 = vector.shape_cast %31 : vector<1x64x128xf32> to vector<64x128xf32>
    %cst_46 = arith.constant dense<0.000000e+00> : vector<36x128xf32>
    %33 = tpu.matmul %30, %32, %cst_46 {dimension_numbers = #tpu.dot_dimension_numbers<[1], [0], [0], [1], [0, 0, 1, 1], [], []>} : vector<36x64xf32>, vector<64x128xf32>, vector<36x128xf32> -> vector<36x128xf32>
    %34 = arith.addf %28, %33 : vector<36x128xf32>
    %c0_47 = arith.constant 0 : index
    %c2_48 = arith.constant 2 : index
    %c0_49 = arith.constant 0 : index
    %c0_50 = arith.constant 0 : index
    %c0_51 = arith.constant 0 : index
    %35 = vector.load %arg1[%c0_47, %c2_48, %c0_49, %c0_50, %c0_51] : memref<1x4x4x36x64xf32, #tpu.memory_space<vmem>>, vector<1x1x1x36x64xf32>
    %36 = vector.shape_cast %35 : vector<1x1x1x36x64xf32> to vector<36x64xf32>
    %c6 = arith.constant 6 : index
    %c0_52 = arith.constant 0 : index
    %c0_53 = arith.constant 0 : index
    %37 = vector.load %arg2[%c6, %c0_52, %c0_53] : memref<9x64x128xf32, #tpu.memory_space<vmem>>, vector<1x64x128xf32>
    %38 = vector.shape_cast %37 : vector<1x64x128xf32> to vector<64x128xf32>
    %cst_54 = arith.constant dense<0.000000e+00> : vector<36x128xf32>
    %39 = tpu.matmul %36, %38, %cst_54 {dimension_numbers = #tpu.dot_dimension_numbers<[1], [0], [0], [1], [0, 0, 1, 1], [], []>} : vector<36x64xf32>, vector<64x128xf32>, vector<36x128xf32> -> vector<36x128xf32>
    %40 = arith.addf %34, %39 : vector<36x128xf32>
    %c0_55 = arith.constant 0 : index
    %c2_56 = arith.constant 2 : index
    %c1_57 = arith.constant 1 : index
    %c0_58 = arith.constant 0 : index
    %c0_59 = arith.constant 0 : index
    %41 = vector.load %arg1[%c0_55, %c2_56, %c1_57, %c0_58, %c0_59] : memref<1x4x4x36x64xf32, #tpu.memory_space<vmem>>, vector<1x1x1x36x64xf32>
    %42 = vector.shape_cast %41 : vector<1x1x1x36x64xf32> to vector<36x64xf32>
    %c7 = arith.constant 7 : index
    %c0_60 = arith.constant 0 : index
    %c0_61 = arith.constant 0 : index
    %43 = vector.load %arg2[%c7, %c0_60, %c0_61] : memref<9x64x128xf32, #tpu.memory_space<vmem>>, vector<1x64x128xf32>
    %44 = vector.shape_cast %43 : vector<1x64x128xf32> to vector<64x128xf32>
    %cst_62 = arith.constant dense<0.000000e+00> : vector<36x128xf32>
    %45 = tpu.matmul %42, %44, %cst_62 {dimension_numbers = #tpu.dot_dimension_numbers<[1], [0], [0], [1], [0, 0, 1, 1], [], []>} : vector<36x64xf32>, vector<64x128xf32>, vector<36x128xf32> -> vector<36x128xf32>
    %46 = arith.addf %40, %45 : vector<36x128xf32>
    %c0_63 = arith.constant 0 : index
    %c2_64 = arith.constant 2 : index
    %c2_65 = arith.constant 2 : index
    %c0_66 = arith.constant 0 : index
    %c0_67 = arith.constant 0 : index
    %47 = vector.load %arg1[%c0_63, %c2_64, %c2_65, %c0_66, %c0_67] : memref<1x4x4x36x64xf32, #tpu.memory_space<vmem>>, vector<1x1x1x36x64xf32>
    %48 = vector.shape_cast %47 : vector<1x1x1x36x64xf32> to vector<36x64xf32>
    %c8 = arith.constant 8 : index
    %c0_68 = arith.constant 0 : index
    %c0_69 = arith.constant 0 : index
    %49 = vector.load %arg2[%c8, %c0_68, %c0_69] : memref<9x64x128xf32, #tpu.memory_space<vmem>>, vector<1x64x128xf32>
    %50 = vector.shape_cast %49 : vector<1x64x128xf32> to vector<64x128xf32>
    %cst_70 = arith.constant dense<0.000000e+00> : vector<36x128xf32>
    %51 = tpu.matmul %48, %50, %cst_70 {dimension_numbers = #tpu.dot_dimension_numbers<[1], [0], [0], [1], [0, 0, 1, 1], [], []>} : vector<36x64xf32>, vector<64x128xf32>, vector<36x128xf32> -> vector<36x128xf32>
    %52 = arith.addf %46, %51 : vector<36x128xf32>
    %c0_71 = arith.constant 0 : index
    %c0_72 = arith.constant 0 : index
    %c1_73 = arith.constant 1 : index
    %c0_74 = arith.constant 0 : index
    %c0_75 = arith.constant 0 : index
    %53 = vector.load %arg1[%c0_71, %c0_72, %c1_73, %c0_74, %c0_75] : memref<1x4x4x36x64xf32, #tpu.memory_space<vmem>>, vector<1x1x1x36x64xf32>
    %54 = vector.shape_cast %53 : vector<1x1x1x36x64xf32> to vector<36x64xf32>
    %c0_76 = arith.constant 0 : index
    %c0_77 = arith.constant 0 : index
    %c0_78 = arith.constant 0 : index
    %55 = vector.load %arg2[%c0_76, %c0_77, %c0_78] : memref<9x64x128xf32, #tpu.memory_space<vmem>>, vector<1x64x128xf32>
    %56 = vector.shape_cast %55 : vector<1x64x128xf32> to vector<64x128xf32>
    %cst_79 = arith.constant dense<0.000000e+00> : vector<36x128xf32>
    %57 = tpu.matmul %54, %56, %cst_79 {dimension_numbers = #tpu.dot_dimension_numbers<[1], [0], [0], [1], [0, 0, 1, 1], [], []>} : vector<36x64xf32>, vector<64x128xf32>, vector<36x128xf32> -> vector<36x128xf32>
    %c0_80 = arith.constant 0 : index
    %c0_81 = arith.constant 0 : index
    %c2_82 = arith.constant 2 : index
    %c0_83 = arith.constant 0 : index
    %c0_84 = arith.constant 0 : index
    %58 = vector.load %arg1[%c0_80, %c0_81, %c2_82, %c0_83, %c0_84] : memref<1x4x4x36x64xf32, #tpu.memory_space<vmem>>, vector<1x1x1x36x64xf32>
    %59 = vector.shape_cast %58 : vector<1x1x1x36x64xf32> to vector<36x64xf32>
    %c1_85 = arith.constant 1 : index
    %c0_86 = arith.constant 0 : index
    %c0_87 = arith.constant 0 : index
    %60 = vector.load %arg2[%c1_85, %c0_86, %c0_87] : memref<9x64x128xf32, #tpu.memory_space<vmem>>, vector<1x64x128xf32>
    %61 = vector.shape_cast %60 : vector<1x64x128xf32> to vector<64x128xf32>
    %cst_88 = arith.constant dense<0.000000e+00> : vector<36x128xf32>
    %62 = tpu.matmul %59, %61, %cst_88 {dimension_numbers = #tpu.dot_dimension_numbers<[1], [0], [0], [1], [0, 0, 1, 1], [], []>} : vector<36x64xf32>, vector<64x128xf32>, vector<36x128xf32> -> vector<36x128xf32>
    %63 = arith.addf %57, %62 : vector<36x128xf32>
    %c0_89 = arith.constant 0 : index
    %c0_90 = arith.constant 0 : index
    %c3_91 = arith.constant 3 : index
    %c0_92 = arith.constant 0 : index
    %c0_93 = arith.constant 0 : index
    %64 = vector.load %arg1[%c0_89, %c0_90, %c3_91, %c0_92, %c0_93] : memref<1x4x4x36x64xf32, #tpu.memory_space<vmem>>, vector<1x1x1x36x64xf32>
    %65 = vector.shape_cast %64 : vector<1x1x1x36x64xf32> to vector<36x64xf32>
    %c2_94 = arith.constant 2 : index
    %c0_95 = arith.constant 0 : index
    %c0_96 = arith.constant 0 : index
    %66 = vector.load %arg2[%c2_94, %c0_95, %c0_96] : memref<9x64x128xf32, #tpu.memory_space<vmem>>, vector<1x64x128xf32>
    %67 = vector.shape_cast %66 : vector<1x64x128xf32> to vector<64x128xf32>
    %cst_97 = arith.constant dense<0.000000e+00> : vector<36x128xf32>
    %68 = tpu.matmul %65, %67, %cst_97 {dimension_numbers = #tpu.dot_dimension_numbers<[1], [0], [0], [1], [0, 0, 1, 1], [], []>} : vector<36x64xf32>, vector<64x128xf32>, vector<36x128xf32> -> vector<36x128xf32>
    %69 = arith.addf %63, %68 : vector<36x128xf32>
    %c0_98 = arith.constant 0 : index
    %c1_99 = arith.constant 1 : index
    %c1_100 = arith.constant 1 : index
    %c0_101 = arith.constant 0 : index
    %c0_102 = arith.constant 0 : index
    %70 = vector.load %arg1[%c0_98, %c1_99, %c1_100, %c0_101, %c0_102] : memref<1x4x4x36x64xf32, #tpu.memory_space<vmem>>, vector<1x1x1x36x64xf32>
    %71 = vector.shape_cast %70 : vector<1x1x1x36x64xf32> to vector<36x64xf32>
    %c3_103 = arith.constant 3 : index
    %c0_104 = arith.constant 0 : index
    %c0_105 = arith.constant 0 : index
    %72 = vector.load %arg2[%c3_103, %c0_104, %c0_105] : memref<9x64x128xf32, #tpu.memory_space<vmem>>, vector<1x64x128xf32>
    %73 = vector.shape_cast %72 : vector<1x64x128xf32> to vector<64x128xf32>
    %cst_106 = arith.constant dense<0.000000e+00> : vector<36x128xf32>
    %74 = tpu.matmul %71, %73, %cst_106 {dimension_numbers = #tpu.dot_dimension_numbers<[1], [0], [0], [1], [0, 0, 1, 1], [], []>} : vector<36x64xf32>, vector<64x128xf32>, vector<36x128xf32> -> vector<36x128xf32>
    %75 = arith.addf %69, %74 : vector<36x128xf32>
    %c0_107 = arith.constant 0 : index
    %c1_108 = arith.constant 1 : index
    %c2_109 = arith.constant 2 : index
    %c0_110 = arith.constant 0 : index
    %c0_111 = arith.constant 0 : index
    %76 = vector.load %arg1[%c0_107, %c1_108, %c2_109, %c0_110, %c0_111] : memref<1x4x4x36x64xf32, #tpu.memory_space<vmem>>, vector<1x1x1x36x64xf32>
    %77 = vector.shape_cast %76 : vector<1x1x1x36x64xf32> to vector<36x64xf32>
    %c4_112 = arith.constant 4 : index
    %c0_113 = arith.constant 0 : index
    %c0_114 = arith.constant 0 : index
    %78 = vector.load %arg2[%c4_112, %c0_113, %c0_114] : memref<9x64x128xf32, #tpu.memory_space<vmem>>, vector<1x64x128xf32>
    %79 = vector.shape_cast %78 : vector<1x64x128xf32> to vector<64x128xf32>
    %cst_115 = arith.constant dense<0.000000e+00> : vector<36x128xf32>
    %80 = tpu.matmul %77, %79, %cst_115 {dimension_numbers = #tpu.dot_dimension_numbers<[1], [0], [0], [1], [0, 0, 1, 1], [], []>} : vector<36x64xf32>, vector<64x128xf32>, vector<36x128xf32> -> vector<36x128xf32>
    %81 = arith.addf %75, %80 : vector<36x128xf32>
    %c0_116 = arith.constant 0 : index
    %c1_117 = arith.constant 1 : index
    %c3_118 = arith.constant 3 : index
    %c0_119 = arith.constant 0 : index
    %c0_120 = arith.constant 0 : index
    %82 = vector.load %arg1[%c0_116, %c1_117, %c3_118, %c0_119, %c0_120] : memref<1x4x4x36x64xf32, #tpu.memory_space<vmem>>, vector<1x1x1x36x64xf32>
    %83 = vector.shape_cast %82 : vector<1x1x1x36x64xf32> to vector<36x64xf32>
    %c5_121 = arith.constant 5 : index
    %c0_122 = arith.constant 0 : index
    %c0_123 = arith.constant 0 : index
    %84 = vector.load %arg2[%c5_121, %c0_122, %c0_123] : memref<9x64x128xf32, #tpu.memory_space<vmem>>, vector<1x64x128xf32>
    %85 = vector.shape_cast %84 : vector<1x64x128xf32> to vector<64x128xf32>
    %cst_124 = arith.constant dense<0.000000e+00> : vector<36x128xf32>
    %86 = tpu.matmul %83, %85, %cst_124 {dimension_numbers = #tpu.dot_dimension_numbers<[1], [0], [0], [1], [0, 0, 1, 1], [], []>} : vector<36x64xf32>, vector<64x128xf32>, vector<36x128xf32> -> vector<36x128xf32>
    %87 = arith.addf %81, %86 : vector<36x128xf32>
    %c0_125 = arith.constant 0 : index
    %c2_126 = arith.constant 2 : index
    %c1_127 = arith.constant 1 : index
    %c0_128 = arith.constant 0 : index
    %c0_129 = arith.constant 0 : index
    %88 = vector.load %arg1[%c0_125, %c2_126, %c1_127, %c0_128, %c0_129] : memref<1x4x4x36x64xf32, #tpu.memory_space<vmem>>, vector<1x1x1x36x64xf32>
    %89 = vector.shape_cast %88 : vector<1x1x1x36x64xf32> to vector<36x64xf32>
    %c6_130 = arith.constant 6 : index
    %c0_131 = arith.constant 0 : index
    %c0_132 = arith.constant 0 : index
    %90 = vector.load %arg2[%c6_130, %c0_131, %c0_132] : memref<9x64x128xf32, #tpu.memory_space<vmem>>, vector<1x64x128xf32>
    %91 = vector.shape_cast %90 : vector<1x64x128xf32> to vector<64x128xf32>
    %cst_133 = arith.constant dense<0.000000e+00> : vector<36x128xf32>
    %92 = tpu.matmul %89, %91, %cst_133 {dimension_numbers = #tpu.dot_dimension_numbers<[1], [0], [0], [1], [0, 0, 1, 1], [], []>} : vector<36x64xf32>, vector<64x128xf32>, vector<36x128xf32> -> vector<36x128xf32>
    %93 = arith.addf %87, %92 : vector<36x128xf32>
    %c0_134 = arith.constant 0 : index
    %c2_135 = arith.constant 2 : index
    %c2_136 = arith.constant 2 : index
    %c0_137 = arith.constant 0 : index
    %c0_138 = arith.constant 0 : index
    %94 = vector.load %arg1[%c0_134, %c2_135, %c2_136, %c0_137, %c0_138] : memref<1x4x4x36x64xf32, #tpu.memory_space<vmem>>, vector<1x1x1x36x64xf32>
    %95 = vector.shape_cast %94 : vector<1x1x1x36x64xf32> to vector<36x64xf32>
    %c7_139 = arith.constant 7 : index
    %c0_140 = arith.constant 0 : index
    %c0_141 = arith.constant 0 : index
    %96 = vector.load %arg2[%c7_139, %c0_140, %c0_141] : memref<9x64x128xf32, #tpu.memory_space<vmem>>, vector<1x64x128xf32>
    %97 = vector.shape_cast %96 : vector<1x64x128xf32> to vector<64x128xf32>
    %cst_142 = arith.constant dense<0.000000e+00> : vector<36x128xf32>
    %98 = tpu.matmul %95, %97, %cst_142 {dimension_numbers = #tpu.dot_dimension_numbers<[1], [0], [0], [1], [0, 0, 1, 1], [], []>} : vector<36x64xf32>, vector<64x128xf32>, vector<36x128xf32> -> vector<36x128xf32>
    %99 = arith.addf %93, %98 : vector<36x128xf32>
    %c0_143 = arith.constant 0 : index
    %c2_144 = arith.constant 2 : index
    %c3_145 = arith.constant 3 : index
    %c0_146 = arith.constant 0 : index
    %c0_147 = arith.constant 0 : index
    %100 = vector.load %arg1[%c0_143, %c2_144, %c3_145, %c0_146, %c0_147] : memref<1x4x4x36x64xf32, #tpu.memory_space<vmem>>, vector<1x1x1x36x64xf32>
    %101 = vector.shape_cast %100 : vector<1x1x1x36x64xf32> to vector<36x64xf32>
    %c8_148 = arith.constant 8 : index
    %c0_149 = arith.constant 0 : index
    %c0_150 = arith.constant 0 : index
    %102 = vector.load %arg2[%c8_148, %c0_149, %c0_150] : memref<9x64x128xf32, #tpu.memory_space<vmem>>, vector<1x64x128xf32>
    %103 = vector.shape_cast %102 : vector<1x64x128xf32> to vector<64x128xf32>
    %cst_151 = arith.constant dense<0.000000e+00> : vector<36x128xf32>
    %104 = tpu.matmul %101, %103, %cst_151 {dimension_numbers = #tpu.dot_dimension_numbers<[1], [0], [0], [1], [0, 0, 1, 1], [], []>} : vector<36x64xf32>, vector<64x128xf32>, vector<36x128xf32> -> vector<36x128xf32>
    %105 = arith.addf %99, %104 : vector<36x128xf32>
    %106 = arith.maximumf %52, %105 : vector<36x128xf32>
    %c0_152 = arith.constant 0 : index
    %c1_153 = arith.constant 1 : index
    %c0_154 = arith.constant 0 : index
    %c0_155 = arith.constant 0 : index
    %c0_156 = arith.constant 0 : index
    %107 = vector.load %arg1[%c0_152, %c1_153, %c0_154, %c0_155, %c0_156] : memref<1x4x4x36x64xf32, #tpu.memory_space<vmem>>, vector<1x1x1x36x64xf32>
    %108 = vector.shape_cast %107 : vector<1x1x1x36x64xf32> to vector<36x64xf32>
    %c0_157 = arith.constant 0 : index
    %c0_158 = arith.constant 0 : index
    %c0_159 = arith.constant 0 : index
    %109 = vector.load %arg2[%c0_157, %c0_158, %c0_159] : memref<9x64x128xf32, #tpu.memory_space<vmem>>, vector<1x64x128xf32>
    %110 = vector.shape_cast %109 : vector<1x64x128xf32> to vector<64x128xf32>
    %cst_160 = arith.constant dense<0.000000e+00> : vector<36x128xf32>
    %111 = tpu.matmul %108, %110, %cst_160 {dimension_numbers = #tpu.dot_dimension_numbers<[1], [0], [0], [1], [0, 0, 1, 1], [], []>} : vector<36x64xf32>, vector<64x128xf32>, vector<36x128xf32> -> vector<36x128xf32>
    %c0_161 = arith.constant 0 : index
    %c1_162 = arith.constant 1 : index
    %c1_163 = arith.constant 1 : index
    %c0_164 = arith.constant 0 : index
    %c0_165 = arith.constant 0 : index
    %112 = vector.load %arg1[%c0_161, %c1_162, %c1_163, %c0_164, %c0_165] : memref<1x4x4x36x64xf32, #tpu.memory_space<vmem>>, vector<1x1x1x36x64xf32>
    %113 = vector.shape_cast %112 : vector<1x1x1x36x64xf32> to vector<36x64xf32>
    %c1_166 = arith.constant 1 : index
    %c0_167 = arith.constant 0 : index
    %c0_168 = arith.constant 0 : index
    %114 = vector.load %arg2[%c1_166, %c0_167, %c0_168] : memref<9x64x128xf32, #tpu.memory_space<vmem>>, vector<1x64x128xf32>
    %115 = vector.shape_cast %114 : vector<1x64x128xf32> to vector<64x128xf32>
    %cst_169 = arith.constant dense<0.000000e+00> : vector<36x128xf32>
    %116 = tpu.matmul %113, %115, %cst_169 {dimension_numbers = #tpu.dot_dimension_numbers<[1], [0], [0], [1], [0, 0, 1, 1], [], []>} : vector<36x64xf32>, vector<64x128xf32>, vector<36x128xf32> -> vector<36x128xf32>
    %117 = arith.addf %111, %116 : vector<36x128xf32>
    %c0_170 = arith.constant 0 : index
    %c1_171 = arith.constant 1 : index
    %c2_172 = arith.constant 2 : index
    %c0_173 = arith.constant 0 : index
    %c0_174 = arith.constant 0 : index
    %118 = vector.load %arg1[%c0_170, %c1_171, %c2_172, %c0_173, %c0_174] : memref<1x4x4x36x64xf32, #tpu.memory_space<vmem>>, vector<1x1x1x36x64xf32>
    %119 = vector.shape_cast %118 : vector<1x1x1x36x64xf32> to vector<36x64xf32>
    %c2_175 = arith.constant 2 : index
    %c0_176 = arith.constant 0 : index
    %c0_177 = arith.constant 0 : index
    %120 = vector.load %arg2[%c2_175, %c0_176, %c0_177] : memref<9x64x128xf32, #tpu.memory_space<vmem>>, vector<1x64x128xf32>
    %121 = vector.shape_cast %120 : vector<1x64x128xf32> to vector<64x128xf32>
    %cst_178 = arith.constant dense<0.000000e+00> : vector<36x128xf32>
    %122 = tpu.matmul %119, %121, %cst_178 {dimension_numbers = #tpu.dot_dimension_numbers<[1], [0], [0], [1], [0, 0, 1, 1], [], []>} : vector<36x64xf32>, vector<64x128xf32>, vector<36x128xf32> -> vector<36x128xf32>
    %123 = arith.addf %117, %122 : vector<36x128xf32>
    %c0_179 = arith.constant 0 : index
    %c2_180 = arith.constant 2 : index
    %c0_181 = arith.constant 0 : index
    %c0_182 = arith.constant 0 : index
    %c0_183 = arith.constant 0 : index
    %124 = vector.load %arg1[%c0_179, %c2_180, %c0_181, %c0_182, %c0_183] : memref<1x4x4x36x64xf32, #tpu.memory_space<vmem>>, vector<1x1x1x36x64xf32>
    %125 = vector.shape_cast %124 : vector<1x1x1x36x64xf32> to vector<36x64xf32>
    %c3_184 = arith.constant 3 : index
    %c0_185 = arith.constant 0 : index
    %c0_186 = arith.constant 0 : index
    %126 = vector.load %arg2[%c3_184, %c0_185, %c0_186] : memref<9x64x128xf32, #tpu.memory_space<vmem>>, vector<1x64x128xf32>
    %127 = vector.shape_cast %126 : vector<1x64x128xf32> to vector<64x128xf32>
    %cst_187 = arith.constant dense<0.000000e+00> : vector<36x128xf32>
    %128 = tpu.matmul %125, %127, %cst_187 {dimension_numbers = #tpu.dot_dimension_numbers<[1], [0], [0], [1], [0, 0, 1, 1], [], []>} : vector<36x64xf32>, vector<64x128xf32>, vector<36x128xf32> -> vector<36x128xf32>
    %129 = arith.addf %123, %128 : vector<36x128xf32>
    %c0_188 = arith.constant 0 : index
    %c2_189 = arith.constant 2 : index
    %c1_190 = arith.constant 1 : index
    %c0_191 = arith.constant 0 : index
    %c0_192 = arith.constant 0 : index
    %130 = vector.load %arg1[%c0_188, %c2_189, %c1_190, %c0_191, %c0_192] : memref<1x4x4x36x64xf32, #tpu.memory_space<vmem>>, vector<1x1x1x36x64xf32>
    %131 = vector.shape_cast %130 : vector<1x1x1x36x64xf32> to vector<36x64xf32>
    %c4_193 = arith.constant 4 : index
    %c0_194 = arith.constant 0 : index
    %c0_195 = arith.constant 0 : index
    %132 = vector.load %arg2[%c4_193, %c0_194, %c0_195] : memref<9x64x128xf32, #tpu.memory_space<vmem>>, vector<1x64x128xf32>
    %133 = vector.shape_cast %132 : vector<1x64x128xf32> to vector<64x128xf32>
    %cst_196 = arith.constant dense<0.000000e+00> : vector<36x128xf32>
    %134 = tpu.matmul %131, %133, %cst_196 {dimension_numbers = #tpu.dot_dimension_numbers<[1], [0], [0], [1], [0, 0, 1, 1], [], []>} : vector<36x64xf32>, vector<64x128xf32>, vector<36x128xf32> -> vector<36x128xf32>
    %135 = arith.addf %129, %134 : vector<36x128xf32>
    %c0_197 = arith.constant 0 : index
    %c2_198 = arith.constant 2 : index
    %c2_199 = arith.constant 2 : index
    %c0_200 = arith.constant 0 : index
    %c0_201 = arith.constant 0 : index
    %136 = vector.load %arg1[%c0_197, %c2_198, %c2_199, %c0_200, %c0_201] : memref<1x4x4x36x64xf32, #tpu.memory_space<vmem>>, vector<1x1x1x36x64xf32>
    %137 = vector.shape_cast %136 : vector<1x1x1x36x64xf32> to vector<36x64xf32>
    %c5_202 = arith.constant 5 : index
    %c0_203 = arith.constant 0 : index
    %c0_204 = arith.constant 0 : index
    %138 = vector.load %arg2[%c5_202, %c0_203, %c0_204] : memref<9x64x128xf32, #tpu.memory_space<vmem>>, vector<1x64x128xf32>
    %139 = vector.shape_cast %138 : vector<1x64x128xf32> to vector<64x128xf32>
    %cst_205 = arith.constant dense<0.000000e+00> : vector<36x128xf32>
    %140 = tpu.matmul %137, %139, %cst_205 {dimension_numbers = #tpu.dot_dimension_numbers<[1], [0], [0], [1], [0, 0, 1, 1], [], []>} : vector<36x64xf32>, vector<64x128xf32>, vector<36x128xf32> -> vector<36x128xf32>
    %141 = arith.addf %135, %140 : vector<36x128xf32>
    %c0_206 = arith.constant 0 : index
    %c3_207 = arith.constant 3 : index
    %c0_208 = arith.constant 0 : index
    %c0_209 = arith.constant 0 : index
    %c0_210 = arith.constant 0 : index
    %142 = vector.load %arg1[%c0_206, %c3_207, %c0_208, %c0_209, %c0_210] : memref<1x4x4x36x64xf32, #tpu.memory_space<vmem>>, vector<1x1x1x36x64xf32>
    %143 = vector.shape_cast %142 : vector<1x1x1x36x64xf32> to vector<36x64xf32>
    %c6_211 = arith.constant 6 : index
    %c0_212 = arith.constant 0 : index
    %c0_213 = arith.constant 0 : index
    %144 = vector.load %arg2[%c6_211, %c0_212, %c0_213] : memref<9x64x128xf32, #tpu.memory_space<vmem>>, vector<1x64x128xf32>
    %145 = vector.shape_cast %144 : vector<1x64x128xf32> to vector<64x128xf32>
    %cst_214 = arith.constant dense<0.000000e+00> : vector<36x128xf32>
    %146 = tpu.matmul %143, %145, %cst_214 {dimension_numbers = #tpu.dot_dimension_numbers<[1], [0], [0], [1], [0, 0, 1, 1], [], []>} : vector<36x64xf32>, vector<64x128xf32>, vector<36x128xf32> -> vector<36x128xf32>
    %147 = arith.addf %141, %146 : vector<36x128xf32>
    %c0_215 = arith.constant 0 : index
    %c3_216 = arith.constant 3 : index
    %c1_217 = arith.constant 1 : index
    %c0_218 = arith.constant 0 : index
    %c0_219 = arith.constant 0 : index
    %148 = vector.load %arg1[%c0_215, %c3_216, %c1_217, %c0_218, %c0_219] : memref<1x4x4x36x64xf32, #tpu.memory_space<vmem>>, vector<1x1x1x36x64xf32>
    %149 = vector.shape_cast %148 : vector<1x1x1x36x64xf32> to vector<36x64xf32>
    %c7_220 = arith.constant 7 : index
    %c0_221 = arith.constant 0 : index
    %c0_222 = arith.constant 0 : index
    %150 = vector.load %arg2[%c7_220, %c0_221, %c0_222] : memref<9x64x128xf32, #tpu.memory_space<vmem>>, vector<1x64x128xf32>
    %151 = vector.shape_cast %150 : vector<1x64x128xf32> to vector<64x128xf32>
    %cst_223 = arith.constant dense<0.000000e+00> : vector<36x128xf32>
    %152 = tpu.matmul %149, %151, %cst_223 {dimension_numbers = #tpu.dot_dimension_numbers<[1], [0], [0], [1], [0, 0, 1, 1], [], []>} : vector<36x64xf32>, vector<64x128xf32>, vector<36x128xf32> -> vector<36x128xf32>
    %153 = arith.addf %147, %152 : vector<36x128xf32>
    %c0_224 = arith.constant 0 : index
    %c3_225 = arith.constant 3 : index
    %c2_226 = arith.constant 2 : index
    %c0_227 = arith.constant 0 : index
    %c0_228 = arith.constant 0 : index
    %154 = vector.load %arg1[%c0_224, %c3_225, %c2_226, %c0_227, %c0_228] : memref<1x4x4x36x64xf32, #tpu.memory_space<vmem>>, vector<1x1x1x36x64xf32>
    %155 = vector.shape_cast %154 : vector<1x1x1x36x64xf32> to vector<36x64xf32>
    %c8_229 = arith.constant 8 : index
    %c0_230 = arith.constant 0 : index
    %c0_231 = arith.constant 0 : index
    %156 = vector.load %arg2[%c8_229, %c0_230, %c0_231] : memref<9x64x128xf32, #tpu.memory_space<vmem>>, vector<1x64x128xf32>
    %157 = vector.shape_cast %156 : vector<1x64x128xf32> to vector<64x128xf32>
    %cst_232 = arith.constant dense<0.000000e+00> : vector<36x128xf32>
    %158 = tpu.matmul %155, %157, %cst_232 {dimension_numbers = #tpu.dot_dimension_numbers<[1], [0], [0], [1], [0, 0, 1, 1], [], []>} : vector<36x64xf32>, vector<64x128xf32>, vector<36x128xf32> -> vector<36x128xf32>
    %159 = arith.addf %153, %158 : vector<36x128xf32>
    %160 = arith.maximumf %106, %159 : vector<36x128xf32>
    %c0_233 = arith.constant 0 : index
    %c1_234 = arith.constant 1 : index
    %c1_235 = arith.constant 1 : index
    %c0_236 = arith.constant 0 : index
    %c0_237 = arith.constant 0 : index
    %161 = vector.load %arg1[%c0_233, %c1_234, %c1_235, %c0_236, %c0_237] : memref<1x4x4x36x64xf32, #tpu.memory_space<vmem>>, vector<1x1x1x36x64xf32>
    %162 = vector.shape_cast %161 : vector<1x1x1x36x64xf32> to vector<36x64xf32>
    %c0_238 = arith.constant 0 : index
    %c0_239 = arith.constant 0 : index
    %c0_240 = arith.constant 0 : index
    %163 = vector.load %arg2[%c0_238, %c0_239, %c0_240] : memref<9x64x128xf32, #tpu.memory_space<vmem>>, vector<1x64x128xf32>
    %164 = vector.shape_cast %163 : vector<1x64x128xf32> to vector<64x128xf32>
    %cst_241 = arith.constant dense<0.000000e+00> : vector<36x128xf32>
    %165 = tpu.matmul %162, %164, %cst_241 {dimension_numbers = #tpu.dot_dimension_numbers<[1], [0], [0], [1], [0, 0, 1, 1], [], []>} : vector<36x64xf32>, vector<64x128xf32>, vector<36x128xf32> -> vector<36x128xf32>
    %c0_242 = arith.constant 0 : index
    %c1_243 = arith.constant 1 : index
    %c2_244 = arith.constant 2 : index
    %c0_245 = arith.constant 0 : index
    %c0_246 = arith.constant 0 : index
    %166 = vector.load %arg1[%c0_242, %c1_243, %c2_244, %c0_245, %c0_246] : memref<1x4x4x36x64xf32, #tpu.memory_space<vmem>>, vector<1x1x1x36x64xf32>
    %167 = vector.shape_cast %166 : vector<1x1x1x36x64xf32> to vector<36x64xf32>
    %c1_247 = arith.constant 1 : index
    %c0_248 = arith.constant 0 : index
    %c0_249 = arith.constant 0 : index
    %168 = vector.load %arg2[%c1_247, %c0_248, %c0_249] : memref<9x64x128xf32, #tpu.memory_space<vmem>>, vector<1x64x128xf32>
    %169 = vector.shape_cast %168 : vector<1x64x128xf32> to vector<64x128xf32>
    %cst_250 = arith.constant dense<0.000000e+00> : vector<36x128xf32>
    %170 = tpu.matmul %167, %169, %cst_250 {dimension_numbers = #tpu.dot_dimension_numbers<[1], [0], [0], [1], [0, 0, 1, 1], [], []>} : vector<36x64xf32>, vector<64x128xf32>, vector<36x128xf32> -> vector<36x128xf32>
    %171 = arith.addf %165, %170 : vector<36x128xf32>
    %c0_251 = arith.constant 0 : index
    %c1_252 = arith.constant 1 : index
    %c3_253 = arith.constant 3 : index
    %c0_254 = arith.constant 0 : index
    %c0_255 = arith.constant 0 : index
    %172 = vector.load %arg1[%c0_251, %c1_252, %c3_253, %c0_254, %c0_255] : memref<1x4x4x36x64xf32, #tpu.memory_space<vmem>>, vector<1x1x1x36x64xf32>
    %173 = vector.shape_cast %172 : vector<1x1x1x36x64xf32> to vector<36x64xf32>
    %c2_256 = arith.constant 2 : index
    %c0_257 = arith.constant 0 : index
    %c0_258 = arith.constant 0 : index
    %174 = vector.load %arg2[%c2_256, %c0_257, %c0_258] : memref<9x64x128xf32, #tpu.memory_space<vmem>>, vector<1x64x128xf32>
    %175 = vector.shape_cast %174 : vector<1x64x128xf32> to vector<64x128xf32>
    %cst_259 = arith.constant dense<0.000000e+00> : vector<36x128xf32>
    %176 = tpu.matmul %173, %175, %cst_259 {dimension_numbers = #tpu.dot_dimension_numbers<[1], [0], [0], [1], [0, 0, 1, 1], [], []>} : vector<36x64xf32>, vector<64x128xf32>, vector<36x128xf32> -> vector<36x128xf32>
    %177 = arith.addf %171, %176 : vector<36x128xf32>
    %c0_260 = arith.constant 0 : index
    %c2_261 = arith.constant 2 : index
    %c1_262 = arith.constant 1 : index
    %c0_263 = arith.constant 0 : index
    %c0_264 = arith.constant 0 : index
    %178 = vector.load %arg1[%c0_260, %c2_261, %c1_262, %c0_263, %c0_264] : memref<1x4x4x36x64xf32, #tpu.memory_space<vmem>>, vector<1x1x1x36x64xf32>
    %179 = vector.shape_cast %178 : vector<1x1x1x36x64xf32> to vector<36x64xf32>
    %c3_265 = arith.constant 3 : index
    %c0_266 = arith.constant 0 : index
    %c0_267 = arith.constant 0 : index
    %180 = vector.load %arg2[%c3_265, %c0_266, %c0_267] : memref<9x64x128xf32, #tpu.memory_space<vmem>>, vector<1x64x128xf32>
    %181 = vector.shape_cast %180 : vector<1x64x128xf32> to vector<64x128xf32>
    %cst_268 = arith.constant dense<0.000000e+00> : vector<36x128xf32>
    %182 = tpu.matmul %179, %181, %cst_268 {dimension_numbers = #tpu.dot_dimension_numbers<[1], [0], [0], [1], [0, 0, 1, 1], [], []>} : vector<36x64xf32>, vector<64x128xf32>, vector<36x128xf32> -> vector<36x128xf32>
    %183 = arith.addf %177, %182 : vector<36x128xf32>
    %c0_269 = arith.constant 0 : index
    %c2_270 = arith.constant 2 : index
    %c2_271 = arith.constant 2 : index
    %c0_272 = arith.constant 0 : index
    %c0_273 = arith.constant 0 : index
    %184 = vector.load %arg1[%c0_269, %c2_270, %c2_271, %c0_272, %c0_273] : memref<1x4x4x36x64xf32, #tpu.memory_space<vmem>>, vector<1x1x1x36x64xf32>
    %185 = vector.shape_cast %184 : vector<1x1x1x36x64xf32> to vector<36x64xf32>
    %c4_274 = arith.constant 4 : index
    %c0_275 = arith.constant 0 : index
    %c0_276 = arith.constant 0 : index
    %186 = vector.load %arg2[%c4_274, %c0_275, %c0_276] : memref<9x64x128xf32, #tpu.memory_space<vmem>>, vector<1x64x128xf32>
    %187 = vector.shape_cast %186 : vector<1x64x128xf32> to vector<64x128xf32>
    %cst_277 = arith.constant dense<0.000000e+00> : vector<36x128xf32>
    %188 = tpu.matmul %185, %187, %cst_277 {dimension_numbers = #tpu.dot_dimension_numbers<[1], [0], [0], [1], [0, 0, 1, 1], [], []>} : vector<36x64xf32>, vector<64x128xf32>, vector<36x128xf32> -> vector<36x128xf32>
    %189 = arith.addf %183, %188 : vector<36x128xf32>
    %c0_278 = arith.constant 0 : index
    %c2_279 = arith.constant 2 : index
    %c3_280 = arith.constant 3 : index
    %c0_281 = arith.constant 0 : index
    %c0_282 = arith.constant 0 : index
    %190 = vector.load %arg1[%c0_278, %c2_279, %c3_280, %c0_281, %c0_282] : memref<1x4x4x36x64xf32, #tpu.memory_space<vmem>>, vector<1x1x1x36x64xf32>
    %191 = vector.shape_cast %190 : vector<1x1x1x36x64xf32> to vector<36x64xf32>
    %c5_283 = arith.constant 5 : index
    %c0_284 = arith.constant 0 : index
    %c0_285 = arith.constant 0 : index
    %192 = vector.load %arg2[%c5_283, %c0_284, %c0_285] : memref<9x64x128xf32, #tpu.memory_space<vmem>>, vector<1x64x128xf32>
    %193 = vector.shape_cast %192 : vector<1x64x128xf32> to vector<64x128xf32>
    %cst_286 = arith.constant dense<0.000000e+00> : vector<36x128xf32>
    %194 = tpu.matmul %191, %193, %cst_286 {dimension_numbers = #tpu.dot_dimension_numbers<[1], [0], [0], [1], [0, 0, 1, 1], [], []>} : vector<36x64xf32>, vector<64x128xf32>, vector<36x128xf32> -> vector<36x128xf32>
    %195 = arith.addf %189, %194 : vector<36x128xf32>
    %c0_287 = arith.constant 0 : index
    %c3_288 = arith.constant 3 : index
    %c1_289 = arith.constant 1 : index
    %c0_290 = arith.constant 0 : index
    %c0_291 = arith.constant 0 : index
    %196 = vector.load %arg1[%c0_287, %c3_288, %c1_289, %c0_290, %c0_291] : memref<1x4x4x36x64xf32, #tpu.memory_space<vmem>>, vector<1x1x1x36x64xf32>
    %197 = vector.shape_cast %196 : vector<1x1x1x36x64xf32> to vector<36x64xf32>
    %c6_292 = arith.constant 6 : index
    %c0_293 = arith.constant 0 : index
    %c0_294 = arith.constant 0 : index
    %198 = vector.load %arg2[%c6_292, %c0_293, %c0_294] : memref<9x64x128xf32, #tpu.memory_space<vmem>>, vector<1x64x128xf32>
    %199 = vector.shape_cast %198 : vector<1x64x128xf32> to vector<64x128xf32>
    %cst_295 = arith.constant dense<0.000000e+00> : vector<36x128xf32>
    %200 = tpu.matmul %197, %199, %cst_295 {dimension_numbers = #tpu.dot_dimension_numbers<[1], [0], [0], [1], [0, 0, 1, 1], [], []>} : vector<36x64xf32>, vector<64x128xf32>, vector<36x128xf32> -> vector<36x128xf32>
    %201 = arith.addf %195, %200 : vector<36x128xf32>
    %c0_296 = arith.constant 0 : index
    %c3_297 = arith.constant 3 : index
    %c2_298 = arith.constant 2 : index
    %c0_299 = arith.constant 0 : index
    %c0_300 = arith.constant 0 : index
    %202 = vector.load %arg1[%c0_296, %c3_297, %c2_298, %c0_299, %c0_300] : memref<1x4x4x36x64xf32, #tpu.memory_space<vmem>>, vector<1x1x1x36x64xf32>
    %203 = vector.shape_cast %202 : vector<1x1x1x36x64xf32> to vector<36x64xf32>
    %c7_301 = arith.constant 7 : index
    %c0_302 = arith.constant 0 : index
    %c0_303 = arith.constant 0 : index
    %204 = vector.load %arg2[%c7_301, %c0_302, %c0_303] : memref<9x64x128xf32, #tpu.memory_space<vmem>>, vector<1x64x128xf32>
    %205 = vector.shape_cast %204 : vector<1x64x128xf32> to vector<64x128xf32>
    %cst_304 = arith.constant dense<0.000000e+00> : vector<36x128xf32>
    %206 = tpu.matmul %203, %205, %cst_304 {dimension_numbers = #tpu.dot_dimension_numbers<[1], [0], [0], [1], [0, 0, 1, 1], [], []>} : vector<36x64xf32>, vector<64x128xf32>, vector<36x128xf32> -> vector<36x128xf32>
    %207 = arith.addf %201, %206 : vector<36x128xf32>
    %c0_305 = arith.constant 0 : index
    %c3_306 = arith.constant 3 : index
    %c3_307 = arith.constant 3 : index
    %c0_308 = arith.constant 0 : index
    %c0_309 = arith.constant 0 : index
    %208 = vector.load %arg1[%c0_305, %c3_306, %c3_307, %c0_308, %c0_309] : memref<1x4x4x36x64xf32, #tpu.memory_space<vmem>>, vector<1x1x1x36x64xf32>
    %209 = vector.shape_cast %208 : vector<1x1x1x36x64xf32> to vector<36x64xf32>
    %c8_310 = arith.constant 8 : index
    %c0_311 = arith.constant 0 : index
    %c0_312 = arith.constant 0 : index
    %210 = vector.load %arg2[%c8_310, %c0_311, %c0_312] : memref<9x64x128xf32, #tpu.memory_space<vmem>>, vector<1x64x128xf32>
    %211 = vector.shape_cast %210 : vector<1x64x128xf32> to vector<64x128xf32>
    %cst_313 = arith.constant dense<0.000000e+00> : vector<36x128xf32>
    %212 = tpu.matmul %209, %211, %cst_313 {dimension_numbers = #tpu.dot_dimension_numbers<[1], [0], [0], [1], [0, 0, 1, 1], [], []>} : vector<36x64xf32>, vector<64x128xf32>, vector<36x128xf32> -> vector<36x128xf32>
    %213 = arith.addf %207, %212 : vector<36x128xf32>
    %214 = arith.maximumf %160, %213 : vector<36x128xf32>
    %c0_314 = arith.constant 0 : index
    %c0_315 = arith.constant 0 : index
    %215 = vector.load %arg3[%c0_314, %c0_315] : memref<1x128xf32, #tpu.memory_space<vmem>>, vector<1x128xf32>
    %216 = vector.broadcast %215 : vector<1x128xf32> to vector<36x128xf32>
    %217 = arith.addf %214, %216 : vector<36x128xf32>
    %cst_316 = arith.constant 0.000000e+00 : f32
    %218 = vector.broadcast %cst_316 : f32 to vector<36x128xf32>
    %219 = arith.maximumf %217, %218 : vector<36x128xf32>
    %c0_317 = arith.constant 0 : index
    %c0_318 = arith.constant 0 : index
    %c0_319 = arith.constant 0 : index
    %220 = vector.load %arg4[%c0_317, %c0_318, %c0_319] : memref<1x36x128xf32, #tpu.memory_space<vmem>>, vector<1x36x128xf32>
    %221 = vector.shape_cast %220 : vector<1x36x128xf32> to vector<36x128xf32>
    %222 = vector.shape_cast %219 : vector<36x128xf32> to vector<1x36x128xf32>
    tpu.vector_store %arg4[%c0_317, %c0_318, %c0_319], %222 {strides = array<i32>} : memref<1x36x128xf32, #tpu.memory_space<vmem>>, vector<1x36x128xf32>,
    return
  }
  func.func @transform_0(%arg0: i32) -> (i32, i32, i32, i32, i32) {
    %c0_i32 = arith.constant 0 : i32
    %c0_i32_0 = arith.constant 0 : i32
    %c0_i32_1 = arith.constant 0 : i32
    %c0_i32_2 = arith.constant 0 : i32
    %c0_i32_3 = arith.constant 0 : i32
    return %arg0, %c0_i32, %c0_i32_0, %c0_i32_1, %c0_i32_2 : i32, i32, i32, i32, i32
  }
  func.func @transform_1(%arg0: i32) -> (i32, i32, i32) {
    %c0_i32 = arith.constant 0 : i32
    %c0_i32_0 = arith.constant 0 : i32
    %c0_i32_1 = arith.constant 0 : i32
    %c0_i32_2 = arith.constant 0 : i32
    return %c0_i32, %c0_i32_0, %c0_i32_1 : i32, i32, i32
  }
  func.func @transform_2(%arg0: i32) -> (i32, i32) {
    %c0_i32 = arith.constant 0 : i32
    %c0_i32_0 = arith.constant 0 : i32
    %c0_i32_1 = arith.constant 0 : i32
    return %c0_i32, %c0_i32_0 : i32, i32
  }
  func.func @transform_3(%arg0: i32) -> (i32, i32, i32) {
    %c0_i32 = arith.constant 0 : i32
    %c0_i32_0 = arith.constant 0 : i32
    %c0_i32_1 = arith.constant 0 : i32
    return %arg0, %c0_i32, %c0_i32_0 : i32, i32, i32
  }
}

module attributes {stable_mosaic.version = 11 : i64} {
  func.func @_conv3_pool_mlp_kernel(%arg0: i32, %arg1: memref<1x4x4x4x128xf32, #tpu.memory_space<vmem>>, %arg2: memref<9x128x64xf32, #tpu.memory_space<vmem>>, %arg3: memref<1x64xf32, #tpu.memory_space<vmem>>, %arg4: memref<4x64x256xf32, #tpu.memory_space<vmem>>, %arg5: memref<1x256xf32, #tpu.memory_space<vmem>>, %arg6: memref<256x64xf32, #tpu.memory_space<vmem>>, %arg7: memref<1x64xf32, #tpu.memory_space<vmem>>, %arg8: memref<64x10xf32, #tpu.memory_space<vmem>>, %arg9: memref<1x10xf32, #tpu.memory_space<vmem>>, %arg10: memref<1x4x64xf32, #tpu.memory_space<vmem>>, %arg11: memref<1x1x10xf32, #tpu.memory_space<vmem>>) attributes {dimension_semantics = [#tpu.dimension_semantics<parallel>], iteration_bounds = array<i64: 2>, scalar_prefetch = 0 : i64, scratch_operands = 0 : i64, tpu.core_type = #tpu.core_type<tc>, window_params = [{transform_indices = @transform_0, window_bounds = array<i64: 1, 4, 4, 4, 128>}, {pipeline_mode = #tpu.pipeline_mode<synchronous>, transform_indices = @transform_1, window_bounds = array<i64: 9, 128, 64>}, {pipeline_mode = #tpu.pipeline_mode<synchronous>, transform_indices = @transform_2, window_bounds = array<i64: 1, 64>}, {pipeline_mode = #tpu.pipeline_mode<synchronous>, transform_indices = @transform_3, window_bounds = array<i64: 4, 64, 256>}, {pipeline_mode = #tpu.pipeline_mode<synchronous>, transform_indices = @transform_4, window_bounds = array<i64: 1, 256>}, {pipeline_mode = #tpu.pipeline_mode<synchronous>, transform_indices = @transform_5, window_bounds = array<i64: 256, 64>}, {pipeline_mode = #tpu.pipeline_mode<synchronous>, transform_indices = @transform_6, window_bounds = array<i64: 1, 64>}, {pipeline_mode = #tpu.pipeline_mode<synchronous>, transform_indices = @transform_7, window_bounds = array<i64: 64, 10>}, {pipeline_mode = #tpu.pipeline_mode<synchronous>, transform_indices = @transform_8, window_bounds = array<i64: 1, 10>}, {transform_indices = @transform_9, window_bounds = array<i64: 1, 4, 64>}, {transform_indices = @transform_10, window_bounds = array<i64: 1, 1, 10>}]} {
    %c0 = arith.constant 0 : index
    %c0_0 = arith.constant 0 : index
    %c0_1 = arith.constant 0 : index
    %c0_2 = arith.constant 0 : index
    %c0_3 = arith.constant 0 : index
    %0 = vector.load %arg1[%c0, %c0_0, %c0_1, %c0_2, %c0_3] : memref<1x4x4x4x128xf32, #tpu.memory_space<vmem>>, vector<1x1x1x4x128xf32>
    %1 = vector.shape_cast %0 : vector<1x1x1x4x128xf32> to vector<4x128xf32>
    %c0_4 = arith.constant 0 : index
    %c0_5 = arith.constant 0 : index
    %c0_6 = arith.constant 0 : index
    %2 = vector.load %arg2[%c0_4, %c0_5, %c0_6] : memref<9x128x64xf32, #tpu.memory_space<vmem>>, vector<1x128x64xf32>
    %3 = vector.shape_cast %2 : vector<1x128x64xf32> to vector<128x64xf32>
    %cst = arith.constant dense<0.000000e+00> : vector<4x64xf32>
    %4 = tpu.matmul %1, %3, %cst {dimension_numbers = #tpu.dot_dimension_numbers<[1], [0], [0], [1], [0, 0, 1, 1], [], []>} : vector<4x128xf32>, vector<128x64xf32>, vector<4x64xf32> -> vector<4x64xf32>
    %c0_7 = arith.constant 0 : index
    %c0_8 = arith.constant 0 : index
    %c1 = arith.constant 1 : index
    %c0_9 = arith.constant 0 : index
    %c0_10 = arith.constant 0 : index
    %5 = vector.load %arg1[%c0_7, %c0_8, %c1, %c0_9, %c0_10] : memref<1x4x4x4x128xf32, #tpu.memory_space<vmem>>, vector<1x1x1x4x128xf32>
    %6 = vector.shape_cast %5 : vector<1x1x1x4x128xf32> to vector<4x128xf32>
    %c1_11 = arith.constant 1 : index
    %c0_12 = arith.constant 0 : index
    %c0_13 = arith.constant 0 : index
    %7 = vector.load %arg2[%c1_11, %c0_12, %c0_13] : memref<9x128x64xf32, #tpu.memory_space<vmem>>, vector<1x128x64xf32>
    %8 = vector.shape_cast %7 : vector<1x128x64xf32> to vector<128x64xf32>
    %cst_14 = arith.constant dense<0.000000e+00> : vector<4x64xf32>
    %9 = tpu.matmul %6, %8, %cst_14 {dimension_numbers = #tpu.dot_dimension_numbers<[1], [0], [0], [1], [0, 0, 1, 1], [], []>} : vector<4x128xf32>, vector<128x64xf32>, vector<4x64xf32> -> vector<4x64xf32>
    %10 = arith.addf %4, %9 : vector<4x64xf32>
    %c0_15 = arith.constant 0 : index
    %c0_16 = arith.constant 0 : index
    %c2 = arith.constant 2 : index
    %c0_17 = arith.constant 0 : index
    %c0_18 = arith.constant 0 : index
    %11 = vector.load %arg1[%c0_15, %c0_16, %c2, %c0_17, %c0_18] : memref<1x4x4x4x128xf32, #tpu.memory_space<vmem>>, vector<1x1x1x4x128xf32>
    %12 = vector.shape_cast %11 : vector<1x1x1x4x128xf32> to vector<4x128xf32>
    %c2_19 = arith.constant 2 : index
    %c0_20 = arith.constant 0 : index
    %c0_21 = arith.constant 0 : index
    %13 = vector.load %arg2[%c2_19, %c0_20, %c0_21] : memref<9x128x64xf32, #tpu.memory_space<vmem>>, vector<1x128x64xf32>
    %14 = vector.shape_cast %13 : vector<1x128x64xf32> to vector<128x64xf32>
    %cst_22 = arith.constant dense<0.000000e+00> : vector<4x64xf32>
    %15 = tpu.matmul %12, %14, %cst_22 {dimension_numbers = #tpu.dot_dimension_numbers<[1], [0], [0], [1], [0, 0, 1, 1], [], []>} : vector<4x128xf32>, vector<128x64xf32>, vector<4x64xf32> -> vector<4x64xf32>
    %16 = arith.addf %10, %15 : vector<4x64xf32>
    %c0_23 = arith.constant 0 : index
    %c1_24 = arith.constant 1 : index
    %c0_25 = arith.constant 0 : index
    %c0_26 = arith.constant 0 : index
    %c0_27 = arith.constant 0 : index
    %17 = vector.load %arg1[%c0_23, %c1_24, %c0_25, %c0_26, %c0_27] : memref<1x4x4x4x128xf32, #tpu.memory_space<vmem>>, vector<1x1x1x4x128xf32>
    %18 = vector.shape_cast %17 : vector<1x1x1x4x128xf32> to vector<4x128xf32>
    %c3 = arith.constant 3 : index
    %c0_28 = arith.constant 0 : index
    %c0_29 = arith.constant 0 : index
    %19 = vector.load %arg2[%c3, %c0_28, %c0_29] : memref<9x128x64xf32, #tpu.memory_space<vmem>>, vector<1x128x64xf32>
    %20 = vector.shape_cast %19 : vector<1x128x64xf32> to vector<128x64xf32>
    %cst_30 = arith.constant dense<0.000000e+00> : vector<4x64xf32>
    %21 = tpu.matmul %18, %20, %cst_30 {dimension_numbers = #tpu.dot_dimension_numbers<[1], [0], [0], [1], [0, 0, 1, 1], [], []>} : vector<4x128xf32>, vector<128x64xf32>, vector<4x64xf32> -> vector<4x64xf32>
    %22 = arith.addf %16, %21 : vector<4x64xf32>
    %c0_31 = arith.constant 0 : index
    %c1_32 = arith.constant 1 : index
    %c1_33 = arith.constant 1 : index
    %c0_34 = arith.constant 0 : index
    %c0_35 = arith.constant 0 : index
    %23 = vector.load %arg1[%c0_31, %c1_32, %c1_33, %c0_34, %c0_35] : memref<1x4x4x4x128xf32, #tpu.memory_space<vmem>>, vector<1x1x1x4x128xf32>
    %24 = vector.shape_cast %23 : vector<1x1x1x4x128xf32> to vector<4x128xf32>
    %c4 = arith.constant 4 : index
    %c0_36 = arith.constant 0 : index
    %c0_37 = arith.constant 0 : index
    %25 = vector.load %arg2[%c4, %c0_36, %c0_37] : memref<9x128x64xf32, #tpu.memory_space<vmem>>, vector<1x128x64xf32>
    %26 = vector.shape_cast %25 : vector<1x128x64xf32> to vector<128x64xf32>
    %cst_38 = arith.constant dense<0.000000e+00> : vector<4x64xf32>
    %27 = tpu.matmul %24, %26, %cst_38 {dimension_numbers = #tpu.dot_dimension_numbers<[1], [0], [0], [1], [0, 0, 1, 1], [], []>} : vector<4x128xf32>, vector<128x64xf32>, vector<4x64xf32> -> vector<4x64xf32>
    %28 = arith.addf %22, %27 : vector<4x64xf32>
    %c0_39 = arith.constant 0 : index
    %c1_40 = arith.constant 1 : index
    %c2_41 = arith.constant 2 : index
    %c0_42 = arith.constant 0 : index
    %c0_43 = arith.constant 0 : index
    %29 = vector.load %arg1[%c0_39, %c1_40, %c2_41, %c0_42, %c0_43] : memref<1x4x4x4x128xf32, #tpu.memory_space<vmem>>, vector<1x1x1x4x128xf32>
    %30 = vector.shape_cast %29 : vector<1x1x1x4x128xf32> to vector<4x128xf32>
    %c5 = arith.constant 5 : index
    %c0_44 = arith.constant 0 : index
    %c0_45 = arith.constant 0 : index
    %31 = vector.load %arg2[%c5, %c0_44, %c0_45] : memref<9x128x64xf32, #tpu.memory_space<vmem>>, vector<1x128x64xf32>
    %32 = vector.shape_cast %31 : vector<1x128x64xf32> to vector<128x64xf32>
    %cst_46 = arith.constant dense<0.000000e+00> : vector<4x64xf32>
    %33 = tpu.matmul %30, %32, %cst_46 {dimension_numbers = #tpu.dot_dimension_numbers<[1], [0], [0], [1], [0, 0, 1, 1], [], []>} : vector<4x128xf32>, vector<128x64xf32>, vector<4x64xf32> -> vector<4x64xf32>
    %34 = arith.addf %28, %33 : vector<4x64xf32>
    %c0_47 = arith.constant 0 : index
    %c2_48 = arith.constant 2 : index
    %c0_49 = arith.constant 0 : index
    %c0_50 = arith.constant 0 : index
    %c0_51 = arith.constant 0 : index
    %35 = vector.load %arg1[%c0_47, %c2_48, %c0_49, %c0_50, %c0_51] : memref<1x4x4x4x128xf32, #tpu.memory_space<vmem>>, vector<1x1x1x4x128xf32>
    %36 = vector.shape_cast %35 : vector<1x1x1x4x128xf32> to vector<4x128xf32>
    %c6 = arith.constant 6 : index
    %c0_52 = arith.constant 0 : index
    %c0_53 = arith.constant 0 : index
    %37 = vector.load %arg2[%c6, %c0_52, %c0_53] : memref<9x128x64xf32, #tpu.memory_space<vmem>>, vector<1x128x64xf32>
    %38 = vector.shape_cast %37 : vector<1x128x64xf32> to vector<128x64xf32>
    %cst_54 = arith.constant dense<0.000000e+00> : vector<4x64xf32>
    %39 = tpu.matmul %36, %38, %cst_54 {dimension_numbers = #tpu.dot_dimension_numbers<[1], [0], [0], [1], [0, 0, 1, 1], [], []>} : vector<4x128xf32>, vector<128x64xf32>, vector<4x64xf32> -> vector<4x64xf32>
    %40 = arith.addf %34, %39 : vector<4x64xf32>
    %c0_55 = arith.constant 0 : index
    %c2_56 = arith.constant 2 : index
    %c1_57 = arith.constant 1 : index
    %c0_58 = arith.constant 0 : index
    %c0_59 = arith.constant 0 : index
    %41 = vector.load %arg1[%c0_55, %c2_56, %c1_57, %c0_58, %c0_59] : memref<1x4x4x4x128xf32, #tpu.memory_space<vmem>>, vector<1x1x1x4x128xf32>
    %42 = vector.shape_cast %41 : vector<1x1x1x4x128xf32> to vector<4x128xf32>
    %c7 = arith.constant 7 : index
    %c0_60 = arith.constant 0 : index
    %c0_61 = arith.constant 0 : index
    %43 = vector.load %arg2[%c7, %c0_60, %c0_61] : memref<9x128x64xf32, #tpu.memory_space<vmem>>, vector<1x128x64xf32>
    %44 = vector.shape_cast %43 : vector<1x128x64xf32> to vector<128x64xf32>
    %cst_62 = arith.constant dense<0.000000e+00> : vector<4x64xf32>
    %45 = tpu.matmul %42, %44, %cst_62 {dimension_numbers = #tpu.dot_dimension_numbers<[1], [0], [0], [1], [0, 0, 1, 1], [], []>} : vector<4x128xf32>, vector<128x64xf32>, vector<4x64xf32> -> vector<4x64xf32>
    %46 = arith.addf %40, %45 : vector<4x64xf32>
    %c0_63 = arith.constant 0 : index
    %c2_64 = arith.constant 2 : index
    %c2_65 = arith.constant 2 : index
    %c0_66 = arith.constant 0 : index
    %c0_67 = arith.constant 0 : index
    %47 = vector.load %arg1[%c0_63, %c2_64, %c2_65, %c0_66, %c0_67] : memref<1x4x4x4x128xf32, #tpu.memory_space<vmem>>, vector<1x1x1x4x128xf32>
    %48 = vector.shape_cast %47 : vector<1x1x1x4x128xf32> to vector<4x128xf32>
    %c8 = arith.constant 8 : index
    %c0_68 = arith.constant 0 : index
    %c0_69 = arith.constant 0 : index
    %49 = vector.load %arg2[%c8, %c0_68, %c0_69] : memref<9x128x64xf32, #tpu.memory_space<vmem>>, vector<1x128x64xf32>
    %50 = vector.shape_cast %49 : vector<1x128x64xf32> to vector<128x64xf32>
    %cst_70 = arith.constant dense<0.000000e+00> : vector<4x64xf32>
    %51 = tpu.matmul %48, %50, %cst_70 {dimension_numbers = #tpu.dot_dimension_numbers<[1], [0], [0], [1], [0, 0, 1, 1], [], []>} : vector<4x128xf32>, vector<128x64xf32>, vector<4x64xf32> -> vector<4x64xf32>
    %52 = arith.addf %46, %51 : vector<4x64xf32>
    %c0_71 = arith.constant 0 : index
    %c0_72 = arith.constant 0 : index
    %c1_73 = arith.constant 1 : index
    %c0_74 = arith.constant 0 : index
    %c0_75 = arith.constant 0 : index
    %53 = vector.load %arg1[%c0_71, %c0_72, %c1_73, %c0_74, %c0_75] : memref<1x4x4x4x128xf32, #tpu.memory_space<vmem>>, vector<1x1x1x4x128xf32>
    %54 = vector.shape_cast %53 : vector<1x1x1x4x128xf32> to vector<4x128xf32>
    %c0_76 = arith.constant 0 : index
    %c0_77 = arith.constant 0 : index
    %c0_78 = arith.constant 0 : index
    %55 = vector.load %arg2[%c0_76, %c0_77, %c0_78] : memref<9x128x64xf32, #tpu.memory_space<vmem>>, vector<1x128x64xf32>
    %56 = vector.shape_cast %55 : vector<1x128x64xf32> to vector<128x64xf32>
    %cst_79 = arith.constant dense<0.000000e+00> : vector<4x64xf32>
    %57 = tpu.matmul %54, %56, %cst_79 {dimension_numbers = #tpu.dot_dimension_numbers<[1], [0], [0], [1], [0, 0, 1, 1], [], []>} : vector<4x128xf32>, vector<128x64xf32>, vector<4x64xf32> -> vector<4x64xf32>
    %c0_80 = arith.constant 0 : index
    %c0_81 = arith.constant 0 : index
    %c2_82 = arith.constant 2 : index
    %c0_83 = arith.constant 0 : index
    %c0_84 = arith.constant 0 : index
    %58 = vector.load %arg1[%c0_80, %c0_81, %c2_82, %c0_83, %c0_84] : memref<1x4x4x4x128xf32, #tpu.memory_space<vmem>>, vector<1x1x1x4x128xf32>
    %59 = vector.shape_cast %58 : vector<1x1x1x4x128xf32> to vector<4x128xf32>
    %c1_85 = arith.constant 1 : index
    %c0_86 = arith.constant 0 : index
    %c0_87 = arith.constant 0 : index
    %60 = vector.load %arg2[%c1_85, %c0_86, %c0_87] : memref<9x128x64xf32, #tpu.memory_space<vmem>>, vector<1x128x64xf32>
    %61 = vector.shape_cast %60 : vector<1x128x64xf32> to vector<128x64xf32>
    %cst_88 = arith.constant dense<0.000000e+00> : vector<4x64xf32>
    %62 = tpu.matmul %59, %61, %cst_88 {dimension_numbers = #tpu.dot_dimension_numbers<[1], [0], [0], [1], [0, 0, 1, 1], [], []>} : vector<4x128xf32>, vector<128x64xf32>, vector<4x64xf32> -> vector<4x64xf32>
    %63 = arith.addf %57, %62 : vector<4x64xf32>
    %c0_89 = arith.constant 0 : index
    %c0_90 = arith.constant 0 : index
    %c3_91 = arith.constant 3 : index
    %c0_92 = arith.constant 0 : index
    %c0_93 = arith.constant 0 : index
    %64 = vector.load %arg1[%c0_89, %c0_90, %c3_91, %c0_92, %c0_93] : memref<1x4x4x4x128xf32, #tpu.memory_space<vmem>>, vector<1x1x1x4x128xf32>
    %65 = vector.shape_cast %64 : vector<1x1x1x4x128xf32> to vector<4x128xf32>
    %c2_94 = arith.constant 2 : index
    %c0_95 = arith.constant 0 : index
    %c0_96 = arith.constant 0 : index
    %66 = vector.load %arg2[%c2_94, %c0_95, %c0_96] : memref<9x128x64xf32, #tpu.memory_space<vmem>>, vector<1x128x64xf32>
    %67 = vector.shape_cast %66 : vector<1x128x64xf32> to vector<128x64xf32>
    %cst_97 = arith.constant dense<0.000000e+00> : vector<4x64xf32>
    %68 = tpu.matmul %65, %67, %cst_97 {dimension_numbers = #tpu.dot_dimension_numbers<[1], [0], [0], [1], [0, 0, 1, 1], [], []>} : vector<4x128xf32>, vector<128x64xf32>, vector<4x64xf32> -> vector<4x64xf32>
    %69 = arith.addf %63, %68 : vector<4x64xf32>
    %c0_98 = arith.constant 0 : index
    %c1_99 = arith.constant 1 : index
    %c1_100 = arith.constant 1 : index
    %c0_101 = arith.constant 0 : index
    %c0_102 = arith.constant 0 : index
    %70 = vector.load %arg1[%c0_98, %c1_99, %c1_100, %c0_101, %c0_102] : memref<1x4x4x4x128xf32, #tpu.memory_space<vmem>>, vector<1x1x1x4x128xf32>
    %71 = vector.shape_cast %70 : vector<1x1x1x4x128xf32> to vector<4x128xf32>
    %c3_103 = arith.constant 3 : index
    %c0_104 = arith.constant 0 : index
    %c0_105 = arith.constant 0 : index
    %72 = vector.load %arg2[%c3_103, %c0_104, %c0_105] : memref<9x128x64xf32, #tpu.memory_space<vmem>>, vector<1x128x64xf32>
    %73 = vector.shape_cast %72 : vector<1x128x64xf32> to vector<128x64xf32>
    %cst_106 = arith.constant dense<0.000000e+00> : vector<4x64xf32>
    %74 = tpu.matmul %71, %73, %cst_106 {dimension_numbers = #tpu.dot_dimension_numbers<[1], [0], [0], [1], [0, 0, 1, 1], [], []>} : vector<4x128xf32>, vector<128x64xf32>, vector<4x64xf32> -> vector<4x64xf32>
    %75 = arith.addf %69, %74 : vector<4x64xf32>
    %c0_107 = arith.constant 0 : index
    %c1_108 = arith.constant 1 : index
    %c2_109 = arith.constant 2 : index
    %c0_110 = arith.constant 0 : index
    %c0_111 = arith.constant 0 : index
    %76 = vector.load %arg1[%c0_107, %c1_108, %c2_109, %c0_110, %c0_111] : memref<1x4x4x4x128xf32, #tpu.memory_space<vmem>>, vector<1x1x1x4x128xf32>
    %77 = vector.shape_cast %76 : vector<1x1x1x4x128xf32> to vector<4x128xf32>
    %c4_112 = arith.constant 4 : index
    %c0_113 = arith.constant 0 : index
    %c0_114 = arith.constant 0 : index
    %78 = vector.load %arg2[%c4_112, %c0_113, %c0_114] : memref<9x128x64xf32, #tpu.memory_space<vmem>>, vector<1x128x64xf32>
    %79 = vector.shape_cast %78 : vector<1x128x64xf32> to vector<128x64xf32>
    %cst_115 = arith.constant dense<0.000000e+00> : vector<4x64xf32>
    %80 = tpu.matmul %77, %79, %cst_115 {dimension_numbers = #tpu.dot_dimension_numbers<[1], [0], [0], [1], [0, 0, 1, 1], [], []>} : vector<4x128xf32>, vector<128x64xf32>, vector<4x64xf32> -> vector<4x64xf32>
    %81 = arith.addf %75, %80 : vector<4x64xf32>
    %c0_116 = arith.constant 0 : index
    %c1_117 = arith.constant 1 : index
    %c3_118 = arith.constant 3 : index
    %c0_119 = arith.constant 0 : index
    %c0_120 = arith.constant 0 : index
    %82 = vector.load %arg1[%c0_116, %c1_117, %c3_118, %c0_119, %c0_120] : memref<1x4x4x4x128xf32, #tpu.memory_space<vmem>>, vector<1x1x1x4x128xf32>
    %83 = vector.shape_cast %82 : vector<1x1x1x4x128xf32> to vector<4x128xf32>
    %c5_121 = arith.constant 5 : index
    %c0_122 = arith.constant 0 : index
    %c0_123 = arith.constant 0 : index
    %84 = vector.load %arg2[%c5_121, %c0_122, %c0_123] : memref<9x128x64xf32, #tpu.memory_space<vmem>>, vector<1x128x64xf32>
    %85 = vector.shape_cast %84 : vector<1x128x64xf32> to vector<128x64xf32>
    %cst_124 = arith.constant dense<0.000000e+00> : vector<4x64xf32>
    %86 = tpu.matmul %83, %85, %cst_124 {dimension_numbers = #tpu.dot_dimension_numbers<[1], [0], [0], [1], [0, 0, 1, 1], [], []>} : vector<4x128xf32>, vector<128x64xf32>, vector<4x64xf32> -> vector<4x64xf32>
    %87 = arith.addf %81, %86 : vector<4x64xf32>
    %c0_125 = arith.constant 0 : index
    %c2_126 = arith.constant 2 : index
    %c1_127 = arith.constant 1 : index
    %c0_128 = arith.constant 0 : index
    %c0_129 = arith.constant 0 : index
    %88 = vector.load %arg1[%c0_125, %c2_126, %c1_127, %c0_128, %c0_129] : memref<1x4x4x4x128xf32, #tpu.memory_space<vmem>>, vector<1x1x1x4x128xf32>
    %89 = vector.shape_cast %88 : vector<1x1x1x4x128xf32> to vector<4x128xf32>
    %c6_130 = arith.constant 6 : index
    %c0_131 = arith.constant 0 : index
    %c0_132 = arith.constant 0 : index
    %90 = vector.load %arg2[%c6_130, %c0_131, %c0_132] : memref<9x128x64xf32, #tpu.memory_space<vmem>>, vector<1x128x64xf32>
    %91 = vector.shape_cast %90 : vector<1x128x64xf32> to vector<128x64xf32>
    %cst_133 = arith.constant dense<0.000000e+00> : vector<4x64xf32>
    %92 = tpu.matmul %89, %91, %cst_133 {dimension_numbers = #tpu.dot_dimension_numbers<[1], [0], [0], [1], [0, 0, 1, 1], [], []>} : vector<4x128xf32>, vector<128x64xf32>, vector<4x64xf32> -> vector<4x64xf32>
    %93 = arith.addf %87, %92 : vector<4x64xf32>
    %c0_134 = arith.constant 0 : index
    %c2_135 = arith.constant 2 : index
    %c2_136 = arith.constant 2 : index
    %c0_137 = arith.constant 0 : index
    %c0_138 = arith.constant 0 : index
    %94 = vector.load %arg1[%c0_134, %c2_135, %c2_136, %c0_137, %c0_138] : memref<1x4x4x4x128xf32, #tpu.memory_space<vmem>>, vector<1x1x1x4x128xf32>
    %95 = vector.shape_cast %94 : vector<1x1x1x4x128xf32> to vector<4x128xf32>
    %c7_139 = arith.constant 7 : index
    %c0_140 = arith.constant 0 : index
    %c0_141 = arith.constant 0 : index
    %96 = vector.load %arg2[%c7_139, %c0_140, %c0_141] : memref<9x128x64xf32, #tpu.memory_space<vmem>>, vector<1x128x64xf32>
    %97 = vector.shape_cast %96 : vector<1x128x64xf32> to vector<128x64xf32>
    %cst_142 = arith.constant dense<0.000000e+00> : vector<4x64xf32>
    %98 = tpu.matmul %95, %97, %cst_142 {dimension_numbers = #tpu.dot_dimension_numbers<[1], [0], [0], [1], [0, 0, 1, 1], [], []>} : vector<4x128xf32>, vector<128x64xf32>, vector<4x64xf32> -> vector<4x64xf32>
    %99 = arith.addf %93, %98 : vector<4x64xf32>
    %c0_143 = arith.constant 0 : index
    %c2_144 = arith.constant 2 : index
    %c3_145 = arith.constant 3 : index
    %c0_146 = arith.constant 0 : index
    %c0_147 = arith.constant 0 : index
    %100 = vector.load %arg1[%c0_143, %c2_144, %c3_145, %c0_146, %c0_147] : memref<1x4x4x4x128xf32, #tpu.memory_space<vmem>>, vector<1x1x1x4x128xf32>
    %101 = vector.shape_cast %100 : vector<1x1x1x4x128xf32> to vector<4x128xf32>
    %c8_148 = arith.constant 8 : index
    %c0_149 = arith.constant 0 : index
    %c0_150 = arith.constant 0 : index
    %102 = vector.load %arg2[%c8_148, %c0_149, %c0_150] : memref<9x128x64xf32, #tpu.memory_space<vmem>>, vector<1x128x64xf32>
    %103 = vector.shape_cast %102 : vector<1x128x64xf32> to vector<128x64xf32>
    %cst_151 = arith.constant dense<0.000000e+00> : vector<4x64xf32>
    %104 = tpu.matmul %101, %103, %cst_151 {dimension_numbers = #tpu.dot_dimension_numbers<[1], [0], [0], [1], [0, 0, 1, 1], [], []>} : vector<4x128xf32>, vector<128x64xf32>, vector<4x64xf32> -> vector<4x64xf32>
    %105 = arith.addf %99, %104 : vector<4x64xf32>
    %106 = arith.maximumf %52, %105 : vector<4x64xf32>
    %c0_152 = arith.constant 0 : index
    %c1_153 = arith.constant 1 : index
    %c0_154 = arith.constant 0 : index
    %c0_155 = arith.constant 0 : index
    %c0_156 = arith.constant 0 : index
    %107 = vector.load %arg1[%c0_152, %c1_153, %c0_154, %c0_155, %c0_156] : memref<1x4x4x4x128xf32, #tpu.memory_space<vmem>>, vector<1x1x1x4x128xf32>
    %108 = vector.shape_cast %107 : vector<1x1x1x4x128xf32> to vector<4x128xf32>
    %c0_157 = arith.constant 0 : index
    %c0_158 = arith.constant 0 : index
    %c0_159 = arith.constant 0 : index
    %109 = vector.load %arg2[%c0_157, %c0_158, %c0_159] : memref<9x128x64xf32, #tpu.memory_space<vmem>>, vector<1x128x64xf32>
    %110 = vector.shape_cast %109 : vector<1x128x64xf32> to vector<128x64xf32>
    %cst_160 = arith.constant dense<0.000000e+00> : vector<4x64xf32>
    %111 = tpu.matmul %108, %110, %cst_160 {dimension_numbers = #tpu.dot_dimension_numbers<[1], [0], [0], [1], [0, 0, 1, 1], [], []>} : vector<4x128xf32>, vector<128x64xf32>, vector<4x64xf32> -> vector<4x64xf32>
    %c0_161 = arith.constant 0 : index
    %c1_162 = arith.constant 1 : index
    %c1_163 = arith.constant 1 : index
    %c0_164 = arith.constant 0 : index
    %c0_165 = arith.constant 0 : index
    %112 = vector.load %arg1[%c0_161, %c1_162, %c1_163, %c0_164, %c0_165] : memref<1x4x4x4x128xf32, #tpu.memory_space<vmem>>, vector<1x1x1x4x128xf32>
    %113 = vector.shape_cast %112 : vector<1x1x1x4x128xf32> to vector<4x128xf32>
    %c1_166 = arith.constant 1 : index
    %c0_167 = arith.constant 0 : index
    %c0_168 = arith.constant 0 : index
    %114 = vector.load %arg2[%c1_166, %c0_167, %c0_168] : memref<9x128x64xf32, #tpu.memory_space<vmem>>, vector<1x128x64xf32>
    %115 = vector.shape_cast %114 : vector<1x128x64xf32> to vector<128x64xf32>
    %cst_169 = arith.constant dense<0.000000e+00> : vector<4x64xf32>
    %116 = tpu.matmul %113, %115, %cst_169 {dimension_numbers = #tpu.dot_dimension_numbers<[1], [0], [0], [1], [0, 0, 1, 1], [], []>} : vector<4x128xf32>, vector<128x64xf32>, vector<4x64xf32> -> vector<4x64xf32>
    %117 = arith.addf %111, %116 : vector<4x64xf32>
    %c0_170 = arith.constant 0 : index
    %c1_171 = arith.constant 1 : index
    %c2_172 = arith.constant 2 : index
    %c0_173 = arith.constant 0 : index
    %c0_174 = arith.constant 0 : index
    %118 = vector.load %arg1[%c0_170, %c1_171, %c2_172, %c0_173, %c0_174] : memref<1x4x4x4x128xf32, #tpu.memory_space<vmem>>, vector<1x1x1x4x128xf32>
    %119 = vector.shape_cast %118 : vector<1x1x1x4x128xf32> to vector<4x128xf32>
    %c2_175 = arith.constant 2 : index
    %c0_176 = arith.constant 0 : index
    %c0_177 = arith.constant 0 : index
    %120 = vector.load %arg2[%c2_175, %c0_176, %c0_177] : memref<9x128x64xf32, #tpu.memory_space<vmem>>, vector<1x128x64xf32>
    %121 = vector.shape_cast %120 : vector<1x128x64xf32> to vector<128x64xf32>
    %cst_178 = arith.constant dense<0.000000e+00> : vector<4x64xf32>
    %122 = tpu.matmul %119, %121, %cst_178 {dimension_numbers = #tpu.dot_dimension_numbers<[1], [0], [0], [1], [0, 0, 1, 1], [], []>} : vector<4x128xf32>, vector<128x64xf32>, vector<4x64xf32> -> vector<4x64xf32>
    %123 = arith.addf %117, %122 : vector<4x64xf32>
    %c0_179 = arith.constant 0 : index
    %c2_180 = arith.constant 2 : index
    %c0_181 = arith.constant 0 : index
    %c0_182 = arith.constant 0 : index
    %c0_183 = arith.constant 0 : index
    %124 = vector.load %arg1[%c0_179, %c2_180, %c0_181, %c0_182, %c0_183] : memref<1x4x4x4x128xf32, #tpu.memory_space<vmem>>, vector<1x1x1x4x128xf32>
    %125 = vector.shape_cast %124 : vector<1x1x1x4x128xf32> to vector<4x128xf32>
    %c3_184 = arith.constant 3 : index
    %c0_185 = arith.constant 0 : index
    %c0_186 = arith.constant 0 : index
    %126 = vector.load %arg2[%c3_184, %c0_185, %c0_186] : memref<9x128x64xf32, #tpu.memory_space<vmem>>, vector<1x128x64xf32>
    %127 = vector.shape_cast %126 : vector<1x128x64xf32> to vector<128x64xf32>
    %cst_187 = arith.constant dense<0.000000e+00> : vector<4x64xf32>
    %128 = tpu.matmul %125, %127, %cst_187 {dimension_numbers = #tpu.dot_dimension_numbers<[1], [0], [0], [1], [0, 0, 1, 1], [], []>} : vector<4x128xf32>, vector<128x64xf32>, vector<4x64xf32> -> vector<4x64xf32>
    %129 = arith.addf %123, %128 : vector<4x64xf32>
    %c0_188 = arith.constant 0 : index
    %c2_189 = arith.constant 2 : index
    %c1_190 = arith.constant 1 : index
    %c0_191 = arith.constant 0 : index
    %c0_192 = arith.constant 0 : index
    %130 = vector.load %arg1[%c0_188, %c2_189, %c1_190, %c0_191, %c0_192] : memref<1x4x4x4x128xf32, #tpu.memory_space<vmem>>, vector<1x1x1x4x128xf32>
    %131 = vector.shape_cast %130 : vector<1x1x1x4x128xf32> to vector<4x128xf32>
    %c4_193 = arith.constant 4 : index
    %c0_194 = arith.constant 0 : index
    %c0_195 = arith.constant 0 : index
    %132 = vector.load %arg2[%c4_193, %c0_194, %c0_195] : memref<9x128x64xf32, #tpu.memory_space<vmem>>, vector<1x128x64xf32>
    %133 = vector.shape_cast %132 : vector<1x128x64xf32> to vector<128x64xf32>
    %cst_196 = arith.constant dense<0.000000e+00> : vector<4x64xf32>
    %134 = tpu.matmul %131, %133, %cst_196 {dimension_numbers = #tpu.dot_dimension_numbers<[1], [0], [0], [1], [0, 0, 1, 1], [], []>} : vector<4x128xf32>, vector<128x64xf32>, vector<4x64xf32> -> vector<4x64xf32>
    %135 = arith.addf %129, %134 : vector<4x64xf32>
    %c0_197 = arith.constant 0 : index
    %c2_198 = arith.constant 2 : index
    %c2_199 = arith.constant 2 : index
    %c0_200 = arith.constant 0 : index
    %c0_201 = arith.constant 0 : index
    %136 = vector.load %arg1[%c0_197, %c2_198, %c2_199, %c0_200, %c0_201] : memref<1x4x4x4x128xf32, #tpu.memory_space<vmem>>, vector<1x1x1x4x128xf32>
    %137 = vector.shape_cast %136 : vector<1x1x1x4x128xf32> to vector<4x128xf32>
    %c5_202 = arith.constant 5 : index
    %c0_203 = arith.constant 0 : index
    %c0_204 = arith.constant 0 : index
    %138 = vector.load %arg2[%c5_202, %c0_203, %c0_204] : memref<9x128x64xf32, #tpu.memory_space<vmem>>, vector<1x128x64xf32>
    %139 = vector.shape_cast %138 : vector<1x128x64xf32> to vector<128x64xf32>
    %cst_205 = arith.constant dense<0.000000e+00> : vector<4x64xf32>
    %140 = tpu.matmul %137, %139, %cst_205 {dimension_numbers = #tpu.dot_dimension_numbers<[1], [0], [0], [1], [0, 0, 1, 1], [], []>} : vector<4x128xf32>, vector<128x64xf32>, vector<4x64xf32> -> vector<4x64xf32>
    %141 = arith.addf %135, %140 : vector<4x64xf32>
    %c0_206 = arith.constant 0 : index
    %c3_207 = arith.constant 3 : index
    %c0_208 = arith.constant 0 : index
    %c0_209 = arith.constant 0 : index
    %c0_210 = arith.constant 0 : index
    %142 = vector.load %arg1[%c0_206, %c3_207, %c0_208, %c0_209, %c0_210] : memref<1x4x4x4x128xf32, #tpu.memory_space<vmem>>, vector<1x1x1x4x128xf32>
    %143 = vector.shape_cast %142 : vector<1x1x1x4x128xf32> to vector<4x128xf32>
    %c6_211 = arith.constant 6 : index
    %c0_212 = arith.constant 0 : index
    %c0_213 = arith.constant 0 : index
    %144 = vector.load %arg2[%c6_211, %c0_212, %c0_213] : memref<9x128x64xf32, #tpu.memory_space<vmem>>, vector<1x128x64xf32>
    %145 = vector.shape_cast %144 : vector<1x128x64xf32> to vector<128x64xf32>
    %cst_214 = arith.constant dense<0.000000e+00> : vector<4x64xf32>
    %146 = tpu.matmul %143, %145, %cst_214 {dimension_numbers = #tpu.dot_dimension_numbers<[1], [0], [0], [1], [0, 0, 1, 1], [], []>} : vector<4x128xf32>, vector<128x64xf32>, vector<4x64xf32> -> vector<4x64xf32>
    %147 = arith.addf %141, %146 : vector<4x64xf32>
    %c0_215 = arith.constant 0 : index
    %c3_216 = arith.constant 3 : index
    %c1_217 = arith.constant 1 : index
    %c0_218 = arith.constant 0 : index
    %c0_219 = arith.constant 0 : index
    %148 = vector.load %arg1[%c0_215, %c3_216, %c1_217, %c0_218, %c0_219] : memref<1x4x4x4x128xf32, #tpu.memory_space<vmem>>, vector<1x1x1x4x128xf32>
    %149 = vector.shape_cast %148 : vector<1x1x1x4x128xf32> to vector<4x128xf32>
    %c7_220 = arith.constant 7 : index
    %c0_221 = arith.constant 0 : index
    %c0_222 = arith.constant 0 : index
    %150 = vector.load %arg2[%c7_220, %c0_221, %c0_222] : memref<9x128x64xf32, #tpu.memory_space<vmem>>, vector<1x128x64xf32>
    %151 = vector.shape_cast %150 : vector<1x128x64xf32> to vector<128x64xf32>
    %cst_223 = arith.constant dense<0.000000e+00> : vector<4x64xf32>
    %152 = tpu.matmul %149, %151, %cst_223 {dimension_numbers = #tpu.dot_dimension_numbers<[1], [0], [0], [1], [0, 0, 1, 1], [], []>} : vector<4x128xf32>, vector<128x64xf32>, vector<4x64xf32> -> vector<4x64xf32>
    %153 = arith.addf %147, %152 : vector<4x64xf32>
    %c0_224 = arith.constant 0 : index
    %c3_225 = arith.constant 3 : index
    %c2_226 = arith.constant 2 : index
    %c0_227 = arith.constant 0 : index
    %c0_228 = arith.constant 0 : index
    %154 = vector.load %arg1[%c0_224, %c3_225, %c2_226, %c0_227, %c0_228] : memref<1x4x4x4x128xf32, #tpu.memory_space<vmem>>, vector<1x1x1x4x128xf32>
    %155 = vector.shape_cast %154 : vector<1x1x1x4x128xf32> to vector<4x128xf32>
    %c8_229 = arith.constant 8 : index
    %c0_230 = arith.constant 0 : index
    %c0_231 = arith.constant 0 : index
    %156 = vector.load %arg2[%c8_229, %c0_230, %c0_231] : memref<9x128x64xf32, #tpu.memory_space<vmem>>, vector<1x128x64xf32>
    %157 = vector.shape_cast %156 : vector<1x128x64xf32> to vector<128x64xf32>
    %cst_232 = arith.constant dense<0.000000e+00> : vector<4x64xf32>
    %158 = tpu.matmul %155, %157, %cst_232 {dimension_numbers = #tpu.dot_dimension_numbers<[1], [0], [0], [1], [0, 0, 1, 1], [], []>} : vector<4x128xf32>, vector<128x64xf32>, vector<4x64xf32> -> vector<4x64xf32>
    %159 = arith.addf %153, %158 : vector<4x64xf32>
    %160 = arith.maximumf %106, %159 : vector<4x64xf32>
    %c0_233 = arith.constant 0 : index
    %c1_234 = arith.constant 1 : index
    %c1_235 = arith.constant 1 : index
    %c0_236 = arith.constant 0 : index
    %c0_237 = arith.constant 0 : index
    %161 = vector.load %arg1[%c0_233, %c1_234, %c1_235, %c0_236, %c0_237] : memref<1x4x4x4x128xf32, #tpu.memory_space<vmem>>, vector<1x1x1x4x128xf32>
    %162 = vector.shape_cast %161 : vector<1x1x1x4x128xf32> to vector<4x128xf32>
    %c0_238 = arith.constant 0 : index
    %c0_239 = arith.constant 0 : index
    %c0_240 = arith.constant 0 : index
    %163 = vector.load %arg2[%c0_238, %c0_239, %c0_240] : memref<9x128x64xf32, #tpu.memory_space<vmem>>, vector<1x128x64xf32>
    %164 = vector.shape_cast %163 : vector<1x128x64xf32> to vector<128x64xf32>
    %cst_241 = arith.constant dense<0.000000e+00> : vector<4x64xf32>
    %165 = tpu.matmul %162, %164, %cst_241 {dimension_numbers = #tpu.dot_dimension_numbers<[1], [0], [0], [1], [0, 0, 1, 1], [], []>} : vector<4x128xf32>, vector<128x64xf32>, vector<4x64xf32> -> vector<4x64xf32>
    %c0_242 = arith.constant 0 : index
    %c1_243 = arith.constant 1 : index
    %c2_244 = arith.constant 2 : index
    %c0_245 = arith.constant 0 : index
    %c0_246 = arith.constant 0 : index
    %166 = vector.load %arg1[%c0_242, %c1_243, %c2_244, %c0_245, %c0_246] : memref<1x4x4x4x128xf32, #tpu.memory_space<vmem>>, vector<1x1x1x4x128xf32>
    %167 = vector.shape_cast %166 : vector<1x1x1x4x128xf32> to vector<4x128xf32>
    %c1_247 = arith.constant 1 : index
    %c0_248 = arith.constant 0 : index
    %c0_249 = arith.constant 0 : index
    %168 = vector.load %arg2[%c1_247, %c0_248, %c0_249] : memref<9x128x64xf32, #tpu.memory_space<vmem>>, vector<1x128x64xf32>
    %169 = vector.shape_cast %168 : vector<1x128x64xf32> to vector<128x64xf32>
    %cst_250 = arith.constant dense<0.000000e+00> : vector<4x64xf32>
    %170 = tpu.matmul %167, %169, %cst_250 {dimension_numbers = #tpu.dot_dimension_numbers<[1], [0], [0], [1], [0, 0, 1, 1], [], []>} : vector<4x128xf32>, vector<128x64xf32>, vector<4x64xf32> -> vector<4x64xf32>
    %171 = arith.addf %165, %170 : vector<4x64xf32>
    %c0_251 = arith.constant 0 : index
    %c1_252 = arith.constant 1 : index
    %c3_253 = arith.constant 3 : index
    %c0_254 = arith.constant 0 : index
    %c0_255 = arith.constant 0 : index
    %172 = vector.load %arg1[%c0_251, %c1_252, %c3_253, %c0_254, %c0_255] : memref<1x4x4x4x128xf32, #tpu.memory_space<vmem>>, vector<1x1x1x4x128xf32>
    %173 = vector.shape_cast %172 : vector<1x1x1x4x128xf32> to vector<4x128xf32>
    %c2_256 = arith.constant 2 : index
    %c0_257 = arith.constant 0 : index
    %c0_258 = arith.constant 0 : index
    %174 = vector.load %arg2[%c2_256, %c0_257, %c0_258] : memref<9x128x64xf32, #tpu.memory_space<vmem>>, vector<1x128x64xf32>
    %175 = vector.shape_cast %174 : vector<1x128x64xf32> to vector<128x64xf32>
    %cst_259 = arith.constant dense<0.000000e+00> : vector<4x64xf32>
    %176 = tpu.matmul %173, %175, %cst_259 {dimension_numbers = #tpu.dot_dimension_numbers<[1], [0], [0], [1], [0, 0, 1, 1], [], []>} : vector<4x128xf32>, vector<128x64xf32>, vector<4x64xf32> -> vector<4x64xf32>
    %177 = arith.addf %171, %176 : vector<4x64xf32>
    %c0_260 = arith.constant 0 : index
    %c2_261 = arith.constant 2 : index
    %c1_262 = arith.constant 1 : index
    %c0_263 = arith.constant 0 : index
    %c0_264 = arith.constant 0 : index
    %178 = vector.load %arg1[%c0_260, %c2_261, %c1_262, %c0_263, %c0_264] : memref<1x4x4x4x128xf32, #tpu.memory_space<vmem>>, vector<1x1x1x4x128xf32>
    %179 = vector.shape_cast %178 : vector<1x1x1x4x128xf32> to vector<4x128xf32>
    %c3_265 = arith.constant 3 : index
    %c0_266 = arith.constant 0 : index
    %c0_267 = arith.constant 0 : index
    %180 = vector.load %arg2[%c3_265, %c0_266, %c0_267] : memref<9x128x64xf32, #tpu.memory_space<vmem>>, vector<1x128x64xf32>
    %181 = vector.shape_cast %180 : vector<1x128x64xf32> to vector<128x64xf32>
    %cst_268 = arith.constant dense<0.000000e+00> : vector<4x64xf32>
    %182 = tpu.matmul %179, %181, %cst_268 {dimension_numbers = #tpu.dot_dimension_numbers<[1], [0], [0], [1], [0, 0, 1, 1], [], []>} : vector<4x128xf32>, vector<128x64xf32>, vector<4x64xf32> -> vector<4x64xf32>
    %183 = arith.addf %177, %182 : vector<4x64xf32>
    %c0_269 = arith.constant 0 : index
    %c2_270 = arith.constant 2 : index
    %c2_271 = arith.constant 2 : index
    %c0_272 = arith.constant 0 : index
    %c0_273 = arith.constant 0 : index
    %184 = vector.load %arg1[%c0_269, %c2_270, %c2_271, %c0_272, %c0_273] : memref<1x4x4x4x128xf32, #tpu.memory_space<vmem>>, vector<1x1x1x4x128xf32>
    %185 = vector.shape_cast %184 : vector<1x1x1x4x128xf32> to vector<4x128xf32>
    %c4_274 = arith.constant 4 : index
    %c0_275 = arith.constant 0 : index
    %c0_276 = arith.constant 0 : index
    %186 = vector.load %arg2[%c4_274, %c0_275, %c0_276] : memref<9x128x64xf32, #tpu.memory_space<vmem>>, vector<1x128x64xf32>
    %187 = vector.shape_cast %186 : vector<1x128x64xf32> to vector<128x64xf32>
    %cst_277 = arith.constant dense<0.000000e+00> : vector<4x64xf32>
    %188 = tpu.matmul %185, %187, %cst_277 {dimension_numbers = #tpu.dot_dimension_numbers<[1], [0], [0], [1], [0, 0, 1, 1], [], []>} : vector<4x128xf32>, vector<128x64xf32>, vector<4x64xf32> -> vector<4x64xf32>
    %189 = arith.addf %183, %188 : vector<4x64xf32>
    %c0_278 = arith.constant 0 : index
    %c2_279 = arith.constant 2 : index
    %c3_280 = arith.constant 3 : index
    %c0_281 = arith.constant 0 : index
    %c0_282 = arith.constant 0 : index
    %190 = vector.load %arg1[%c0_278, %c2_279, %c3_280, %c0_281, %c0_282] : memref<1x4x4x4x128xf32, #tpu.memory_space<vmem>>, vector<1x1x1x4x128xf32>
    %191 = vector.shape_cast %190 : vector<1x1x1x4x128xf32> to vector<4x128xf32>
    %c5_283 = arith.constant 5 : index
    %c0_284 = arith.constant 0 : index
    %c0_285 = arith.constant 0 : index
    %192 = vector.load %arg2[%c5_283, %c0_284, %c0_285] : memref<9x128x64xf32, #tpu.memory_space<vmem>>, vector<1x128x64xf32>
    %193 = vector.shape_cast %192 : vector<1x128x64xf32> to vector<128x64xf32>
    %cst_286 = arith.constant dense<0.000000e+00> : vector<4x64xf32>
    %194 = tpu.matmul %191, %193, %cst_286 {dimension_numbers = #tpu.dot_dimension_numbers<[1], [0], [0], [1], [0, 0, 1, 1], [], []>} : vector<4x128xf32>, vector<128x64xf32>, vector<4x64xf32> -> vector<4x64xf32>
    %195 = arith.addf %189, %194 : vector<4x64xf32>
    %c0_287 = arith.constant 0 : index
    %c3_288 = arith.constant 3 : index
    %c1_289 = arith.constant 1 : index
    %c0_290 = arith.constant 0 : index
    %c0_291 = arith.constant 0 : index
    %196 = vector.load %arg1[%c0_287, %c3_288, %c1_289, %c0_290, %c0_291] : memref<1x4x4x4x128xf32, #tpu.memory_space<vmem>>, vector<1x1x1x4x128xf32>
    %197 = vector.shape_cast %196 : vector<1x1x1x4x128xf32> to vector<4x128xf32>
    %c6_292 = arith.constant 6 : index
    %c0_293 = arith.constant 0 : index
    %c0_294 = arith.constant 0 : index
    %198 = vector.load %arg2[%c6_292, %c0_293, %c0_294] : memref<9x128x64xf32, #tpu.memory_space<vmem>>, vector<1x128x64xf32>
    %199 = vector.shape_cast %198 : vector<1x128x64xf32> to vector<128x64xf32>
    %cst_295 = arith.constant dense<0.000000e+00> : vector<4x64xf32>
    %200 = tpu.matmul %197, %199, %cst_295 {dimension_numbers = #tpu.dot_dimension_numbers<[1], [0], [0], [1], [0, 0, 1, 1], [], []>} : vector<4x128xf32>, vector<128x64xf32>, vector<4x64xf32> -> vector<4x64xf32>
    %201 = arith.addf %195, %200 : vector<4x64xf32>
    %c0_296 = arith.constant 0 : index
    %c3_297 = arith.constant 3 : index
    %c2_298 = arith.constant 2 : index
    %c0_299 = arith.constant 0 : index
    %c0_300 = arith.constant 0 : index
    %202 = vector.load %arg1[%c0_296, %c3_297, %c2_298, %c0_299, %c0_300] : memref<1x4x4x4x128xf32, #tpu.memory_space<vmem>>, vector<1x1x1x4x128xf32>
    %203 = vector.shape_cast %202 : vector<1x1x1x4x128xf32> to vector<4x128xf32>
    %c7_301 = arith.constant 7 : index
    %c0_302 = arith.constant 0 : index
    %c0_303 = arith.constant 0 : index
    %204 = vector.load %arg2[%c7_301, %c0_302, %c0_303] : memref<9x128x64xf32, #tpu.memory_space<vmem>>, vector<1x128x64xf32>
    %205 = vector.shape_cast %204 : vector<1x128x64xf32> to vector<128x64xf32>
    %cst_304 = arith.constant dense<0.000000e+00> : vector<4x64xf32>
    %206 = tpu.matmul %203, %205, %cst_304 {dimension_numbers = #tpu.dot_dimension_numbers<[1], [0], [0], [1], [0, 0, 1, 1], [], []>} : vector<4x128xf32>, vector<128x64xf32>, vector<4x64xf32> -> vector<4x64xf32>
    %207 = arith.addf %201, %206 : vector<4x64xf32>
    %c0_305 = arith.constant 0 : index
    %c3_306 = arith.constant 3 : index
    %c3_307 = arith.constant 3 : index
    %c0_308 = arith.constant 0 : index
    %c0_309 = arith.constant 0 : index
    %208 = vector.load %arg1[%c0_305, %c3_306, %c3_307, %c0_308, %c0_309] : memref<1x4x4x4x128xf32, #tpu.memory_space<vmem>>, vector<1x1x1x4x128xf32>
    %209 = vector.shape_cast %208 : vector<1x1x1x4x128xf32> to vector<4x128xf32>
    %c8_310 = arith.constant 8 : index
    %c0_311 = arith.constant 0 : index
    %c0_312 = arith.constant 0 : index
    %210 = vector.load %arg2[%c8_310, %c0_311, %c0_312] : memref<9x128x64xf32, #tpu.memory_space<vmem>>, vector<1x128x64xf32>
    %211 = vector.shape_cast %210 : vector<1x128x64xf32> to vector<128x64xf32>
    %cst_313 = arith.constant dense<0.000000e+00> : vector<4x64xf32>
    %212 = tpu.matmul %209, %211, %cst_313 {dimension_numbers = #tpu.dot_dimension_numbers<[1], [0], [0], [1], [0, 0, 1, 1], [], []>} : vector<4x128xf32>, vector<128x64xf32>, vector<4x64xf32> -> vector<4x64xf32>
    %213 = arith.addf %207, %212 : vector<4x64xf32>
    %214 = arith.maximumf %160, %213 : vector<4x64xf32>
    %c0_314 = arith.constant 0 : index
    %c0_315 = arith.constant 0 : index
    %215 = vector.load %arg3[%c0_314, %c0_315] : memref<1x64xf32, #tpu.memory_space<vmem>>, vector<1x64xf32>
    %216 = vector.broadcast %215 : vector<1x64xf32> to vector<4x64xf32>
    %217 = arith.addf %214, %216 : vector<4x64xf32>
    %cst_316 = arith.constant 0.000000e+00 : f32
    %218 = vector.broadcast %cst_316 : f32 to vector<4x64xf32>
    %219 = arith.maximumf %217, %218 : vector<4x64xf32>
    %c0_317 = arith.constant 0 : index
    %c0_318 = arith.constant 0 : index
    %c0_319 = arith.constant 0 : index
    %220 = vector.load %arg10[%c0_317, %c0_318, %c0_319] : memref<1x4x64xf32, #tpu.memory_space<vmem>>, vector<1x4x64xf32>
    %221 = vector.shape_cast %220 : vector<1x4x64xf32> to vector<4x64xf32>
    %222 = vector.shape_cast %219 : vector<4x64xf32> to vector<1x4x64xf32>
    tpu.vector_store %arg10[%c0_317, %c0_318, %c0_319], %222 {strides = array<i32>} : memref<1x4x64xf32, #tpu.memory_space<vmem>>, vector<1x4x64xf32>,
    %223 = tpu.iota {dimensions = array<i32: 0>} : vector<4x64xi32>
    %c0_320 = arith.constant 0 : index
    %c0_321 = arith.constant 0 : index
    %224 = vector.load %arg5[%c0_320, %c0_321] : memref<1x256xf32, #tpu.memory_space<vmem>>, vector<1x256xf32>
    %c0_i32 = arith.constant 0 : i32
    %225 = vector.broadcast %c0_i32 : i32 to vector<4x64xi32>
    %226 = arith.cmpi eq, %223, %225 : vector<4x64xi32>
    %cst_322 = arith.constant 0.000000e+00 : f32
    %227 = vector.broadcast %cst_322 : f32 to vector<4x64xf32>
    %228 = arith.select %226, %219, %227 : vector<4x64xi1>, vector<4x64xf32>
    %cst_323 = arith.constant dense<0.000000e+00> : vector<64xf32>
    %229 = vector.multi_reduction <add>, %228, %cst_323 [0] : vector<4x64xf32> to vector<64xf32>
    %230 = vector.shape_cast %229 : vector<64xf32> to vector<1x64xf32>
    %c0_324 = arith.constant 0 : index
    %c0_325 = arith.constant 0 : index
    %c0_326 = arith.constant 0 : index
    %231 = vector.load %arg4[%c0_324, %c0_325, %c0_326] : memref<4x64x256xf32, #tpu.memory_space<vmem>>, vector<1x64x256xf32>
    %232 = vector.shape_cast %231 : vector<1x64x256xf32> to vector<64x256xf32>
    %cst_327 = arith.constant dense<0.000000e+00> : vector<1x256xf32>
    %233 = tpu.matmul %230, %232, %cst_327 {dimension_numbers = #tpu.dot_dimension_numbers<[1], [0], [0], [1], [0, 0, 1, 1], [], []>} : vector<1x64xf32>, vector<64x256xf32>, vector<1x256xf32> -> vector<1x256xf32>
    %234 = arith.addf %224, %233 : vector<1x256xf32>
    %c1_i32 = arith.constant 1 : i32
    %235 = vector.broadcast %c1_i32 : i32 to vector<4x64xi32>
    %236 = arith.cmpi eq, %223, %235 : vector<4x64xi32>
    %cst_328 = arith.constant 0.000000e+00 : f32
    %237 = vector.broadcast %cst_328 : f32 to vector<4x64xf32>
    %238 = arith.select %236, %219, %237 : vector<4x64xi1>, vector<4x64xf32>
    %cst_329 = arith.constant dense<0.000000e+00> : vector<64xf32>
    %239 = vector.multi_reduction <add>, %238, %cst_329 [0] : vector<4x64xf32> to vector<64xf32>
    %240 = vector.shape_cast %239 : vector<64xf32> to vector<1x64xf32>
    %c1_330 = arith.constant 1 : index
    %c0_331 = arith.constant 0 : index
    %c0_332 = arith.constant 0 : index
    %241 = vector.load %arg4[%c1_330, %c0_331, %c0_332] : memref<4x64x256xf32, #tpu.memory_space<vmem>>, vector<1x64x256xf32>
    %242 = vector.shape_cast %241 : vector<1x64x256xf32> to vector<64x256xf32>
    %cst_333 = arith.constant dense<0.000000e+00> : vector<1x256xf32>
    %243 = tpu.matmul %240, %242, %cst_333 {dimension_numbers = #tpu.dot_dimension_numbers<[1], [0], [0], [1], [0, 0, 1, 1], [], []>} : vector<1x64xf32>, vector<64x256xf32>, vector<1x256xf32> -> vector<1x256xf32>
    %244 = arith.addf %234, %243 : vector<1x256xf32>
    %c2_i32 = arith.constant 2 : i32
    %245 = vector.broadcast %c2_i32 : i32 to vector<4x64xi32>
    %246 = arith.cmpi eq, %223, %245 : vector<4x64xi32>
    %cst_334 = arith.constant 0.000000e+00 : f32
    %247 = vector.broadcast %cst_334 : f32 to vector<4x64xf32>
    %248 = arith.select %246, %219, %247 : vector<4x64xi1>, vector<4x64xf32>
    %cst_335 = arith.constant dense<0.000000e+00> : vector<64xf32>
    %249 = vector.multi_reduction <add>, %248, %cst_335 [0] : vector<4x64xf32> to vector<64xf32>
    %250 = vector.shape_cast %249 : vector<64xf32> to vector<1x64xf32>
    %c2_336 = arith.constant 2 : index
    %c0_337 = arith.constant 0 : index
    %c0_338 = arith.constant 0 : index
    %251 = vector.load %arg4[%c2_336, %c0_337, %c0_338] : memref<4x64x256xf32, #tpu.memory_space<vmem>>, vector<1x64x256xf32>
    %252 = vector.shape_cast %251 : vector<1x64x256xf32> to vector<64x256xf32>
    %cst_339 = arith.constant dense<0.000000e+00> : vector<1x256xf32>
    %253 = tpu.matmul %250, %252, %cst_339 {dimension_numbers = #tpu.dot_dimension_numbers<[1], [0], [0], [1], [0, 0, 1, 1], [], []>} : vector<1x64xf32>, vector<64x256xf32>, vector<1x256xf32> -> vector<1x256xf32>
    %254 = arith.addf %244, %253 : vector<1x256xf32>
    %c3_i32 = arith.constant 3 : i32
    %255 = vector.broadcast %c3_i32 : i32 to vector<4x64xi32>
    %256 = arith.cmpi eq, %223, %255 : vector<4x64xi32>
    %cst_340 = arith.constant 0.000000e+00 : f32
    %257 = vector.broadcast %cst_340 : f32 to vector<4x64xf32>
    %258 = arith.select %256, %219, %257 : vector<4x64xi1>, vector<4x64xf32>
    %cst_341 = arith.constant dense<0.000000e+00> : vector<64xf32>
    %259 = vector.multi_reduction <add>, %258, %cst_341 [0] : vector<4x64xf32> to vector<64xf32>
    %260 = vector.shape_cast %259 : vector<64xf32> to vector<1x64xf32>
    %c3_342 = arith.constant 3 : index
    %c0_343 = arith.constant 0 : index
    %c0_344 = arith.constant 0 : index
    %261 = vector.load %arg4[%c3_342, %c0_343, %c0_344] : memref<4x64x256xf32, #tpu.memory_space<vmem>>, vector<1x64x256xf32>
    %262 = vector.shape_cast %261 : vector<1x64x256xf32> to vector<64x256xf32>
    %cst_345 = arith.constant dense<0.000000e+00> : vector<1x256xf32>
    %263 = tpu.matmul %260, %262, %cst_345 {dimension_numbers = #tpu.dot_dimension_numbers<[1], [0], [0], [1], [0, 0, 1, 1], [], []>} : vector<1x64xf32>, vector<64x256xf32>, vector<1x256xf32> -> vector<1x256xf32>
    %264 = arith.addf %254, %263 : vector<1x256xf32>
    %c0_346 = arith.constant 0 : index
    %c0_347 = arith.constant 0 : index
    %265 = vector.load %arg6[%c0_346, %c0_347] : memref<256x64xf32, #tpu.memory_space<vmem>>, vector<256x64xf32>
    %cst_348 = arith.constant dense<0.000000e+00> : vector<1x64xf32>
    %266 = tpu.matmul %264, %265, %cst_348 {dimension_numbers = #tpu.dot_dimension_numbers<[1], [0], [0], [1], [0, 0, 1, 1], [], []>} : vector<1x256xf32>, vector<256x64xf32>, vector<1x64xf32> -> vector<1x64xf32>
    %c0_349 = arith.constant 0 : index
    %c0_350 = arith.constant 0 : index
    %267 = vector.load %arg7[%c0_349, %c0_350] : memref<1x64xf32, #tpu.memory_space<vmem>>, vector<1x64xf32>
    %268 = arith.addf %266, %267 : vector<1x64xf32>
    %c0_351 = arith.constant 0 : index
    %c0_352 = arith.constant 0 : index
    %269 = vector.load %arg8[%c0_351, %c0_352] : memref<64x10xf32, #tpu.memory_space<vmem>>, vector<64x10xf32>
    %cst_353 = arith.constant dense<0.000000e+00> : vector<1x10xf32>
    %270 = tpu.matmul %268, %269, %cst_353 {dimension_numbers = #tpu.dot_dimension_numbers<[1], [0], [0], [1], [0, 0, 1, 1], [], []>} : vector<1x64xf32>, vector<64x10xf32>, vector<1x10xf32> -> vector<1x10xf32>
    %c0_354 = arith.constant 0 : index
    %c0_355 = arith.constant 0 : index
    %271 = vector.load %arg9[%c0_354, %c0_355] : memref<1x10xf32, #tpu.memory_space<vmem>>, vector<1x10xf32>
    %272 = arith.addf %270, %271 : vector<1x10xf32>
    %c0_356 = arith.constant 0 : index
    %c0_357 = arith.constant 0 : index
    %c0_358 = arith.constant 0 : index
    %273 = vector.load %arg11[%c0_356, %c0_357, %c0_358] : memref<1x1x10xf32, #tpu.memory_space<vmem>>, vector<1x1x10xf32>
    %274 = vector.shape_cast %273 : vector<1x1x10xf32> to vector<1x10xf32>
    %275 = vector.shape_cast %272 : vector<1x10xf32> to vector<1x1x10xf32>
    tpu.vector_store %arg11[%c0_356, %c0_357, %c0_358], %275 {strides = array<i32>} : memref<1x1x10xf32, #tpu.memory_space<vmem>>, vector<1x1x10xf32>,
    return
  }
  func.func @transform_0(%arg0: i32) -> (i32, i32, i32, i32, i32) {
    %c0_i32 = arith.constant 0 : i32
    %c0_i32_0 = arith.constant 0 : i32
    %c0_i32_1 = arith.constant 0 : i32
    %c0_i32_2 = arith.constant 0 : i32
    %c0_i32_3 = arith.constant 0 : i32
    return %arg0, %c0_i32, %c0_i32_0, %c0_i32_1, %c0_i32_2 : i32, i32, i32, i32, i32
  }
  func.func @transform_1(%arg0: i32) -> (i32, i32, i32) {
    %c0_i32 = arith.constant 0 : i32
    %c0_i32_0 = arith.constant 0 : i32
    %c0_i32_1 = arith.constant 0 : i32
    %c0_i32_2 = arith.constant 0 : i32
    return %c0_i32, %c0_i32_0, %c0_i32_1 : i32, i32, i32
  }
  func.func @transform_2(%arg0: i32) -> (i32, i32) {
    %c0_i32 = arith.constant 0 : i32
    %c0_i32_0 = arith.constant 0 : i32
    %c0_i32_1 = arith.constant 0 : i32
    return %c0_i32, %c0_i32_0 : i32, i32
  }
  func.func @transform_3(%arg0: i32) -> (i32, i32, i32) {
    %c0_i32 = arith.constant 0 : i32
    %c0_i32_0 = arith.constant 0 : i32
    %c0_i32_1 = arith.constant 0 : i32
    %c0_i32_2 = arith.constant 0 : i32
    return %c0_i32, %c0_i32_0, %c0_i32_1 : i32, i32, i32
  }
  func.func @transform_4(%arg0: i32) -> (i32, i32) {
    %c0_i32 = arith.constant 0 : i32
    %c0_i32_0 = arith.constant 0 : i32
    %c0_i32_1 = arith.constant 0 : i32
    return %c0_i32, %c0_i32_0 : i32, i32
  }
  func.func @transform_5(%arg0: i32) -> (i32, i32) {
    %c0_i32 = arith.constant 0 : i32
    %c0_i32_0 = arith.constant 0 : i32
    %c0_i32_1 = arith.constant 0 : i32
    return %c0_i32, %c0_i32_0 : i32, i32
  }
  func.func @transform_6(%arg0: i32) -> (i32, i32) {
    %c0_i32 = arith.constant 0 : i32
    %c0_i32_0 = arith.constant 0 : i32
    %c0_i32_1 = arith.constant 0 : i32
    return %c0_i32, %c0_i32_0 : i32, i32
  }
  func.func @transform_7(%arg0: i32) -> (i32, i32) {
    %c0_i32 = arith.constant 0 : i32
    %c0_i32_0 = arith.constant 0 : i32
    %c0_i32_1 = arith.constant 0 : i32
    return %c0_i32, %c0_i32_0 : i32, i32
  }
  func.func @transform_8(%arg0: i32) -> (i32, i32) {
    %c0_i32 = arith.constant 0 : i32
    %c0_i32_0 = arith.constant 0 : i32
    %c0_i32_1 = arith.constant 0 : i32
    return %c0_i32, %c0_i32_0 : i32, i32
  }
  func.func @transform_9(%arg0: i32) -> (i32, i32, i32) {
    %c0_i32 = arith.constant 0 : i32
    %c0_i32_0 = arith.constant 0 : i32
    %c0_i32_1 = arith.constant 0 : i32
    return %arg0, %c0_i32, %c0_i32_0 : i32, i32, i32
  }
  func.func @transform_10(%arg0: i32) -> (i32, i32, i32) {
    %c0_i32 = arith.constant 0 : i32
    %c0_i32_0 = arith.constant 0 : i32
    %c0_i32_1 = arith.constant 0 : i32
    return %arg0, %c0_i32, %c0_i32_0 : i32, i32, i32
  }
}

</mosaic_0001>

<llo_original>
// kernel: baseline_forward.3
$region0: #{baseline_forward.3}
  #allocation0 [shape = 'u32[]', space=smem, size = 0x4, offset = 0x4, fixed_abs, tag = 'smem constant byte address 0x4 - core index']
  #allocation1 [shape = 'u32[144,128]{1,0:T(1,128)}', space=vmem, size = 0x12000, scoped, tag = 'internal scratch']
  %s0 = inlined_call_operand.vmem [shape: f32[2,2,2,225,27], index: 0, kind: input, shape index: {}]
  %s1 = inlined_call_operand.vmem [shape: f32[27,64], index: 1, kind: input, shape index: {}]
  %s2 = inlined_call_operand.vmem [shape: f32[1,64], index: 2, kind: input, shape index: {}]
  %s3 = inlined_call_operand.vmem [shape: f32[2,225,64], index: 3, kind: output, shape index: {}]
  %s4 = sld [smem:[#allocation0]]
  $region45: #{baseline_forward.3} parent=0
    _
  %s6 = ssub.s32 1, %s4
  %s7 = scalar_select 0, %s6, %s4
  loop: start=0, step=1, limit=4
  $region2: #{baseline_forward.3} parent=0 // loop_pre_header
    _
  $region3: #{baseline_forward.3} parent=0 // loop_header
    %s9 = sphi 0, %s13
    %p10 = scmp.ge.s32.totalorder %s9, 4
    %s19 = sphi 0, %s21
    %s22 = sphi 0, %s19
    %s23 = sphi 0, %s22
    %s39 = sphi 0, %s23
    %s43 = sphi 0, %s43
    %s45 = sphi 0, %s43
    %s46 = sphi 0, %s45
    %s60 = sphi 0, %s46
    %s64 = sphi 0, %s64
    %s66 = sphi 0, %s64
    %s67 = sphi 0, %s66
    %s81 = sphi 0, %s67
    %s87 = sphi 0, %s89
    %s90 = sphi 0, %s87
    %s91 = sphi 0, %s90
    %s107 = sphi 0, %s91
  $region4: #{baseline_forward.3} parent=0 // loop_header_branch
    %12 = sbr.rel (%p10) target = $region8
  $region5: #{baseline_forward.3} parent=0 // loop_body
    %s14 = ssub.s32 %s9, 1
    %s15 = ssub.s32 %s9, 2
    %s16 = sadd.s32 %s9, 1
    %s17 = ssub.s32 %s9, %s16
    %p18 = scmp.eq.s32.totalorder %s17, 0
    %s20 = sadd.s32 %s19, 1
    %s21 = scalar_select %p18, %s19, %s20
    %p24 = pneg %p18
    %p25 = scmp.eq.s32.totalorder %s9, 1
    %p26 = por %p24, %p25
    %p27 = scmp.ne.s32.totalorder %s19, %s22
    %p28 = scmp.eq.s32.totalorder %s9, 0
    %p29 = por %p27, %p28
    %p30 = scmp.ne.s32.totalorder %s19, %s22
    %p31 = scmp.eq.s32.totalorder %s14, 1
    %p32 = por %p30, %p31
    %p33 = scmp.ne.s32.totalorder %s22, %s23
    %p34 = scmp.eq.s32.totalorder %s14, 0
    %p35 = por %p33, %p34
    %p36 = scmp.ne.s32.totalorder %s22, %s23
    %p37 = scmp.eq.s32.totalorder %s15, 1
    %p38 = por %p36, %p37
    %p40 = scmp.ne.s32.totalorder %s23, %s39
    %p41 = scmp.eq.s32.totalorder %s15, 0
    %p42 = por %p40, %p41
    %s44 = sadd.s32 %s43, 1
    %p47 = scmp.eq.s32.totalorder %s9, 1
    %p48 = scmp.ne.s32.totalorder %s43, %s45
    %p49 = scmp.eq.s32.totalorder %s9, 0
    %p50 = por %p48, %p49
    %p51 = scmp.ne.s32.totalorder %s43, %s45
    %p52 = scmp.eq.s32.totalorder %s14, 1
    %p53 = por %p51, %p52
    %p54 = scmp.ne.s32.totalorder %s45, %s46
    %p55 = scmp.eq.s32.totalorder %s14, 0
    %p56 = por %p54, %p55
    %p57 = scmp.ne.s32.totalorder %s45, %s46
    %p58 = scmp.eq.s32.totalorder %s15, 1
    %p59 = por %p57, %p58
    %p61 = scmp.ne.s32.totalorder %s46, %s60
    %p62 = scmp.eq.s32.totalorder %s15, 0
    %p63 = por %p61, %p62
    %s65 = sadd.s32 %s64, 1
    %p68 = scmp.eq.s32.totalorder %s9, 1
    %p69 = scmp.ne.s32.totalorder %s64, %s66
    %p70 = scmp.eq.s32.totalorder %s9, 0
    %p71 = por %p69, %p70
    %p72 = scmp.ne.s32.totalorder %s64, %s66
    %p73 = scmp.eq.s32.totalorder %s14, 1
    %p74 = por %p72, %p73
    %p75 = scmp.ne.s32.totalorder %s66, %s67
    %p76 = scmp.eq.s32.totalorder %s14, 0
    %p77 = por %p75, %p76
    %p78 = scmp.ne.s32.totalorder %s66, %s67
    %p79 = scmp.eq.s32.totalorder %s15, 1
    %p80 = por %p78, %p79
    %p82 = scmp.ne.s32.totalorder %s67, %s81
    %p83 = scmp.eq.s32.totalorder %s15, 0
    %p84 = por %p82, %p83
    %s85 = ssub.s32 %s9, %s16
    %p86 = scmp.eq.s32.totalorder %s85, 0
    %s88 = sadd.s32 %s87, 1
    %s89 = scalar_select %p86, %s87, %s88
    %p92 = pneg %p86
    %p93 = scmp.eq.s32.totalorder %s9, 1
    %p94 = por %p92, %p93
    %p95 = scmp.ne.s32.totalorder %s87, %s90
    %p96 = scmp.eq.s32.totalorder %s9, 0
    %p97 = por %p95, %p96
    %p98 = scmp.ne.s32.totalorder %s87, %s90
    %p99 = scmp.eq.s32.totalorder %s14, 1
    %p100 = por %p98, %p99
    %p101 = scmp.ne.s32.totalorder %s90, %s91
    %p102 = scmp.eq.s32.totalorder %s14, 0
    %p103 = por %p101, %p102
    %p104 = scmp.ne.s32.totalorder %s90, %s91
    %p105 = scmp.eq.s32.totalorder %s15, 1
    %p106 = por %p104, %p105
    %p108 = scmp.ne.s32.totalorder %s91, %s107
    %p109 = scmp.eq.s32.totalorder %s15, 0
    %p110 = por %p108, %p109
    %p111 = scmp.le.s32.totalorder 1, %s9
    %p112 = scmp.lt.s32.totalorder %s9, 3
    %p113 = pnand %p111, %p112
    %p114 = pneg %p113
    // Predicated region
    $region9: #{baseline_forward.3} parent=5 // pred_check
      _
    $region10: #{baseline_forward.3} parent=5 // pred_check_branch
      %116 = sbr.rel (%p113) target = $region12
    $region11: #{baseline_forward.3} parent=5 // pred_region
      %s117 = ssub.s32 %s9, 1
      // Predicated region
      $region13: #{baseline_forward.3} parent=11 // pred_check
        %p118 = pneg %p56
      $region14: #{baseline_forward.3} parent=11 // pred_check_branch
        %120 = sbr.rel (%p118) target = $region16
      $region15: #{baseline_forward.3} parent=11 // pred_region
        _
      $region16: #{baseline_forward.3} parent=11 // pred_fallthru
        _
      // Predicated region
      $region17: #{baseline_forward.3} parent=11 // pred_check
        %p121 = pneg %p77
      $region18: #{baseline_forward.3} parent=11 // pred_check_branch
        %123 = sbr.rel (%p121) target = $region20
      $region19: #{baseline_forward.3} parent=11 // pred_region
        _
      $region20: #{baseline_forward.3} parent=11 // pred_fallthru
        _
    $region12: #{baseline_forward.3} parent=5 // pred_fallthru
      _
    %p124 = scmp.lt.s32.totalorder %s9, 2
    // Predicated region
    $region21: #{baseline_forward.3} parent=5 // pred_check
      %p125 = pneg %p124
    $region22: #{baseline_forward.3} parent=5 // pred_check_branch
      %127 = sbr.rel (%p125) target = $region24
    $region23: #{baseline_forward.3} parent=5 // pred_region
      // Predicated region
      $region25: #{baseline_forward.3} parent=23 // pred_check
        %p128 = pneg %p29
      $region26: #{baseline_forward.3} parent=23 // pred_check_branch
        %130 = sbr.rel (%p128) target = $region28
      $region27: #{baseline_forward.3} parent=23 // pred_region
        %p131 = scmp.lt.s32.totalorder %s9, 1
        %s132 = scalar_select %p131, %s9, 1
        %s133 = smul.addr %s132, 116
        %s134 = smul.addr %s133, 8
        %s135 = scalar_lea.vmem %s0, %s134
      $region28: #{baseline_forward.3} parent=23 // pred_fallthru
        _
    $region24: #{baseline_forward.3} parent=5 // pred_fallthru
      _
    %p136 = scmp.le.s32.totalorder 1, %s9
    %p137 = scmp.lt.s32.totalorder %s9, 3
    %p138 = pnand %p136, %p137
    %p139 = pneg %p138
    // Predicated region
    $region29: #{baseline_forward.3} parent=5 // pred_check
      _
    $region30: #{baseline_forward.3} parent=5 // pred_check_branch
      %141 = sbr.rel (%p138) target = $region32
    $region31: #{baseline_forward.3} parent=5 // pred_region
      %s142 = ssub.s32 %s9, 1
      %p143 = scmp.lt.s32.totalorder %s14, 1
      %s144 = scalar_select %p143, %s14, 1
      %s145 = smul.addr %s144, 116
      %s146 = smul.addr %s145, 8
      %s147 = scalar_lea.vmem %s0, %s146
      %p148 = pneg %p35
      %p149 = pneg %p32
      %p150 = pneg %p56
      %p151 = pneg %p53
      %p152 = pneg %p77
      %p153 = pneg %p74
      %p154 = pneg %p103
      %p155 = pneg %p100
      %p156 = scmp.lt.s32.totalorder %s14, 1
      %s157 = scalar_select %p156, %s14, 1
      %s158 = smul.addr %s157, 29
      %s159 = smul.addr %s158, 8
      %s160 = scalar_lea.vmem %s3, %s159
      %p161 = scmp.lt.s32.totalorder %s14, 1
      %s162 = scalar_select %p161, %s14, 1
      %s163 = smul.addr %s162, 116
      %s164 = smul.addr %s163, 8
      %s165 = scalar_lea.vmem %s0, %s164
      %p166 = scmp.lt.s32.totalorder %s14, 1
      %s167 = scalar_select %p166, %s14, 1
      %s168 = smul.addr %s167, 29
      %s169 = smul.addr %s168, 8
      %s170 = scalar_lea.vmem %s3, %s169
      %v171 = vld [vmem:[%s165] sm:$0xff]
      %v172 = vld [vmem:[%s165 + $0x8] sm:$0xff]
      %v173 = vld [vmem:[%s165 + $0x10] sm:$0xff]
      %v174 = vld [vmem:[%s165 + $0x18] sm:$0xff]
      %v175 = vld [vmem:[%s165 + $0x20] sm:$0xff]
      %v176 = vld [vmem:[%s165 + $0x28] sm:$0xff]
      %v177 = vld [vmem:[%s165 + $0x30] sm:$0xff]
      %v178 = vld [vmem:[%s165 + $0x38] sm:$0xff]
      %v179 = vld [vmem:[%s165 + $0x40] sm:$0xff]
      %v180 = vld [vmem:[%s165 + $0x48] sm:$0xff]
      %v181 = vld [vmem:[%s165 + $0x50] sm:$0xff]
      %v182 = vld [vmem:[%s165 + $0x58] sm:$0xff]
      %v183 = vld [vmem:[%s165 + $0x60] sm:$0xff]
      %v184 = vld [vmem:[%s165 + $0x68] sm:$0xff]
      %v185 = vld [vmem:[%s165 + $0x70] sm:$0xff]
      %v186 = vld [vmem:[%s165 + $0x78] sm:$0xff]
      %v187 = vld [vmem:[%s165 + $0x80] sm:$0xff]
      %v188 = vld [vmem:[%s165 + $0x88] sm:$0xff]
      %v189 = vld [vmem:[%s165 + $0x90] sm:$0xff]
      %v190 = vld [vmem:[%s165 + $0x98] sm:$0xff]
      %v191 = vld [vmem:[%s165 + $0xa0] sm:$0xff]
      %v192 = vld [vmem:[%s165 + $0xa8] sm:$0xff]
      %v193 = vld [vmem:[%s165 + $0xb0] sm:$0xff]
      %v194 = vld [vmem:[%s165 + $0xb8] sm:$0xff]
      %v195 = vld [vmem:[%s165 + $0xc0] sm:$0xff]
      %v196 = vld [vmem:[%s165 + $0xc8] sm:$0xff]
      %v197 = vld [vmem:[%s165 + $0xd0] sm:$0xff]
      %v198 = vld [vmem:[%s165 + $0xd8] sm:$0xff]
      %v199 = vld [vmem:[%s165 + $0xe0] sm:$0x1]
      %v200 = vld [vmem:[%s1] sm:$0xff]
      %v201 = vld [vmem:[%s1 + $0x8] sm:$0xff]
      %v202 = vld [vmem:[%s1 + $0x10] sm:$0xff]
      %v203 = vld [vmem:[%s1 + $0x18] sm:$0x7]
      %vm204 = vcmask 220160
      %v206 = vsel %vm204, %v171, 0
      %v209 = vsel %vm204, %v172, 0
      %v212 = vsel %vm204, %v173, 0
      %v215 = vsel %vm204, %v174, 0
      %v218 = vsel %vm204, %v175, 0
      %v221 = vsel %vm204, %v176, 0
      %v224 = vsel %vm204, %v177, 0
      %v227 = vsel %vm204, %v178, 0
      %v230 = vsel %vm204, %v179, 0
      %v233 = vsel %vm204, %v180, 0
      %v236 = vsel %vm204, %v181, 0
      %v239 = vsel %vm204, %v182, 0
      %v242 = vsel %vm204, %v183, 0
      %v245 = vsel %vm204, %v184, 0
      %v248 = vsel %vm204, %v185, 0
      %v251 = vsel %vm204, %v186, 0
      %v254 = vsel %vm204, %v187, 0
      %v257 = vsel %vm204, %v188, 0
      %v260 = vsel %vm204, %v189, 0
      %v263 = vsel %vm204, %v190, 0
      %v266 = vsel %vm204, %v191, 0
      %v269 = vsel %vm204, %v192, 0
      %v272 = vsel %vm204, %v193, 0
      %v275 = vsel %vm204, %v194, 0
      %v278 = vsel %vm204, %v195, 0
      %v281 = vsel %vm204, %v196, 0
      %v284 = vsel %vm204, %v197, 0
      %v287 = vsel %vm204, %v198, 0
      %v290 = vsel %vm204, %v199, 0
      %vm292 = vcmask 1042432
      %v294 = vsel %vm292, %v203, 0
      %296 = vmatprep.subr.mxu0 0.0
      %297 = vmatpush1.msra.mxu0 %v200
      %298 = vmatprep.subr.mxu0 0.0
      %299 = vmatpush1.msra.mxu0 %v201
      %300 = vmatprep.subr.mxu0 0.0
      %301 = vmatpush1.msra.mxu0 %v202
      %302 = vmatprep.subr.mxu0 0.0
      %303 = vmatpush1.msra.mxu0 %v294
      %304 = vmatprep.subr.mxu0 0.0
      %305 = vmatpush1.msra.mxu0 0.0
      %306 = vmatprep.subr.mxu0 0.0
      %307 = vmatpush1.msra.mxu0 0.0
      %308 = vmatprep.subr.mxu0 0.0
      %309 = vmatpush1.msra.mxu0 0.0
      %310 = vmatprep.subr.mxu0 0.0
      %311 = vmatpush1.msra.mxu0 0.0
      %312 = vmatprep.subr.mxu0 0.0
      %313 = vmatpush1.msra.mxu0 0.0
      %314 = vmatprep.subr.mxu0 0.0
      %315 = vmatpush1.msra.mxu0 0.0
      %316 = vmatprep.subr.mxu0 0.0
      %317 = vmatpush1.msra.mxu0 0.0
      %318 = vmatprep.subr.mxu0 0.0
      %319 = vmatpush1.msra.mxu0 0.0
      %320 = vmatprep.subr.mxu0 0.0
      %321 = vmatpush1.msra.mxu0 0.0
      %322 = vmatprep.subr.mxu0 0.0
      %323 = vmatpush1.msra.mxu0 0.0
      %324 = vmatprep.subr.mxu0 0.0
      %325 = vmatpush1.msra.mxu0 0.0
      %326 = vmatprep.subr.mxu0 0.0
      %327 = vmatpush1.msra.mxu0 0.0
      %328 = vmatprep.subr.mxu0 0.0
      %329 = vmatpush1.msra.mxu0 0.0
      %330 = vmatprep.subr.mxu0 0.0
      %331 = vmatpush1.msra.mxu0 0.0
      %332 = vmatprep.subr.mxu0 0.0
      %333 = vmatpush1.msra.mxu0 0.0
      %334 = vmatprep.subr.mxu0 0.0
      %335 = vmatpush1.msra.mxu0 0.0
      %336 = vmatprep.subr.mxu0 0.0
      %337 = vmatpush1.msra.mxu0 0.0
      %338 = vmatprep.subr.mxu0 0.0
      %339 = vmatpush1.msra.mxu0 0.0
      %340 = vmatprep.subr.mxu0 0.0
      %341 = vmatpush1.msra.mxu0 0.0
      %342 = vmatprep.subr.mxu0 0.0
      %343 = vmatpush1.msra.mxu0 0.0
      %344 = vmatprep.subr.mxu0 0.0
      %345 = vmatpush1.msra.mxu0 0.0
      %346 = vmatprep.subr.mxu0 0.0
      %347 = vmatpush1.msra.mxu0 0.0
      %348 = vmatprep.subr.mxu0 0.0
      %349 = vmatpush1.msra.mxu0 0.0
      %350 = vmatprep.subr.mxu0 0.0
      %351 = vmatpush1.msra.mxu0 0.0
      %352 = vmatprep.subr.mxu0 0.0
      %353 = vmatpush1.msra.mxu0 0.0
      %354 = vmatprep.subr.mxu0 0.0
      %355 = vmatpush1.msra.mxu0 0.0
      %356 = vmatprep.subr.mxu0 0.0
      %357 = vmatpush1.msra.mxu0 0.0
      %358 = vmatprep.subr.mxu0 0.0
      %359 = vmatpush1.msra.mxu0 0.0
      %360 = vmatprep.mubr.f32.mxu0 0.0
      %361 = vmatmul.mubr.f32.gmra.mrb[0].mxu0 %v206
      %v362 = vpop.f32.mrb[0].mxu0
      %v363 = vadd.f32 0.0, %v362
      %v364 = vpop.f32.mrb[0].mxu0
      %365 = vmatprep.mubr.f32.mxu0 0.0
      %366 = vmatmul.mubr.f32.gmra.mrb[0].mxu0 %v209
      %v367 = vpop.f32.mrb[0].mxu0
      %v368 = vadd.f32 0.0, %v367
      %v369 = vpop.f32.mrb[0].mxu0
      %370 = vmatprep.mubr.f32.mxu0 0.0
      %371 = vmatmul.mubr.f32.gmra.mrb[0].mxu0 %v212
      %v372 = vpop.f32.mrb[0].mxu0
      %v373 = vadd.f32 0.0, %v372
      %v374 = vpop.f32.mrb[0].mxu0
      %375 = vmatprep.mubr.f32.mxu0 0.0
      %376 = vmatmul.mubr.f32.gmra.mrb[0].mxu0 %v215
      %v377 = vpop.f32.mrb[0].mxu0
      %v378 = vadd.f32 0.0, %v377
      %v379 = vpop.f32.mrb[0].mxu0
      %380 = vmatprep.mubr.f32.mxu0 0.0
      %381 = vmatmul.mubr.f32.gmra.mrb[0].mxu0 %v218
      %v382 = vpop.f32.mrb[0].mxu0
      %v383 = vadd.f32 0.0, %v382
      %v384 = vpop.f32.mrb[0].mxu0
      %385 = vmatprep.mubr.f32.mxu0 0.0
      %386 = vmatmul.mubr.f32.gmra.mrb[0].mxu0 %v221
      %v387 = vpop.f32.mrb[0].mxu0
      %v388 = vadd.f32 0.0, %v387
      %v389 = vpop.f32.mrb[0].mxu0
      %390 = vmatprep.mubr.f32.mxu0 0.0
      %391 = vmatmul.mubr.f32.gmra.mrb[0].mxu0 %v224
      %v392 = vpop.f32.mrb[0].mxu0
      %v393 = vadd.f32 0.0, %v392
      %v394 = vpop.f32.mrb[0].mxu0
      %395 = vmatprep.mubr.f32.mxu0 0.0
      %396 = vmatmul.mubr.f32.gmra.mrb[0].mxu0 %v227
      %v397 = vpop.f32.mrb[0].mxu0
      %v398 = vadd.f32 0.0, %v397
      %v399 = vpop.f32.mrb[0].mxu0
      %400 = vmatprep.mubr.f32.mxu0 0.0
      %401 = vmatmul.mubr.f32.gmra.mrb[0].mxu0 %v230
      %v402 = vpop.f32.mrb[0].mxu0
      %v403 = vadd.f32 0.0, %v402
      %v404 = vpop.f32.mrb[0].mxu0
      %405 = vmatprep.mubr.f32.mxu0 0.0
      %406 = vmatmul.mubr.f32.gmra.mrb[0].mxu0 %v233
      %v407 = vpop.f32.mrb[0].mxu0
      %v408 = vadd.f32 0.0, %v407
      %v409 = vpop.f32.mrb[0].mxu0
      %410 = vmatprep.mubr.f32.mxu0 0.0
      %411 = vmatmul.mubr.f32.gmra.mrb[0].mxu0 %v236
      %v412 = vpop.f32.mrb[0].mxu0
      %v413 = vadd.f32 0.0, %v412
      %v414 = vpop.f32.mrb[0].mxu0
      %415 = vmatprep.mubr.f32.mxu0 0.0
      %416 = vmatmul.mubr.f32.gmra.mrb[0].mxu0 %v239
      %v417 = vpop.f32.mrb[0].mxu0
      %v418 = vadd.f32 0.0, %v417
      %v419 = vpop.f32.mrb[0].mxu0
      %420 = vmatprep.mubr.f32.mxu0 0.0
      %421 = vmatmul.mubr.f32.gmra.mrb[0].mxu0 %v242
      %v422 = vpop.f32.mrb[0].mxu0
      %v423 = vadd.f32 0.0, %v422
      %v424 = vpop.f32.mrb[0].mxu0
      %425 = vmatprep.mubr.f32.mxu0 0.0
      %426 = vmatmul.mubr.f32.gmra.mrb[0].mxu0 %v245
      %v427 = vpop.f32.mrb[0].mxu0
      %v428 = vadd.f32 0.0, %v427
      %v429 = vpop.f32.mrb[0].mxu0
      %430 = vmatprep.mubr.f32.mxu0 0.0
      %431 = vmatmul.mubr.f32.gmra.mrb[0].mxu0 %v248
      %v432 = vpop.f32.mrb[0].mxu0
      %v433 = vadd.f32 0.0, %v432
      %v434 = vpop.f32.mrb[0].mxu0
      %435 = vmatprep.mubr.f32.mxu0 0.0
      %436 = vmatmul.mubr.f32.gmra.mrb[0].mxu0 %v251
      %v437 = vpop.f32.mrb[0].mxu0
      %v438 = vadd.f32 0.0, %v437
      %v439 = vpop.f32.mrb[0].mxu0
      %440 = vmatprep.mubr.f32.mxu0 0.0
      %441 = vmatmul.mubr.f32.gmra.mrb[0].mxu0 %v254
      %v442 = vpop.f32.mrb[0].mxu0
      %v443 = vadd.f32 0.0, %v442
      %v444 = vpop.f32.mrb[0].mxu0
      %445 = vmatprep.mubr.f32.mxu0 0.0
      %446 = vmatmul.mubr.f32.gmra.mrb[0].mxu0 %v257
      %v447 = vpop.f32.mrb[0].mxu0
      %v448 = vadd.f32 0.0, %v447
      %v449 = vpop.f32.mrb[0].mxu0
      %450 = vmatprep.mubr.f32.mxu0 0.0
      %451 = vmatmul.mubr.f32.gmra.mrb[0].mxu0 %v260
      %v452 = vpop.f32.mrb[0].mxu0
      %v453 = vadd.f32 0.0, %v452
      %v454 = vpop.f32.mrb[0].mxu0
      %455 = vmatprep.mubr.f32.mxu0 0.0
      %456 = vmatmul.mubr.f32.gmra.mrb[0].mxu0 %v263
      %v457 = vpop.f32.mrb[0].mxu0
      %v458 = vadd.f32 0.0, %v457
      %v459 = vpop.f32.mrb[0].mxu0
      %460 = vmatprep.mubr.f32.mxu0 0.0
      %461 = vmatmul.mubr.f32.gmra.mrb[0].mxu0 %v266
      %v462 = vpop.f32.mrb[0].mxu0
      %v463 = vadd.f32 0.0, %v462
      %v464 = vpop.f32.mrb[0].mxu0
      %465 = vmatprep.mubr.f32.mxu0 0.0
      %466 = vmatmul.mubr.f32.gmra.mrb[0].mxu0 %v269
      %v467 = vpop.f32.mrb[0].mxu0
      %v468 = vadd.f32 0.0, %v467
      %v469 = vpop.f32.mrb[0].mxu0
      %470 = vmatprep.mubr.f32.mxu0 0.0
      %471 = vmatmul.mubr.f32.gmra.mrb[0].mxu0 %v272
      %v472 = vpop.f32.mrb[0].mxu0
      %v473 = vadd.f32 0.0, %v472
      %v474 = vpop.f32.mrb[0].mxu0
      %475 = vmatprep.mubr.f32.mxu0 0.0
      %476 = vmatmul.mubr.f32.gmra.mrb[0].mxu0 %v275
      %v477 = vpop.f32.mrb[0].mxu0
      %v478 = vadd.f32 0.0, %v477
      %v479 = vpop.f32.mrb[0].mxu0
      %480 = vmatprep.mubr.f32.mxu0 0.0
      %481 = vmatmul.mubr.f32.gmra.mrb[0].mxu0 %v278
      %v482 = vpop.f32.mrb[0].mxu0
      %v483 = vadd.f32 0.0, %v482
      %v484 = vpop.f32.mrb[0].mxu0
      %485 = vmatprep.mubr.f32.mxu0 0.0
      %486 = vmatmul.mubr.f32.gmra.mrb[0].mxu0 %v281
      %v487 = vpop.f32.mrb[0].mxu0
      %v488 = vadd.f32 0.0, %v487
      %v489 = vpop.f32.mrb[0].mxu0
      %490 = vmatprep.mubr.f32.mxu0 0.0
      %491 = vmatmul.mubr.f32.gmra.mrb[0].mxu0 %v284
      %v492 = vpop.f32.mrb[0].mxu0
      %v493 = vadd.f32 0.0, %v492
      %v494 = vpop.f32.mrb[0].mxu0
      %495 = vmatprep.mubr.f32.mxu0 0.0
      %496 = vmatmul.mubr.f32.gmra.mrb[0].mxu0 %v287
      %v497 = vpop.f32.mrb[0].mxu0
      %v498 = vadd.f32 0.0, %v497
      %v499 = vpop.f32.mrb[0].mxu0
      %500 = vmatprep.mubr.f32.mxu0 0.0
      %501 = vmatmul.mubr.f32.gmra.mrb[0].mxu0 %v290
      %v502 = vpop.f32.mrb[0].mxu0
      %v503 = vadd.f32 0.0, %v502
      %v504 = vpop.f32.mrb[0].mxu0
      %505 = vdwg.mxu0
      %s506 = scalar_lea.vmem %s165, 232
      %v507 = vld [vmem:[%s506] sm:$0xff]
      %v508 = vld [vmem:[%s506 + $0x8] sm:$0xff]
      %v509 = vld [vmem:[%s506 + $0x10] sm:$0xff]
      %v510 = vld [vmem:[%s506 + $0x18] sm:$0xff]
      %v511 = vld [vmem:[%s506 + $0x20] sm:$0xff]
      %v512 = vld [vmem:[%s506 + $0x28] sm:$0xff]
      %v513 = vld [vmem:[%s506 + $0x30] sm:$0xff]
      %v514 = vld [vmem:[%s506 + $0x38] sm:$0xff]
      %v515 = vld [vmem:[%s506 + $0x40] sm:$0xff]
      %v516 = vld [vmem:[%s506 + $0x48] sm:$0xff]
      %v517 = vld [vmem:[%s506 + $0x50] sm:$0xff]
      %v518 = vld [vmem:[%s506 + $0x58] sm:$0xff]
      %v519 = vld [vmem:[%s506 + $0x60] sm:$0xff]
      %v520 = vld [vmem:[%s506 + $0x68] sm:$0xff]
      %v521 = vld [vmem:[%s506 + $0x70] sm:$0xff]
      %v522 = vld [vmem:[%s506 + $0x78] sm:$0xff]
      %v523 = vld [vmem:[%s506 + $0x80] sm:$0xff]
      %v524 = vld [vmem:[%s506 + $0x88] sm:$0xff]
      %v525 = vld [vmem:[%s506 + $0x90] sm:$0xff]
      %v526 = vld [vmem:[%s506 + $0x98] sm:$0xff]
      %v527 = vld [vmem:[%s506 + $0xa0] sm:$0xff]
      %v528 = vld [vmem:[%s506 + $0xa8] sm:$0xff]
      %v529 = vld [vmem:[%s506 + $0xb0] sm:$0xff]
      %v530 = vld [vmem:[%s506 + $0xb8] sm:$0xff]
      %v531 = vld [vmem:[%s506 + $0xc0] sm:$0xff]
      %v532 = vld [vmem:[%s506 + $0xc8] sm:$0xff]
      %v533 = vld [vmem:[%s506 + $0xd0] sm:$0xff]
      %v534 = vld [vmem:[%s506 + $0xd8] sm:$0xff]
      %v535 = vld [vmem:[%s506 + $0xe0] sm:$0x1]
      %v537 = vsel %vm204, %v507, 0
      %v540 = vsel %vm204, %v508, 0
      %v543 = vsel %vm204, %v509, 0
      %v546 = vsel %vm204, %v510, 0
      %v549 = vsel %vm204, %v511, 0
      %v552 = vsel %vm204, %v512, 0
      %v555 = vsel %vm204, %v513, 0
      %v558 = vsel %vm204, %v514, 0
      %v561 = vsel %vm204, %v515, 0
      %v564 = vsel %vm204, %v516, 0
      %v567 = vsel %vm204, %v517, 0
      %v570 = vsel %vm204, %v518, 0
      %v573 = vsel %vm204, %v519, 0
      %v576 = vsel %vm204, %v520, 0
      %v579 = vsel %vm204, %v521, 0
      %v582 = vsel %vm204, %v522, 0
      %v585 = vsel %vm204, %v523, 0
      %v588 = vsel %vm204, %v524, 0
      %v591 = vsel %vm204, %v525, 0
      %v594 = vsel %vm204, %v526, 0
      %v597 = vsel %vm204, %v527, 0
      %v600 = vsel %vm204, %v528, 0
      %v603 = vsel %vm204, %v529, 0
      %v606 = vsel %vm204, %v530, 0
      %v609 = vsel %vm204, %v531, 0
      %v612 = vsel %vm204, %v532, 0
      %v615 = vsel %vm204, %v533, 0
      %v618 = vsel %vm204, %v534, 0
      %v621 = vsel %vm204, %v535, 0
      %623 = vmatprep.subr.mxu0 0.0
      %624 = vmatpush1.msra.mxu0 %v200
      %625 = vmatprep.subr.mxu0 0.0
      %626 = vmatpush1.msra.mxu0 %v201
      %627 = vmatprep.subr.mxu0 0.0
      %628 = vmatpush1.msra.mxu0 %v202
      %629 = vmatprep.subr.mxu0 0.0
      %630 = vmatpush1.msra.mxu0 %v294
      %631 = vmatprep.subr.mxu0 0.0
      %632 = vmatpush1.msra.mxu0 0.0
      %633 = vmatprep.subr.mxu0 0.0
      %634 = vmatpush1.msra.mxu0 0.0
      %635 = vmatprep.subr.mxu0 0.0
      %636 = vmatpush1.msra.mxu0 0.0
      %637 = vmatprep.subr.mxu0 0.0
      %638 = vmatpush1.msra.mxu0 0.0
      %639 = vmatprep.subr.mxu0 0.0
      %640 = vmatpush1.msra.mxu0 0.0
      %641 = vmatprep.subr.mxu0 0.0
      %642 = vmatpush1.msra.mxu0 0.0
      %643 = vmatprep.subr.mxu0 0.0
      %644 = vmatpush1.msra.mxu0 0.0
      %645 = vmatprep.subr.mxu0 0.0
      %646 = vmatpush1.msra.mxu0 0.0
      %647 = vmatprep.subr.mxu0 0.0
      %648 = vmatpush1.msra.mxu0 0.0
      %649 = vmatprep.subr.mxu0 0.0
      %650 = vmatpush1.msra.mxu0 0.0
      %651 = vmatprep.subr.mxu0 0.0
      %652 = vmatpush1.msra.mxu0 0.0
      %653 = vmatprep.subr.mxu0 0.0
      %654 = vmatpush1.msra.mxu0 0.0
      %655 = vmatprep.subr.mxu0 0.0
      %656 = vmatpush1.msra.mxu0 0.0
      %657 = vmatprep.subr.mxu0 0.0
      %658 = vmatpush1.msra.mxu0 0.0
      %659 = vmatprep.subr.mxu0 0.0
      %660 = vmatpush1.msra.mxu0 0.0
      %661 = vmatprep.subr.mxu0 0.0
      %662 = vmatpush1.msra.mxu0 0.0
      %663 = vmatprep.subr.mxu0 0.0
      %664 = vmatpush1.msra.mxu0 0.0
      %665 = vmatprep.subr.mxu0 0.0
      %666 = vmatpush1.msra.mxu0 0.0
      %667 = vmatprep.subr.mxu0 0.0
      %668 = vmatpush1.msra.mxu0 0.0
      %669 = vmatprep.subr.mxu0 0.0
      %670 = vmatpush1.msra.mxu0 0.0
      %671 = vmatprep.subr.mxu0 0.0
      %672 = vmatpush1.msra.mxu0 0.0
      %673 = vmatprep.subr.mxu0 0.0
      %674 = vmatpush1.msra.mxu0 0.0
      %675 = vmatprep.subr.mxu0 0.0
      %676 = vmatpush1.msra.mxu0 0.0
      %677 = vmatprep.subr.mxu0 0.0
      %678 = vmatpush1.msra.mxu0 0.0
      %679 = vmatprep.subr.mxu0 0.0
      %680 = vmatpush1.msra.mxu0 0.0
      %681 = vmatprep.subr.mxu0 0.0
      %682 = vmatpush1.msra.mxu0 0.0
      %683 = vmatprep.subr.mxu0 0.0
      %684 = vmatpush1.msra.mxu0 0.0
      %685 = vmatprep.subr.mxu0 0.0
      %686 = vmatpush1.msra.mxu0 0.0
      %687 = vmatprep.mubr.f32.mxu0 0.0
      %688 = vmatmul.mubr.f32.gmra.mrb[0].mxu0 %v537
      %v689 = vpop.f32.mrb[0].mxu0
      %v690 = vadd.f32 0.0, %v689
      %v691 = vpop.f32.mrb[0].mxu0
      %692 = vmatprep.mubr.f32.mxu0 0.0
      %693 = vmatmul.mubr.f32.gmra.mrb[0].mxu0 %v540
      %v694 = vpop.f32.mrb[0].mxu0
      %v695 = vadd.f32 0.0, %v694
      %v696 = vpop.f32.mrb[0].mxu0
      %697 = vmatprep.mubr.f32.mxu0 0.0
      %698 = vmatmul.mubr.f32.gmra.mrb[0].mxu0 %v543
      %v699 = vpop.f32.mrb[0].mxu0
      %v700 = vadd.f32 0.0, %v699
      %v701 = vpop.f32.mrb[0].mxu0
      %702 = vmatprep.mubr.f32.mxu0 0.0
      %703 = vmatmul.mubr.f32.gmra.mrb[0].mxu0 %v546
      %v704 = vpop.f32.mrb[0].mxu0
      %v705 = vadd.f32 0.0, %v704
      %v706 = vpop.f32.mrb[0].mxu0
      %707 = vmatprep.mubr.f32.mxu0 0.0
      %708 = vmatmul.mubr.f32.gmra.mrb[0].mxu0 %v549
      %v709 = vpop.f32.mrb[0].mxu0
      %v710 = vadd.f32 0.0, %v709
      %v711 = vpop.f32.mrb[0].mxu0
      %712 = vmatprep.mubr.f32.mxu0 0.0
      %713 = vmatmul.mubr.f32.gmra.mrb[0].mxu0 %v552
      %v714 = vpop.f32.mrb[0].mxu0
      %v715 = vadd.f32 0.0, %v714
      %v716 = vpop.f32.mrb[0].mxu0
      %717 = vmatprep.mubr.f32.mxu0 0.0
      %718 = vmatmul.mubr.f32.gmra.mrb[0].mxu0 %v555
      %v719 = vpop.f32.mrb[0].mxu0
      %v720 = vadd.f32 0.0, %v719
      %v721 = vpop.f32.mrb[0].mxu0
      %722 = vmatprep.mubr.f32.mxu0 0.0
      %723 = vmatmul.mubr.f32.gmra.mrb[0].mxu0 %v558
      %v724 = vpop.f32.mrb[0].mxu0
      %v725 = vadd.f32 0.0, %v724
      %v726 = vpop.f32.mrb[0].mxu0
      %727 = vmatprep.mubr.f32.mxu0 0.0
      %728 = vmatmul.mubr.f32.gmra.mrb[0].mxu0 %v561
      %v729 = vpop.f32.mrb[0].mxu0
      %v730 = vadd.f32 0.0, %v729
      %v731 = vpop.f32.mrb[0].mxu0
      %732 = vmatprep.mubr.f32.mxu0 0.0
      %733 = vmatmul.mubr.f32.gmra.mrb[0].mxu0 %v564
      %v734 = vpop.f32.mrb[0].mxu0
      %v735 = vadd.f32 0.0, %v734
      %v736 = vpop.f32.mrb[0].mxu0
      %737 = vmatprep.mubr.f32.mxu0 0.0
      %738 = vmatmul.mubr.f32.gmra.mrb[0].mxu0 %v567
      %v739 = vpop.f32.mrb[0].mxu0
      %v740 = vadd.f32 0.0, %v739
      %v741 = vpop.f32.mrb[0].mxu0
      %742 = vmatprep.mubr.f32.mxu0 0.0
      %743 = vmatmul.mubr.f32.gmra.mrb[0].mxu0 %v570
      %v744 = vpop.f32.mrb[0].mxu0
      %v745 = vadd.f32 0.0, %v744
      %v746 = vpop.f32.mrb[0].mxu0
      %747 = vmatprep.mubr.f32.mxu0 0.0
      %748 = vmatmul.mubr.f32.gmra.mrb[0].mxu0 %v573
      %v749 = vpop.f32.mrb[0].mxu0
      %v750 = vadd.f32 0.0, %v749
      %v751 = vpop.f32.mrb[0].mxu0
      %752 = vmatprep.mubr.f32.mxu0 0.0
      %753 = vmatmul.mubr.f32.gmra.mrb[0].mxu0 %v576
      %v754 = vpop.f32.mrb[0].mxu0
      %v755 = vadd.f32 0.0, %v754
      %v756 = vpop.f32.mrb[0].mxu0
      %757 = vmatprep.mubr.f32.mxu0 0.0
      %758 = vmatmul.mubr.f32.gmra.mrb[0].mxu0 %v579
      %v759 = vpop.f32.mrb[0].mxu0
      %v760 = vadd.f32 0.0, %v759
      %v761 = vpop.f32.mrb[0].mxu0
      %762 = vmatprep.mubr.f32.mxu0 0.0
      %763 = vmatmul.mubr.f32.gmra.mrb[0].mxu0 %v582
      %v764 = vpop.f32.mrb[0].mxu0
      %v765 = vadd.f32 0.0, %v764
      %v766 = vpop.f32.mrb[0].mxu0
      %767 = vmatprep.mubr.f32.mxu0 0.0
      %768 = vmatmul.mubr.f32.gmra.mrb[0].mxu0 %v585
      %v769 = vpop.f32.mrb[0].mxu0
      %v770 = vadd.f32 0.0, %v769
      %v771 = vpop.f32.mrb[0].mxu0
      %772 = vmatprep.mubr.f32.mxu0 0.0
      %773 = vmatmul.mubr.f32.gmra.mrb[0].mxu0 %v588
      %v774 = vpop.f32.mrb[0].mxu0
      %v775 = vadd.f32 0.0, %v774
      %v776 = vpop.f32.mrb[0].mxu0
      %777 = vmatprep.mubr.f32.mxu0 0.0
      %778 = vmatmul.mubr.f32.gmra.mrb[0].mxu0 %v591
      %v779 = vpop.f32.mrb[0].mxu0
      %v780 = vadd.f32 0.0, %v779
      %v781 = vpop.f32.mrb[0].mxu0
      %782 = vmatprep.mubr.f32.mxu0 0.0
      %783 = vmatmul.mubr.f32.gmra.mrb[0].mxu0 %v594
      %v784 = vpop.f32.mrb[0].mxu0
      %v785 = vadd.f32 0.0, %v784
      %v786 = vpop.f32.mrb[0].mxu0
      %787 = vmatprep.mubr.f32.mxu0 0.0
      %788 = vmatmul.mubr.f32.gmra.mrb[0].mxu0 %v597
      %v789 = vpop.f32.mrb[0].mxu0
      %v790 = vadd.f32 0.0, %v789
      %v791 = vpop.f32.mrb[0].mxu0
      %792 = vmatprep.mubr.f32.mxu0 0.0
      %793 = vmatmul.mubr.f32.gmra.mrb[0].mxu0 %v600
      %v794 = vpop.f32.mrb[0].mxu0
      %v795 = vadd.f32 0.0, %v794
      %v796 = vpop.f32.mrb[0].mxu0
      %797 = vmatprep.mubr.f32.mxu0 0.0
      %798 = vmatmul.mubr.f32.gmra.mrb[0].mxu0 %v603
      %v799 = vpop.f32.mrb[0].mxu0
      %v800 = vadd.f32 0.0, %v799
      %v801 = vpop.f32.mrb[0].mxu0
      %802 = vmatprep.mubr.f32.mxu0 0.0
      %803 = vmatmul.mubr.f32.gmra.mrb[0].mxu0 %v606
      %v804 = vpop.f32.mrb[0].mxu0
      %v805 = vadd.f32 0.0, %v804
      %v806 = vpop.f32.mrb[0].mxu0
      %807 = vmatprep.mubr.f32.mxu0 0.0
      %808 = vmatmul.mubr.f32.gmra.mrb[0].mxu0 %v609
      %v809 = vpop.f32.mrb[0].mxu0
      %v810 = vadd.f32 0.0, %v809
      %v811 = vpop.f32.mrb[0].mxu0
      %812 = vmatprep.mubr.f32.mxu0 0.0
      %813 = vmatmul.mubr.f32.gmra.mrb[0].mxu0 %v612
      %v814 = vpop.f32.mrb[0].mxu0
      %v815 = vadd.f32 0.0, %v814
      %v816 = vpop.f32.mrb[0].mxu0
      %817 = vmatprep.mubr.f32.mxu0 0.0
      %818 = vmatmul.mubr.f32.gmra.mrb[0].mxu0 %v615
      %v819 = vpop.f32.mrb[0].mxu0
      %v820 = vadd.f32 0.0, %v819
      %v821 = vpop.f32.mrb[0].mxu0
      %822 = vmatprep.mubr.f32.mxu0 0.0
      %823 = vmatmul.mubr.f32.gmra.mrb[0].mxu0 %v618
      %v824 = vpop.f32.mrb[0].mxu0
      %v825 = vadd.f32 0.0, %v824
      %v826 = vpop.f32.mrb[0].mxu0
      %827 = vmatprep.mubr.f32.mxu0 0.0
      %828 = vmatmul.mubr.f32.gmra.mrb[0].mxu0 %v621
      %v829 = vpop.f32.mrb[0].mxu0
      %v830 = vadd.f32 0.0, %v829
      %v831 = vpop.f32.mrb[0].mxu0
      %832 = vdwg.mxu0
      %v833 = vmax.f32 %v363, %v690
      %v834 = vmax.f32 %v368, %v695
      %v835 = vmax.f32 %v373, %v700
      %v836 = vmax.f32 %v378, %v705
      %v837 = vmax.f32 %v383, %v710
      %v838 = vmax.f32 %v388, %v715
      %v839 = vmax.f32 %v393, %v720
      %v840 = vmax.f32 %v398, %v725
      %v841 = vmax.f32 %v403, %v730
      %v842 = vmax.f32 %v408, %v735
      %v843 = vmax.f32 %v413, %v740
      %v844 = vmax.f32 %v418, %v745
      %v845 = vmax.f32 %v423, %v750
      %v846 = vmax.f32 %v428, %v755
      %v847 = vmax.f32 %v433, %v760
      %v848 = vmax.f32 %v438, %v765
      %v849 = vmax.f32 %v443, %v770
      %v850 = vmax.f32 %v448, %v775
      %v851 = vmax.f32 %v453, %v780
      %v852 = vmax.f32 %v458, %v785
      %v853 = vmax.f32 %v463, %v790
      %v854 = vmax.f32 %v468, %v795
      %v855 = vmax.f32 %v473, %v800
      %v856 = vmax.f32 %v478, %v805
      %v857 = vmax.f32 %v483, %v810
      %v858 = vmax.f32 %v488, %v815
      %v859 = vmax.f32 %v493, %v820
      %v860 = vmax.f32 %v498, %v825
      %v861 = vmax.f32 %v503, %v830
      %s862 = scalar_lea.vmem %s165, 464
      %v863 = vld [vmem:[%s862] sm:$0xff]
      %v864 = vld [vmem:[%s862 + $0x8] sm:$0xff]
      %v865 = vld [vmem:[%s862 + $0x10] sm:$0xff]
      %v866 = vld [vmem:[%s862 + $0x18] sm:$0xff]
      %v867 = vld [vmem:[%s862 + $0x20] sm:$0xff]
      %v868 = vld [vmem:[%s862 + $0x28] sm:$0xff]
      %v869 = vld [vmem:[%s862 + $0x30] sm:$0xff]
      %v870 = vld [vmem:[%s862 + $0x38] sm:$0xff]
      %v871 = vld [vmem:[%s862 + $0x40] sm:$0xff]
      %v872 = vld [vmem:[%s862 + $0x48] sm:$0xff]
      %v873 = vld [vmem:[%s862 + $0x50] sm:$0xff]
      %v874 = vld [vmem:[%s862 + $0x58] sm:$0xff]
      %v875 = vld [vmem:[%s862 + $0x60] sm:$0xff]
      %v876 = vld [vmem:[%s862 + $0x68] sm:$0xff]
      %v877 = vld [vmem:[%s862 + $0x70] sm:$0xff]
      %v878 = vld [vmem:[%s862 + $0x78] sm:$0xff]
      %v879 = vld [vmem:[%s862 + $0x80] sm:$0xff]
      %v880 = vld [vmem:[%s862 + $0x88] sm:$0xff]
      %v881 = vld [vmem:[%s862 + $0x90] sm:$0xff]
      %v882 = vld [vmem:[%s862 + $0x98] sm:$0xff]
      %v883 = vld [vmem:[%s862 + $0xa0] sm:$0xff]
      %v884 = vld [vmem:[%s862 + $0xa8] sm:$0xff]
      %v885 = vld [vmem:[%s862 + $0xb0] sm:$0xff]
      %v886 = vld [vmem:[%s862 + $0xb8] sm:$0xff]
      %v887 = vld [vmem:[%s862 + $0xc0] sm:$0xff]
      %v888 = vld [vmem:[%s862 + $0xc8] sm:$0xff]
      %v889 = vld [vmem:[%s862 + $0xd0] sm:$0xff]
      %v890 = vld [vmem:[%s862 + $0xd8] sm:$0xff]
      %v891 = vld [vmem:[%s862 + $0xe0] sm:$0x1]
      %v893 = vsel %vm204, %v863, 0
      %v896 = vsel %vm204, %v864, 0
      %v899 = vsel %vm204, %v865, 0
      %v902 = vsel %vm204, %v866, 0
      %v905 = vsel %vm204, %v867, 0
      %v908 = vsel %vm204, %v868, 0
      %v911 = vsel %vm204, %v869, 0
      %v914 = vsel %vm204, %v870, 0
      %v917 = vsel %vm204, %v871, 0
      %v920 = vsel %vm204, %v872, 0
      %v923 = vsel %vm204, %v873, 0
      %v926 = vsel %vm204, %v874, 0
      %v929 = vsel %vm204, %v875, 0
      %v932 = vsel %vm204, %v876, 0
      %v935 = vsel %vm204, %v877, 0
      %v938 = vsel %vm204, %v878, 0
      %v941 = vsel %vm204, %v879, 0
      %v944 = vsel %vm204, %v880, 0
      %v947 = vsel %vm204, %v881, 0
      %v950 = vsel %vm204, %v882, 0
      %v953 = vsel %vm204, %v883, 0
      %v956 = vsel %vm204, %v884, 0
      %v959 = vsel %vm204, %v885, 0
      %v962 = vsel %vm204, %v886, 0
      %v965 = vsel %vm204, %v887, 0
      %v968 = vsel %vm204, %v888, 0
      %v971 = vsel %vm204, %v889, 0
      %v974 = vsel %vm204, %v890, 0
      %v977 = vsel %vm204, %v891, 0
      %979 = vmatprep.subr.mxu0 0.0
      %980 = vmatpush1.msra.mxu0 %v200
      %981 = vmatprep.subr.mxu0 0.0
      %982 = vmatpush1.msra.mxu0 %v201
      %983 = vmatprep.subr.mxu0 0.0
      %984 = vmatpush1.msra.mxu0 %v202
      %985 = vmatprep.subr.mxu0 0.0
      %986 = vmatpush1.msra.mxu0 %v294
      %987 = vmatprep.subr.mxu0 0.0
      %988 = vmatpush1.msra.mxu0 0.0
      %989 = vmatprep.subr.mxu0 0.0
      %990 = vmatpush1.msra.mxu0 0.0
      %991 = vmatprep.subr.mxu0 0.0
      %992 = vmatpush1.msra.mxu0 0.0
      %993 = vmatprep.subr.mxu0 0.0
      %994 = vmatpush1.msra.mxu0 0.0
      %995 = vmatprep.subr.mxu0 0.0
      %996 = vmatpush1.msra.mxu0 0.0
      %997 = vmatprep.subr.mxu0 0.0
      %998 = vmatpush1.msra.mxu0 0.0
      %999 = vmatprep.subr.mxu0 0.0
      %1000 = vmatpush1.msra.mxu0 0.0
      %1001 = vmatprep.subr.mxu0 0.0
      %1002 = vmatpush1.msra.mxu0 0.0
      %1003 = vmatprep.subr.mxu0 0.0
      %1004 = vmatpush1.msra.mxu0 0.0
      %1005 = vmatprep.subr.mxu0 0.0
      %1006 = vmatpush1.msra.mxu0 0.0
      %1007 = vmatprep.subr.mxu0 0.0
      %1008 = vmatpush1.msra.mxu0 0.0
      %1009 = vmatprep.subr.mxu0 0.0
      %1010 = vmatpush1.msra.mxu0 0.0
      %1011 = vmatprep.subr.mxu0 0.0
      %1012 = vmatpush1.msra.mxu0 0.0
      %1013 = vmatprep.subr.mxu0 0.0
      %1014 = vmatpush1.msra.mxu0 0.0
      %1015 = vmatprep.subr.mxu0 0.0
      %1016 = vmatpush1.msra.mxu0 0.0
      %1017 = vmatprep.subr.mxu0 0.0
      %1018 = vmatpush1.msra.mxu0 0.0
      %1019 = vmatprep.subr.mxu0 0.0
      %1020 = vmatpush1.msra.mxu0 0.0
      %1021 = vmatprep.subr.mxu0 0.0
      %1022 = vmatpush1.msra.mxu0 0.0
      %1023 = vmatprep.subr.mxu0 0.0
      %1024 = vmatpush1.msra.mxu0 0.0
      %1025 = vmatprep.subr.mxu0 0.0
      %1026 = vmatpush1.msra.mxu0 0.0
      %1027 = vmatprep.subr.mxu0 0.0
      %1028 = vmatpush1.msra.mxu0 0.0
      %1029 = vmatprep.subr.mxu0 0.0
      %1030 = vmatpush1.msra.mxu0 0.0
      %1031 = vmatprep.subr.mxu0 0.0
      %1032 = vmatpush1.msra.mxu0 0.0
      %1033 = vmatprep.subr.mxu0 0.0
      %1034 = vmatpush1.msra.mxu0 0.0
      %1035 = vmatprep.subr.mxu0 0.0
      %1036 = vmatpush1.msra.mxu0 0.0
      %1037 = vmatprep.subr.mxu0 0.0
      %1038 = vmatpush1.msra.mxu0 0.0
      %1039 = vmatprep.subr.mxu0 0.0
      %1040 = vmatpush1.msra.mxu0 0.0
      %1041 = vmatprep.subr.mxu0 0.0
      %1042 = vmatpush1.msra.mxu0 0.0
      %1043 = vmatprep.mubr.f32.mxu0 0.0
      %1044 = vmatmul.mubr.f32.gmra.mrb[0].mxu0 %v893
      %v1045 = vpop.f32.mrb[0].mxu0
      %v1046 = vadd.f32 0.0, %v1045
      %v1047 = vpop.f32.mrb[0].mxu0
      %1048 = vmatprep.mubr.f32.mxu0 0.0
      %1049 = vmatmul.mubr.f32.gmra.mrb[0].mxu0 %v896
      %v1050 = vpop.f32.mrb[0].mxu0
      %v1051 = vadd.f32 0.0, %v1050
      %v1052 = vpop.f32.mrb[0].mxu0
      %1053 = vmatprep.mubr.f32.mxu0 0.0
      %1054 = vmatmul.mubr.f32.gmra.mrb[0].mxu0 %v899
      %v1055 = vpop.f32.mrb[0].mxu0
      %v1056 = vadd.f32 0.0, %v1055
      %v1057 = vpop.f32.mrb[0].mxu0
      %1058 = vmatprep.mubr.f32.mxu0 0.0
      %1059 = vmatmul.mubr.f32.gmra.mrb[0].mxu0 %v902
      %v1060 = vpop.f32.mrb[0].mxu0
      %v1061 = vadd.f32 0.0, %v1060
      %v1062 = vpop.f32.mrb[0].mxu0
      %1063 = vmatprep.mubr.f32.mxu0 0.0
      %1064 = vmatmul.mubr.f32.gmra.mrb[0].mxu0 %v905
      %v1065 = vpop.f32.mrb[0].mxu0
      %v1066 = vadd.f32 0.0, %v1065
      %v1067 = vpop.f32.mrb[0].mxu0
      %1068 = vmatprep.mubr.f32.mxu0 0.0
      %1069 = vmatmul.mubr.f32.gmra.mrb[0].mxu0 %v908
      %v1070 = vpop.f32.mrb[0].mxu0
      %v1071 = vadd.f32 0.0, %v1070
      %v1072 = vpop.f32.mrb[0].mxu0
      %1073 = vmatprep.mubr.f32.mxu0 0.0
      %1074 = vmatmul.mubr.f32.gmra.mrb[0].mxu0 %v911
      %v1075 = vpop.f32.mrb[0].mxu0
      %v1076 = vadd.f32 0.0, %v1075
      %v1077 = vpop.f32.mrb[0].mxu0
      %1078 = vmatprep.mubr.f32.mxu0 0.0
      %1079 = vmatmul.mubr.f32.gmra.mrb[0].mxu0 %v914
      %v1080 = vpop.f32.mrb[0].mxu0
      %v1081 = vadd.f32 0.0, %v1080
      %v1082 = vpop.f32.mrb[0].mxu0
      %1083 = vmatprep.mubr.f32.mxu0 0.0
      %1084 = vmatmul.mubr.f32.gmra.mrb[0].mxu0 %v917
      %v1085 = vpop.f32.mrb[0].mxu0
      %v1086 = vadd.f32 0.0, %v1085
      %v1087 = vpop.f32.mrb[0].mxu0
      %1088 = vmatprep.mubr.f32.mxu0 0.0
      %1089 = vmatmul.mubr.f32.gmra.mrb[0].mxu0 %v920
      %v1090 = vpop.f32.mrb[0].mxu0
      %v1091 = vadd.f32 0.0, %v1090
      %v1092 = vpop.f32.mrb[0].mxu0
      %1093 = vmatprep.mubr.f32.mxu0 0.0
      %1094 = vmatmul.mubr.f32.gmra.mrb[0].mxu0 %v923
      %v1095 = vpop.f32.mrb[0].mxu0
      %v1096 = vadd.f32 0.0, %v1095
      %v1097 = vpop.f32.mrb[0].mxu0
      %1098 = vmatprep.mubr.f32.mxu0 0.0
      %1099 = vmatmul.mubr.f32.gmra.mrb[0].mxu0 %v926
      %v1100 = vpop.f32.mrb[0].mxu0
      %v1101 = vadd.f32 0.0, %v1100
      %v1102 = vpop.f32.mrb[0].mxu0
      %1103 = vmatprep.mubr.f32.mxu0 0.0
      %1104 = vmatmul.mubr.f32.gmra.mrb[0].mxu0 %v929
      %v1105 = vpop.f32.mrb[0].mxu0
      %v1106 = vadd.f32 0.0, %v1105
      %v1107 = vpop.f32.mrb[0].mxu0
      %1108 = vmatprep.mubr.f32.mxu0 0.0
      %1109 = vmatmul.mubr.f32.gmra.mrb[0].mxu0 %v932
      %v1110 = vpop.f32.mrb[0].mxu0
      %v1111 = vadd.f32 0.0, %v1110
      %v1112 = vpop.f32.mrb[0].mxu0
      %1113 = vmatprep.mubr.f32.mxu0 0.0
      %1114 = vmatmul.mubr.f32.gmra.mrb[0].mxu0 %v935
      %v1115 = vpop.f32.mrb[0].mxu0
      %v1116 = vadd.f32 0.0, %v1115
      %v1117 = vpop.f32.mrb[0].mxu0
      %1118 = vmatprep.mubr.f32.mxu0 0.0
      %1119 = vmatmul.mubr.f32.gmra.mrb[0].mxu0 %v938
      %v1120 = vpop.f32.mrb[0].mxu0
      %v1121 = vadd.f32 0.0, %v1120
      %v1122 = vpop.f32.mrb[0].mxu0
      %1123 = vmatprep.mubr.f32.mxu0 0.0
      %1124 = vmatmul.mubr.f32.gmra.mrb[0].mxu0 %v941
      %v1125 = vpop.f32.mrb[0].mxu0
      %v1126 = vadd.f32 0.0, %v1125
      %v1127 = vpop.f32.mrb[0].mxu0
      %1128 = vmatprep.mubr.f32.mxu0 0.0
      %1129 = vmatmul.mubr.f32.gmra.mrb[0].mxu0 %v944
      %v1130 = vpop.f32.mrb[0].mxu0
      %v1131 = vadd.f32 0.0, %v1130
      %v1132 = vpop.f32.mrb[0].mxu0
      %1133 = vmatprep.mubr.f32.mxu0 0.0
      %1134 = vmatmul.mubr.f32.gmra.mrb[0].mxu0 %v947
      %v1135 = vpop.f32.mrb[0].mxu0
      %v1136 = vadd.f32 0.0, %v1135
      %v1137 = vpop.f32.mrb[0].mxu0
      %1138 = vmatprep.mubr.f32.mxu0 0.0
      %1139 = vmatmul.mubr.f32.gmra.mrb[0].mxu0 %v950
      %v1140 = vpop.f32.mrb[0].mxu0
      %v1141 = vadd.f32 0.0, %v1140
      %v1142 = vpop.f32.mrb[0].mxu0
      %1143 = vmatprep.mubr.f32.mxu0 0.0
      %1144 = vmatmul.mubr.f32.gmra.mrb[0].mxu0 %v953
      %v1145 = vpop.f32.mrb[0].mxu0
      %v1146 = vadd.f32 0.0, %v1145
      %v1147 = vpop.f32.mrb[0].mxu0
      %1148 = vmatprep.mubr.f32.mxu0 0.0
      %1149 = vmatmul.mubr.f32.gmra.mrb[0].mxu0 %v956
      %v1150 = vpop.f32.mrb[0].mxu0
      %v1151 = vadd.f32 0.0, %v1150
      %v1152 = vpop.f32.mrb[0].mxu0
      %1153 = vmatprep.mubr.f32.mxu0 0.0
      %1154 = vmatmul.mubr.f32.gmra.mrb[0].mxu0 %v959
      %v1155 = vpop.f32.mrb[0].mxu0
      %v1156 = vadd.f32 0.0, %v1155
      %v1157 = vpop.f32.mrb[0].mxu0
      %1158 = vmatprep.mubr.f32.mxu0 0.0
      %1159 = vmatmul.mubr.f32.gmra.mrb[0].mxu0 %v962
      %v1160 = vpop.f32.mrb[0].mxu0
      %v1161 = vadd.f32 0.0, %v1160
      %v1162 = vpop.f32.mrb[0].mxu0
      %1163 = vmatprep.mubr.f32.mxu0 0.0
      %1164 = vmatmul.mubr.f32.gmra.mrb[0].mxu0 %v965
      %v1165 = vpop.f32.mrb[0].mxu0
      %v1166 = vadd.f32 0.0, %v1165
      %v1167 = vpop.f32.mrb[0].mxu0
      %1168 = vmatprep.mubr.f32.mxu0 0.0
      %1169 = vmatmul.mubr.f32.gmra.mrb[0].mxu0 %v968
      %v1170 = vpop.f32.mrb[0].mxu0
      %v1171 = vadd.f32 0.0, %v1170
      %v1172 = vpop.f32.mrb[0].mxu0
      %1173 = vmatprep.mubr.f32.mxu0 0.0
      %1174 = vmatmul.mubr.f32.gmra.mrb[0].mxu0 %v971
      %v1175 = vpop.f32.mrb[0].mxu0
      %v1176 = vadd.f32 0.0, %v1175
      %v1177 = vpop.f32.mrb[0].mxu0
      %1178 = vmatprep.mubr.f32.mxu0 0.0
      %1179 = vmatmul.mubr.f32.gmra.mrb[0].mxu0 %v974
      %v1180 = vpop.f32.mrb[0].mxu0
      %v1181 = vadd.f32 0.0, %v1180
      %v1182 = vpop.f32.mrb[0].mxu0
      %1183 = vmatprep.mubr.f32.mxu0 0.0
      %1184 = vmatmul.mubr.f32.gmra.mrb[0].mxu0 %v977
      %v1185 = vpop.f32.mrb[0].mxu0
      %v1186 = vadd.f32 0.0, %v1185
      %v1187 = vpop.f32.mrb[0].mxu0
      %1188 = vdwg.mxu0
      %v1189 = vmax.f32 %v833, %v1046
      %v1190 = vmax.f32 %v834, %v1051
      %v1191 = vmax.f32 %v835, %v1056
      %v1192 = vmax.f32 %v836, %v1061
      %v1193 = vmax.f32 %v837, %v1066
      %v1194 = vmax.f32 %v838, %v1071
      %v1195 = vmax.f32 %v839, %v1076
      %v1196 = vmax.f32 %v840, %v1081
      %v1197 = vmax.f32 %v841, %v1086
      %v1198 = vmax.f32 %v842, %v1091
      %v1199 = vmax.f32 %v843, %v1096
      %v1200 = vmax.f32 %v844, %v1101
      %v1201 = vmax.f32 %v845, %v1106
      %v1202 = vmax.f32 %v846, %v1111
      %v1203 = vmax.f32 %v847, %v1116
      %v1204 = vmax.f32 %v848, %v1121
      %v1205 = vmax.f32 %v849, %v1126
      %v1206 = vmax.f32 %v850, %v1131
      %v1207 = vmax.f32 %v851, %v1136
      %v1208 = vmax.f32 %v852, %v1141
      %v1209 = vmax.f32 %v853, %v1146
      %v1210 = vmax.f32 %v854, %v1151
      %v1211 = vmax.f32 %v855, %v1156
      %v1212 = vmax.f32 %v856, %v1161
      %v1213 = vmax.f32 %v857, %v1166
      %v1214 = vmax.f32 %v858, %v1171
      %v1215 = vmax.f32 %v859, %v1176
      %v1216 = vmax.f32 %v860, %v1181
      %v1217 = vmax.f32 %v861, %v1186
      %s1218 = scalar_lea.vmem %s165, 696
      %v1219 = vld [vmem:[%s1218] sm:$0xff]
      %v1220 = vld [vmem:[%s1218 + $0x8] sm:$0xff]
      %v1221 = vld [vmem:[%s1218 + $0x10] sm:$0xff]
      %v1222 = vld [vmem:[%s1218 + $0x18] sm:$0xff]
      %v1223 = vld [vmem:[%s1218 + $0x20] sm:$0xff]
      %v1224 = vld [vmem:[%s1218 + $0x28] sm:$0xff]
      %v1225 = vld [vmem:[%s1218 + $0x30] sm:$0xff]
      %v1226 = vld [vmem:[%s1218 + $0x38] sm:$0xff]
      %v1227 = vld [vmem:[%s1218 + $0x40] sm:$0xff]
      %v1228 = vld [vmem:[%s1218 + $0x48] sm:$0xff]
      %v1229 = vld [vmem:[%s1218 + $0x50] sm:$0xff]
      %v1230 = vld [vmem:[%s1218 + $0x58] sm:$0xff]
      %v1231 = vld [vmem:[%s1218 + $0x60] sm:$0xff]
      %v1232 = vld [vmem:[%s1218 + $0x68] sm:$0xff]
      %v1233 = vld [vmem:[%s1218 + $0x70] sm:$0xff]
      %v1234 = vld [vmem:[%s1218 + $0x78] sm:$0xff]
      %v1235 = vld [vmem:[%s1218 + $0x80] sm:$0xff]
      %v1236 = vld [vmem:[%s1218 + $0x88] sm:$0xff]
      %v1237 = vld [vmem:[%s1218 + $0x90] sm:$0xff]
      %v1238 = vld [vmem:[%s1218 + $0x98] sm:$0xff]
      %v1239 = vld [vmem:[%s1218 + $0xa0] sm:$0xff]
      %v1240 = vld [vmem:[%s1218 + $0xa8] sm:$0xff]
      %v1241 = vld [vmem:[%s1218 + $0xb0] sm:$0xff]
      %v1242 = vld [vmem:[%s1218 + $0xb8] sm:$0xff]
      %v1243 = vld [vmem:[%s1218 + $0xc0] sm:$0xff]
      %v1244 = vld [vmem:[%s1218 + $0xc8] sm:$0xff]
      %v1245 = vld [vmem:[%s1218 + $0xd0] sm:$0xff]
      %v1246 = vld [vmem:[%s1218 + $0xd8] sm:$0xff]
      %v1247 = vld [vmem:[%s1218 + $0xe0] sm:$0x1]
      %v1249 = vsel %vm204, %v1219, 0
      %v1252 = vsel %vm204, %v1220, 0
      %v1255 = vsel %vm204, %v1221, 0
      %v1258 = vsel %vm204, %v1222, 0
      %v1261 = vsel %vm204, %v1223, 0
      %v1264 = vsel %vm204, %v1224, 0
      %v1267 = vsel %vm204, %v1225, 0
      %v1270 = vsel %vm204, %v1226, 0
      %v1273 = vsel %vm204, %v1227, 0
      %v1276 = vsel %vm204, %v1228, 0
      %v1279 = vsel %vm204, %v1229, 0
      %v1282 = vsel %vm204, %v1230, 0
      %v1285 = vsel %vm204, %v1231, 0
      %v1288 = vsel %vm204, %v1232, 0
      %v1291 = vsel %vm204, %v1233, 0
      %v1294 = vsel %vm204, %v1234, 0
      %v1297 = vsel %vm204, %v1235, 0
      %v1300 = vsel %vm204, %v1236, 0
      %v1303 = vsel %vm204, %v1237, 0
      %v1306 = vsel %vm204, %v1238, 0
      %v1309 = vsel %vm204, %v1239, 0
      %v1312 = vsel %vm204, %v1240, 0
      %v1315 = vsel %vm204, %v1241, 0
      %v1318 = vsel %vm204, %v1242, 0
      %v1321 = vsel %vm204, %v1243, 0
      %v1324 = vsel %vm204, %v1244, 0
      %v1327 = vsel %vm204, %v1245, 0
      %v1330 = vsel %vm204, %v1246, 0
      %v1333 = vsel %vm204, %v1247, 0
      %1335 = vmatprep.subr.mxu0 0.0
      %1336 = vmatpush1.msra.mxu0 %v200
      %1337 = vmatprep.subr.mxu0 0.0
      %1338 = vmatpush1.msra.mxu0 %v201
      %1339 = vmatprep.subr.mxu0 0.0
      %1340 = vmatpush1.msra.mxu0 %v202
      %1341 = vmatprep.subr.mxu0 0.0
      %1342 = vmatpush1.msra.mxu0 %v294
      %1343 = vmatprep.subr.mxu0 0.0
      %1344 = vmatpush1.msra.mxu0 0.0
      %1345 = vmatprep.subr.mxu0 0.0
      %1346 = vmatpush1.msra.mxu0 0.0
      %1347 = vmatprep.subr.mxu0 0.0
      %1348 = vmatpush1.msra.mxu0 0.0
      %1349 = vmatprep.subr.mxu0 0.0
      %1350 = vmatpush1.msra.mxu0 0.0
      %1351 = vmatprep.subr.mxu0 0.0
      %1352 = vmatpush1.msra.mxu0 0.0
      %1353 = vmatprep.subr.mxu0 0.0
      %1354 = vmatpush1.msra.mxu0 0.0
      %1355 = vmatprep.subr.mxu0 0.0
      %1356 = vmatpush1.msra.mxu0 0.0
      %1357 = vmatprep.subr.mxu0 0.0
      %1358 = vmatpush1.msra.mxu0 0.0
      %1359 = vmatprep.subr.mxu0 0.0
      %1360 = vmatpush1.msra.mxu0 0.0
      %1361 = vmatprep.subr.mxu0 0.0
      %1362 = vmatpush1.msra.mxu0 0.0
      %1363 = vmatprep.subr.mxu0 0.0
      %1364 = vmatpush1.msra.mxu0 0.0
      %1365 = vmatprep.subr.mxu0 0.0
      %1366 = vmatpush1.msra.mxu0 0.0
      %1367 = vmatprep.subr.mxu0 0.0
      %1368 = vmatpush1.msra.mxu0 0.0
      %1369 = vmatprep.subr.mxu0 0.0
      %1370 = vmatpush1.msra.mxu0 0.0
      %1371 = vmatprep.subr.mxu0 0.0
      %1372 = vmatpush1.msra.mxu0 0.0
      %1373 = vmatprep.subr.mxu0 0.0
      %1374 = vmatpush1.msra.mxu0 0.0
      %1375 = vmatprep.subr.mxu0 0.0
      %1376 = vmatpush1.msra.mxu0 0.0
      %1377 = vmatprep.subr.mxu0 0.0
      %1378 = vmatpush1.msra.mxu0 0.0
      %1379 = vmatprep.subr.mxu0 0.0
      %1380 = vmatpush1.msra.mxu0 0.0
      %1381 = vmatprep.subr.mxu0 0.0
      %1382 = vmatpush1.msra.mxu0 0.0
      %1383 = vmatprep.subr.mxu0 0.0
      %1384 = vmatpush1.msra.mxu0 0.0
      %1385 = vmatprep.subr.mxu0 0.0
      %1386 = vmatpush1.msra.mxu0 0.0
      %1387 = vmatprep.subr.mxu0 0.0
      %1388 = vmatpush1.msra.mxu0 0.0
      %1389 = vmatprep.subr.mxu0 0.0
      %1390 = vmatpush1.msra.mxu0 0.0
      %1391 = vmatprep.subr.mxu0 0.0
      %1392 = vmatpush1.msra.mxu0 0.0
      %1393 = vmatprep.subr.mxu0 0.0
      %1394 = vmatpush1.msra.mxu0 0.0
      %1395 = vmatprep.subr.mxu0 0.0
      %1396 = vmatpush1.msra.mxu0 0.0
      %1397 = vmatprep.subr.mxu0 0.0
      %1398 = vmatpush1.msra.mxu0 0.0
      %1399 = vmatprep.mubr.f32.mxu0 0.0
      %1400 = vmatmul.mubr.f32.gmra.mrb[0].mxu0 %v1249
      %v1401 = vpop.f32.mrb[0].mxu0
      %v1402 = vadd.f32 0.0, %v1401
      %v1403 = vpop.f32.mrb[0].mxu0
      %1404 = vmatprep.mubr.f32.mxu0 0.0
      %1405 = vmatmul.mubr.f32.gmra.mrb[0].mxu0 %v1252
      %v1406 = vpop.f32.mrb[0].mxu0
      %v1407 = vadd.f32 0.0, %v1406
      %v1408 = vpop.f32.mrb[0].mxu0
      %1409 = vmatprep.mubr.f32.mxu0 0.0
      %1410 = vmatmul.mubr.f32.gmra.mrb[0].mxu0 %v1255
      %v1411 = vpop.f32.mrb[0].mxu0
      %v1412 = vadd.f32 0.0, %v1411
      %v1413 = vpop.f32.mrb[0].mxu0
      %1414 = vmatprep.mubr.f32.mxu0 0.0
      %1415 = vmatmul.mubr.f32.gmra.mrb[0].mxu0 %v1258
      %v1416 = vpop.f32.mrb[0].mxu0
      %v1417 = vadd.f32 0.0, %v1416
      %v1418 = vpop.f32.mrb[0].mxu0
      %1419 = vmatprep.mubr.f32.mxu0 0.0
      %1420 = vmatmul.mubr.f32.gmra.mrb[0].mxu0 %v1261
      %v1421 = vpop.f32.mrb[0].mxu0
      %v1422 = vadd.f32 0.0, %v1421
      %v1423 = vpop.f32.mrb[0].mxu0
      %1424 = vmatprep.mubr.f32.mxu0 0.0
      %1425 = vmatmul.mubr.f32.gmra.mrb[0].mxu0 %v1264
      %v1426 = vpop.f32.mrb[0].mxu0
      %v1427 = vadd.f32 0.0, %v1426
      %v1428 = vpop.f32.mrb[0].mxu0
      %1429 = vmatprep.mubr.f32.mxu0 0.0
      %1430 = vmatmul.mubr.f32.gmra.mrb[0].mxu0 %v1267
      %v1431 = vpop.f32.mrb[0].mxu0
      %v1432 = vadd.f32 0.0, %v1431
      %v1433 = vpop.f32.mrb[0].mxu0
      %1434 = vmatprep.mubr.f32.mxu0 0.0
      %1435 = vmatmul.mubr.f32.gmra.mrb[0].mxu0 %v1270
      %v1436 = vpop.f32.mrb[0].mxu0
      %v1437 = vadd.f32 0.0, %v1436
      %v1438 = vpop.f32.mrb[0].mxu0
      %1439 = vmatprep.mubr.f32.mxu0 0.0
      %1440 = vmatmul.mubr.f32.gmra.mrb[0].mxu0 %v1273
      %v1441 = vpop.f32.mrb[0].mxu0
      %v1442 = vadd.f32 0.0, %v1441
      %v1443 = vpop.f32.mrb[0].mxu0
      %1444 = vmatprep.mubr.f32.mxu0 0.0
      %1445 = vmatmul.mubr.f32.gmra.mrb[0].mxu0 %v1276
      %v1446 = vpop.f32.mrb[0].mxu0
      %v1447 = vadd.f32 0.0, %v1446
      %v1448 = vpop.f32.mrb[0].mxu0
      %1449 = vmatprep.mubr.f32.mxu0 0.0
      %1450 = vmatmul.mubr.f32.gmra.mrb[0].mxu0 %v1279
      %v1451 = vpop.f32.mrb[0].mxu0
      %v1452 = vadd.f32 0.0, %v1451
      %v1453 = vpop.f32.mrb[0].mxu0
      %1454 = vmatprep.mubr.f32.mxu0 0.0
      %1455 = vmatmul.mubr.f32.gmra.mrb[0].mxu0 %v1282
      %v1456 = vpop.f32.mrb[0].mxu0
      %v1457 = vadd.f32 0.0, %v1456
      %v1458 = vpop.f32.mrb[0].mxu0
      %1459 = vmatprep.mubr.f32.mxu0 0.0
      %1460 = vmatmul.mubr.f32.gmra.mrb[0].mxu0 %v1285
      %v1461 = vpop.f32.mrb[0].mxu0
      %v1462 = vadd.f32 0.0, %v1461
      %v1463 = vpop.f32.mrb[0].mxu0
      %1464 = vmatprep.mubr.f32.mxu0 0.0
      %1465 = vmatmul.mubr.f32.gmra.mrb[0].mxu0 %v1288
      %v1466 = vpop.f32.mrb[0].mxu0
      %v1467 = vadd.f32 0.0, %v1466
      %v1468 = vpop.f32.mrb[0].mxu0
      %1469 = vmatprep.mubr.f32.mxu0 0.0
      %1470 = vmatmul.mubr.f32.gmra.mrb[0].mxu0 %v1291
      %v1471 = vpop.f32.mrb[0].mxu0
      %v1472 = vadd.f32 0.0, %v1471
      %v1473 = vpop.f32.mrb[0].mxu0
      %1474 = vmatprep.mubr.f32.mxu0 0.0
      %1475 = vmatmul.mubr.f32.gmra.mrb[0].mxu0 %v1294
      %v1476 = vpop.f32.mrb[0].mxu0
      %v1477 = vadd.f32 0.0, %v1476
      %v1478 = vpop.f32.mrb[0].mxu0
      %1479 = vmatprep.mubr.f32.mxu0 0.0
      %1480 = vmatmul.mubr.f32.gmra.mrb[0].mxu0 %v1297
      %v1481 = vpop.f32.mrb[0].mxu0
      %v1482 = vadd.f32 0.0, %v1481
      %v1483 = vpop.f32.mrb[0].mxu0
      %1484 = vmatprep.mubr.f32.mxu0 0.0
      %1485 = vmatmul.mubr.f32.gmra.mrb[0].mxu0 %v1300
      %v1486 = vpop.f32.mrb[0].mxu0
      %v1487 = vadd.f32 0.0, %v1486
      %v1488 = vpop.f32.mrb[0].mxu0
      %1489 = vmatprep.mubr.f32.mxu0 0.0
      %1490 = vmatmul.mubr.f32.gmra.mrb[0].mxu0 %v1303
      %v1491 = vpop.f32.mrb[0].mxu0
      %v1492 = vadd.f32 0.0, %v1491
      %v1493 = vpop.f32.mrb[0].mxu0
      %1494 = vmatprep.mubr.f32.mxu0 0.0
      %1495 = vmatmul.mubr.f32.gmra.mrb[0].mxu0 %v1306
      %v1496 = vpop.f32.mrb[0].mxu0
      %v1497 = vadd.f32 0.0, %v1496
      %v1498 = vpop.f32.mrb[0].mxu0
      %1499 = vmatprep.mubr.f32.mxu0 0.0
      %1500 = vmatmul.mubr.f32.gmra.mrb[0].mxu0 %v1309
      %v1501 = vpop.f32.mrb[0].mxu0
      %v1502 = vadd.f32 0.0, %v1501
      %v1503 = vpop.f32.mrb[0].mxu0
      %1504 = vmatprep.mubr.f32.mxu0 0.0
      %1505 = vmatmul.mubr.f32.gmra.mrb[0].mxu0 %v1312
      %v1506 = vpop.f32.mrb[0].mxu0
      %v1507 = vadd.f32 0.0, %v1506
      %v1508 = vpop.f32.mrb[0].mxu0
      %1509 = vmatprep.mubr.f32.mxu0 0.0
      %1510 = vmatmul.mubr.f32.gmra.mrb[0].mxu0 %v1315
      %v1511 = vpop.f32.mrb[0].mxu0
      %v1512 = vadd.f32 0.0, %v1511
      %v1513 = vpop.f32.mrb[0].mxu0
      %1514 = vmatprep.mubr.f32.mxu0 0.0
      %1515 = vmatmul.mubr.f32.gmra.mrb[0].mxu0 %v1318
      %v1516 = vpop.f32.mrb[0].mxu0
      %v1517 = vadd.f32 0.0, %v1516
      %v1518 = vpop.f32.mrb[0].mxu0
      %1519 = vmatprep.mubr.f32.mxu0 0.0
      %1520 = vmatmul.mubr.f32.gmra.mrb[0].mxu0 %v1321
      %v1521 = vpop.f32.mrb[0].mxu0
      %v1522 = vadd.f32 0.0, %v1521
      %v1523 = vpop.f32.mrb[0].mxu0
      %1524 = vmatprep.mubr.f32.mxu0 0.0
      %1525 = vmatmul.mubr.f32.gmra.mrb[0].mxu0 %v1324
      %v1526 = vpop.f32.mrb[0].mxu0
      %v1527 = vadd.f32 0.0, %v1526
      %v1528 = vpop.f32.mrb[0].mxu0
      %1529 = vmatprep.mubr.f32.mxu0 0.0
      %1530 = vmatmul.mubr.f32.gmra.mrb[0].mxu0 %v1327
      %v1531 = vpop.f32.mrb[0].mxu0
      %v1532 = vadd.f32 0.0, %v1531
      %v1533 = vpop.f32.mrb[0].mxu0
      %1534 = vmatprep.mubr.f32.mxu0 0.0
      %1535 = vmatmul.mubr.f32.gmra.mrb[0].mxu0 %v1330
      %v1536 = vpop.f32.mrb[0].mxu0
      %v1537 = vadd.f32 0.0, %v1536
      %v1538 = vpop.f32.mrb[0].mxu0
      %1539 = vmatprep.mubr.f32.mxu0 0.0
      %1540 = vmatmul.mubr.f32.gmra.mrb[0].mxu0 %v1333
      %v1541 = vpop.f32.mrb[0].mxu0
      %v1542 = vadd.f32 0.0, %v1541
      %v1543 = vpop.f32.mrb[0].mxu0
      %1544 = vdwg.mxu0
      %v1545 = vmax.f32 %v1189, %v1402
      %v1546 = vmax.f32 %v1190, %v1407
      %v1547 = vmax.f32 %v1191, %v1412
      %v1548 = vmax.f32 %v1192, %v1417
      %v1549 = vmax.f32 %v1193, %v1422
      %v1550 = vmax.f32 %v1194, %v1427
      %v1551 = vmax.f32 %v1195, %v1432
      %v1552 = vmax.f32 %v1196, %v1437
      %v1553 = vmax.f32 %v1197, %v1442
      %v1554 = vmax.f32 %v1198, %v1447
      %v1555 = vmax.f32 %v1199, %v1452
      %v1556 = vmax.f32 %v1200, %v1457
      %v1557 = vmax.f32 %v1201, %v1462
      %v1558 = vmax.f32 %v1202, %v1467
      %v1559 = vmax.f32 %v1203, %v1472
      %v1560 = vmax.f32 %v1204, %v1477
      %v1561 = vmax.f32 %v1205, %v1482
      %v1562 = vmax.f32 %v1206, %v1487
      %v1563 = vmax.f32 %v1207, %v1492
      %v1564 = vmax.f32 %v1208, %v1497
      %v1565 = vmax.f32 %v1209, %v1502
      %v1566 = vmax.f32 %v1210, %v1507
      %v1567 = vmax.f32 %v1211, %v1512
      %v1568 = vmax.f32 %v1212, %v1517
      %v1569 = vmax.f32 %v1213, %v1522
      %v1570 = vmax.f32 %v1214, %v1527
      %v1571 = vmax.f32 %v1215, %v1532
      %v1572 = vmax.f32 %v1216, %v1537
      %v1573 = vmax.f32 %v1217, %v1542
      %v1574 = vld [vmem:[%s2] sm:$0x1]
      %v1576 = vlaneseq
      %v1577 = vshrl.u32 %v1576, 7
      %v1578 = vsub.s32 0, %v1577
      %v1579 = vrot.slane %v1574, %v1578
      %v1581 = vadd.f32 %v1545, %v1579
      %v1582 = vadd.f32 %v1546, %v1579
      %v1583 = vadd.f32 %v1547, %v1579
      %v1584 = vadd.f32 %v1548, %v1579
      %v1585 = vadd.f32 %v1549, %v1579
      %v1586 = vadd.f32 %v1550, %v1579
      %v1587 = vadd.f32 %v1551, %v1579
      %v1588 = vadd.f32 %v1552, %v1579
      %v1589 = vadd.f32 %v1553, %v1579
      %v1590 = vadd.f32 %v1554, %v1579
      %v1591 = vadd.f32 %v1555, %v1579
      %v1592 = vadd.f32 %v1556, %v1579
      %v1593 = vadd.f32 %v1557, %v1579
      %v1594 = vadd.f32 %v1558, %v1579
      %v1595 = vadd.f32 %v1559, %v1579
      %v1596 = vadd.f32 %v1560, %v1579
      %v1597 = vadd.f32 %v1561, %v1579
      %v1598 = vadd.f32 %v1562, %v1579
      %v1599 = vadd.f32 %v1563, %v1579
      %v1600 = vadd.f32 %v1564, %v1579
      %v1601 = vadd.f32 %v1565, %v1579
      %v1602 = vadd.f32 %v1566, %v1579
      %v1603 = vadd.f32 %v1567, %v1579
      %v1604 = vadd.f32 %v1568, %v1579
      %v1605 = vadd.f32 %v1569, %v1579
      %v1606 = vadd.f32 %v1570, %v1579
      %v1607 = vadd.f32 %v1571, %v1579
      %v1608 = vadd.f32 %v1572, %v1579
      %v1609 = vadd.f32 %v1573, %v1579
      %v1610 = vmax.f32 %v1581, 0.0
      %v1611 = vmax.f32 %v1582, 0.0
      %v1612 = vmax.f32 %v1583, 0.0
      %v1613 = vmax.f32 %v1584, 0.0
      %v1614 = vmax.f32 %v1585, 0.0
      %v1615 = vmax.f32 %v1586, 0.0
      %v1616 = vmax.f32 %v1587, 0.0
      %v1617 = vmax.f32 %v1588, 0.0
      %v1618 = vmax.f32 %v1589, 0.0
      %v1619 = vmax.f32 %v1590, 0.0
      %v1620 = vmax.f32 %v1591, 0.0
      %v1621 = vmax.f32 %v1592, 0.0
      %v1622 = vmax.f32 %v1593, 0.0
      %v1623 = vmax.f32 %v1594, 0.0
      %v1624 = vmax.f32 %v1595, 0.0
      %v1625 = vmax.f32 %v1596, 0.0
      %v1626 = vmax.f32 %v1597, 0.0
      %v1627 = vmax.f32 %v1598, 0.0
      %v1628 = vmax.f32 %v1599, 0.0
      %v1629 = vmax.f32 %v1600, 0.0
      %v1630 = vmax.f32 %v1601, 0.0
      %v1631 = vmax.f32 %v1602, 0.0
      %v1632 = vmax.f32 %v1603, 0.0
      %v1633 = vmax.f32 %v1604, 0.0
      %v1634 = vmax.f32 %v1605, 0.0
      %v1635 = vmax.f32 %v1606, 0.0
      %v1636 = vmax.f32 %v1607, 0.0
      %v1637 = vmax.f32 %v1608, 0.0
      %v1638 = vmax.f32 %v1609, 0.0
      %vm1639 = vcmask 523264
      %1640 = vst.msk [vmem:[%s170] sm:$0xff] %vm1639, %v1610
      %1641 = vst.msk [vmem:[%s170 + $0x8] sm:$0xff] %vm1639, %v1611
      %1642 = vst.msk [vmem:[%s170 + $0x10] sm:$0xff] %vm1639, %v1612
      %1643 = vst.msk [vmem:[%s170 + $0x18] sm:$0xff] %vm1639, %v1613
      %1644 = vst.msk [vmem:[%s170 + $0x20] sm:$0xff] %vm1639, %v1614
      %1645 = vst.msk [vmem:[%s170 + $0x28] sm:$0xff] %vm1639, %v1615
      %1646 = vst.msk [vmem:[%s170 + $0x30] sm:$0xff] %vm1639, %v1616
      %1647 = vst.msk [vmem:[%s170 + $0x38] sm:$0xff] %vm1639, %v1617
      %1648 = vst.msk [vmem:[%s170 + $0x40] sm:$0xff] %vm1639, %v1618
      %1649 = vst.msk [vmem:[%s170 + $0x48] sm:$0xff] %vm1639, %v1619
      %1650 = vst.msk [vmem:[%s170 + $0x50] sm:$0xff] %vm1639, %v1620
      %1651 = vst.msk [vmem:[%s170 + $0x58] sm:$0xff] %vm1639, %v1621
      %1652 = vst.msk [vmem:[%s170 + $0x60] sm:$0xff] %vm1639, %v1622
      %1653 = vst.msk [vmem:[%s170 + $0x68] sm:$0xff] %vm1639, %v1623
      %1654 = vst.msk [vmem:[%s170 + $0x70] sm:$0xff] %vm1639, %v1624
      %1655 = vst.msk [vmem:[%s170 + $0x78] sm:$0xff] %vm1639, %v1625
      %1656 = vst.msk [vmem:[%s170 + $0x80] sm:$0xff] %vm1639, %v1626
      %1657 = vst.msk [vmem:[%s170 + $0x88] sm:$0xff] %vm1639, %v1627
      %1658 = vst.msk [vmem:[%s170 + $0x90] sm:$0xff] %vm1639, %v1628
      %1659 = vst.msk [vmem:[%s170 + $0x98] sm:$0xff] %vm1639, %v1629
      %1660 = vst.msk [vmem:[%s170 + $0xa0] sm:$0xff] %vm1639, %v1630
      %1661 = vst.msk [vmem:[%s170 + $0xa8] sm:$0xff] %vm1639, %v1631
      %1662 = vst.msk [vmem:[%s170 + $0xb0] sm:$0xff] %vm1639, %v1632
      %1663 = vst.msk [vmem:[%s170 + $0xb8] sm:$0xff] %vm1639, %v1633
      %1664 = vst.msk [vmem:[%s170 + $0xc0] sm:$0xff] %vm1639, %v1634
      %1665 = vst.msk [vmem:[%s170 + $0xc8] sm:$0xff] %vm1639, %v1635
      %1666 = vst.msk [vmem:[%s170 + $0xd0] sm:$0xff] %vm1639, %v1636
      %1667 = vst.msk [vmem:[%s170 + $0xd8] sm:$0xff] %vm1639, %v1637
      %vm1668 = vcmask 516096
      %1669 = vst.msk [vmem:[%s170 + $0xe0] sm:$0x1] %vm1668, %v1638
      %p1670 = scmp.lt.s32.totalorder %s14, 1
      %s1671 = scalar_select %p1670, %s14, 1
      %s1672 = smul.addr %s1671, 29
      %s1673 = smul.addr %s1672, 8
      %s1674 = scalar_lea.vmem %s3, %s1673
      // Predicated region
      $region33: #{baseline_forward.3} parent=31 // pred_check
        %p1675 = pneg %p100
      $region34: #{baseline_forward.3} parent=31 // pred_check_branch
        %1677 = sbr.rel (%p1675) target = $region36
      $region35: #{baseline_forward.3} parent=31 // pred_region
        _
      $region36: #{baseline_forward.3} parent=31 // pred_fallthru
        _
    $region32: #{baseline_forward.3} parent=5 // pred_fallthru
      _
    %p1678 = scmp.le.s32.totalorder 2, %s9
    // Predicated region
    $region37: #{baseline_forward.3} parent=5 // pred_check
      %p1679 = pneg %p1678
    $region38: #{baseline_forward.3} parent=5 // pred_check_branch
      %1681 = sbr.rel (%p1679) target = $region40
    $region39: #{baseline_forward.3} parent=5 // pred_region
      %s1682 = ssub.s32 %s9, 2
      // Predicated region
      $region41: #{baseline_forward.3} parent=39 // pred_check
        %p1683 = pneg %p106
      $region42: #{baseline_forward.3} parent=39 // pred_check_branch
        %1685 = sbr.rel (%p1683) target = $region44
      $region43: #{baseline_forward.3} parent=39 // pred_region
        %p1686 = scmp.lt.s32.totalorder %s15, 1
        %s1687 = scalar_select %p1686, %s15, 1
        %s1688 = smul.addr %s1687, 29
        %s1689 = smul.addr %s1688, 8
        %s1690 = scalar_lea.vmem %s3, %s1689
      $region44: #{baseline_forward.3} parent=39 // pred_fallthru
        _
    $region40: #{baseline_forward.3} parent=5 // pred_fallthru
      _
  $region6: #{baseline_forward.3} parent=0 // loop_footer
    %s13 = sadd.s32 1, %s9
  $region7: #{baseline_forward.3} parent=0 // loop_footer_branch
    %8 = sbr.rel target = $region3
  $region8: #{baseline_forward.3} parent=0 // loop_exit
    _

// kernel: baseline_forward.4
$region0: #{baseline_forward.4}
  #allocation0 [shape = 'u32[]', space=smem, size = 0x4, offset = 0x4, fixed_abs, tag = 'smem constant byte address 0x4 - core index']
  #allocation1 [shape = 'u32[144,128]{1,0:T(1,128)}', space=vmem, size = 0x12000, scoped, tag = 'internal scratch']
  %s0 = inlined_call_operand.vmem [shape: f32[2,4,4,36,64], index: 0, kind: input, shape index: {}]
  %s1 = inlined_call_operand.vmem [shape: f32[9,64,128], index: 1, kind: input, shape index: {}]
  %s2 = inlined_call_operand.vmem [shape: f32[1,128], index: 2, kind: input, shape index: {}]
  %s3 = inlined_call_operand.vmem [shape: f32[2,36,128], index: 3, kind: output, shape index: {}]
  %s4 = sld [smem:[#allocation0]]
  $region45: #{baseline_forward.4} parent=0
    _
  %s6 = ssub.s32 1, %s4
  %s7 = scalar_select 0, %s6, %s4
  loop: start=0, step=1, limit=4
  $region2: #{baseline_forward.4} parent=0 // loop_pre_header
    _
  $region3: #{baseline_forward.4} parent=0 // loop_header
    %s9 = sphi 0, %s13
    %p10 = scmp.ge.s32.totalorder %s9, 4
    %s19 = sphi 0, %s21
    %s22 = sphi 0, %s19
    %s23 = sphi 0, %s22
    %s39 = sphi 0, %s23
    %s43 = sphi 0, %s43
    %s45 = sphi 0, %s43
    %s46 = sphi 0, %s45
    %s60 = sphi 0, %s46
    %s64 = sphi 0, %s64
    %s66 = sphi 0, %s64
    %s67 = sphi 0, %s66
    %s81 = sphi 0, %s67
    %s87 = sphi 0, %s89
    %s90 = sphi 0, %s87
    %s91 = sphi 0, %s90
    %s107 = sphi 0, %s91
  $region4: #{baseline_forward.4} parent=0 // loop_header_branch
    %12 = sbr.rel (%p10) target = $region8
  $region5: #{baseline_forward.4} parent=0 // loop_body
    %s14 = ssub.s32 %s9, 1
    %s15 = ssub.s32 %s9, 2
    %s16 = sadd.s32 %s9, 1
    %s17 = ssub.s32 %s9, %s16
    %p18 = scmp.eq.s32.totalorder %s17, 0
    %s20 = sadd.s32 %s19, 1
    %s21 = scalar_select %p18, %s19, %s20
    %p24 = pneg %p18
    %p25 = scmp.eq.s32.totalorder %s9, 1
    %p26 = por %p24, %p25
    %p27 = scmp.ne.s32.totalorder %s19, %s22
    %p28 = scmp.eq.s32.totalorder %s9, 0
    %p29 = por %p27, %p28
    %p30 = scmp.ne.s32.totalorder %s19, %s22
    %p31 = scmp.eq.s32.totalorder %s14, 1
    %p32 = por %p30, %p31
    %p33 = scmp.ne.s32.totalorder %s22, %s23
    %p34 = scmp.eq.s32.totalorder %s14, 0
    %p35 = por %p33, %p34
    %p36 = scmp.ne.s32.totalorder %s22, %s23
    %p37 = scmp.eq.s32.totalorder %s15, 1
    %p38 = por %p36, %p37
    %p40 = scmp.ne.s32.totalorder %s23, %s39
    %p41 = scmp.eq.s32.totalorder %s15, 0
    %p42 = por %p40, %p41
    %s44 = sadd.s32 %s43, 1
    %p47 = scmp.eq.s32.totalorder %s9, 1
    %p48 = scmp.ne.s32.totalorder %s43, %s45
    %p49 = scmp.eq.s32.totalorder %s9, 0
    %p50 = por %p48, %p49
    %p51 = scmp.ne.s32.totalorder %s43, %s45
    %p52 = scmp.eq.s32.totalorder %s14, 1
    %p53 = por %p51, %p52
    %p54 = scmp.ne.s32.totalorder %s45, %s46
    %p55 = scmp.eq.s32.totalorder %s14, 0
    %p56 = por %p54, %p55
    %p57 = scmp.ne.s32.totalorder %s45, %s46
    %p58 = scmp.eq.s32.totalorder %s15, 1
    %p59 = por %p57, %p58
    %p61 = scmp.ne.s32.totalorder %s46, %s60
    %p62 = scmp.eq.s32.totalorder %s15, 0
    %p63 = por %p61, %p62
    %s65 = sadd.s32 %s64, 1
    %p68 = scmp.eq.s32.totalorder %s9, 1
    %p69 = scmp.ne.s32.totalorder %s64, %s66
    %p70 = scmp.eq.s32.totalorder %s9, 0
    %p71 = por %p69, %p70
    %p72 = scmp.ne.s32.totalorder %s64, %s66
    %p73 = scmp.eq.s32.totalorder %s14, 1
    %p74 = por %p72, %p73
    %p75 = scmp.ne.s32.totalorder %s66, %s67
    %p76 = scmp.eq.s32.totalorder %s14, 0
    %p77 = por %p75, %p76
    %p78 = scmp.ne.s32.totalorder %s66, %s67
    %p79 = scmp.eq.s32.totalorder %s15, 1
    %p80 = por %p78, %p79
    %p82 = scmp.ne.s32.totalorder %s67, %s81
    %p83 = scmp.eq.s32.totalorder %s15, 0
    %p84 = por %p82, %p83
    %s85 = ssub.s32 %s9, %s16
    %p86 = scmp.eq.s32.totalorder %s85, 0
    %s88 = sadd.s32 %s87, 1
    %s89 = scalar_select %p86, %s87, %s88
    %p92 = pneg %p86
    %p93 = scmp.eq.s32.totalorder %s9, 1
    %p94 = por %p92, %p93
    %p95 = scmp.ne.s32.totalorder %s87, %s90
    %p96 = scmp.eq.s32.totalorder %s9, 0
    %p97 = por %p95, %p96
    %p98 = scmp.ne.s32.totalorder %s87, %s90
    %p99 = scmp.eq.s32.totalorder %s14, 1
    %p100 = por %p98, %p99
    %p101 = scmp.ne.s32.totalorder %s90, %s91
    %p102 = scmp.eq.s32.totalorder %s14, 0
    %p103 = por %p101, %p102
    %p104 = scmp.ne.s32.totalorder %s90, %s91
    %p105 = scmp.eq.s32.totalorder %s15, 1
    %p106 = por %p104, %p105
    %p108 = scmp.ne.s32.totalorder %s91, %s107
    %p109 = scmp.eq.s32.totalorder %s15, 0
    %p110 = por %p108, %p109
    %p111 = scmp.le.s32.totalorder 1, %s9
    %p112 = scmp.lt.s32.totalorder %s9, 3
    %p113 = pnand %p111, %p112
    %p114 = pneg %p113
    // Predicated region
    $region9: #{baseline_forward.4} parent=5 // pred_check
      _
    $region10: #{baseline_forward.4} parent=5 // pred_check_branch
      %116 = sbr.rel (%p113) target = $region12
    $region11: #{baseline_forward.4} parent=5 // pred_region
      %s117 = ssub.s32 %s9, 1
      // Predicated region
      $region13: #{baseline_forward.4} parent=11 // pred_check
        %p118 = pneg %p56
      $region14: #{baseline_forward.4} parent=11 // pred_check_branch
        %120 = sbr.rel (%p118) target = $region16
      $region15: #{baseline_forward.4} parent=11 // pred_region
        _
      $region16: #{baseline_forward.4} parent=11 // pred_fallthru
        _
      // Predicated region
      $region17: #{baseline_forward.4} parent=11 // pred_check
        %p121 = pneg %p77
      $region18: #{baseline_forward.4} parent=11 // pred_check_branch
        %123 = sbr.rel (%p121) target = $region20
      $region19: #{baseline_forward.4} parent=11 // pred_region
        _
      $region20: #{baseline_forward.4} parent=11 // pred_fallthru
        _
    $region12: #{baseline_forward.4} parent=5 // pred_fallthru
      _
    %p124 = scmp.lt.s32.totalorder %s9, 2
    // Predicated region
    $region21: #{baseline_forward.4} parent=5 // pred_check
      %p125 = pneg %p124
    $region22: #{baseline_forward.4} parent=5 // pred_check_branch
      %127 = sbr.rel (%p125) target = $region24
    $region23: #{baseline_forward.4} parent=5 // pred_region
      // Predicated region
      $region25: #{baseline_forward.4} parent=23 // pred_check
        %p128 = pneg %p29
      $region26: #{baseline_forward.4} parent=23 // pred_check_branch
        %130 = sbr.rel (%p128) target = $region28
      $region27: #{baseline_forward.4} parent=23 // pred_region
        %p131 = scmp.lt.s32.totalorder %s9, 1
        %s132 = scalar_select %p131, %s9, 1
        %s133 = smul.addr %s132, 80
        %s134 = smul.addr %s133, 8
        %s135 = scalar_lea.vmem %s0, %s134
      $region28: #{baseline_forward.4} parent=23 // pred_fallthru
        _
    $region24: #{baseline_forward.4} parent=5 // pred_fallthru
      _
    %p136 = scmp.le.s32.totalorder 1, %s9
    %p137 = scmp.lt.s32.totalorder %s9, 3
    %p138 = pnand %p136, %p137
    %p139 = pneg %p138
    // Predicated region
    $region29: #{baseline_forward.4} parent=5 // pred_check
      _
    $region30: #{baseline_forward.4} parent=5 // pred_check_branch
      %141 = sbr.rel (%p138) target = $region32
    $region31: #{baseline_forward.4} parent=5 // pred_region
      %s142 = ssub.s32 %s9, 1
      %p143 = scmp.lt.s32.totalorder %s14, 1
      %s144 = scalar_select %p143, %s14, 1
      %s145 = smul.addr %s144, 80
      %s146 = smul.addr %s145, 8
      %s147 = scalar_lea.vmem %s0, %s146
      %p148 = pneg %p35
      %p149 = pneg %p32
      %p150 = pneg %p56
      %p151 = pneg %p53
      %p152 = pneg %p77
      %p153 = pneg %p74
      %p154 = pneg %p103
      %p155 = pneg %p100
      %p156 = scmp.lt.s32.totalorder %s14, 1
      %s157 = scalar_select %p156, %s14, 1
      %s158 = smul.addr %s157, 5
      %s159 = smul.addr %s158, 8
      %s160 = scalar_lea.vmem %s3, %s159
      %p161 = scmp.lt.s32.totalorder %s14, 1
      %s162 = scalar_select %p161, %s14, 1
      %s163 = smul.addr %s162, 80
      %s164 = smul.addr %s163, 8
      %s165 = scalar_lea.vmem %s0, %s164
      %p166 = scmp.lt.s32.totalorder %s14, 1
      %s167 = scalar_select %p166, %s14, 1
      %s168 = smul.addr %s167, 5
      %s169 = smul.addr %s168, 8
      %s170 = scalar_lea.vmem %s3, %s169
      %v171 = vld [vmem:[%s165] sm:$0xff]
      %v172 = vld [vmem:[%s165 + $0x8] sm:$0xff]
      %v173 = vld [vmem:[%s165 + $0x10] sm:$0xff]
      %v174 = vld [vmem:[%s165 + $0x18] sm:$0xff]
      %v175 = vld [vmem:[%s165 + $0x20] sm:$0xf]
      %v176 = vld [vmem:[%s1] sm:$0xff]
      %v177 = vld [vmem:[%s1 + $0x8] sm:$0xff]
      %v178 = vld [vmem:[%s1 + $0x10] sm:$0xff]
      %v179 = vld [vmem:[%s1 + $0x18] sm:$0xff]
      %v180 = vld [vmem:[%s1 + $0x20] sm:$0xff]
      %v181 = vld [vmem:[%s1 + $0x28] sm:$0xff]
      %v182 = vld [vmem:[%s1 + $0x30] sm:$0xff]
      %v183 = vld [vmem:[%s1 + $0x38] sm:$0xff]
      %s184 = scalar_lea.vmem %s165, 40
      %v185 = vld [vmem:[%s184] sm:$0xff]
      %v186 = vld [vmem:[%s184 + $0x8] sm:$0xff]
      %v187 = vld [vmem:[%s184 + $0x10] sm:$0xff]
      %v188 = vld [vmem:[%s184 + $0x18] sm:$0xff]
      %v189 = vld [vmem:[%s184 + $0x20] sm:$0xf]
      %s190 = scalar_lea.vmem %s1, 64
      %v191 = vld [vmem:[%s190] sm:$0xff]
      %v192 = vld [vmem:[%s190 + $0x8] sm:$0xff]
      %v193 = vld [vmem:[%s190 + $0x10] sm:$0xff]
      %v194 = vld [vmem:[%s190 + $0x18] sm:$0xff]
      %v195 = vld [vmem:[%s190 + $0x20] sm:$0xff]
      %v196 = vld [vmem:[%s190 + $0x28] sm:$0xff]
      %v197 = vld [vmem:[%s190 + $0x30] sm:$0xff]
      %v198 = vld [vmem:[%s190 + $0x38] sm:$0xff]
      %vm199 = vcmask 523264
      %v201 = vsel %vm199, %v185, 0
      %v204 = vsel %vm199, %v186, 0
      %v207 = vsel %vm199, %v187, 0
      %v210 = vsel %vm199, %v188, 0
      %v213 = vsel %vm199, %v189, 0
      %215 = vmatprep.subr.mxu0 0.0
      %216 = vmatpush1.msra.mxu0 %v191
      %217 = vmatprep.subr.mxu0 0.0
      %218 = vmatpush1.msra.mxu0 %v192
      %219 = vmatprep.subr.mxu0 0.0
      %220 = vmatpush1.msra.mxu0 %v193
      %221 = vmatprep.subr.mxu0 0.0
      %222 = vmatpush1.msra.mxu0 %v194
      %223 = vmatprep.subr.mxu0 0.0
      %224 = vmatpush1.msra.mxu0 %v195
      %225 = vmatprep.subr.mxu0 0.0
      %226 = vmatpush1.msra.mxu0 %v196
      %227 = vmatprep.subr.mxu0 0.0
      %228 = vmatpush1.msra.mxu0 %v197
      %229 = vmatprep.subr.mxu0 0.0
      %230 = vmatpush1.msra.mxu0 %v198
      %231 = vmatprep.subr.mxu0 0.0
      %232 = vmatpush1.msra.mxu0 0.0
      %233 = vmatprep.subr.mxu0 0.0
      %234 = vmatpush1.msra.mxu0 0.0
      %235 = vmatprep.subr.mxu0 0.0
      %236 = vmatpush1.msra.mxu0 0.0
      %237 = vmatprep.subr.mxu0 0.0
      %238 = vmatpush1.msra.mxu0 0.0
      %239 = vmatprep.subr.mxu0 0.0
      %240 = vmatpush1.msra.mxu0 0.0
      %241 = vmatprep.subr.mxu0 0.0
      %242 = vmatpush1.msra.mxu0 0.0
      %243 = vmatprep.subr.mxu0 0.0
      %244 = vmatpush1.msra.mxu0 0.0
      %245 = vmatprep.subr.mxu0 0.0
      %246 = vmatpush1.msra.mxu0 0.0
      %247 = vmatprep.subr.mxu0 0.0
      %248 = vmatpush1.msra.mxu0 0.0
      %249 = vmatprep.subr.mxu0 0.0
      %250 = vmatpush1.msra.mxu0 0.0
      %251 = vmatprep.subr.mxu0 0.0
      %252 = vmatpush1.msra.mxu0 0.0
      %253 = vmatprep.subr.mxu0 0.0
      %254 = vmatpush1.msra.mxu0 0.0
      %255 = vmatprep.subr.mxu0 0.0
      %256 = vmatpush1.msra.mxu0 0.0
      %257 = vmatprep.subr.mxu0 0.0
      %258 = vmatpush1.msra.mxu0 0.0
      %259 = vmatprep.subr.mxu0 0.0
      %260 = vmatpush1.msra.mxu0 0.0
      %261 = vmatprep.subr.mxu0 0.0
      %262 = vmatpush1.msra.mxu0 0.0
      %263 = vmatprep.subr.mxu0 0.0
      %264 = vmatpush1.msra.mxu0 0.0
      %265 = vmatprep.subr.mxu0 0.0
      %266 = vmatpush1.msra.mxu0 0.0
      %267 = vmatprep.subr.mxu0 0.0
      %268 = vmatpush1.msra.mxu0 0.0
      %269 = vmatprep.subr.mxu0 0.0
      %270 = vmatpush1.msra.mxu0 0.0
      %271 = vmatprep.subr.mxu0 0.0
      %272 = vmatpush1.msra.mxu0 0.0
      %273 = vmatprep.subr.mxu0 0.0
      %274 = vmatpush1.msra.mxu0 0.0
      %275 = vmatprep.subr.mxu0 0.0
      %276 = vmatpush1.msra.mxu0 0.0
      %277 = vmatprep.subr.mxu0 0.0
      %278 = vmatpush1.msra.mxu0 0.0
      %279 = vmatprep.mubr.f32.mxu0 0.0
      %280 = vmatmul.mubr.f32.gmra.mrb[0].mxu0 %v201
      %v281 = vpop.f32.mrb[0].mxu0
      %v282 = vadd.f32 0.0, %v281
      %v283 = vpop.f32.mrb[0].mxu0
      %284 = vmatprep.mubr.f32.mxu0 0.0
      %285 = vmatmul.mubr.f32.gmra.mrb[0].mxu0 %v204
      %v286 = vpop.f32.mrb[0].mxu0
      %v287 = vadd.f32 0.0, %v286
      %v288 = vpop.f32.mrb[0].mxu0
      %289 = vmatprep.mubr.f32.mxu0 0.0
      %290 = vmatmul.mubr.f32.gmra.mrb[0].mxu0 %v207
      %v291 = vpop.f32.mrb[0].mxu0
      %v292 = vadd.f32 0.0, %v291
      %v293 = vpop.f32.mrb[0].mxu0
      %294 = vmatprep.mubr.f32.mxu0 0.0
      %295 = vmatmul.mubr.f32.gmra.mrb[0].mxu0 %v210
      %v296 = vpop.f32.mrb[0].mxu0
      %v297 = vadd.f32 0.0, %v296
      %v298 = vpop.f32.mrb[0].mxu0
      %299 = vmatprep.mubr.f32.mxu0 0.0
      %300 = vmatmul.mubr.f32.gmra.mrb[0].mxu0 %v213
      %v301 = vpop.f32.mrb[0].mxu0
      %v302 = vadd.f32 0.0, %v301
      %v303 = vpop.f32.mrb[0].mxu0
      %304 = vdwg.mxu0
      %v306 = vsel %vm199, %v171, 0
      %v309 = vsel %vm199, %v172, 0
      %v312 = vsel %vm199, %v173, 0
      %v315 = vsel %vm199, %v174, 0
      %v318 = vsel %vm199, %v175, 0
      %320 = vmatprep.subr.mxu0 0.0
      %321 = vmatpush1.msra.mxu0 %v176
      %322 = vmatprep.subr.mxu0 0.0
      %323 = vmatpush1.msra.mxu0 %v177
      %324 = vmatprep.subr.mxu0 0.0
      %325 = vmatpush1.msra.mxu0 %v178
      %326 = vmatprep.subr.mxu0 0.0
      %327 = vmatpush1.msra.mxu0 %v179
      %328 = vmatprep.subr.mxu0 0.0
      %329 = vmatpush1.msra.mxu0 %v180
      %330 = vmatprep.subr.mxu0 0.0
      %331 = vmatpush1.msra.mxu0 %v181
      %332 = vmatprep.subr.mxu0 0.0
      %333 = vmatpush1.msra.mxu0 %v182
      %334 = vmatprep.subr.mxu0 0.0
      %335 = vmatpush1.msra.mxu0 %v183
      %336 = vmatprep.subr.mxu0 0.0
      %337 = vmatpush1.msra.mxu0 0.0
      %338 = vmatprep.subr.mxu0 0.0
      %339 = vmatpush1.msra.mxu0 0.0
      %340 = vmatprep.subr.mxu0 0.0
      %341 = vmatpush1.msra.mxu0 0.0
      %342 = vmatprep.subr.mxu0 0.0
      %343 = vmatpush1.msra.mxu0 0.0
      %344 = vmatprep.subr.mxu0 0.0
      %345 = vmatpush1.msra.mxu0 0.0
      %346 = vmatprep.subr.mxu0 0.0
      %347 = vmatpush1.msra.mxu0 0.0
      %348 = vmatprep.subr.mxu0 0.0
      %349 = vmatpush1.msra.mxu0 0.0
      %350 = vmatprep.subr.mxu0 0.0
      %351 = vmatpush1.msra.mxu0 0.0
      %352 = vmatprep.subr.mxu0 0.0
      %353 = vmatpush1.msra.mxu0 0.0
      %354 = vmatprep.subr.mxu0 0.0
      %355 = vmatpush1.msra.mxu0 0.0
      %356 = vmatprep.subr.mxu0 0.0
      %357 = vmatpush1.msra.mxu0 0.0
      %358 = vmatprep.subr.mxu0 0.0
      %359 = vmatpush1.msra.mxu0 0.0
      %360 = vmatprep.subr.mxu0 0.0
      %361 = vmatpush1.msra.mxu0 0.0
      %362 = vmatprep.subr.mxu0 0.0
      %363 = vmatpush1.msra.mxu0 0.0
      %364 = vmatprep.subr.mxu0 0.0
      %365 = vmatpush1.msra.mxu0 0.0
      %366 = vmatprep.subr.mxu0 0.0
      %367 = vmatpush1.msra.mxu0 0.0
      %368 = vmatprep.subr.mxu0 0.0
      %369 = vmatpush1.msra.mxu0 0.0
      %370 = vmatprep.subr.mxu0 0.0
      %371 = vmatpush1.msra.mxu0 0.0
      %372 = vmatprep.subr.mxu0 0.0
      %373 = vmatpush1.msra.mxu0 0.0
      %374 = vmatprep.subr.mxu0 0.0
      %375 = vmatpush1.msra.mxu0 0.0
      %376 = vmatprep.subr.mxu0 0.0
      %377 = vmatpush1.msra.mxu0 0.0
      %378 = vmatprep.subr.mxu0 0.0
      %379 = vmatpush1.msra.mxu0 0.0
      %380 = vmatprep.subr.mxu0 0.0
      %381 = vmatpush1.msra.mxu0 0.0
      %382 = vmatprep.subr.mxu0 0.0
      %383 = vmatpush1.msra.mxu0 0.0
      %384 = vmatprep.mubr.f32.mxu0 0.0
      %385 = vmatmul.mubr.f32.gmra.mrb[0].mxu0 %v306
      %v386 = vpop.f32.mrb[0].mxu0
      %v387 = vadd.f32 %v282, %v386
      %v388 = vpop.f32.mrb[0].mxu0
      %389 = vmatprep.mubr.f32.mxu0 0.0
      %390 = vmatmul.mubr.f32.gmra.mrb[0].mxu0 %v309
      %v391 = vpop.f32.mrb[0].mxu0
      %v392 = vadd.f32 %v287, %v391
      %v393 = vpop.f32.mrb[0].mxu0
      %394 = vmatprep.mubr.f32.mxu0 0.0
      %395 = vmatmul.mubr.f32.gmra.mrb[0].mxu0 %v312
      %v396 = vpop.f32.mrb[0].mxu0
      %v397 = vadd.f32 %v292, %v396
      %v398 = vpop.f32.mrb[0].mxu0
      %399 = vmatprep.mubr.f32.mxu0 0.0
      %400 = vmatmul.mubr.f32.gmra.mrb[0].mxu0 %v315
      %v401 = vpop.f32.mrb[0].mxu0
      %v402 = vadd.f32 %v297, %v401
      %v403 = vpop.f32.mrb[0].mxu0
      %404 = vmatprep.mubr.f32.mxu0 0.0
      %405 = vmatmul.mubr.f32.gmra.mrb[0].mxu0 %v318
      %v406 = vpop.f32.mrb[0].mxu0
      %v407 = vadd.f32 %v302, %v406
      %v408 = vpop.f32.mrb[0].mxu0
      %409 = vdwg.mxu0
      %s410 = scalar_lea.vmem %s165, 80
      %v411 = vld [vmem:[%s410] sm:$0xff]
      %v412 = vld [vmem:[%s410 + $0x8] sm:$0xff]
      %v413 = vld [vmem:[%s410 + $0x10] sm:$0xff]
      %v414 = vld [vmem:[%s410 + $0x18] sm:$0xff]
      %v415 = vld [vmem:[%s410 + $0x20] sm:$0xf]
      %s416 = scalar_lea.vmem %s1, 128
      %v417 = vld [vmem:[%s416] sm:$0xff]
      %v418 = vld [vmem:[%s416 + $0x8] sm:$0xff]
      %v419 = vld [vmem:[%s416 + $0x10] sm:$0xff]
      %v420 = vld [vmem:[%s416 + $0x18] sm:$0xff]
      %v421 = vld [vmem:[%s416 + $0x20] sm:$0xff]
      %v422 = vld [vmem:[%s416 + $0x28] sm:$0xff]
      %v423 = vld [vmem:[%s416 + $0x30] sm:$0xff]
      %v424 = vld [vmem:[%s416 + $0x38] sm:$0xff]
      %v426 = vsel %vm199, %v411, 0
      %v429 = vsel %vm199, %v412, 0
      %v432 = vsel %vm199, %v413, 0
      %v435 = vsel %vm199, %v414, 0
      %v438 = vsel %vm199, %v415, 0
      %440 = vmatprep.subr.mxu0 0.0
      %441 = vmatpush1.msra.mxu0 %v417
      %442 = vmatprep.subr.mxu0 0.0
      %443 = vmatpush1.msra.mxu0 %v418
      %444 = vmatprep.subr.mxu0 0.0
      %445 = vmatpush1.msra.mxu0 %v419
      %446 = vmatprep.subr.mxu0 0.0
      %447 = vmatpush1.msra.mxu0 %v420
      %448 = vmatprep.subr.mxu0 0.0
      %449 = vmatpush1.msra.mxu0 %v421
      %450 = vmatprep.subr.mxu0 0.0
      %451 = vmatpush1.msra.mxu0 %v422
      %452 = vmatprep.subr.mxu0 0.0
      %453 = vmatpush1.msra.mxu0 %v423
      %454 = vmatprep.subr.mxu0 0.0
      %455 = vmatpush1.msra.mxu0 %v424
      %456 = vmatprep.subr.mxu0 0.0
      %457 = vmatpush1.msra.mxu0 0.0
      %458 = vmatprep.subr.mxu0 0.0
      %459 = vmatpush1.msra.mxu0 0.0
      %460 = vmatprep.subr.mxu0 0.0
      %461 = vmatpush1.msra.mxu0 0.0
      %462 = vmatprep.subr.mxu0 0.0
      %463 = vmatpush1.msra.mxu0 0.0
      %464 = vmatprep.subr.mxu0 0.0
      %465 = vmatpush1.msra.mxu0 0.0
      %466 = vmatprep.subr.mxu0 0.0
      %467 = vmatpush1.msra.mxu0 0.0
      %468 = vmatprep.subr.mxu0 0.0
      %469 = vmatpush1.msra.mxu0 0.0
      %470 = vmatprep.subr.mxu0 0.0
      %471 = vmatpush1.msra.mxu0 0.0
      %472 = vmatprep.subr.mxu0 0.0
      %473 = vmatpush1.msra.mxu0 0.0
      %474 = vmatprep.subr.mxu0 0.0
      %475 = vmatpush1.msra.mxu0 0.0
      %476 = vmatprep.subr.mxu0 0.0
      %477 = vmatpush1.msra.mxu0 0.0
      %478 = vmatprep.subr.mxu0 0.0
      %479 = vmatpush1.msra.mxu0 0.0
      %480 = vmatprep.subr.mxu0 0.0
      %481 = vmatpush1.msra.mxu0 0.0
      %482 = vmatprep.subr.mxu0 0.0
      %483 = vmatpush1.msra.mxu0 0.0
      %484 = vmatprep.subr.mxu0 0.0
      %485 = vmatpush1.msra.mxu0 0.0
      %486 = vmatprep.subr.mxu0 0.0
      %487 = vmatpush1.msra.mxu0 0.0
      %488 = vmatprep.subr.mxu0 0.0
      %489 = vmatpush1.msra.mxu0 0.0
      %490 = vmatprep.subr.mxu0 0.0
      %491 = vmatpush1.msra.mxu0 0.0
      %492 = vmatprep.subr.mxu0 0.0
      %493 = vmatpush1.msra.mxu0 0.0
      %494 = vmatprep.subr.mxu0 0.0
      %495 = vmatpush1.msra.mxu0 0.0
      %496 = vmatprep.subr.mxu0 0.0
      %497 = vmatpush1.msra.mxu0 0.0
      %498 = vmatprep.subr.mxu0 0.0
      %499 = vmatpush1.msra.mxu0 0.0
      %500 = vmatprep.subr.mxu0 0.0
      %501 = vmatpush1.msra.mxu0 0.0
      %502 = vmatprep.subr.mxu0 0.0
      %503 = vmatpush1.msra.mxu0 0.0
      %504 = vmatprep.mubr.f32.mxu0 0.0
      %505 = vmatmul.mubr.f32.gmra.mrb[0].mxu0 %v426
      %v506 = vpop.f32.mrb[0].mxu0
      %v507 = vadd.f32 0.0, %v506
      %v508 = vpop.f32.mrb[0].mxu0
      %509 = vmatprep.mubr.f32.mxu0 0.0
      %510 = vmatmul.mubr.f32.gmra.mrb[0].mxu0 %v429
      %v511 = vpop.f32.mrb[0].mxu0
      %v512 = vadd.f32 0.0, %v511
      %v513 = vpop.f32.mrb[0].mxu0
      %514 = vmatprep.mubr.f32.mxu0 0.0
      %515 = vmatmul.mubr.f32.gmra.mrb[0].mxu0 %v432
      %v516 = vpop.f32.mrb[0].mxu0
      %v517 = vadd.f32 0.0, %v516
      %v518 = vpop.f32.mrb[0].mxu0
      %519 = vmatprep.mubr.f32.mxu0 0.0
      %520 = vmatmul.mubr.f32.gmra.mrb[0].mxu0 %v435
      %v521 = vpop.f32.mrb[0].mxu0
      %v522 = vadd.f32 0.0, %v521
      %v523 = vpop.f32.mrb[0].mxu0
      %524 = vmatprep.mubr.f32.mxu0 0.0
      %525 = vmatmul.mubr.f32.gmra.mrb[0].mxu0 %v438
      %v526 = vpop.f32.mrb[0].mxu0
      %v527 = vadd.f32 0.0, %v526
      %v528 = vpop.f32.mrb[0].mxu0
      %529 = vdwg.mxu0
      %v530 = vadd.f32 %v387, %v507
      %v531 = vadd.f32 %v392, %v512
      %v532 = vadd.f32 %v397, %v517
      %v533 = vadd.f32 %v402, %v522
      %v534 = vadd.f32 %v407, %v527
      %s535 = scalar_lea.vmem %s165, 160
      %v536 = vld [vmem:[%s535] sm:$0xff]
      %v537 = vld [vmem:[%s535 + $0x8] sm:$0xff]
      %v538 = vld [vmem:[%s535 + $0x10] sm:$0xff]
      %v539 = vld [vmem:[%s535 + $0x18] sm:$0xff]
      %v540 = vld [vmem:[%s535 + $0x20] sm:$0xf]
      %s541 = scalar_lea.vmem %s1, 192
      %v542 = vld [vmem:[%s541] sm:$0xff]
      %v543 = vld [vmem:[%s541 + $0x8] sm:$0xff]
      %v544 = vld [vmem:[%s541 + $0x10] sm:$0xff]
      %v545 = vld [vmem:[%s541 + $0x18] sm:$0xff]
      %v546 = vld [vmem:[%s541 + $0x20] sm:$0xff]
      %v547 = vld [vmem:[%s541 + $0x28] sm:$0xff]
      %v548 = vld [vmem:[%s541 + $0x30] sm:$0xff]
      %v549 = vld [vmem:[%s541 + $0x38] sm:$0xff]
      %v551 = vsel %vm199, %v536, 0
      %v554 = vsel %vm199, %v537, 0
      %v557 = vsel %vm199, %v538, 0
      %v560 = vsel %vm199, %v539, 0
      %v563 = vsel %vm199, %v540, 0
      %565 = vmatprep.subr.mxu0 0.0
      %566 = vmatpush1.msra.mxu0 %v542
      %567 = vmatprep.subr.mxu0 0.0
      %568 = vmatpush1.msra.mxu0 %v543
      %569 = vmatprep.subr.mxu0 0.0
      %570 = vmatpush1.msra.mxu0 %v544
      %571 = vmatprep.subr.mxu0 0.0
      %572 = vmatpush1.msra.mxu0 %v545
      %573 = vmatprep.subr.mxu0 0.0
      %574 = vmatpush1.msra.mxu0 %v546
      %575 = vmatprep.subr.mxu0 0.0
      %576 = vmatpush1.msra.mxu0 %v547
      %577 = vmatprep.subr.mxu0 0.0
      %578 = vmatpush1.msra.mxu0 %v548
      %579 = vmatprep.subr.mxu0 0.0
      %580 = vmatpush1.msra.mxu0 %v549
      %581 = vmatprep.subr.mxu0 0.0
      %582 = vmatpush1.msra.mxu0 0.0
      %583 = vmatprep.subr.mxu0 0.0
      %584 = vmatpush1.msra.mxu0 0.0
      %585 = vmatprep.subr.mxu0 0.0
      %586 = vmatpush1.msra.mxu0 0.0
      %587 = vmatprep.subr.mxu0 0.0
      %588 = vmatpush1.msra.mxu0 0.0
      %589 = vmatprep.subr.mxu0 0.0
      %590 = vmatpush1.msra.mxu0 0.0
      %591 = vmatprep.subr.mxu0 0.0
      %592 = vmatpush1.msra.mxu0 0.0
      %593 = vmatprep.subr.mxu0 0.0
      %594 = vmatpush1.msra.mxu0 0.0
      %595 = vmatprep.subr.mxu0 0.0
      %596 = vmatpush1.msra.mxu0 0.0
      %597 = vmatprep.subr.mxu0 0.0
      %598 = vmatpush1.msra.mxu0 0.0
      %599 = vmatprep.subr.mxu0 0.0
      %600 = vmatpush1.msra.mxu0 0.0
      %601 = vmatprep.subr.mxu0 0.0
      %602 = vmatpush1.msra.mxu0 0.0
      %603 = vmatprep.subr.mxu0 0.0
      %604 = vmatpush1.msra.mxu0 0.0
      %605 = vmatprep.subr.mxu0 0.0
      %606 = vmatpush1.msra.mxu0 0.0
      %607 = vmatprep.subr.mxu0 0.0
      %608 = vmatpush1.msra.mxu0 0.0
      %609 = vmatprep.subr.mxu0 0.0
      %610 = vmatpush1.msra.mxu0 0.0
      %611 = vmatprep.subr.mxu0 0.0
      %612 = vmatpush1.msra.mxu0 0.0
      %613 = vmatprep.subr.mxu0 0.0
      %614 = vmatpush1.msra.mxu0 0.0
      %615 = vmatprep.subr.mxu0 0.0
      %616 = vmatpush1.msra.mxu0 0.0
      %617 = vmatprep.subr.mxu0 0.0
      %618 = vmatpush1.msra.mxu0 0.0
      %619 = vmatprep.subr.mxu0 0.0
      %620 = vmatpush1.msra.mxu0 0.0
      %621 = vmatprep.subr.mxu0 0.0
      %622 = vmatpush1.msra.mxu0 0.0
      %623 = vmatprep.subr.mxu0 0.0
      %624 = vmatpush1.msra.mxu0 0.0
      %625 = vmatprep.subr.mxu0 0.0
      %626 = vmatpush1.msra.mxu0 0.0
      %627 = vmatprep.subr.mxu0 0.0
      %628 = vmatpush1.msra.mxu0 0.0
      %629 = vmatprep.mubr.f32.mxu0 0.0
      %630 = vmatmul.mubr.f32.gmra.mrb[0].mxu0 %v551
      %v631 = vpop.f32.mrb[0].mxu0
      %v632 = vadd.f32 0.0, %v631
      %v633 = vpop.f32.mrb[0].mxu0
      %634 = vmatprep.mubr.f32.mxu0 0.0
      %635 = vmatmul.mubr.f32.gmra.mrb[0].mxu0 %v554
      %v636 = vpop.f32.mrb[0].mxu0
      %v637 = vadd.f32 0.0, %v636
      %v638 = vpop.f32.mrb[0].mxu0
      %639 = vmatprep.mubr.f32.mxu0 0.0
      %640 = vmatmul.mubr.f32.gmra.mrb[0].mxu0 %v557
      %v641 = vpop.f32.mrb[0].mxu0
      %v642 = vadd.f32 0.0, %v641
      %v643 = vpop.f32.mrb[0].mxu0
      %644 = vmatprep.mubr.f32.mxu0 0.0
      %645 = vmatmul.mubr.f32.gmra.mrb[0].mxu0 %v560
      %v646 = vpop.f32.mrb[0].mxu0
      %v647 = vadd.f32 0.0, %v646
      %v648 = vpop.f32.mrb[0].mxu0
      %649 = vmatprep.mubr.f32.mxu0 0.0
      %650 = vmatmul.mubr.f32.gmra.mrb[0].mxu0 %v563
      %v651 = vpop.f32.mrb[0].mxu0
      %v652 = vadd.f32 0.0, %v651
      %v653 = vpop.f32.mrb[0].mxu0
      %654 = vdwg.mxu0
      %v655 = vadd.f32 %v530, %v632
      %v656 = vadd.f32 %v531, %v637
      %v657 = vadd.f32 %v532, %v642
      %v658 = vadd.f32 %v533, %v647
      %v659 = vadd.f32 %v534, %v652
      %s660 = scalar_lea.vmem %s165, 200
      %v661 = vld [vmem:[%s660] sm:$0xff]
      %v662 = vld [vmem:[%s660 + $0x8] sm:$0xff]
      %v663 = vld [vmem:[%s660 + $0x10] sm:$0xff]
      %v664 = vld [vmem:[%s660 + $0x18] sm:$0xff]
      %v665 = vld [vmem:[%s660 + $0x20] sm:$0xf]
      %s666 = scalar_lea.vmem %s1, 256
      %v667 = vld [vmem:[%s666] sm:$0xff]
      %v668 = vld [vmem:[%s666 + $0x8] sm:$0xff]
      %v669 = vld [vmem:[%s666 + $0x10] sm:$0xff]
      %v670 = vld [vmem:[%s666 + $0x18] sm:$0xff]
      %v671 = vld [vmem:[%s666 + $0x20] sm:$0xff]
      %v672 = vld [vmem:[%s666 + $0x28] sm:$0xff]
      %v673 = vld [vmem:[%s666 + $0x30] sm:$0xff]
      %v674 = vld [vmem:[%s666 + $0x38] sm:$0xff]
      %v676 = vsel %vm199, %v661, 0
      %v679 = vsel %vm199, %v662, 0
      %v682 = vsel %vm199, %v663, 0
      %v685 = vsel %vm199, %v664, 0
      %v688 = vsel %vm199, %v665, 0
      %690 = vmatprep.subr.mxu0 0.0
      %691 = vmatpush1.msra.mxu0 %v667
      %692 = vmatprep.subr.mxu0 0.0
      %693 = vmatpush1.msra.mxu0 %v668
      %694 = vmatprep.subr.mxu0 0.0
      %695 = vmatpush1.msra.mxu0 %v669
      %696 = vmatprep.subr.mxu0 0.0
      %697 = vmatpush1.msra.mxu0 %v670
      %698 = vmatprep.subr.mxu0 0.0
      %699 = vmatpush1.msra.mxu0 %v671
      %700 = vmatprep.subr.mxu0 0.0
      %701 = vmatpush1.msra.mxu0 %v672
      %702 = vmatprep.subr.mxu0 0.0
      %703 = vmatpush1.msra.mxu0 %v673
      %704 = vmatprep.subr.mxu0 0.0
      %705 = vmatpush1.msra.mxu0 %v674
      %706 = vmatprep.subr.mxu0 0.0
      %707 = vmatpush1.msra.mxu0 0.0
      %708 = vmatprep.subr.mxu0 0.0
      %709 = vmatpush1.msra.mxu0 0.0
      %710 = vmatprep.subr.mxu0 0.0
      %711 = vmatpush1.msra.mxu0 0.0
      %712 = vmatprep.subr.mxu0 0.0
      %713 = vmatpush1.msra.mxu0 0.0
      %714 = vmatprep.subr.mxu0 0.0
      %715 = vmatpush1.msra.mxu0 0.0
      %716 = vmatprep.subr.mxu0 0.0
      %717 = vmatpush1.msra.mxu0 0.0
      %718 = vmatprep.subr.mxu0 0.0
      %719 = vmatpush1.msra.mxu0 0.0
      %720 = vmatprep.subr.mxu0 0.0
      %721 = vmatpush1.msra.mxu0 0.0
      %722 = vmatprep.subr.mxu0 0.0
      %723 = vmatpush1.msra.mxu0 0.0
      %724 = vmatprep.subr.mxu0 0.0
      %725 = vmatpush1.msra.mxu0 0.0
      %726 = vmatprep.subr.mxu0 0.0
      %727 = vmatpush1.msra.mxu0 0.0
      %728 = vmatprep.subr.mxu0 0.0
      %729 = vmatpush1.msra.mxu0 0.0
      %730 = vmatprep.subr.mxu0 0.0
      %731 = vmatpush1.msra.mxu0 0.0
      %732 = vmatprep.subr.mxu0 0.0
      %733 = vmatpush1.msra.mxu0 0.0
      %734 = vmatprep.subr.mxu0 0.0
      %735 = vmatpush1.msra.mxu0 0.0
      %736 = vmatprep.subr.mxu0 0.0
      %737 = vmatpush1.msra.mxu0 0.0
      %738 = vmatprep.subr.mxu0 0.0
      %739 = vmatpush1.msra.mxu0 0.0
      %740 = vmatprep.subr.mxu0 0.0
      %741 = vmatpush1.msra.mxu0 0.0
      %742 = vmatprep.subr.mxu0 0.0
      %743 = vmatpush1.msra.mxu0 0.0
      %744 = vmatprep.subr.mxu0 0.0
      %745 = vmatpush1.msra.mxu0 0.0
      %746 = vmatprep.subr.mxu0 0.0
      %747 = vmatpush1.msra.mxu0 0.0
      %748 = vmatprep.subr.mxu0 0.0
      %749 = vmatpush1.msra.mxu0 0.0
      %750 = vmatprep.subr.mxu0 0.0
      %751 = vmatpush1.msra.mxu0 0.0
      %752 = vmatprep.subr.mxu0 0.0
      %753 = vmatpush1.msra.mxu0 0.0
      %754 = vmatprep.mubr.f32.mxu0 0.0
      %755 = vmatmul.mubr.f32.gmra.mrb[0].mxu0 %v676
      %v756 = vpop.f32.mrb[0].mxu0
      %v757 = vadd.f32 0.0, %v756
      %v758 = vpop.f32.mrb[0].mxu0
      %759 = vmatprep.mubr.f32.mxu0 0.0
      %760 = vmatmul.mubr.f32.gmra.mrb[0].mxu0 %v679
      %v761 = vpop.f32.mrb[0].mxu0
      %v762 = vadd.f32 0.0, %v761
      %v763 = vpop.f32.mrb[0].mxu0
      %764 = vmatprep.mubr.f32.mxu0 0.0
      %765 = vmatmul.mubr.f32.gmra.mrb[0].mxu0 %v682
      %v766 = vpop.f32.mrb[0].mxu0
      %v767 = vadd.f32 0.0, %v766
      %v768 = vpop.f32.mrb[0].mxu0
      %769 = vmatprep.mubr.f32.mxu0 0.0
      %770 = vmatmul.mubr.f32.gmra.mrb[0].mxu0 %v685
      %v771 = vpop.f32.mrb[0].mxu0
      %v772 = vadd.f32 0.0, %v771
      %v773 = vpop.f32.mrb[0].mxu0
      %774 = vmatprep.mubr.f32.mxu0 0.0
      %775 = vmatmul.mubr.f32.gmra.mrb[0].mxu0 %v688
      %v776 = vpop.f32.mrb[0].mxu0
      %v777 = vadd.f32 0.0, %v776
      %v778 = vpop.f32.mrb[0].mxu0
      %779 = vdwg.mxu0
      %v780 = vadd.f32 %v655, %v757
      %v781 = vadd.f32 %v656, %v762
      %v782 = vadd.f32 %v657, %v767
      %v783 = vadd.f32 %v658, %v772
      %v784 = vadd.f32 %v659, %v777
      %s785 = scalar_lea.vmem %s165, 240
      %v786 = vld [vmem:[%s785] sm:$0xff]
      %v787 = vld [vmem:[%s785 + $0x8] sm:$0xff]
      %v788 = vld [vmem:[%s785 + $0x10] sm:$0xff]
      %v789 = vld [vmem:[%s785 + $0x18] sm:$0xff]
      %v790 = vld [vmem:[%s785 + $0x20] sm:$0xf]
      %s791 = scalar_lea.vmem %s1, 320
      %v792 = vld [vmem:[%s791] sm:$0xff]
      %v793 = vld [vmem:[%s791 + $0x8] sm:$0xff]
      %v794 = vld [vmem:[%s791 + $0x10] sm:$0xff]
      %v795 = vld [vmem:[%s791 + $0x18] sm:$0xff]
      %v796 = vld [vmem:[%s791 + $0x20] sm:$0xff]
      %v797 = vld [vmem:[%s791 + $0x28] sm:$0xff]
      %v798 = vld [vmem:[%s791 + $0x30] sm:$0xff]
      %v799 = vld [vmem:[%s791 + $0x38] sm:$0xff]
      %v801 = vsel %vm199, %v786, 0
      %v804 = vsel %vm199, %v787, 0
      %v807 = vsel %vm199, %v788, 0
      %v810 = vsel %vm199, %v789, 0
      %v813 = vsel %vm199, %v790, 0
      %815 = vmatprep.subr.mxu0 0.0
      %816 = vmatpush1.msra.mxu0 %v792
      %817 = vmatprep.subr.mxu0 0.0
      %818 = vmatpush1.msra.mxu0 %v793
      %819 = vmatprep.subr.mxu0 0.0
      %820 = vmatpush1.msra.mxu0 %v794
      %821 = vmatprep.subr.mxu0 0.0
      %822 = vmatpush1.msra.mxu0 %v795
      %823 = vmatprep.subr.mxu0 0.0
      %824 = vmatpush1.msra.mxu0 %v796
      %825 = vmatprep.subr.mxu0 0.0
      %826 = vmatpush1.msra.mxu0 %v797
      %827 = vmatprep.subr.mxu0 0.0
      %828 = vmatpush1.msra.mxu0 %v798
      %829 = vmatprep.subr.mxu0 0.0
      %830 = vmatpush1.msra.mxu0 %v799
      %831 = vmatprep.subr.mxu0 0.0
      %832 = vmatpush1.msra.mxu0 0.0
      %833 = vmatprep.subr.mxu0 0.0
      %834 = vmatpush1.msra.mxu0 0.0
      %835 = vmatprep.subr.mxu0 0.0
      %836 = vmatpush1.msra.mxu0 0.0
      %837 = vmatprep.subr.mxu0 0.0
      %838 = vmatpush1.msra.mxu0 0.0
      %839 = vmatprep.subr.mxu0 0.0
      %840 = vmatpush1.msra.mxu0 0.0
      %841 = vmatprep.subr.mxu0 0.0
      %842 = vmatpush1.msra.mxu0 0.0
      %843 = vmatprep.subr.mxu0 0.0
      %844 = vmatpush1.msra.mxu0 0.0
      %845 = vmatprep.subr.mxu0 0.0
      %846 = vmatpush1.msra.mxu0 0.0
      %847 = vmatprep.subr.mxu0 0.0
      %848 = vmatpush1.msra.mxu0 0.0
      %849 = vmatprep.subr.mxu0 0.0
      %850 = vmatpush1.msra.mxu0 0.0
      %851 = vmatprep.subr.mxu0 0.0
      %852 = vmatpush1.msra.mxu0 0.0
      %853 = vmatprep.subr.mxu0 0.0
      %854 = vmatpush1.msra.mxu0 0.0
      %855 = vmatprep.subr.mxu0 0.0
      %856 = vmatpush1.msra.mxu0 0.0
      %857 = vmatprep.subr.mxu0 0.0
      %858 = vmatpush1.msra.mxu0 0.0
      %859 = vmatprep.subr.mxu0 0.0
      %860 = vmatpush1.msra.mxu0 0.0
      %861 = vmatprep.subr.mxu0 0.0
      %862 = vmatpush1.msra.mxu0 0.0
      %863 = vmatprep.subr.mxu0 0.0
      %864 = vmatpush1.msra.mxu0 0.0
      %865 = vmatprep.subr.mxu0 0.0
      %866 = vmatpush1.msra.mxu0 0.0
      %867 = vmatprep.subr.mxu0 0.0
      %868 = vmatpush1.msra.mxu0 0.0
      %869 = vmatprep.subr.mxu0 0.0
      %870 = vmatpush1.msra.mxu0 0.0
      %871 = vmatprep.subr.mxu0 0.0
      %872 = vmatpush1.msra.mxu0 0.0
      %873 = vmatprep.subr.mxu0 0.0
      %874 = vmatpush1.msra.mxu0 0.0
      %875 = vmatprep.subr.mxu0 0.0
      %876 = vmatpush1.msra.mxu0 0.0
      %877 = vmatprep.subr.mxu0 0.0
      %878 = vmatpush1.msra.mxu0 0.0
      %879 = vmatprep.mubr.f32.mxu0 0.0
      %880 = vmatmul.mubr.f32.gmra.mrb[0].mxu0 %v801
      %v881 = vpop.f32.mrb[0].mxu0
      %v882 = vadd.f32 0.0, %v881
      %v883 = vpop.f32.mrb[0].mxu0
      %884 = vmatprep.mubr.f32.mxu0 0.0
      %885 = vmatmul.mubr.f32.gmra.mrb[0].mxu0 %v804
      %v886 = vpop.f32.mrb[0].mxu0
      %v887 = vadd.f32 0.0, %v886
      %v888 = vpop.f32.mrb[0].mxu0
      %889 = vmatprep.mubr.f32.mxu0 0.0
      %890 = vmatmul.mubr.f32.gmra.mrb[0].mxu0 %v807
      %v891 = vpop.f32.mrb[0].mxu0
      %v892 = vadd.f32 0.0, %v891
      %v893 = vpop.f32.mrb[0].mxu0
      %894 = vmatprep.mubr.f32.mxu0 0.0
      %895 = vmatmul.mubr.f32.gmra.mrb[0].mxu0 %v810
      %v896 = vpop.f32.mrb[0].mxu0
      %v897 = vadd.f32 0.0, %v896
      %v898 = vpop.f32.mrb[0].mxu0
      %899 = vmatprep.mubr.f32.mxu0 0.0
      %900 = vmatmul.mubr.f32.gmra.mrb[0].mxu0 %v813
      %v901 = vpop.f32.mrb[0].mxu0
      %v902 = vadd.f32 0.0, %v901
      %v903 = vpop.f32.mrb[0].mxu0
      %904 = vdwg.mxu0
      %v905 = vadd.f32 %v780, %v882
      %v906 = vadd.f32 %v781, %v887
      %v907 = vadd.f32 %v782, %v892
      %v908 = vadd.f32 %v783, %v897
      %v909 = vadd.f32 %v784, %v902
      %s910 = scalar_lea.vmem %s165, 320
      %v911 = vld [vmem:[%s910] sm:$0xff]
      %v912 = vld [vmem:[%s910 + $0x8] sm:$0xff]
      %v913 = vld [vmem:[%s910 + $0x10] sm:$0xff]
      %v914 = vld [vmem:[%s910 + $0x18] sm:$0xff]
      %v915 = vld [vmem:[%s910 + $0x20] sm:$0xf]
      %s916 = scalar_lea.vmem %s1, 384
      %v917 = vld [vmem:[%s916] sm:$0xff]
      %v918 = vld [vmem:[%s916 + $0x8] sm:$0xff]
      %v919 = vld [vmem:[%s916 + $0x10] sm:$0xff]
      %v920 = vld [vmem:[%s916 + $0x18] sm:$0xff]
      %v921 = vld [vmem:[%s916 + $0x20] sm:$0xff]
      %v922 = vld [vmem:[%s916 + $0x28] sm:$0xff]
      %v923 = vld [vmem:[%s916 + $0x30] sm:$0xff]
      %v924 = vld [vmem:[%s916 + $0x38] sm:$0xff]
      %v926 = vsel %vm199, %v911, 0
      %v929 = vsel %vm199, %v912, 0
      %v932 = vsel %vm199, %v913, 0
      %v935 = vsel %vm199, %v914, 0
      %v938 = vsel %vm199, %v915, 0
      %940 = vmatprep.subr.mxu0 0.0
      %941 = vmatpush1.msra.mxu0 %v917
      %942 = vmatprep.subr.mxu0 0.0
      %943 = vmatpush1.msra.mxu0 %v918
      %944 = vmatprep.subr.mxu0 0.0
      %945 = vmatpush1.msra.mxu0 %v919
      %946 = vmatprep.subr.mxu0 0.0
      %947 = vmatpush1.msra.mxu0 %v920
      %948 = vmatprep.subr.mxu0 0.0
      %949 = vmatpush1.msra.mxu0 %v921
      %950 = vmatprep.subr.mxu0 0.0
      %951 = vmatpush1.msra.mxu0 %v922
      %952 = vmatprep.subr.mxu0 0.0
      %953 = vmatpush1.msra.mxu0 %v923
      %954 = vmatprep.subr.mxu0 0.0
      %955 = vmatpush1.msra.mxu0 %v924
      %956 = vmatprep.subr.mxu0 0.0
      %957 = vmatpush1.msra.mxu0 0.0
      %958 = vmatprep.subr.mxu0 0.0
      %959 = vmatpush1.msra.mxu0 0.0
      %960 = vmatprep.subr.mxu0 0.0
      %961 = vmatpush1.msra.mxu0 0.0
      %962 = vmatprep.subr.mxu0 0.0
      %963 = vmatpush1.msra.mxu0 0.0
      %964 = vmatprep.subr.mxu0 0.0
      %965 = vmatpush1.msra.mxu0 0.0
      %966 = vmatprep.subr.mxu0 0.0
      %967 = vmatpush1.msra.mxu0 0.0
      %968 = vmatprep.subr.mxu0 0.0
      %969 = vmatpush1.msra.mxu0 0.0
      %970 = vmatprep.subr.mxu0 0.0
      %971 = vmatpush1.msra.mxu0 0.0
      %972 = vmatprep.subr.mxu0 0.0
      %973 = vmatpush1.msra.mxu0 0.0
      %974 = vmatprep.subr.mxu0 0.0
      %975 = vmatpush1.msra.mxu0 0.0
      %976 = vmatprep.subr.mxu0 0.0
      %977 = vmatpush1.msra.mxu0 0.0
      %978 = vmatprep.subr.mxu0 0.0
      %979 = vmatpush1.msra.mxu0 0.0
      %980 = vmatprep.subr.mxu0 0.0
      %981 = vmatpush1.msra.mxu0 0.0
      %982 = vmatprep.subr.mxu0 0.0
      %983 = vmatpush1.msra.mxu0 0.0
      %984 = vmatprep.subr.mxu0 0.0
      %985 = vmatpush1.msra.mxu0 0.0
      %986 = vmatprep.subr.mxu0 0.0
      %987 = vmatpush1.msra.mxu0 0.0
      %988 = vmatprep.subr.mxu0 0.0
      %989 = vmatpush1.msra.mxu0 0.0
      %990 = vmatprep.subr.mxu0 0.0
      %991 = vmatpush1.msra.mxu0 0.0
      %992 = vmatprep.subr.mxu0 0.0
      %993 = vmatpush1.msra.mxu0 0.0
      %994 = vmatprep.subr.mxu0 0.0
      %995 = vmatpush1.msra.mxu0 0.0
      %996 = vmatprep.subr.mxu0 0.0
      %997 = vmatpush1.msra.mxu0 0.0
      %998 = vmatprep.subr.mxu0 0.0
      %999 = vmatpush1.msra.mxu0 0.0
      %1000 = vmatprep.subr.mxu0 0.0
      %1001 = vmatpush1.msra.mxu0 0.0
      %1002 = vmatprep.subr.mxu0 0.0
      %1003 = vmatpush1.msra.mxu0 0.0
      %1004 = vmatprep.mubr.f32.mxu0 0.0
      %1005 = vmatmul.mubr.f32.gmra.mrb[0].mxu0 %v926
      %v1006 = vpop.f32.mrb[0].mxu0
      %v1007 = vadd.f32 0.0, %v1006
      %v1008 = vpop.f32.mrb[0].mxu0
      %1009 = vmatprep.mubr.f32.mxu0 0.0
      %1010 = vmatmul.mubr.f32.gmra.mrb[0].mxu0 %v929
      %v1011 = vpop.f32.mrb[0].mxu0
      %v1012 = vadd.f32 0.0, %v1011
      %v1013 = vpop.f32.mrb[0].mxu0
      %1014 = vmatprep.mubr.f32.mxu0 0.0
      %1015 = vmatmul.mubr.f32.gmra.mrb[0].mxu0 %v932
      %v1016 = vpop.f32.mrb[0].mxu0
      %v1017 = vadd.f32 0.0, %v1016
      %v1018 = vpop.f32.mrb[0].mxu0
      %1019 = vmatprep.mubr.f32.mxu0 0.0
      %1020 = vmatmul.mubr.f32.gmra.mrb[0].mxu0 %v935
      %v1021 = vpop.f32.mrb[0].mxu0
      %v1022 = vadd.f32 0.0, %v1021
      %v1023 = vpop.f32.mrb[0].mxu0
      %1024 = vmatprep.mubr.f32.mxu0 0.0
      %1025 = vmatmul.mubr.f32.gmra.mrb[0].mxu0 %v938
      %v1026 = vpop.f32.mrb[0].mxu0
      %v1027 = vadd.f32 0.0, %v1026
      %v1028 = vpop.f32.mrb[0].mxu0
      %1029 = vdwg.mxu0
      %v1030 = vadd.f32 %v905, %v1007
      %v1031 = vadd.f32 %v906, %v1012
      %v1032 = vadd.f32 %v907, %v1017
      %v1033 = vadd.f32 %v908, %v1022
      %v1034 = vadd.f32 %v909, %v1027
      %s1035 = scalar_lea.vmem %s165, 360
      %v1036 = vld [vmem:[%s1035] sm:$0xff]
      %v1037 = vld [vmem:[%s1035 + $0x8] sm:$0xff]
      %v1038 = vld [vmem:[%s1035 + $0x10] sm:$0xff]
      %v1039 = vld [vmem:[%s1035 + $0x18] sm:$0xff]
      %v1040 = vld [vmem:[%s1035 + $0x20] sm:$0xf]
      %s1041 = scalar_lea.vmem %s1, 448
      %v1042 = vld [vmem:[%s1041] sm:$0xff]
      %v1043 = vld [vmem:[%s1041 + $0x8] sm:$0xff]
      %v1044 = vld [vmem:[%s1041 + $0x10] sm:$0xff]
      %v1045 = vld [vmem:[%s1041 + $0x18] sm:$0xff]
      %v1046 = vld [vmem:[%s1041 + $0x20] sm:$0xff]
      %v1047 = vld [vmem:[%s1041 + $0x28] sm:$0xff]
      %v1048 = vld [vmem:[%s1041 + $0x30] sm:$0xff]
      %v1049 = vld [vmem:[%s1041 + $0x38] sm:$0xff]
      %v1051 = vsel %vm199, %v1036, 0
      %v1054 = vsel %vm199, %v1037, 0
      %v1057 = vsel %vm199, %v1038, 0
      %v1060 = vsel %vm199, %v1039, 0
      %v1063 = vsel %vm199, %v1040, 0
      %1065 = vmatprep.subr.mxu0 0.0
      %1066 = vmatpush1.msra.mxu0 %v1042
      %1067 = vmatprep.subr.mxu0 0.0
      %1068 = vmatpush1.msra.mxu0 %v1043
      %1069 = vmatprep.subr.mxu0 0.0
      %1070 = vmatpush1.msra.mxu0 %v1044
      %1071 = vmatprep.subr.mxu0 0.0
      %1072 = vmatpush1.msra.mxu0 %v1045
      %1073 = vmatprep.subr.mxu0 0.0
      %1074 = vmatpush1.msra.mxu0 %v1046
      %1075 = vmatprep.subr.mxu0 0.0
      %1076 = vmatpush1.msra.mxu0 %v1047
      %1077 = vmatprep.subr.mxu0 0.0
      %1078 = vmatpush1.msra.mxu0 %v1048
      %1079 = vmatprep.subr.mxu0 0.0
      %1080 = vmatpush1.msra.mxu0 %v1049
      %1081 = vmatprep.subr.mxu0 0.0
      %1082 = vmatpush1.msra.mxu0 0.0
      %1083 = vmatprep.subr.mxu0 0.0
      %1084 = vmatpush1.msra.mxu0 0.0
      %1085 = vmatprep.subr.mxu0 0.0
      %1086 = vmatpush1.msra.mxu0 0.0
      %1087 = vmatprep.subr.mxu0 0.0
      %1088 = vmatpush1.msra.mxu0 0.0
      %1089 = vmatprep.subr.mxu0 0.0
      %1090 = vmatpush1.msra.mxu0 0.0
      %1091 = vmatprep.subr.mxu0 0.0
      %1092 = vmatpush1.msra.mxu0 0.0
      %1093 = vmatprep.subr.mxu0 0.0
      %1094 = vmatpush1.msra.mxu0 0.0
      %1095 = vmatprep.subr.mxu0 0.0
      %1096 = vmatpush1.msra.mxu0 0.0
      %1097 = vmatprep.subr.mxu0 0.0
      %1098 = vmatpush1.msra.mxu0 0.0
      %1099 = vmatprep.subr.mxu0 0.0
      %1100 = vmatpush1.msra.mxu0 0.0
      %1101 = vmatprep.subr.mxu0 0.0
      %1102 = vmatpush1.msra.mxu0 0.0
      %1103 = vmatprep.subr.mxu0 0.0
      %1104 = vmatpush1.msra.mxu0 0.0
      %1105 = vmatprep.subr.mxu0 0.0
      %1106 = vmatpush1.msra.mxu0 0.0
      %1107 = vmatprep.subr.mxu0 0.0
      %1108 = vmatpush1.msra.mxu0 0.0
      %1109 = vmatprep.subr.mxu0 0.0
      %1110 = vmatpush1.msra.mxu0 0.0
      %1111 = vmatprep.subr.mxu0 0.0
      %1112 = vmatpush1.msra.mxu0 0.0
      %1113 = vmatprep.subr.mxu0 0.0
      %1114 = vmatpush1.msra.mxu0 0.0
      %1115 = vmatprep.subr.mxu0 0.0
      %1116 = vmatpush1.msra.mxu0 0.0
      %1117 = vmatprep.subr.mxu0 0.0
      %1118 = vmatpush1.msra.mxu0 0.0
      %1119 = vmatprep.subr.mxu0 0.0
      %1120 = vmatpush1.msra.mxu0 0.0
      %1121 = vmatprep.subr.mxu0 0.0
      %1122 = vmatpush1.msra.mxu0 0.0
      %1123 = vmatprep.subr.mxu0 0.0
      %1124 = vmatpush1.msra.mxu0 0.0
      %1125 = vmatprep.subr.mxu0 0.0
      %1126 = vmatpush1.msra.mxu0 0.0
      %1127 = vmatprep.subr.mxu0 0.0
      %1128 = vmatpush1.msra.mxu0 0.0
      %1129 = vmatprep.mubr.f32.mxu0 0.0
      %1130 = vmatmul.mubr.f32.gmra.mrb[0].mxu0 %v1051
      %v1131 = vpop.f32.mrb[0].mxu0
      %v1132 = vadd.f32 0.0, %v1131
      %v1133 = vpop.f32.mrb[0].mxu0
      %1134 = vmatprep.mubr.f32.mxu0 0.0
      %1135 = vmatmul.mubr.f32.gmra.mrb[0].mxu0 %v1054
      %v1136 = vpop.f32.mrb[0].mxu0
      %v1137 = vadd.f32 0.0, %v1136
      %v1138 = vpop.f32.mrb[0].mxu0
      %1139 = vmatprep.mubr.f32.mxu0 0.0
      %1140 = vmatmul.mubr.f32.gmra.mrb[0].mxu0 %v1057
      %v1141 = vpop.f32.mrb[0].mxu0
      %v1142 = vadd.f32 0.0, %v1141
      %v1143 = vpop.f32.mrb[0].mxu0
      %1144 = vmatprep.mubr.f32.mxu0 0.0
      %1145 = vmatmul.mubr.f32.gmra.mrb[0].mxu0 %v1060
      %v1146 = vpop.f32.mrb[0].mxu0
      %v1147 = vadd.f32 0.0, %v1146
      %v1148 = vpop.f32.mrb[0].mxu0
      %1149 = vmatprep.mubr.f32.mxu0 0.0
      %1150 = vmatmul.mubr.f32.gmra.mrb[0].mxu0 %v1063
      %v1151 = vpop.f32.mrb[0].mxu0
      %v1152 = vadd.f32 0.0, %v1151
      %v1153 = vpop.f32.mrb[0].mxu0
      %1154 = vdwg.mxu0
      %v1155 = vadd.f32 %v1030, %v1132
      %v1156 = vadd.f32 %v1031, %v1137
      %v1157 = vadd.f32 %v1032, %v1142
      %v1158 = vadd.f32 %v1033, %v1147
      %v1159 = vadd.f32 %v1034, %v1152
      %s1160 = scalar_lea.vmem %s165, 400
      %v1161 = vld [vmem:[%s1160] sm:$0xff]
      %v1162 = vld [vmem:[%s1160 + $0x8] sm:$0xff]
      %v1163 = vld [vmem:[%s1160 + $0x10] sm:$0xff]
      %v1164 = vld [vmem:[%s1160 + $0x18] sm:$0xff]
      %v1165 = vld [vmem:[%s1160 + $0x20] sm:$0xf]
      %s1166 = scalar_lea.vmem %s1, 512
      %v1167 = vld [vmem:[%s1166] sm:$0xff]
      %v1168 = vld [vmem:[%s1166 + $0x8] sm:$0xff]
      %v1169 = vld [vmem:[%s1166 + $0x10] sm:$0xff]
      %v1170 = vld [vmem:[%s1166 + $0x18] sm:$0xff]
      %v1171 = vld [vmem:[%s1166 + $0x20] sm:$0xff]
      %v1172 = vld [vmem:[%s1166 + $0x28] sm:$0xff]
      %v1173 = vld [vmem:[%s1166 + $0x30] sm:$0xff]
      %v1174 = vld [vmem:[%s1166 + $0x38] sm:$0xff]
      %v1176 = vsel %vm199, %v1161, 0
      %v1179 = vsel %vm199, %v1162, 0
      %v1182 = vsel %vm199, %v1163, 0
      %v1185 = vsel %vm199, %v1164, 0
      %v1188 = vsel %vm199, %v1165, 0
      %1190 = vmatprep.subr.mxu0 0.0
      %1191 = vmatpush1.msra.mxu0 %v1167
      %1192 = vmatprep.subr.mxu0 0.0
      %1193 = vmatpush1.msra.mxu0 %v1168
      %1194 = vmatprep.subr.mxu0 0.0
      %1195 = vmatpush1.msra.mxu0 %v1169
      %1196 = vmatprep.subr.mxu0 0.0
      %1197 = vmatpush1.msra.mxu0 %v1170
      %1198 = vmatprep.subr.mxu0 0.0
      %1199 = vmatpush1.msra.mxu0 %v1171
      %1200 = vmatprep.subr.mxu0 0.0
      %1201 = vmatpush1.msra.mxu0 %v1172
      %1202 = vmatprep.subr.mxu0 0.0
      %1203 = vmatpush1.msra.mxu0 %v1173
      %1204 = vmatprep.subr.mxu0 0.0
      %1205 = vmatpush1.msra.mxu0 %v1174
      %1206 = vmatprep.subr.mxu0 0.0
      %1207 = vmatpush1.msra.mxu0 0.0
      %1208 = vmatprep.subr.mxu0 0.0
      %1209 = vmatpush1.msra.mxu0 0.0
      %1210 = vmatprep.subr.mxu0 0.0
      %1211 = vmatpush1.msra.mxu0 0.0
      %1212 = vmatprep.subr.mxu0 0.0
      %1213 = vmatpush1.msra.mxu0 0.0
      %1214 = vmatprep.subr.mxu0 0.0
      %1215 = vmatpush1.msra.mxu0 0.0
      %1216 = vmatprep.subr.mxu0 0.0
      %1217 = vmatpush1.msra.mxu0 0.0
      %1218 = vmatprep.subr.mxu0 0.0
      %1219 = vmatpush1.msra.mxu0 0.0
      %1220 = vmatprep.subr.mxu0 0.0
      %1221 = vmatpush1.msra.mxu0 0.0
      %1222 = vmatprep.subr.mxu0 0.0
      %1223 = vmatpush1.msra.mxu0 0.0
      %1224 = vmatprep.subr.mxu0 0.0
      %1225 = vmatpush1.msra.mxu0 0.0
      %1226 = vmatprep.subr.mxu0 0.0
      %1227 = vmatpush1.msra.mxu0 0.0
      %1228 = vmatprep.subr.mxu0 0.0
      %1229 = vmatpush1.msra.mxu0 0.0
      %1230 = vmatprep.subr.mxu0 0.0
      %1231 = vmatpush1.msra.mxu0 0.0
      %1232 = vmatprep.subr.mxu0 0.0
      %1233 = vmatpush1.msra.mxu0 0.0
      %1234 = vmatprep.subr.mxu0 0.0
      %1235 = vmatpush1.msra.mxu0 0.0
      %1236 = vmatprep.subr.mxu0 0.0
      %1237 = vmatpush1.msra.mxu0 0.0
      %1238 = vmatprep.subr.mxu0 0.0
      %1239 = vmatpush1.msra.mxu0 0.0
      %1240 = vmatprep.subr.mxu0 0.0
      %1241 = vmatpush1.msra.mxu0 0.0
      %1242 = vmatprep.subr.mxu0 0.0
      %1243 = vmatpush1.msra.mxu0 0.0
      %1244 = vmatprep.subr.mxu0 0.0
      %1245 = vmatpush1.msra.mxu0 0.0
      %1246 = vmatprep.subr.mxu0 0.0
      %1247 = vmatpush1.msra.mxu0 0.0
      %1248 = vmatprep.subr.mxu0 0.0
      %1249 = vmatpush1.msra.mxu0 0.0
      %1250 = vmatprep.subr.mxu0 0.0
      %1251 = vmatpush1.msra.mxu0 0.0
      %1252 = vmatprep.subr.mxu0 0.0
      %1253 = vmatpush1.msra.mxu0 0.0
      %1254 = vmatprep.mubr.f32.mxu0 0.0
      %1255 = vmatmul.mubr.f32.gmra.mrb[0].mxu0 %v1176
      %v1256 = vpop.f32.mrb[0].mxu0
      %v1257 = vadd.f32 0.0, %v1256
      %v1258 = vpop.f32.mrb[0].mxu0
      %1259 = vmatprep.mubr.f32.mxu0 0.0
      %1260 = vmatmul.mubr.f32.gmra.mrb[0].mxu0 %v1179
      %v1261 = vpop.f32.mrb[0].mxu0
      %v1262 = vadd.f32 0.0, %v1261
      %v1263 = vpop.f32.mrb[0].mxu0
      %1264 = vmatprep.mubr.f32.mxu0 0.0
      %1265 = vmatmul.mubr.f32.gmra.mrb[0].mxu0 %v1182
      %v1266 = vpop.f32.mrb[0].mxu0
      %v1267 = vadd.f32 0.0, %v1266
      %v1268 = vpop.f32.mrb[0].mxu0
      %1269 = vmatprep.mubr.f32.mxu0 0.0
      %1270 = vmatmul.mubr.f32.gmra.mrb[0].mxu0 %v1185
      %v1271 = vpop.f32.mrb[0].mxu0
      %v1272 = vadd.f32 0.0, %v1271
      %v1273 = vpop.f32.mrb[0].mxu0
      %1274 = vmatprep.mubr.f32.mxu0 0.0
      %1275 = vmatmul.mubr.f32.gmra.mrb[0].mxu0 %v1188
      %v1276 = vpop.f32.mrb[0].mxu0
      %v1277 = vadd.f32 0.0, %v1276
      %v1278 = vpop.f32.mrb[0].mxu0
      %1279 = vdwg.mxu0
      %v1280 = vadd.f32 %v1155, %v1257
      %v1281 = vadd.f32 %v1156, %v1262
      %v1282 = vadd.f32 %v1157, %v1267
      %v1283 = vadd.f32 %v1158, %v1272
      %v1284 = vadd.f32 %v1159, %v1277
      %1285 = vmatprep.subr.mxu0 0.0
      %1286 = vmatpush1.msra.mxu0 %v191
      %1287 = vmatprep.subr.mxu0 0.0
      %1288 = vmatpush1.msra.mxu0 %v192
      %1289 = vmatprep.subr.mxu0 0.0
      %1290 = vmatpush1.msra.mxu0 %v193
      %1291 = vmatprep.subr.mxu0 0.0
      %1292 = vmatpush1.msra.mxu0 %v194
      %1293 = vmatprep.subr.mxu0 0.0
      %1294 = vmatpush1.msra.mxu0 %v195
      %1295 = vmatprep.subr.mxu0 0.0
      %1296 = vmatpush1.msra.mxu0 %v196
      %1297 = vmatprep.subr.mxu0 0.0
      %1298 = vmatpush1.msra.mxu0 %v197
      %1299 = vmatprep.subr.mxu0 0.0
      %1300 = vmatpush1.msra.mxu0 %v198
      %1301 = vmatprep.subr.mxu0 0.0
      %1302 = vmatpush1.msra.mxu0 0.0
      %1303 = vmatprep.subr.mxu0 0.0
      %1304 = vmatpush1.msra.mxu0 0.0
      %1305 = vmatprep.subr.mxu0 0.0
      %1306 = vmatpush1.msra.mxu0 0.0
      %1307 = vmatprep.subr.mxu0 0.0
      %1308 = vmatpush1.msra.mxu0 0.0
      %1309 = vmatprep.subr.mxu0 0.0
      %1310 = vmatpush1.msra.mxu0 0.0
      %1311 = vmatprep.subr.mxu0 0.0
      %1312 = vmatpush1.msra.mxu0 0.0
      %1313 = vmatprep.subr.mxu0 0.0
      %1314 = vmatpush1.msra.mxu0 0.0
      %1315 = vmatprep.subr.mxu0 0.0
      %1316 = vmatpush1.msra.mxu0 0.0
      %1317 = vmatprep.subr.mxu0 0.0
      %1318 = vmatpush1.msra.mxu0 0.0
      %1319 = vmatprep.subr.mxu0 0.0
      %1320 = vmatpush1.msra.mxu0 0.0
      %1321 = vmatprep.subr.mxu0 0.0
      %1322 = vmatpush1.msra.mxu0 0.0
      %1323 = vmatprep.subr.mxu0 0.0
      %1324 = vmatpush1.msra.mxu0 0.0
      %1325 = vmatprep.subr.mxu0 0.0
      %1326 = vmatpush1.msra.mxu0 0.0
      %1327 = vmatprep.subr.mxu0 0.0
      %1328 = vmatpush1.msra.mxu0 0.0
      %1329 = vmatprep.subr.mxu0 0.0
      %1330 = vmatpush1.msra.mxu0 0.0
      %1331 = vmatprep.subr.mxu0 0.0
      %1332 = vmatpush1.msra.mxu0 0.0
      %1333 = vmatprep.subr.mxu0 0.0
      %1334 = vmatpush1.msra.mxu0 0.0
      %1335 = vmatprep.subr.mxu0 0.0
      %1336 = vmatpush1.msra.mxu0 0.0
      %1337 = vmatprep.subr.mxu0 0.0
      %1338 = vmatpush1.msra.mxu0 0.0
      %1339 = vmatprep.subr.mxu0 0.0
      %1340 = vmatpush1.msra.mxu0 0.0
      %1341 = vmatprep.subr.mxu0 0.0
      %1342 = vmatpush1.msra.mxu0 0.0
      %1343 = vmatprep.subr.mxu0 0.0
      %1344 = vmatpush1.msra.mxu0 0.0
      %1345 = vmatprep.subr.mxu0 0.0
      %1346 = vmatpush1.msra.mxu0 0.0
      %1347 = vmatprep.subr.mxu0 0.0
      %1348 = vmatpush1.msra.mxu0 0.0
      %1349 = vmatprep.mubr.f32.mxu0 0.0
      %1350 = vmatmul.mubr.f32.gmra.mrb[0].mxu0 %v426
      %v1351 = vpop.f32.mrb[0].mxu0
      %v1352 = vadd.f32 0.0, %v1351
      %v1353 = vpop.f32.mrb[0].mxu0
      %1354 = vmatprep.mubr.f32.mxu0 0.0
      %1355 = vmatmul.mubr.f32.gmra.mrb[0].mxu0 %v429
      %v1356 = vpop.f32.mrb[0].mxu0
      %v1357 = vadd.f32 0.0, %v1356
      %v1358 = vpop.f32.mrb[0].mxu0
      %1359 = vmatprep.mubr.f32.mxu0 0.0
      %1360 = vmatmul.mubr.f32.gmra.mrb[0].mxu0 %v432
      %v1361 = vpop.f32.mrb[0].mxu0
      %v1362 = vadd.f32 0.0, %v1361
      %v1363 = vpop.f32.mrb[0].mxu0
      %1364 = vmatprep.mubr.f32.mxu0 0.0
      %1365 = vmatmul.mubr.f32.gmra.mrb[0].mxu0 %v435
      %v1366 = vpop.f32.mrb[0].mxu0
      %v1367 = vadd.f32 0.0, %v1366
      %v1368 = vpop.f32.mrb[0].mxu0
      %1369 = vmatprep.mubr.f32.mxu0 0.0
      %1370 = vmatmul.mubr.f32.gmra.mrb[0].mxu0 %v438
      %v1371 = vpop.f32.mrb[0].mxu0
      %v1372 = vadd.f32 0.0, %v1371
      %v1373 = vpop.f32.mrb[0].mxu0
      %1374 = vdwg.mxu0
      %1375 = vmatprep.subr.mxu0 0.0
      %1376 = vmatpush1.msra.mxu0 %v176
      %1377 = vmatprep.subr.mxu0 0.0
      %1378 = vmatpush1.msra.mxu0 %v177
      %1379 = vmatprep.subr.mxu0 0.0
      %1380 = vmatpush1.msra.mxu0 %v178
      %1381 = vmatprep.subr.mxu0 0.0
      %1382 = vmatpush1.msra.mxu0 %v179
      %1383 = vmatprep.subr.mxu0 0.0
      %1384 = vmatpush1.msra.mxu0 %v180
      %1385 = vmatprep.subr.mxu0 0.0
      %1386 = vmatpush1.msra.mxu0 %v181
      %1387 = vmatprep.subr.mxu0 0.0
      %1388 = vmatpush1.msra.mxu0 %v182
      %1389 = vmatprep.subr.mxu0 0.0
      %1390 = vmatpush1.msra.mxu0 %v183
      %1391 = vmatprep.subr.mxu0 0.0
      %1392 = vmatpush1.msra.mxu0 0.0
      %1393 = vmatprep.subr.mxu0 0.0
      %1394 = vmatpush1.msra.mxu0 0.0
      %1395 = vmatprep.subr.mxu0 0.0
      %1396 = vmatpush1.msra.mxu0 0.0
      %1397 = vmatprep.subr.mxu0 0.0
      %1398 = vmatpush1.msra.mxu0 0.0
      %1399 = vmatprep.subr.mxu0 0.0
      %1400 = vmatpush1.msra.mxu0 0.0
      %1401 = vmatprep.subr.mxu0 0.0
      %1402 = vmatpush1.msra.mxu0 0.0
      %1403 = vmatprep.subr.mxu0 0.0
      %1404 = vmatpush1.msra.mxu0 0.0
      %1405 = vmatprep.subr.mxu0 0.0
      %1406 = vmatpush1.msra.mxu0 0.0
      %1407 = vmatprep.subr.mxu0 0.0
      %1408 = vmatpush1.msra.mxu0 0.0
      %1409 = vmatprep.subr.mxu0 0.0
      %1410 = vmatpush1.msra.mxu0 0.0
      %1411 = vmatprep.subr.mxu0 0.0
      %1412 = vmatpush1.msra.mxu0 0.0
      %1413 = vmatprep.subr.mxu0 0.0
      %1414 = vmatpush1.msra.mxu0 0.0
      %1415 = vmatprep.subr.mxu0 0.0
      %1416 = vmatpush1.msra.mxu0 0.0
      %1417 = vmatprep.subr.mxu0 0.0
      %1418 = vmatpush1.msra.mxu0 0.0
      %1419 = vmatprep.subr.mxu0 0.0
      %1420 = vmatpush1.msra.mxu0 0.0
      %1421 = vmatprep.subr.mxu0 0.0
      %1422 = vmatpush1.msra.mxu0 0.0
      %1423 = vmatprep.subr.mxu0 0.0
      %1424 = vmatpush1.msra.mxu0 0.0
      %1425 = vmatprep.subr.mxu0 0.0
      %1426 = vmatpush1.msra.mxu0 0.0
      %1427 = vmatprep.subr.mxu0 0.0
      %1428 = vmatpush1.msra.mxu0 0.0
      %1429 = vmatprep.subr.mxu0 0.0
      %1430 = vmatpush1.msra.mxu0 0.0
      %1431 = vmatprep.subr.mxu0 0.0
      %1432 = vmatpush1.msra.mxu0 0.0
      %1433 = vmatprep.subr.mxu0 0.0
      %1434 = vmatpush1.msra.mxu0 0.0
      %1435 = vmatprep.subr.mxu0 0.0
      %1436 = vmatpush1.msra.mxu0 0.0
      %1437 = vmatprep.subr.mxu0 0.0
      %1438 = vmatpush1.msra.mxu0 0.0
      %1439 = vmatprep.mubr.f32.mxu0 0.0
      %1440 = vmatmul.mubr.f32.gmra.mrb[0].mxu0 %v201
      %v1441 = vpop.f32.mrb[0].mxu0
      %v1442 = vadd.f32 %v1352, %v1441
      %v1443 = vpop.f32.mrb[0].mxu0
      %1444 = vmatprep.mubr.f32.mxu0 0.0
      %1445 = vmatmul.mubr.f32.gmra.mrb[0].mxu0 %v204
      %v1446 = vpop.f32.mrb[0].mxu0
      %v1447 = vadd.f32 %v1357, %v1446
      %v1448 = vpop.f32.mrb[0].mxu0
      %1449 = vmatprep.mubr.f32.mxu0 0.0
      %1450 = vmatmul.mubr.f32.gmra.mrb[0].mxu0 %v207
      %v1451 = vpop.f32.mrb[0].mxu0
      %v1452 = vadd.f32 %v1362, %v1451
      %v1453 = vpop.f32.mrb[0].mxu0
      %1454 = vmatprep.mubr.f32.mxu0 0.0
      %1455 = vmatmul.mubr.f32.gmra.mrb[0].mxu0 %v210
      %v1456 = vpop.f32.mrb[0].mxu0
      %v1457 = vadd.f32 %v1367, %v1456
      %v1458 = vpop.f32.mrb[0].mxu0
      %1459 = vmatprep.mubr.f32.mxu0 0.0
      %1460 = vmatmul.mubr.f32.gmra.mrb[0].mxu0 %v213
      %v1461 = vpop.f32.mrb[0].mxu0
      %v1462 = vadd.f32 %v1372, %v1461
      %v1463 = vpop.f32.mrb[0].mxu0
      %1464 = vdwg.mxu0
      %s1465 = scalar_lea.vmem %s165, 120
      %v1466 = vld [vmem:[%s1465] sm:$0xff]
      %v1467 = vld [vmem:[%s1465 + $0x8] sm:$0xff]
      %v1468 = vld [vmem:[%s1465 + $0x10] sm:$0xff]
      %v1469 = vld [vmem:[%s1465 + $0x18] sm:$0xff]
      %v1470 = vld [vmem:[%s1465 + $0x20] sm:$0xf]
      %v1472 = vsel %vm199, %v1466, 0
      %v1475 = vsel %vm199, %v1467, 0
      %v1478 = vsel %vm199, %v1468, 0
      %v1481 = vsel %vm199, %v1469, 0
      %v1484 = vsel %vm199, %v1470, 0
      %1486 = vmatprep.subr.mxu0 0.0
      %1487 = vmatpush1.msra.mxu0 %v417
      %1488 = vmatprep.subr.mxu0 0.0
      %1489 = vmatpush1.msra.mxu0 %v418
      %1490 = vmatprep.subr.mxu0 0.0
      %1491 = vmatpush1.msra.mxu0 %v419
      %1492 = vmatprep.subr.mxu0 0.0
      %1493 = vmatpush1.msra.mxu0 %v420
      %1494 = vmatprep.subr.mxu0 0.0
      %1495 = vmatpush1.msra.mxu0 %v421
      %1496 = vmatprep.subr.mxu0 0.0
      %1497 = vmatpush1.msra.mxu0 %v422
      %1498 = vmatprep.subr.mxu0 0.0
      %1499 = vmatpush1.msra.mxu0 %v423
      %1500 = vmatprep.subr.mxu0 0.0
      %1501 = vmatpush1.msra.mxu0 %v424
      %1502 = vmatprep.subr.mxu0 0.0
      %1503 = vmatpush1.msra.mxu0 0.0
      %1504 = vmatprep.subr.mxu0 0.0
      %1505 = vmatpush1.msra.mxu0 0.0
      %1506 = vmatprep.subr.mxu0 0.0
      %1507 = vmatpush1.msra.mxu0 0.0
      %1508 = vmatprep.subr.mxu0 0.0
      %1509 = vmatpush1.msra.mxu0 0.0
      %1510 = vmatprep.subr.mxu0 0.0
      %1511 = vmatpush1.msra.mxu0 0.0
      %1512 = vmatprep.subr.mxu0 0.0
      %1513 = vmatpush1.msra.mxu0 0.0
      %1514 = vmatprep.subr.mxu0 0.0
      %1515 = vmatpush1.msra.mxu0 0.0
      %1516 = vmatprep.subr.mxu0 0.0
      %1517 = vmatpush1.msra.mxu0 0.0
      %1518 = vmatprep.subr.mxu0 0.0
      %1519 = vmatpush1.msra.mxu0 0.0
      %1520 = vmatprep.subr.mxu0 0.0
      %1521 = vmatpush1.msra.mxu0 0.0
      %1522 = vmatprep.subr.mxu0 0.0
      %1523 = vmatpush1.msra.mxu0 0.0
      %1524 = vmatprep.subr.mxu0 0.0
      %1525 = vmatpush1.msra.mxu0 0.0
      %1526 = vmatprep.subr.mxu0 0.0
      %1527 = vmatpush1.msra.mxu0 0.0
      %1528 = vmatprep.subr.mxu0 0.0
      %1529 = vmatpush1.msra.mxu0 0.0
      %1530 = vmatprep.subr.mxu0 0.0
      %1531 = vmatpush1.msra.mxu0 0.0
      %1532 = vmatprep.subr.mxu0 0.0
      %1533 = vmatpush1.msra.mxu0 0.0
      %1534 = vmatprep.subr.mxu0 0.0
      %1535 = vmatpush1.msra.mxu0 0.0
      %1536 = vmatprep.subr.mxu0 0.0
      %1537 = vmatpush1.msra.mxu0 0.0
      %1538 = vmatprep.subr.mxu0 0.0
      %1539 = vmatpush1.msra.mxu0 0.0
      %1540 = vmatprep.subr.mxu0 0.0
      %1541 = vmatpush1.msra.mxu0 0.0
      %1542 = vmatprep.subr.mxu0 0.0
      %1543 = vmatpush1.msra.mxu0 0.0
      %1544 = vmatprep.subr.mxu0 0.0
      %1545 = vmatpush1.msra.mxu0 0.0
      %1546 = vmatprep.subr.mxu0 0.0
      %1547 = vmatpush1.msra.mxu0 0.0
      %1548 = vmatprep.subr.mxu0 0.0
      %1549 = vmatpush1.msra.mxu0 0.0
      %1550 = vmatprep.mubr.f32.mxu0 0.0
      %1551 = vmatmul.mubr.f32.gmra.mrb[0].mxu0 %v1472
      %v1552 = vpop.f32.mrb[0].mxu0
      %v1553 = vadd.f32 0.0, %v1552
      %v1554 = vpop.f32.mrb[0].mxu0
      %1555 = vmatprep.mubr.f32.mxu0 0.0
      %1556 = vmatmul.mubr.f32.gmra.mrb[0].mxu0 %v1475
      %v1557 = vpop.f32.mrb[0].mxu0
      %v1558 = vadd.f32 0.0, %v1557
      %v1559 = vpop.f32.mrb[0].mxu0
      %1560 = vmatprep.mubr.f32.mxu0 0.0
      %1561 = vmatmul.mubr.f32.gmra.mrb[0].mxu0 %v1478
      %v1562 = vpop.f32.mrb[0].mxu0
      %v1563 = vadd.f32 0.0, %v1562
      %v1564 = vpop.f32.mrb[0].mxu0
      %1565 = vmatprep.mubr.f32.mxu0 0.0
      %1566 = vmatmul.mubr.f32.gmra.mrb[0].mxu0 %v1481
      %v1567 = vpop.f32.mrb[0].mxu0
      %v1568 = vadd.f32 0.0, %v1567
      %v1569 = vpop.f32.mrb[0].mxu0
      %1570 = vmatprep.mubr.f32.mxu0 0.0
      %1571 = vmatmul.mubr.f32.gmra.mrb[0].mxu0 %v1484
      %v1572 = vpop.f32.mrb[0].mxu0
      %v1573 = vadd.f32 0.0, %v1572
      %v1574 = vpop.f32.mrb[0].mxu0
      %1575 = vdwg.mxu0
      %v1576 = vadd.f32 %v1442, %v1553
      %v1577 = vadd.f32 %v1447, %v1558
      %v1578 = vadd.f32 %v1452, %v1563
      %v1579 = vadd.f32 %v1457, %v1568
      %v1580 = vadd.f32 %v1462, %v1573
      %1581 = vmatprep.subr.mxu0 0.0
      %1582 = vmatpush1.msra.mxu0 %v542
      %1583 = vmatprep.subr.mxu0 0.0
      %1584 = vmatpush1.msra.mxu0 %v543
      %1585 = vmatprep.subr.mxu0 0.0
      %1586 = vmatpush1.msra.mxu0 %v544
      %1587 = vmatprep.subr.mxu0 0.0
      %1588 = vmatpush1.msra.mxu0 %v545
      %1589 = vmatprep.subr.mxu0 0.0
      %1590 = vmatpush1.msra.mxu0 %v546
      %1591 = vmatprep.subr.mxu0 0.0
      %1592 = vmatpush1.msra.mxu0 %v547
      %1593 = vmatprep.subr.mxu0 0.0
      %1594 = vmatpush1.msra.mxu0 %v548
      %1595 = vmatprep.subr.mxu0 0.0
      %1596 = vmatpush1.msra.mxu0 %v549
      %1597 = vmatprep.subr.mxu0 0.0
      %1598 = vmatpush1.msra.mxu0 0.0
      %1599 = vmatprep.subr.mxu0 0.0
      %1600 = vmatpush1.msra.mxu0 0.0
      %1601 = vmatprep.subr.mxu0 0.0
      %1602 = vmatpush1.msra.mxu0 0.0
      %1603 = vmatprep.subr.mxu0 0.0
      %1604 = vmatpush1.msra.mxu0 0.0
      %1605 = vmatprep.subr.mxu0 0.0
      %1606 = vmatpush1.msra.mxu0 0.0
      %1607 = vmatprep.subr.mxu0 0.0
      %1608 = vmatpush1.msra.mxu0 0.0
      %1609 = vmatprep.subr.mxu0 0.0
      %1610 = vmatpush1.msra.mxu0 0.0
      %1611 = vmatprep.subr.mxu0 0.0
      %1612 = vmatpush1.msra.mxu0 0.0
      %1613 = vmatprep.subr.mxu0 0.0
      %1614 = vmatpush1.msra.mxu0 0.0
      %1615 = vmatprep.subr.mxu0 0.0
      %1616 = vmatpush1.msra.mxu0 0.0
      %1617 = vmatprep.subr.mxu0 0.0
      %1618 = vmatpush1.msra.mxu0 0.0
      %1619 = vmatprep.subr.mxu0 0.0
      %1620 = vmatpush1.msra.mxu0 0.0
      %1621 = vmatprep.subr.mxu0 0.0
      %1622 = vmatpush1.msra.mxu0 0.0
      %1623 = vmatprep.subr.mxu0 0.0
      %1624 = vmatpush1.msra.mxu0 0.0
      %1625 = vmatprep.subr.mxu0 0.0
      %1626 = vmatpush1.msra.mxu0 0.0
      %1627 = vmatprep.subr.mxu0 0.0
      %1628 = vmatpush1.msra.mxu0 0.0
      %1629 = vmatprep.subr.mxu0 0.0
      %1630 = vmatpush1.msra.mxu0 0.0
      %1631 = vmatprep.subr.mxu0 0.0
      %1632 = vmatpush1.msra.mxu0 0.0
      %1633 = vmatprep.subr.mxu0 0.0
      %1634 = vmatpush1.msra.mxu0 0.0
      %1635 = vmatprep.subr.mxu0 0.0
      %1636 = vmatpush1.msra.mxu0 0.0
      %1637 = vmatprep.subr.mxu0 0.0
      %1638 = vmatpush1.msra.mxu0 0.0
      %1639 = vmatprep.subr.mxu0 0.0
      %1640 = vmatpush1.msra.mxu0 0.0
      %1641 = vmatprep.subr.mxu0 0.0
      %1642 = vmatpush1.msra.mxu0 0.0
      %1643 = vmatprep.subr.mxu0 0.0
      %1644 = vmatpush1.msra.mxu0 0.0
      %1645 = vmatprep.mubr.f32.mxu0 0.0
      %1646 = vmatmul.mubr.f32.gmra.mrb[0].mxu0 %v676
      %v1647 = vpop.f32.mrb[0].mxu0
      %v1648 = vadd.f32 0.0, %v1647
      %v1649 = vpop.f32.mrb[0].mxu0
      %1650 = vmatprep.mubr.f32.mxu0 0.0
      %1651 = vmatmul.mubr.f32.gmra.mrb[0].mxu0 %v679
      %v1652 = vpop.f32.mrb[0].mxu0
      %v1653 = vadd.f32 0.0, %v1652
      %v1654 = vpop.f32.mrb[0].mxu0
      %1655 = vmatprep.mubr.f32.mxu0 0.0
      %1656 = vmatmul.mubr.f32.gmra.mrb[0].mxu0 %v682
      %v1657 = vpop.f32.mrb[0].mxu0
      %v1658 = vadd.f32 0.0, %v1657
      %v1659 = vpop.f32.mrb[0].mxu0
      %1660 = vmatprep.mubr.f32.mxu0 0.0
      %1661 = vmatmul.mubr.f32.gmra.mrb[0].mxu0 %v685
      %v1662 = vpop.f32.mrb[0].mxu0
      %v1663 = vadd.f32 0.0, %v1662
      %v1664 = vpop.f32.mrb[0].mxu0
      %1665 = vmatprep.mubr.f32.mxu0 0.0
      %1666 = vmatmul.mubr.f32.gmra.mrb[0].mxu0 %v688
      %v1667 = vpop.f32.mrb[0].mxu0
      %v1668 = vadd.f32 0.0, %v1667
      %v1669 = vpop.f32.mrb[0].mxu0
      %1670 = vdwg.mxu0
      %v1671 = vadd.f32 %v1576, %v1648
      %v1672 = vadd.f32 %v1577, %v1653
      %v1673 = vadd.f32 %v1578, %v1658
      %v1674 = vadd.f32 %v1579, %v1663
      %v1675 = vadd.f32 %v1580, %v1668
      %1676 = vmatprep.subr.mxu0 0.0
      %1677 = vmatpush1.msra.mxu0 %v667
      %1678 = vmatprep.subr.mxu0 0.0
      %1679 = vmatpush1.msra.mxu0 %v668
      %1680 = vmatprep.subr.mxu0 0.0
      %1681 = vmatpush1.msra.mxu0 %v669
      %1682 = vmatprep.subr.mxu0 0.0
      %1683 = vmatpush1.msra.mxu0 %v670
      %1684 = vmatprep.subr.mxu0 0.0
      %1685 = vmatpush1.msra.mxu0 %v671
      %1686 = vmatprep.subr.mxu0 0.0
      %1687 = vmatpush1.msra.mxu0 %v672
      %1688 = vmatprep.subr.mxu0 0.0
      %1689 = vmatpush1.msra.mxu0 %v673
      %1690 = vmatprep.subr.mxu0 0.0
      %1691 = vmatpush1.msra.mxu0 %v674
      %1692 = vmatprep.subr.mxu0 0.0
      %1693 = vmatpush1.msra.mxu0 0.0
      %1694 = vmatprep.subr.mxu0 0.0
      %1695 = vmatpush1.msra.mxu0 0.0
      %1696 = vmatprep.subr.mxu0 0.0
      %1697 = vmatpush1.msra.mxu0 0.0
      %1698 = vmatprep.subr.mxu0 0.0
      %1699 = vmatpush1.msra.mxu0 0.0
      %1700 = vmatprep.subr.mxu0 0.0
      %1701 = vmatpush1.msra.mxu0 0.0
      %1702 = vmatprep.subr.mxu0 0.0
      %1703 = vmatpush1.msra.mxu0 0.0
      %1704 = vmatprep.subr.mxu0 0.0
      %1705 = vmatpush1.msra.mxu0 0.0
      %1706 = vmatprep.subr.mxu0 0.0
      %1707 = vmatpush1.msra.mxu0 0.0
      %1708 = vmatprep.subr.mxu0 0.0
      %1709 = vmatpush1.msra.mxu0 0.0
      %1710 = vmatprep.subr.mxu0 0.0
      %1711 = vmatpush1.msra.mxu0 0.0
      %1712 = vmatprep.subr.mxu0 0.0
      %1713 = vmatpush1.msra.mxu0 0.0
      %1714 = vmatprep.subr.mxu0 0.0
      %1715 = vmatpush1.msra.mxu0 0.0
      %1716 = vmatprep.subr.mxu0 0.0
      %1717 = vmatpush1.msra.mxu0 0.0
      %1718 = vmatprep.subr.mxu0 0.0
      %1719 = vmatpush1.msra.mxu0 0.0
      %1720 = vmatprep.subr.mxu0 0.0
      %1721 = vmatpush1.msra.mxu0 0.0
      %1722 = vmatprep.subr.mxu0 0.0
      %1723 = vmatpush1.msra.mxu0 0.0
      %1724 = vmatprep.subr.mxu0 0.0
      %1725 = vmatpush1.msra.mxu0 0.0
      %1726 = vmatprep.subr.mxu0 0.0
      %1727 = vmatpush1.msra.mxu0 0.0
      %1728 = vmatprep.subr.mxu0 0.0
      %1729 = vmatpush1.msra.mxu0 0.0
      %1730 = vmatprep.subr.mxu0 0.0
      %1731 = vmatpush1.msra.mxu0 0.0
      %1732 = vmatprep.subr.mxu0 0.0
      %1733 = vmatpush1.msra.mxu0 0.0
      %1734 = vmatprep.subr.mxu0 0.0
      %1735 = vmatpush1.msra.mxu0 0.0
      %1736 = vmatprep.subr.mxu0 0.0
      %1737 = vmatpush1.msra.mxu0 0.0
      %1738 = vmatprep.subr.mxu0 0.0
      %1739 = vmatpush1.msra.mxu0 0.0
      %1740 = vmatprep.mubr.f32.mxu0 0.0
      %1741 = vmatmul.mubr.f32.gmra.mrb[0].mxu0 %v801
      %v1742 = vpop.f32.mrb[0].mxu0
      %v1743 = vadd.f32 0.0, %v1742
      %v1744 = vpop.f32.mrb[0].mxu0
      %1745 = vmatprep.mubr.f32.mxu0 0.0
      %1746 = vmatmul.mubr.f32.gmra.mrb[0].mxu0 %v804
      %v1747 = vpop.f32.mrb[0].mxu0
      %v1748 = vadd.f32 0.0, %v1747
      %v1749 = vpop.f32.mrb[0].mxu0
      %1750 = vmatprep.mubr.f32.mxu0 0.0
      %1751 = vmatmul.mubr.f32.gmra.mrb[0].mxu0 %v807
      %v1752 = vpop.f32.mrb[0].mxu0
      %v1753 = vadd.f32 0.0, %v1752
      %v1754 = vpop.f32.mrb[0].mxu0
      %1755 = vmatprep.mubr.f32.mxu0 0.0
      %1756 = vmatmul.mubr.f32.gmra.mrb[0].mxu0 %v810
      %v1757 = vpop.f32.mrb[0].mxu0
      %v1758 = vadd.f32 0.0, %v1757
      %v1759 = vpop.f32.mrb[0].mxu0
      %1760 = vmatprep.mubr.f32.mxu0 0.0
      %1761 = vmatmul.mubr.f32.gmra.mrb[0].mxu0 %v813
      %v1762 = vpop.f32.mrb[0].mxu0
      %v1763 = vadd.f32 0.0, %v1762
      %v1764 = vpop.f32.mrb[0].mxu0
      %1765 = vdwg.mxu0
      %v1766 = vadd.f32 %v1671, %v1743
      %v1767 = vadd.f32 %v1672, %v1748
      %v1768 = vadd.f32 %v1673, %v1753
      %v1769 = vadd.f32 %v1674, %v1758
      %v1770 = vadd.f32 %v1675, %v1763
      %s1771 = scalar_lea.vmem %s165, 280
      %v1772 = vld [vmem:[%s1771] sm:$0xff]
      %v1773 = vld [vmem:[%s1771 + $0x8] sm:$0xff]
      %v1774 = vld [vmem:[%s1771 + $0x10] sm:$0xff]
      %v1775 = vld [vmem:[%s1771 + $0x18] sm:$0xff]
      %v1776 = vld [vmem:[%s1771 + $0x20] sm:$0xf]
      %v1778 = vsel %vm199, %v1772, 0
      %v1781 = vsel %vm199, %v1773, 0
      %v1784 = vsel %vm199, %v1774, 0
      %v1787 = vsel %vm199, %v1775, 0
      %v1790 = vsel %vm199, %v1776, 0
      %1792 = vmatprep.subr.mxu0 0.0
      %1793 = vmatpush1.msra.mxu0 %v792
      %1794 = vmatprep.subr.mxu0 0.0
      %1795 = vmatpush1.msra.mxu0 %v793
      %1796 = vmatprep.subr.mxu0 0.0
      %1797 = vmatpush1.msra.mxu0 %v794
      %1798 = vmatprep.subr.mxu0 0.0
      %1799 = vmatpush1.msra.mxu0 %v795
      %1800 = vmatprep.subr.mxu0 0.0
      %1801 = vmatpush1.msra.mxu0 %v796
      %1802 = vmatprep.subr.mxu0 0.0
      %1803 = vmatpush1.msra.mxu0 %v797
      %1804 = vmatprep.subr.mxu0 0.0
      %1805 = vmatpush1.msra.mxu0 %v798
      %1806 = vmatprep.subr.mxu0 0.0
      %1807 = vmatpush1.msra.mxu0 %v799
      %1808 = vmatprep.subr.mxu0 0.0
      %1809 = vmatpush1.msra.mxu0 0.0
      %1810 = vmatprep.subr.mxu0 0.0
      %1811 = vmatpush1.msra.mxu0 0.0
      %1812 = vmatprep.subr.mxu0 0.0
      %1813 = vmatpush1.msra.mxu0 0.0
      %1814 = vmatprep.subr.mxu0 0.0
      %1815 = vmatpush1.msra.mxu0 0.0
      %1816 = vmatprep.subr.mxu0 0.0
      %1817 = vmatpush1.msra.mxu0 0.0
      %1818 = vmatprep.subr.mxu0 0.0
      %1819 = vmatpush1.msra.mxu0 0.0
      %1820 = vmatprep.subr.mxu0 0.0
      %1821 = vmatpush1.msra.mxu0 0.0
      %1822 = vmatprep.subr.mxu0 0.0
      %1823 = vmatpush1.msra.mxu0 0.0
      %1824 = vmatprep.subr.mxu0 0.0
      %1825 = vmatpush1.msra.mxu0 0.0
      %1826 = vmatprep.subr.mxu0 0.0
      %1827 = vmatpush1.msra.mxu0 0.0
      %1828 = vmatprep.subr.mxu0 0.0
      %1829 = vmatpush1.msra.mxu0 0.0
      %1830 = vmatprep.subr.mxu0 0.0
      %1831 = vmatpush1.msra.mxu0 0.0
      %1832 = vmatprep.subr.mxu0 0.0
      %1833 = vmatpush1.msra.mxu0 0.0
      %1834 = vmatprep.subr.mxu0 0.0
      %1835 = vmatpush1.msra.mxu0 0.0
      %1836 = vmatprep.subr.mxu0 0.0
      %1837 = vmatpush1.msra.mxu0 0.0
      %1838 = vmatprep.subr.mxu0 0.0
      %1839 = vmatpush1.msra.mxu0 0.0
      %1840 = vmatprep.subr.mxu0 0.0
      %1841 = vmatpush1.msra.mxu0 0.0
      %1842 = vmatprep.subr.mxu0 0.0
      %1843 = vmatpush1.msra.mxu0 0.0
      %1844 = vmatprep.subr.mxu0 0.0
      %1845 = vmatpush1.msra.mxu0 0.0
      %1846 = vmatprep.subr.mxu0 0.0
      %1847 = vmatpush1.msra.mxu0 0.0
      %1848 = vmatprep.subr.mxu0 0.0
      %1849 = vmatpush1.msra.mxu0 0.0
      %1850 = vmatprep.subr.mxu0 0.0
      %1851 = vmatpush1.msra.mxu0 0.0
      %1852 = vmatprep.subr.mxu0 0.0
      %1853 = vmatpush1.msra.mxu0 0.0
      %1854 = vmatprep.subr.mxu0 0.0
      %1855 = vmatpush1.msra.mxu0 0.0
      %1856 = vmatprep.mubr.f32.mxu0 0.0
      %1857 = vmatmul.mubr.f32.gmra.mrb[0].mxu0 %v1778
      %v1858 = vpop.f32.mrb[0].mxu0
      %v1859 = vadd.f32 0.0, %v1858
      %v1860 = vpop.f32.mrb[0].mxu0
      %1861 = vmatprep.mubr.f32.mxu0 0.0
      %1862 = vmatmul.mubr.f32.gmra.mrb[0].mxu0 %v1781
      %v1863 = vpop.f32.mrb[0].mxu0
      %v1864 = vadd.f32 0.0, %v1863
      %v1865 = vpop.f32.mrb[0].mxu0
      %1866 = vmatprep.mubr.f32.mxu0 0.0
      %1867 = vmatmul.mubr.f32.gmra.mrb[0].mxu0 %v1784
      %v1868 = vpop.f32.mrb[0].mxu0
      %v1869 = vadd.f32 0.0, %v1868
      %v1870 = vpop.f32.mrb[0].mxu0
      %1871 = vmatprep.mubr.f32.mxu0 0.0
      %1872 = vmatmul.mubr.f32.gmra.mrb[0].mxu0 %v1787
      %v1873 = vpop.f32.mrb[0].mxu0
      %v1874 = vadd.f32 0.0, %v1873
      %v1875 = vpop.f32.mrb[0].mxu0
      %1876 = vmatprep.mubr.f32.mxu0 0.0
      %1877 = vmatmul.mubr.f32.gmra.mrb[0].mxu0 %v1790
      %v1878 = vpop.f32.mrb[0].mxu0
      %v1879 = vadd.f32 0.0, %v1878
      %v1880 = vpop.f32.mrb[0].mxu0
      %1881 = vdwg.mxu0
      %v1882 = vadd.f32 %v1766, %v1859
      %v1883 = vadd.f32 %v1767, %v1864
      %v1884 = vadd.f32 %v1768, %v1869
      %v1885 = vadd.f32 %v1769, %v1874
      %v1886 = vadd.f32 %v1770, %v1879
      %1887 = vmatprep.subr.mxu0 0.0
      %1888 = vmatpush1.msra.mxu0 %v917
      %1889 = vmatprep.subr.mxu0 0.0
      %1890 = vmatpush1.msra.mxu0 %v918
      %1891 = vmatprep.subr.mxu0 0.0
      %1892 = vmatpush1.msra.mxu0 %v919
      %1893 = vmatprep.subr.mxu0 0.0
      %1894 = vmatpush1.msra.mxu0 %v920
      %1895 = vmatprep.subr.mxu0 0.0
      %1896 = vmatpush1.msra.mxu0 %v921
      %1897 = vmatprep.subr.mxu0 0.0
      %1898 = vmatpush1.msra.mxu0 %v922
      %1899 = vmatprep.subr.mxu0 0.0
      %1900 = vmatpush1.msra.mxu0 %v923
      %1901 = vmatprep.subr.mxu0 0.0
      %1902 = vmatpush1.msra.mxu0 %v924
      %1903 = vmatprep.subr.mxu0 0.0
      %1904 = vmatpush1.msra.mxu0 0.0
      %1905 = vmatprep.subr.mxu0 0.0
      %1906 = vmatpush1.msra.mxu0 0.0
      %1907 = vmatprep.subr.mxu0 0.0
      %1908 = vmatpush1.msra.mxu0 0.0
      %1909 = vmatprep.subr.mxu0 0.0
      %1910 = vmatpush1.msra.mxu0 0.0
      %1911 = vmatprep.subr.mxu0 0.0
      %1912 = vmatpush1.msra.mxu0 0.0
      %1913 = vmatprep.subr.mxu0 0.0
      %1914 = vmatpush1.msra.mxu0 0.0
      %1915 = vmatprep.subr.mxu0 0.0
      %1916 = vmatpush1.msra.mxu0 0.0
      %1917 = vmatprep.subr.mxu0 0.0
      %1918 = vmatpush1.msra.mxu0 0.0
      %1919 = vmatprep.subr.mxu0 0.0
      %1920 = vmatpush1.msra.mxu0 0.0
      %1921 = vmatprep.subr.mxu0 0.0
      %1922 = vmatpush1.msra.mxu0 0.0
      %1923 = vmatprep.subr.mxu0 0.0
      %1924 = vmatpush1.msra.mxu0 0.0
      %1925 = vmatprep.subr.mxu0 0.0
      %1926 = vmatpush1.msra.mxu0 0.0
      %1927 = vmatprep.subr.mxu0 0.0
      %1928 = vmatpush1.msra.mxu0 0.0
      %1929 = vmatprep.subr.mxu0 0.0
      %1930 = vmatpush1.msra.mxu0 0.0
      %1931 = vmatprep.subr.mxu0 0.0
      %1932 = vmatpush1.msra.mxu0 0.0
      %1933 = vmatprep.subr.mxu0 0.0
      %1934 = vmatpush1.msra.mxu0 0.0
      %1935 = vmatprep.subr.mxu0 0.0
      %1936 = vmatpush1.msra.mxu0 0.0
      %1937 = vmatprep.subr.mxu0 0.0
      %1938 = vmatpush1.msra.mxu0 0.0
      %1939 = vmatprep.subr.mxu0 0.0
      %1940 = vmatpush1.msra.mxu0 0.0
      %1941 = vmatprep.subr.mxu0 0.0
      %1942 = vmatpush1.msra.mxu0 0.0
      %1943 = vmatprep.subr.mxu0 0.0
      %1944 = vmatpush1.msra.mxu0 0.0
      %1945 = vmatprep.subr.mxu0 0.0
      %1946 = vmatpush1.msra.mxu0 0.0
      %1947 = vmatprep.subr.mxu0 0.0
      %1948 = vmatpush1.msra.mxu0 0.0
      %1949 = vmatprep.subr.mxu0 0.0
      %1950 = vmatpush1.msra.mxu0 0.0
      %1951 = vmatprep.mubr.f32.mxu0 0.0
      %1952 = vmatmul.mubr.f32.gmra.mrb[0].mxu0 %v1051
      %v1953 = vpop.f32.mrb[0].mxu0
      %v1954 = vadd.f32 0.0, %v1953
      %v1955 = vpop.f32.mrb[0].mxu0
      %1956 = vmatprep.mubr.f32.mxu0 0.0
      %1957 = vmatmul.mubr.f32.gmra.mrb[0].mxu0 %v1054
      %v1958 = vpop.f32.mrb[0].mxu0
      %v1959 = vadd.f32 0.0, %v1958
      %v1960 = vpop.f32.mrb[0].mxu0
      %1961 = vmatprep.mubr.f32.mxu0 0.0
      %1962 = vmatmul.mubr.f32.gmra.mrb[0].mxu0 %v1057
      %v1963 = vpop.f32.mrb[0].mxu0
      %v1964 = vadd.f32 0.0, %v1963
      %v1965 = vpop.f32.mrb[0].mxu0
      %1966 = vmatprep.mubr.f32.mxu0 0.0
      %1967 = vmatmul.mubr.f32.gmra.mrb[0].mxu0 %v1060
      %v1968 = vpop.f32.mrb[0].mxu0
      %v1969 = vadd.f32 0.0, %v1968
      %v1970 = vpop.f32.mrb[0].mxu0
      %1971 = vmatprep.mubr.f32.mxu0 0.0
      %1972 = vmatmul.mubr.f32.gmra.mrb[0].mxu0 %v1063
      %v1973 = vpop.f32.mrb[0].mxu0
      %v1974 = vadd.f32 0.0, %v1973
      %v1975 = vpop.f32.mrb[0].mxu0
      %1976 = vdwg.mxu0
      %v1977 = vadd.f32 %v1882, %v1954
      %v1978 = vadd.f32 %v1883, %v1959
      %v1979 = vadd.f32 %v1884, %v1964
      %v1980 = vadd.f32 %v1885, %v1969
      %v1981 = vadd.f32 %v1886, %v1974
      %1982 = vmatprep.subr.mxu0 0.0
      %1983 = vmatpush1.msra.mxu0 %v1042
      %1984 = vmatprep.subr.mxu0 0.0
      %1985 = vmatpush1.msra.mxu0 %v1043
      %1986 = vmatprep.subr.mxu0 0.0
      %1987 = vmatpush1.msra.mxu0 %v1044
      %1988 = vmatprep.subr.mxu0 0.0
      %1989 = vmatpush1.msra.mxu0 %v1045
      %1990 = vmatprep.subr.mxu0 0.0
      %1991 = vmatpush1.msra.mxu0 %v1046
      %1992 = vmatprep.subr.mxu0 0.0
      %1993 = vmatpush1.msra.mxu0 %v1047
      %1994 = vmatprep.subr.mxu0 0.0
      %1995 = vmatpush1.msra.mxu0 %v1048
      %1996 = vmatprep.subr.mxu0 0.0
      %1997 = vmatpush1.msra.mxu0 %v1049
      %1998 = vmatprep.subr.mxu0 0.0
      %1999 = vmatpush1.msra.mxu0 0.0
      %2000 = vmatprep.subr.mxu0 0.0
      %2001 = vmatpush1.msra.mxu0 0.0
      %2002 = vmatprep.subr.mxu0 0.0
      %2003 = vmatpush1.msra.mxu0 0.0
      %2004 = vmatprep.subr.mxu0 0.0
      %2005 = vmatpush1.msra.mxu0 0.0
      %2006 = vmatprep.subr.mxu0 0.0
      %2007 = vmatpush1.msra.mxu0 0.0
      %2008 = vmatprep.subr.mxu0 0.0
      %2009 = vmatpush1.msra.mxu0 0.0
      %2010 = vmatprep.subr.mxu0 0.0
      %2011 = vmatpush1.msra.mxu0 0.0
      %2012 = vmatprep.subr.mxu0 0.0
      %2013 = vmatpush1.msra.mxu0 0.0
      %2014 = vmatprep.subr.mxu0 0.0
      %2015 = vmatpush1.msra.mxu0 0.0
      %2016 = vmatprep.subr.mxu0 0.0
      %2017 = vmatpush1.msra.mxu0 0.0
      %2018 = vmatprep.subr.mxu0 0.0
      %2019 = vmatpush1.msra.mxu0 0.0
      %2020 = vmatprep.subr.mxu0 0.0
      %2021 = vmatpush1.msra.mxu0 0.0
      %2022 = vmatprep.subr.mxu0 0.0
      %2023 = vmatpush1.msra.mxu0 0.0
      %2024 = vmatprep.subr.mxu0 0.0
      %2025 = vmatpush1.msra.mxu0 0.0
      %2026 = vmatprep.subr.mxu0 0.0
      %2027 = vmatpush1.msra.mxu0 0.0
      %2028 = vmatprep.subr.mxu0 0.0
      %2029 = vmatpush1.msra.mxu0 0.0
      %2030 = vmatprep.subr.mxu0 0.0
      %2031 = vmatpush1.msra.mxu0 0.0
      %2032 = vmatprep.subr.mxu0 0.0
      %2033 = vmatpush1.msra.mxu0 0.0
      %2034 = vmatprep.subr.mxu0 0.0
      %2035 = vmatpush1.msra.mxu0 0.0
      %2036 = vmatprep.subr.mxu0 0.0
      %2037 = vmatpush1.msra.mxu0 0.0
      %2038 = vmatprep.subr.mxu0 0.0
      %2039 = vmatpush1.msra.mxu0 0.0
      %2040 = vmatprep.subr.mxu0 0.0
      %2041 = vmatpush1.msra.mxu0 0.0
      %2042 = vmatprep.subr.mxu0 0.0
      %2043 = vmatpush1.msra.mxu0 0.0
      %2044 = vmatprep.subr.mxu0 0.0
      %2045 = vmatpush1.msra.mxu0 0.0
      %2046 = vmatprep.mubr.f32.mxu0 0.0
      %2047 = vmatmul.mubr.f32.gmra.mrb[0].mxu0 %v1176
      %v2048 = vpop.f32.mrb[0].mxu0
      %v2049 = vadd.f32 0.0, %v2048
      %v2050 = vpop.f32.mrb[0].mxu0
      %2051 = vmatprep.mubr.f32.mxu0 0.0
      %2052 = vmatmul.mubr.f32.gmra.mrb[0].mxu0 %v1179
      %v2053 = vpop.f32.mrb[0].mxu0
      %v2054 = vadd.f32 0.0, %v2053
      %v2055 = vpop.f32.mrb[0].mxu0
      %2056 = vmatprep.mubr.f32.mxu0 0.0
      %2057 = vmatmul.mubr.f32.gmra.mrb[0].mxu0 %v1182
      %v2058 = vpop.f32.mrb[0].mxu0
      %v2059 = vadd.f32 0.0, %v2058
      %v2060 = vpop.f32.mrb[0].mxu0
      %2061 = vmatprep.mubr.f32.mxu0 0.0
      %2062 = vmatmul.mubr.f32.gmra.mrb[0].mxu0 %v1185
      %v2063 = vpop.f32.mrb[0].mxu0
      %v2064 = vadd.f32 0.0, %v2063
      %v2065 = vpop.f32.mrb[0].mxu0
      %2066 = vmatprep.mubr.f32.mxu0 0.0
      %2067 = vmatmul.mubr.f32.gmra.mrb[0].mxu0 %v1188
      %v2068 = vpop.f32.mrb[0].mxu0
      %v2069 = vadd.f32 0.0, %v2068
      %v2070 = vpop.f32.mrb[0].mxu0
      %2071 = vdwg.mxu0
      %v2072 = vadd.f32 %v1977, %v2049
      %v2073 = vadd.f32 %v1978, %v2054
      %v2074 = vadd.f32 %v1979, %v2059
      %v2075 = vadd.f32 %v1980, %v2064
      %v2076 = vadd.f32 %v1981, %v2069
      %s2077 = scalar_lea.vmem %s165, 440
      %v2078 = vld [vmem:[%s2077] sm:$0xff]
      %v2079 = vld [vmem:[%s2077 + $0x8] sm:$0xff]
      %v2080 = vld [vmem:[%s2077 + $0x10] sm:$0xff]
      %v2081 = vld [vmem:[%s2077 + $0x18] sm:$0xff]
      %v2082 = vld [vmem:[%s2077 + $0x20] sm:$0xf]
      %v2084 = vsel %vm199, %v2078, 0
      %v2087 = vsel %vm199, %v2079, 0
      %v2090 = vsel %vm199, %v2080, 0
      %v2093 = vsel %vm199, %v2081, 0
      %v2096 = vsel %vm199, %v2082, 0
      %2098 = vmatprep.subr.mxu0 0.0
      %2099 = vmatpush1.msra.mxu0 %v1167
      %2100 = vmatprep.subr.mxu0 0.0
      %2101 = vmatpush1.msra.mxu0 %v1168
      %2102 = vmatprep.subr.mxu0 0.0
      %2103 = vmatpush1.msra.mxu0 %v1169
      %2104 = vmatprep.subr.mxu0 0.0
      %2105 = vmatpush1.msra.mxu0 %v1170
      %2106 = vmatprep.subr.mxu0 0.0
      %2107 = vmatpush1.msra.mxu0 %v1171
      %2108 = vmatprep.subr.mxu0 0.0
      %2109 = vmatpush1.msra.mxu0 %v1172
      %2110 = vmatprep.subr.mxu0 0.0
      %2111 = vmatpush1.msra.mxu0 %v1173
      %2112 = vmatprep.subr.mxu0 0.0
      %2113 = vmatpush1.msra.mxu0 %v1174
      %2114 = vmatprep.subr.mxu0 0.0
      %2115 = vmatpush1.msra.mxu0 0.0
      %2116 = vmatprep.subr.mxu0 0.0
      %2117 = vmatpush1.msra.mxu0 0.0
      %2118 = vmatprep.subr.mxu0 0.0
      %2119 = vmatpush1.msra.mxu0 0.0
      %2120 = vmatprep.subr.mxu0 0.0
      %2121 = vmatpush1.msra.mxu0 0.0
      %2122 = vmatprep.subr.mxu0 0.0
      %2123 = vmatpush1.msra.mxu0 0.0
      %2124 = vmatprep.subr.mxu0 0.0
      %2125 = vmatpush1.msra.mxu0 0.0
      %2126 = vmatprep.subr.mxu0 0.0
      %2127 = vmatpush1.msra.mxu0 0.0
      %2128 = vmatprep.subr.mxu0 0.0
      %2129 = vmatpush1.msra.mxu0 0.0
      %2130 = vmatprep.subr.mxu0 0.0
      %2131 = vmatpush1.msra.mxu0 0.0
      %2132 = vmatprep.subr.mxu0 0.0
      %2133 = vmatpush1.msra.mxu0 0.0
      %2134 = vmatprep.subr.mxu0 0.0
      %2135 = vmatpush1.msra.mxu0 0.0
      %2136 = vmatprep.subr.mxu0 0.0
      %2137 = vmatpush1.msra.mxu0 0.0
      %2138 = vmatprep.subr.mxu0 0.0
      %2139 = vmatpush1.msra.mxu0 0.0
      %2140 = vmatprep.subr.mxu0 0.0
      %2141 = vmatpush1.msra.mxu0 0.0
      %2142 = vmatprep.subr.mxu0 0.0
      %2143 = vmatpush1.msra.mxu0 0.0
      %2144 = vmatprep.subr.mxu0 0.0
      %2145 = vmatpush1.msra.mxu0 0.0
      %2146 = vmatprep.subr.mxu0 0.0
      %2147 = vmatpush1.msra.mxu0 0.0
      %2148 = vmatprep.subr.mxu0 0.0
      %2149 = vmatpush1.msra.mxu0 0.0
      %2150 = vmatprep.subr.mxu0 0.0
      %2151 = vmatpush1.msra.mxu0 0.0
      %2152 = vmatprep.subr.mxu0 0.0
      %2153 = vmatpush1.msra.mxu0 0.0
      %2154 = vmatprep.subr.mxu0 0.0
      %2155 = vmatpush1.msra.mxu0 0.0
      %2156 = vmatprep.subr.mxu0 0.0
      %2157 = vmatpush1.msra.mxu0 0.0
      %2158 = vmatprep.subr.mxu0 0.0
      %2159 = vmatpush1.msra.mxu0 0.0
      %2160 = vmatprep.subr.mxu0 0.0
      %2161 = vmatpush1.msra.mxu0 0.0
      %2162 = vmatprep.mubr.f32.mxu0 0.0
      %2163 = vmatmul.mubr.f32.gmra.mrb[0].mxu0 %v2084
      %v2164 = vpop.f32.mrb[0].mxu0
      %v2165 = vadd.f32 0.0, %v2164
      %v2166 = vpop.f32.mrb[0].mxu0
      %2167 = vmatprep.mubr.f32.mxu0 0.0
      %2168 = vmatmul.mubr.f32.gmra.mrb[0].mxu0 %v2087
      %v2169 = vpop.f32.mrb[0].mxu0
      %v2170 = vadd.f32 0.0, %v2169
      %v2171 = vpop.f32.mrb[0].mxu0
      %2172 = vmatprep.mubr.f32.mxu0 0.0
      %2173 = vmatmul.mubr.f32.gmra.mrb[0].mxu0 %v2090
      %v2174 = vpop.f32.mrb[0].mxu0
      %v2175 = vadd.f32 0.0, %v2174
      %v2176 = vpop.f32.mrb[0].mxu0
      %2177 = vmatprep.mubr.f32.mxu0 0.0
      %2178 = vmatmul.mubr.f32.gmra.mrb[0].mxu0 %v2093
      %v2179 = vpop.f32.mrb[0].mxu0
      %v2180 = vadd.f32 0.0, %v2179
      %v2181 = vpop.f32.mrb[0].mxu0
      %2182 = vmatprep.mubr.f32.mxu0 0.0
      %2183 = vmatmul.mubr.f32.gmra.mrb[0].mxu0 %v2096
      %v2184 = vpop.f32.mrb[0].mxu0
      %v2185 = vadd.f32 0.0, %v2184
      %v2186 = vpop.f32.mrb[0].mxu0
      %2187 = vdwg.mxu0
      %v2188 = vadd.f32 %v2072, %v2165
      %v2189 = vadd.f32 %v2073, %v2170
      %v2190 = vadd.f32 %v2074, %v2175
      %v2191 = vadd.f32 %v2075, %v2180
      %v2192 = vadd.f32 %v2076, %v2185
      %v2193 = vmax.f32 %v1280, %v2188
      %v2194 = vmax.f32 %v1281, %v2189
      %v2195 = vmax.f32 %v1282, %v2190
      %v2196 = vmax.f32 %v1283, %v2191
      %v2197 = vmax.f32 %v1284, %v2192
      %2198 = vmatprep.subr.mxu0 0.0
      %2199 = vmatpush1.msra.mxu0 %v191
      %2200 = vmatprep.subr.mxu0 0.0
      %2201 = vmatpush1.msra.mxu0 %v192
      %2202 = vmatprep.subr.mxu0 0.0
      %2203 = vmatpush1.msra.mxu0 %v193
      %2204 = vmatprep.subr.mxu0 0.0
      %2205 = vmatpush1.msra.mxu0 %v194
      %2206 = vmatprep.subr.mxu0 0.0
      %2207 = vmatpush1.msra.mxu0 %v195
      %2208 = vmatprep.subr.mxu0 0.0
      %2209 = vmatpush1.msra.mxu0 %v196
      %2210 = vmatprep.subr.mxu0 0.0
      %2211 = vmatpush1.msra.mxu0 %v197
      %2212 = vmatprep.subr.mxu0 0.0
      %2213 = vmatpush1.msra.mxu0 %v198
      %2214 = vmatprep.subr.mxu0 0.0
      %2215 = vmatpush1.msra.mxu0 0.0
      %2216 = vmatprep.subr.mxu0 0.0
      %2217 = vmatpush1.msra.mxu0 0.0
      %2218 = vmatprep.subr.mxu0 0.0
      %2219 = vmatpush1.msra.mxu0 0.0
      %2220 = vmatprep.subr.mxu0 0.0
      %2221 = vmatpush1.msra.mxu0 0.0
      %2222 = vmatprep.subr.mxu0 0.0
      %2223 = vmatpush1.msra.mxu0 0.0
      %2224 = vmatprep.subr.mxu0 0.0
      %2225 = vmatpush1.msra.mxu0 0.0
      %2226 = vmatprep.subr.mxu0 0.0
      %2227 = vmatpush1.msra.mxu0 0.0
      %2228 = vmatprep.subr.mxu0 0.0
      %2229 = vmatpush1.msra.mxu0 0.0
      %2230 = vmatprep.subr.mxu0 0.0
      %2231 = vmatpush1.msra.mxu0 0.0
      %2232 = vmatprep.subr.mxu0 0.0
      %2233 = vmatpush1.msra.mxu0 0.0
      %2234 = vmatprep.subr.mxu0 0.0
      %2235 = vmatpush1.msra.mxu0 0.0
      %2236 = vmatprep.subr.mxu0 0.0
      %2237 = vmatpush1.msra.mxu0 0.0
      %2238 = vmatprep.subr.mxu0 0.0
      %2239 = vmatpush1.msra.mxu0 0.0
      %2240 = vmatprep.subr.mxu0 0.0
      %2241 = vmatpush1.msra.mxu0 0.0
      %2242 = vmatprep.subr.mxu0 0.0
      %2243 = vmatpush1.msra.mxu0 0.0
      %2244 = vmatprep.subr.mxu0 0.0
      %2245 = vmatpush1.msra.mxu0 0.0
      %2246 = vmatprep.subr.mxu0 0.0
      %2247 = vmatpush1.msra.mxu0 0.0
      %2248 = vmatprep.subr.mxu0 0.0
      %2249 = vmatpush1.msra.mxu0 0.0
      %2250 = vmatprep.subr.mxu0 0.0
      %2251 = vmatpush1.msra.mxu0 0.0
      %2252 = vmatprep.subr.mxu0 0.0
      %2253 = vmatpush1.msra.mxu0 0.0
      %2254 = vmatprep.subr.mxu0 0.0
      %2255 = vmatpush1.msra.mxu0 0.0
      %2256 = vmatprep.subr.mxu0 0.0
      %2257 = vmatpush1.msra.mxu0 0.0
      %2258 = vmatprep.subr.mxu0 0.0
      %2259 = vmatpush1.msra.mxu0 0.0
      %2260 = vmatprep.subr.mxu0 0.0
      %2261 = vmatpush1.msra.mxu0 0.0
      %2262 = vmatprep.mubr.f32.mxu0 0.0
      %2263 = vmatmul.mubr.f32.gmra.mrb[0].mxu0 %v676
      %v2264 = vpop.f32.mrb[0].mxu0
      %v2265 = vadd.f32 0.0, %v2264
      %v2266 = vpop.f32.mrb[0].mxu0
      %2267 = vmatprep.mubr.f32.mxu0 0.0
      %2268 = vmatmul.mubr.f32.gmra.mrb[0].mxu0 %v679
      %v2269 = vpop.f32.mrb[0].mxu0
      %v2270 = vadd.f32 0.0, %v2269
      %v2271 = vpop.f32.mrb[0].mxu0
      %2272 = vmatprep.mubr.f32.mxu0 0.0
      %2273 = vmatmul.mubr.f32.gmra.mrb[0].mxu0 %v682
      %v2274 = vpop.f32.mrb[0].mxu0
      %v2275 = vadd.f32 0.0, %v2274
      %v2276 = vpop.f32.mrb[0].mxu0
      %2277 = vmatprep.mubr.f32.mxu0 0.0
      %2278 = vmatmul.mubr.f32.gmra.mrb[0].mxu0 %v685
      %v2279 = vpop.f32.mrb[0].mxu0
      %v2280 = vadd.f32 0.0, %v2279
      %v2281 = vpop.f32.mrb[0].mxu0
      %2282 = vmatprep.mubr.f32.mxu0 0.0
      %2283 = vmatmul.mubr.f32.gmra.mrb[0].mxu0 %v688
      %v2284 = vpop.f32.mrb[0].mxu0
      %v2285 = vadd.f32 0.0, %v2284
      %v2286 = vpop.f32.mrb[0].mxu0
      %2287 = vdwg.mxu0
      %2288 = vmatprep.subr.mxu0 0.0
      %2289 = vmatpush1.msra.mxu0 %v176
      %2290 = vmatprep.subr.mxu0 0.0
      %2291 = vmatpush1.msra.mxu0 %v177
      %2292 = vmatprep.subr.mxu0 0.0
      %2293 = vmatpush1.msra.mxu0 %v178
      %2294 = vmatprep.subr.mxu0 0.0
      %2295 = vmatpush1.msra.mxu0 %v179
      %2296 = vmatprep.subr.mxu0 0.0
      %2297 = vmatpush1.msra.mxu0 %v180
      %2298 = vmatprep.subr.mxu0 0.0
      %2299 = vmatpush1.msra.mxu0 %v181
      %2300 = vmatprep.subr.mxu0 0.0
      %2301 = vmatpush1.msra.mxu0 %v182
      %2302 = vmatprep.subr.mxu0 0.0
      %2303 = vmatpush1.msra.mxu0 %v183
      %2304 = vmatprep.subr.mxu0 0.0
      %2305 = vmatpush1.msra.mxu0 0.0
      %2306 = vmatprep.subr.mxu0 0.0
      %2307 = vmatpush1.msra.mxu0 0.0
      %2308 = vmatprep.subr.mxu0 0.0
      %2309 = vmatpush1.msra.mxu0 0.0
      %2310 = vmatprep.subr.mxu0 0.0
      %2311 = vmatpush1.msra.mxu0 0.0
      %2312 = vmatprep.subr.mxu0 0.0
      %2313 = vmatpush1.msra.mxu0 0.0
      %2314 = vmatprep.subr.mxu0 0.0
      %2315 = vmatpush1.msra.mxu0 0.0
      %2316 = vmatprep.subr.mxu0 0.0
      %2317 = vmatpush1.msra.mxu0 0.0
      %2318 = vmatprep.subr.mxu0 0.0
      %2319 = vmatpush1.msra.mxu0 0.0
      %2320 = vmatprep.subr.mxu0 0.0
      %2321 = vmatpush1.msra.mxu0 0.0
      %2322 = vmatprep.subr.mxu0 0.0
      %2323 = vmatpush1.msra.mxu0 0.0
      %2324 = vmatprep.subr.mxu0 0.0
      %2325 = vmatpush1.msra.mxu0 0.0
      %2326 = vmatprep.subr.mxu0 0.0
      %2327 = vmatpush1.msra.mxu0 0.0
      %2328 = vmatprep.subr.mxu0 0.0
      %2329 = vmatpush1.msra.mxu0 0.0
      %2330 = vmatprep.subr.mxu0 0.0
      %2331 = vmatpush1.msra.mxu0 0.0
      %2332 = vmatprep.subr.mxu0 0.0
      %2333 = vmatpush1.msra.mxu0 0.0
      %2334 = vmatprep.subr.mxu0 0.0
      %2335 = vmatpush1.msra.mxu0 0.0
      %2336 = vmatprep.subr.mxu0 0.0
      %2337 = vmatpush1.msra.mxu0 0.0
      %2338 = vmatprep.subr.mxu0 0.0
      %2339 = vmatpush1.msra.mxu0 0.0
      %2340 = vmatprep.subr.mxu0 0.0
      %2341 = vmatpush1.msra.mxu0 0.0
      %2342 = vmatprep.subr.mxu0 0.0
      %2343 = vmatpush1.msra.mxu0 0.0
      %2344 = vmatprep.subr.mxu0 0.0
      %2345 = vmatpush1.msra.mxu0 0.0
      %2346 = vmatprep.subr.mxu0 0.0
      %2347 = vmatpush1.msra.mxu0 0.0
      %2348 = vmatprep.subr.mxu0 0.0
      %2349 = vmatpush1.msra.mxu0 0.0
      %2350 = vmatprep.subr.mxu0 0.0
      %2351 = vmatpush1.msra.mxu0 0.0
      %2352 = vmatprep.mubr.f32.mxu0 0.0
      %2353 = vmatmul.mubr.f32.gmra.mrb[0].mxu0 %v551
      %v2354 = vpop.f32.mrb[0].mxu0
      %v2355 = vadd.f32 %v2265, %v2354
      %v2356 = vpop.f32.mrb[0].mxu0
      %2357 = vmatprep.mubr.f32.mxu0 0.0
      %2358 = vmatmul.mubr.f32.gmra.mrb[0].mxu0 %v554
      %v2359 = vpop.f32.mrb[0].mxu0
      %v2360 = vadd.f32 %v2270, %v2359
      %v2361 = vpop.f32.mrb[0].mxu0
      %2362 = vmatprep.mubr.f32.mxu0 0.0
      %2363 = vmatmul.mubr.f32.gmra.mrb[0].mxu0 %v557
      %v2364 = vpop.f32.mrb[0].mxu0
      %v2365 = vadd.f32 %v2275, %v2364
      %v2366 = vpop.f32.mrb[0].mxu0
      %2367 = vmatprep.mubr.f32.mxu0 0.0
      %2368 = vmatmul.mubr.f32.gmra.mrb[0].mxu0 %v560
      %v2369 = vpop.f32.mrb[0].mxu0
      %v2370 = vadd.f32 %v2280, %v2369
      %v2371 = vpop.f32.mrb[0].mxu0
      %2372 = vmatprep.mubr.f32.mxu0 0.0
      %2373 = vmatmul.mubr.f32.gmra.mrb[0].mxu0 %v563
      %v2374 = vpop.f32.mrb[0].mxu0
      %v2375 = vadd.f32 %v2285, %v2374
      %v2376 = vpop.f32.mrb[0].mxu0
      %2377 = vdwg.mxu0
      %2378 = vmatprep.subr.mxu0 0.0
      %2379 = vmatpush1.msra.mxu0 %v417
      %2380 = vmatprep.subr.mxu0 0.0
      %2381 = vmatpush1.msra.mxu0 %v418
      %2382 = vmatprep.subr.mxu0 0.0
      %2383 = vmatpush1.msra.mxu0 %v419
      %2384 = vmatprep.subr.mxu0 0.0
      %2385 = vmatpush1.msra.mxu0 %v420
      %2386 = vmatprep.subr.mxu0 0.0
      %2387 = vmatpush1.msra.mxu0 %v421
      %2388 = vmatprep.subr.mxu0 0.0
      %2389 = vmatpush1.msra.mxu0 %v422
      %2390 = vmatprep.subr.mxu0 0.0
      %2391 = vmatpush1.msra.mxu0 %v423
      %2392 = vmatprep.subr.mxu0 0.0
      %2393 = vmatpush1.msra.mxu0 %v424
      %2394 = vmatprep.subr.mxu0 0.0
      %2395 = vmatpush1.msra.mxu0 0.0
      %2396 = vmatprep.subr.mxu0 0.0
      %2397 = vmatpush1.msra.mxu0 0.0
      %2398 = vmatprep.subr.mxu0 0.0
      %2399 = vmatpush1.msra.mxu0 0.0
      %2400 = vmatprep.subr.mxu0 0.0
      %2401 = vmatpush1.msra.mxu0 0.0
      %2402 = vmatprep.subr.mxu0 0.0
      %2403 = vmatpush1.msra.mxu0 0.0
      %2404 = vmatprep.subr.mxu0 0.0
      %2405 = vmatpush1.msra.mxu0 0.0
      %2406 = vmatprep.subr.mxu0 0.0
      %2407 = vmatpush1.msra.mxu0 0.0
      %2408 = vmatprep.subr.mxu0 0.0
      %2409 = vmatpush1.msra.mxu0 0.0
      %2410 = vmatprep.subr.mxu0 0.0
      %2411 = vmatpush1.msra.mxu0 0.0
      %2412 = vmatprep.subr.mxu0 0.0
      %2413 = vmatpush1.msra.mxu0 0.0
      %2414 = vmatprep.subr.mxu0 0.0
      %2415 = vmatpush1.msra.mxu0 0.0
      %2416 = vmatprep.subr.mxu0 0.0
      %2417 = vmatpush1.msra.mxu0 0.0
      %2418 = vmatprep.subr.mxu0 0.0
      %2419 = vmatpush1.msra.mxu0 0.0
      %2420 = vmatprep.subr.mxu0 0.0
      %2421 = vmatpush1.msra.mxu0 0.0
      %2422 = vmatprep.subr.mxu0 0.0
      %2423 = vmatpush1.msra.mxu0 0.0
      %2424 = vmatprep.subr.mxu0 0.0
      %2425 = vmatpush1.msra.mxu0 0.0
      %2426 = vmatprep.subr.mxu0 0.0
      %2427 = vmatpush1.msra.mxu0 0.0
      %2428 = vmatprep.subr.mxu0 0.0
      %2429 = vmatpush1.msra.mxu0 0.0
      %2430 = vmatprep.subr.mxu0 0.0
      %2431 = vmatpush1.msra.mxu0 0.0
      %2432 = vmatprep.subr.mxu0 0.0
      %2433 = vmatpush1.msra.mxu0 0.0
      %2434 = vmatprep.subr.mxu0 0.0
      %2435 = vmatpush1.msra.mxu0 0.0
      %2436 = vmatprep.subr.mxu0 0.0
      %2437 = vmatpush1.msra.mxu0 0.0
      %2438 = vmatprep.subr.mxu0 0.0
      %2439 = vmatpush1.msra.mxu0 0.0
      %2440 = vmatprep.subr.mxu0 0.0
      %2441 = vmatpush1.msra.mxu0 0.0
      %2442 = vmatprep.mubr.f32.mxu0 0.0
      %2443 = vmatmul.mubr.f32.gmra.mrb[0].mxu0 %v801
      %v2444 = vpop.f32.mrb[0].mxu0
      %v2445 = vadd.f32 0.0, %v2444
      %v2446 = vpop.f32.mrb[0].mxu0
      %2447 = vmatprep.mubr.f32.mxu0 0.0
      %2448 = vmatmul.mubr.f32.gmra.mrb[0].mxu0 %v804
      %v2449 = vpop.f32.mrb[0].mxu0
      %v2450 = vadd.f32 0.0, %v2449
      %v2451 = vpop.f32.mrb[0].mxu0
      %2452 = vmatprep.mubr.f32.mxu0 0.0
      %2453 = vmatmul.mubr.f32.gmra.mrb[0].mxu0 %v807
      %v2454 = vpop.f32.mrb[0].mxu0
      %v2455 = vadd.f32 0.0, %v2454
      %v2456 = vpop.f32.mrb[0].mxu0
      %2457 = vmatprep.mubr.f32.mxu0 0.0
      %2458 = vmatmul.mubr.f32.gmra.mrb[0].mxu0 %v810
      %v2459 = vpop.f32.mrb[0].mxu0
      %v2460 = vadd.f32 0.0, %v2459
      %v2461 = vpop.f32.mrb[0].mxu0
      %2462 = vmatprep.mubr.f32.mxu0 0.0
      %2463 = vmatmul.mubr.f32.gmra.mrb[0].mxu0 %v813
      %v2464 = vpop.f32.mrb[0].mxu0
      %v2465 = vadd.f32 0.0, %v2464
      %v2466 = vpop.f32.mrb[0].mxu0
      %2467 = vdwg.mxu0
      %v2468 = vadd.f32 %v2355, %v2445
      %v2469 = vadd.f32 %v2360, %v2450
      %v2470 = vadd.f32 %v2365, %v2455
      %v2471 = vadd.f32 %v2370, %v2460
      %v2472 = vadd.f32 %v2375, %v2465
      %2473 = vmatprep.subr.mxu0 0.0
      %2474 = vmatpush1.msra.mxu0 %v542
      %2475 = vmatprep.subr.mxu0 0.0
      %2476 = vmatpush1.msra.mxu0 %v543
      %2477 = vmatprep.subr.mxu0 0.0
      %2478 = vmatpush1.msra.mxu0 %v544
      %2479 = vmatprep.subr.mxu0 0.0
      %2480 = vmatpush1.msra.mxu0 %v545
      %2481 = vmatprep.subr.mxu0 0.0
      %2482 = vmatpush1.msra.mxu0 %v546
      %2483 = vmatprep.subr.mxu0 0.0
      %2484 = vmatpush1.msra.mxu0 %v547
      %2485 = vmatprep.subr.mxu0 0.0
      %2486 = vmatpush1.msra.mxu0 %v548
      %2487 = vmatprep.subr.mxu0 0.0
      %2488 = vmatpush1.msra.mxu0 %v549
      %2489 = vmatprep.subr.mxu0 0.0
      %2490 = vmatpush1.msra.mxu0 0.0
      %2491 = vmatprep.subr.mxu0 0.0
      %2492 = vmatpush1.msra.mxu0 0.0
      %2493 = vmatprep.subr.mxu0 0.0
      %2494 = vmatpush1.msra.mxu0 0.0
      %2495 = vmatprep.subr.mxu0 0.0
      %2496 = vmatpush1.msra.mxu0 0.0
      %2497 = vmatprep.subr.mxu0 0.0
      %2498 = vmatpush1.msra.mxu0 0.0
      %2499 = vmatprep.subr.mxu0 0.0
      %2500 = vmatpush1.msra.mxu0 0.0
      %2501 = vmatprep.subr.mxu0 0.0
      %2502 = vmatpush1.msra.mxu0 0.0
      %2503 = vmatprep.subr.mxu0 0.0
      %2504 = vmatpush1.msra.mxu0 0.0
      %2505 = vmatprep.subr.mxu0 0.0
      %2506 = vmatpush1.msra.mxu0 0.0
      %2507 = vmatprep.subr.mxu0 0.0
      %2508 = vmatpush1.msra.mxu0 0.0
      %2509 = vmatprep.subr.mxu0 0.0
      %2510 = vmatpush1.msra.mxu0 0.0
      %2511 = vmatprep.subr.mxu0 0.0
      %2512 = vmatpush1.msra.mxu0 0.0
      %2513 = vmatprep.subr.mxu0 0.0
      %2514 = vmatpush1.msra.mxu0 0.0
      %2515 = vmatprep.subr.mxu0 0.0
      %2516 = vmatpush1.msra.mxu0 0.0
      %2517 = vmatprep.subr.mxu0 0.0
      %2518 = vmatpush1.msra.mxu0 0.0
      %2519 = vmatprep.subr.mxu0 0.0
      %2520 = vmatpush1.msra.mxu0 0.0
      %2521 = vmatprep.subr.mxu0 0.0
      %2522 = vmatpush1.msra.mxu0 0.0
      %2523 = vmatprep.subr.mxu0 0.0
      %2524 = vmatpush1.msra.mxu0 0.0
      %2525 = vmatprep.subr.mxu0 0.0
      %2526 = vmatpush1.msra.mxu0 0.0
      %2527 = vmatprep.subr.mxu0 0.0
      %2528 = vmatpush1.msra.mxu0 0.0
      %2529 = vmatprep.subr.mxu0 0.0
      %2530 = vmatpush1.msra.mxu0 0.0
      %2531 = vmatprep.subr.mxu0 0.0
      %2532 = vmatpush1.msra.mxu0 0.0
      %2533 = vmatprep.subr.mxu0 0.0
      %2534 = vmatpush1.msra.mxu0 0.0
      %2535 = vmatprep.subr.mxu0 0.0
      %2536 = vmatpush1.msra.mxu0 0.0
      %2537 = vmatprep.mubr.f32.mxu0 0.0
      %2538 = vmatmul.mubr.f32.gmra.mrb[0].mxu0 %v926
      %v2539 = vpop.f32.mrb[0].mxu0
      %v2540 = vadd.f32 0.0, %v2539
      %v2541 = vpop.f32.mrb[0].mxu0
      %2542 = vmatprep.mubr.f32.mxu0 0.0
      %2543 = vmatmul.mubr.f32.gmra.mrb[0].mxu0 %v929
      %v2544 = vpop.f32.mrb[0].mxu0
      %v2545 = vadd.f32 0.0, %v2544
      %v2546 = vpop.f32.mrb[0].mxu0
      %2547 = vmatprep.mubr.f32.mxu0 0.0
      %2548 = vmatmul.mubr.f32.gmra.mrb[0].mxu0 %v932
      %v2549 = vpop.f32.mrb[0].mxu0
      %v2550 = vadd.f32 0.0, %v2549
      %v2551 = vpop.f32.mrb[0].mxu0
      %2552 = vmatprep.mubr.f32.mxu0 0.0
      %2553 = vmatmul.mubr.f32.gmra.mrb[0].mxu0 %v935
      %v2554 = vpop.f32.mrb[0].mxu0
      %v2555 = vadd.f32 0.0, %v2554
      %v2556 = vpop.f32.mrb[0].mxu0
      %2557 = vmatprep.mubr.f32.mxu0 0.0
      %2558 = vmatmul.mubr.f32.gmra.mrb[0].mxu0 %v938
      %v2559 = vpop.f32.mrb[0].mxu0
      %v2560 = vadd.f32 0.0, %v2559
      %v2561 = vpop.f32.mrb[0].mxu0
      %2562 = vdwg.mxu0
      %v2563 = vadd.f32 %v2468, %v2540
      %v2564 = vadd.f32 %v2469, %v2545
      %v2565 = vadd.f32 %v2470, %v2550
      %v2566 = vadd.f32 %v2471, %v2555
      %v2567 = vadd.f32 %v2472, %v2560
      %2568 = vmatprep.subr.mxu0 0.0
      %2569 = vmatpush1.msra.mxu0 %v667
      %2570 = vmatprep.subr.mxu0 0.0
      %2571 = vmatpush1.msra.mxu0 %v668
      %2572 = vmatprep.subr.mxu0 0.0
      %2573 = vmatpush1.msra.mxu0 %v669
      %2574 = vmatprep.subr.mxu0 0.0
      %2575 = vmatpush1.msra.mxu0 %v670
      %2576 = vmatprep.subr.mxu0 0.0
      %2577 = vmatpush1.msra.mxu0 %v671
      %2578 = vmatprep.subr.mxu0 0.0
      %2579 = vmatpush1.msra.mxu0 %v672
      %2580 = vmatprep.subr.mxu0 0.0
      %2581 = vmatpush1.msra.mxu0 %v673
      %2582 = vmatprep.subr.mxu0 0.0
      %2583 = vmatpush1.msra.mxu0 %v674
      %2584 = vmatprep.subr.mxu0 0.0
      %2585 = vmatpush1.msra.mxu0 0.0
      %2586 = vmatprep.subr.mxu0 0.0
      %2587 = vmatpush1.msra.mxu0 0.0
      %2588 = vmatprep.subr.mxu0 0.0
      %2589 = vmatpush1.msra.mxu0 0.0
      %2590 = vmatprep.subr.mxu0 0.0
      %2591 = vmatpush1.msra.mxu0 0.0
      %2592 = vmatprep.subr.mxu0 0.0
      %2593 = vmatpush1.msra.mxu0 0.0
      %2594 = vmatprep.subr.mxu0 0.0
      %2595 = vmatpush1.msra.mxu0 0.0
      %2596 = vmatprep.subr.mxu0 0.0
      %2597 = vmatpush1.msra.mxu0 0.0
      %2598 = vmatprep.subr.mxu0 0.0
      %2599 = vmatpush1.msra.mxu0 0.0
      %2600 = vmatprep.subr.mxu0 0.0
      %2601 = vmatpush1.msra.mxu0 0.0
      %2602 = vmatprep.subr.mxu0 0.0
      %2603 = vmatpush1.msra.mxu0 0.0
      %2604 = vmatprep.subr.mxu0 0.0
      %2605 = vmatpush1.msra.mxu0 0.0
      %2606 = vmatprep.subr.mxu0 0.0
      %2607 = vmatpush1.msra.mxu0 0.0
      %2608 = vmatprep.subr.mxu0 0.0
      %2609 = vmatpush1.msra.mxu0 0.0
      %2610 = vmatprep.subr.mxu0 0.0
      %2611 = vmatpush1.msra.mxu0 0.0
      %2612 = vmatprep.subr.mxu0 0.0
      %2613 = vmatpush1.msra.mxu0 0.0
      %2614 = vmatprep.subr.mxu0 0.0
      %2615 = vmatpush1.msra.mxu0 0.0
      %2616 = vmatprep.subr.mxu0 0.0
      %2617 = vmatpush1.msra.mxu0 0.0
      %2618 = vmatprep.subr.mxu0 0.0
      %2619 = vmatpush1.msra.mxu0 0.0
      %2620 = vmatprep.subr.mxu0 0.0
      %2621 = vmatpush1.msra.mxu0 0.0
      %2622 = vmatprep.subr.mxu0 0.0
      %2623 = vmatpush1.msra.mxu0 0.0
      %2624 = vmatprep.subr.mxu0 0.0
      %2625 = vmatpush1.msra.mxu0 0.0
      %2626 = vmatprep.subr.mxu0 0.0
      %2627 = vmatpush1.msra.mxu0 0.0
      %2628 = vmatprep.subr.mxu0 0.0
      %2629 = vmatpush1.msra.mxu0 0.0
      %2630 = vmatprep.subr.mxu0 0.0
      %2631 = vmatpush1.msra.mxu0 0.0
      %2632 = vmatprep.mubr.f32.mxu0 0.0
      %2633 = vmatmul.mubr.f32.gmra.mrb[0].mxu0 %v1051
      %v2634 = vpop.f32.mrb[0].mxu0
      %v2635 = vadd.f32 0.0, %v2634
      %v2636 = vpop.f32.mrb[0].mxu0
      %2637 = vmatprep.mubr.f32.mxu0 0.0
      %2638 = vmatmul.mubr.f32.gmra.mrb[0].mxu0 %v1054
      %v2639 = vpop.f32.mrb[0].mxu0
      %v2640 = vadd.f32 0.0, %v2639
      %v2641 = vpop.f32.mrb[0].mxu0
      %2642 = vmatprep.mubr.f32.mxu0 0.0
      %2643 = vmatmul.mubr.f32.gmra.mrb[0].mxu0 %v1057
      %v2644 = vpop.f32.mrb[0].mxu0
      %v2645 = vadd.f32 0.0, %v2644
      %v2646 = vpop.f32.mrb[0].mxu0
      %2647 = vmatprep.mubr.f32.mxu0 0.0
      %2648 = vmatmul.mubr.f32.gmra.mrb[0].mxu0 %v1060
      %v2649 = vpop.f32.mrb[0].mxu0
      %v2650 = vadd.f32 0.0, %v2649
      %v2651 = vpop.f32.mrb[0].mxu0
      %2652 = vmatprep.mubr.f32.mxu0 0.0
      %2653 = vmatmul.mubr.f32.gmra.mrb[0].mxu0 %v1063
      %v2654 = vpop.f32.mrb[0].mxu0
      %v2655 = vadd.f32 0.0, %v2654
      %v2656 = vpop.f32.mrb[0].mxu0
      %2657 = vdwg.mxu0
      %v2658 = vadd.f32 %v2563, %v2635
      %v2659 = vadd.f32 %v2564, %v2640
      %v2660 = vadd.f32 %v2565, %v2645
      %v2661 = vadd.f32 %v2566, %v2650
      %v2662 = vadd.f32 %v2567, %v2655
      %2663 = vmatprep.subr.mxu0 0.0
      %2664 = vmatpush1.msra.mxu0 %v792
      %2665 = vmatprep.subr.mxu0 0.0
      %2666 = vmatpush1.msra.mxu0 %v793
      %2667 = vmatprep.subr.mxu0 0.0
      %2668 = vmatpush1.msra.mxu0 %v794
      %2669 = vmatprep.subr.mxu0 0.0
      %2670 = vmatpush1.msra.mxu0 %v795
      %2671 = vmatprep.subr.mxu0 0.0
      %2672 = vmatpush1.msra.mxu0 %v796
      %2673 = vmatprep.subr.mxu0 0.0
      %2674 = vmatpush1.msra.mxu0 %v797
      %2675 = vmatprep.subr.mxu0 0.0
      %2676 = vmatpush1.msra.mxu0 %v798
      %2677 = vmatprep.subr.mxu0 0.0
      %2678 = vmatpush1.msra.mxu0 %v799
      %2679 = vmatprep.subr.mxu0 0.0
      %2680 = vmatpush1.msra.mxu0 0.0
      %2681 = vmatprep.subr.mxu0 0.0
      %2682 = vmatpush1.msra.mxu0 0.0
      %2683 = vmatprep.subr.mxu0 0.0
      %2684 = vmatpush1.msra.mxu0 0.0
      %2685 = vmatprep.subr.mxu0 0.0
      %2686 = vmatpush1.msra.mxu0 0.0
      %2687 = vmatprep.subr.mxu0 0.0
      %2688 = vmatpush1.msra.mxu0 0.0
      %2689 = vmatprep.subr.mxu0 0.0
      %2690 = vmatpush1.msra.mxu0 0.0
      %2691 = vmatprep.subr.mxu0 0.0
      %2692 = vmatpush1.msra.mxu0 0.0
      %2693 = vmatprep.subr.mxu0 0.0
      %2694 = vmatpush1.msra.mxu0 0.0
      %2695 = vmatprep.subr.mxu0 0.0
      %2696 = vmatpush1.msra.mxu0 0.0
      %2697 = vmatprep.subr.mxu0 0.0
      %2698 = vmatpush1.msra.mxu0 0.0
      %2699 = vmatprep.subr.mxu0 0.0
      %2700 = vmatpush1.msra.mxu0 0.0
      %2701 = vmatprep.subr.mxu0 0.0
      %2702 = vmatpush1.msra.mxu0 0.0
      %2703 = vmatprep.subr.mxu0 0.0
      %2704 = vmatpush1.msra.mxu0 0.0
      %2705 = vmatprep.subr.mxu0 0.0
      %2706 = vmatpush1.msra.mxu0 0.0
      %2707 = vmatprep.subr.mxu0 0.0
      %2708 = vmatpush1.msra.mxu0 0.0
      %2709 = vmatprep.subr.mxu0 0.0
      %2710 = vmatpush1.msra.mxu0 0.0
      %2711 = vmatprep.subr.mxu0 0.0
      %2712 = vmatpush1.msra.mxu0 0.0
      %2713 = vmatprep.subr.mxu0 0.0
      %2714 = vmatpush1.msra.mxu0 0.0
      %2715 = vmatprep.subr.mxu0 0.0
      %2716 = vmatpush1.msra.mxu0 0.0
      %2717 = vmatprep.subr.mxu0 0.0
      %2718 = vmatpush1.msra.mxu0 0.0
      %2719 = vmatprep.subr.mxu0 0.0
      %2720 = vmatpush1.msra.mxu0 0.0
      %2721 = vmatprep.subr.mxu0 0.0
      %2722 = vmatpush1.msra.mxu0 0.0
      %2723 = vmatprep.subr.mxu0 0.0
      %2724 = vmatpush1.msra.mxu0 0.0
      %2725 = vmatprep.subr.mxu0 0.0
      %2726 = vmatpush1.msra.mxu0 0.0
      %2727 = vmatprep.mubr.f32.mxu0 0.0
      %2728 = vmatmul.mubr.f32.gmra.mrb[0].mxu0 %v1176
      %v2729 = vpop.f32.mrb[0].mxu0
      %v2730 = vadd.f32 0.0, %v2729
      %v2731 = vpop.f32.mrb[0].mxu0
      %2732 = vmatprep.mubr.f32.mxu0 0.0
      %2733 = vmatmul.mubr.f32.gmra.mrb[0].mxu0 %v1179
      %v2734 = vpop.f32.mrb[0].mxu0
      %v2735 = vadd.f32 0.0, %v2734
      %v2736 = vpop.f32.mrb[0].mxu0
      %2737 = vmatprep.mubr.f32.mxu0 0.0
      %2738 = vmatmul.mubr.f32.gmra.mrb[0].mxu0 %v1182
      %v2739 = vpop.f32.mrb[0].mxu0
      %v2740 = vadd.f32 0.0, %v2739
      %v2741 = vpop.f32.mrb[0].mxu0
      %2742 = vmatprep.mubr.f32.mxu0 0.0
      %2743 = vmatmul.mubr.f32.gmra.mrb[0].mxu0 %v1185
      %v2744 = vpop.f32.mrb[0].mxu0
      %v2745 = vadd.f32 0.0, %v2744
      %v2746 = vpop.f32.mrb[0].mxu0
      %2747 = vmatprep.mubr.f32.mxu0 0.0
      %2748 = vmatmul.mubr.f32.gmra.mrb[0].mxu0 %v1188
      %v2749 = vpop.f32.mrb[0].mxu0
      %v2750 = vadd.f32 0.0, %v2749
      %v2751 = vpop.f32.mrb[0].mxu0
      %2752 = vdwg.mxu0
      %v2753 = vadd.f32 %v2658, %v2730
      %v2754 = vadd.f32 %v2659, %v2735
      %v2755 = vadd.f32 %v2660, %v2740
      %v2756 = vadd.f32 %v2661, %v2745
      %v2757 = vadd.f32 %v2662, %v2750
      %s2758 = scalar_lea.vmem %s165, 480
      %v2759 = vld [vmem:[%s2758] sm:$0xff]
      %v2760 = vld [vmem:[%s2758 + $0x8] sm:$0xff]
      %v2761 = vld [vmem:[%s2758 + $0x10] sm:$0xff]
      %v2762 = vld [vmem:[%s2758 + $0x18] sm:$0xff]
      %v2763 = vld [vmem:[%s2758 + $0x20] sm:$0xf]
      %v2765 = vsel %vm199, %v2759, 0
      %v2768 = vsel %vm199, %v2760, 0
      %v2771 = vsel %vm199, %v2761, 0
      %v2774 = vsel %vm199, %v2762, 0
      %v2777 = vsel %vm199, %v2763, 0
      %2779 = vmatprep.subr.mxu0 0.0
      %2780 = vmatpush1.msra.mxu0 %v917
      %2781 = vmatprep.subr.mxu0 0.0
      %2782 = vmatpush1.msra.mxu0 %v918
      %2783 = vmatprep.subr.mxu0 0.0
      %2784 = vmatpush1.msra.mxu0 %v919
      %2785 = vmatprep.subr.mxu0 0.0
      %2786 = vmatpush1.msra.mxu0 %v920
      %2787 = vmatprep.subr.mxu0 0.0
      %2788 = vmatpush1.msra.mxu0 %v921
      %2789 = vmatprep.subr.mxu0 0.0
      %2790 = vmatpush1.msra.mxu0 %v922
      %2791 = vmatprep.subr.mxu0 0.0
      %2792 = vmatpush1.msra.mxu0 %v923
      %2793 = vmatprep.subr.mxu0 0.0
      %2794 = vmatpush1.msra.mxu0 %v924
      %2795 = vmatprep.subr.mxu0 0.0
      %2796 = vmatpush1.msra.mxu0 0.0
      %2797 = vmatprep.subr.mxu0 0.0
      %2798 = vmatpush1.msra.mxu0 0.0
      %2799 = vmatprep.subr.mxu0 0.0
      %2800 = vmatpush1.msra.mxu0 0.0
      %2801 = vmatprep.subr.mxu0 0.0
      %2802 = vmatpush1.msra.mxu0 0.0
      %2803 = vmatprep.subr.mxu0 0.0
      %2804 = vmatpush1.msra.mxu0 0.0
      %2805 = vmatprep.subr.mxu0 0.0
      %2806 = vmatpush1.msra.mxu0 0.0
      %2807 = vmatprep.subr.mxu0 0.0
      %2808 = vmatpush1.msra.mxu0 0.0
      %2809 = vmatprep.subr.mxu0 0.0
      %2810 = vmatpush1.msra.mxu0 0.0
      %2811 = vmatprep.subr.mxu0 0.0
      %2812 = vmatpush1.msra.mxu0 0.0
      %2813 = vmatprep.subr.mxu0 0.0
      %2814 = vmatpush1.msra.mxu0 0.0
      %2815 = vmatprep.subr.mxu0 0.0
      %2816 = vmatpush1.msra.mxu0 0.0
      %2817 = vmatprep.subr.mxu0 0.0
      %2818 = vmatpush1.msra.mxu0 0.0
      %2819 = vmatprep.subr.mxu0 0.0
      %2820 = vmatpush1.msra.mxu0 0.0
      %2821 = vmatprep.subr.mxu0 0.0
      %2822 = vmatpush1.msra.mxu0 0.0
      %2823 = vmatprep.subr.mxu0 0.0
      %2824 = vmatpush1.msra.mxu0 0.0
      %2825 = vmatprep.subr.mxu0 0.0
      %2826 = vmatpush1.msra.mxu0 0.0
      %2827 = vmatprep.subr.mxu0 0.0
      %2828 = vmatpush1.msra.mxu0 0.0
      %2829 = vmatprep.subr.mxu0 0.0
      %2830 = vmatpush1.msra.mxu0 0.0
      %2831 = vmatprep.subr.mxu0 0.0
      %2832 = vmatpush1.msra.mxu0 0.0
      %2833 = vmatprep.subr.mxu0 0.0
      %2834 = vmatpush1.msra.mxu0 0.0
      %2835 = vmatprep.subr.mxu0 0.0
      %2836 = vmatpush1.msra.mxu0 0.0
      %2837 = vmatprep.subr.mxu0 0.0
      %2838 = vmatpush1.msra.mxu0 0.0
      %2839 = vmatprep.subr.mxu0 0.0
      %2840 = vmatpush1.msra.mxu0 0.0
      %2841 = vmatprep.subr.mxu0 0.0
      %2842 = vmatpush1.msra.mxu0 0.0
      %2843 = vmatprep.mubr.f32.mxu0 0.0
      %2844 = vmatmul.mubr.f32.gmra.mrb[0].mxu0 %v2765
      %v2845 = vpop.f32.mrb[0].mxu0
      %v2846 = vadd.f32 0.0, %v2845
      %v2847 = vpop.f32.mrb[0].mxu0
      %2848 = vmatprep.mubr.f32.mxu0 0.0
      %2849 = vmatmul.mubr.f32.gmra.mrb[0].mxu0 %v2768
      %v2850 = vpop.f32.mrb[0].mxu0
      %v2851 = vadd.f32 0.0, %v2850
      %v2852 = vpop.f32.mrb[0].mxu0
      %2853 = vmatprep.mubr.f32.mxu0 0.0
      %2854 = vmatmul.mubr.f32.gmra.mrb[0].mxu0 %v2771
      %v2855 = vpop.f32.mrb[0].mxu0
      %v2856 = vadd.f32 0.0, %v2855
      %v2857 = vpop.f32.mrb[0].mxu0
      %2858 = vmatprep.mubr.f32.mxu0 0.0
      %2859 = vmatmul.mubr.f32.gmra.mrb[0].mxu0 %v2774
      %v2860 = vpop.f32.mrb[0].mxu0
      %v2861 = vadd.f32 0.0, %v2860
      %v2862 = vpop.f32.mrb[0].mxu0
      %2863 = vmatprep.mubr.f32.mxu0 0.0
      %2864 = vmatmul.mubr.f32.gmra.mrb[0].mxu0 %v2777
      %v2865 = vpop.f32.mrb[0].mxu0
      %v2866 = vadd.f32 0.0, %v2865
      %v2867 = vpop.f32.mrb[0].mxu0
      %2868 = vdwg.mxu0
      %v2869 = vadd.f32 %v2753, %v2846
      %v2870 = vadd.f32 %v2754, %v2851
      %v2871 = vadd.f32 %v2755, %v2856
      %v2872 = vadd.f32 %v2756, %v2861
      %v2873 = vadd.f32 %v2757, %v2866
      %s2874 = scalar_lea.vmem %s165, 520
      %v2875 = vld [vmem:[%s2874] sm:$0xff]
      %v2876 = vld [vmem:[%s2874 + $0x8] sm:$0xff]
      %v2877 = vld [vmem:[%s2874 + $0x10] sm:$0xff]
      %v2878 = vld [vmem:[%s2874 + $0x18] sm:$0xff]
      %v2879 = vld [vmem:[%s2874 + $0x20] sm:$0xf]
      %v2881 = vsel %vm199, %v2875, 0
      %v2884 = vsel %vm199, %v2876, 0
      %v2887 = vsel %vm199, %v2877, 0
      %v2890 = vsel %vm199, %v2878, 0
      %v2893 = vsel %vm199, %v2879, 0
      %2895 = vmatprep.subr.mxu0 0.0
      %2896 = vmatpush1.msra.mxu0 %v1042
      %2897 = vmatprep.subr.mxu0 0.0
      %2898 = vmatpush1.msra.mxu0 %v1043
      %2899 = vmatprep.subr.mxu0 0.0
      %2900 = vmatpush1.msra.mxu0 %v1044
      %2901 = vmatprep.subr.mxu0 0.0
      %2902 = vmatpush1.msra.mxu0 %v1045
      %2903 = vmatprep.subr.mxu0 0.0
      %2904 = vmatpush1.msra.mxu0 %v1046
      %2905 = vmatprep.subr.mxu0 0.0
      %2906 = vmatpush1.msra.mxu0 %v1047
      %2907 = vmatprep.subr.mxu0 0.0
      %2908 = vmatpush1.msra.mxu0 %v1048
      %2909 = vmatprep.subr.mxu0 0.0
      %2910 = vmatpush1.msra.mxu0 %v1049
      %2911 = vmatprep.subr.mxu0 0.0
      %2912 = vmatpush1.msra.mxu0 0.0
      %2913 = vmatprep.subr.mxu0 0.0
      %2914 = vmatpush1.msra.mxu0 0.0
      %2915 = vmatprep.subr.mxu0 0.0
      %2916 = vmatpush1.msra.mxu0 0.0
      %2917 = vmatprep.subr.mxu0 0.0
      %2918 = vmatpush1.msra.mxu0 0.0
      %2919 = vmatprep.subr.mxu0 0.0
      %2920 = vmatpush1.msra.mxu0 0.0
      %2921 = vmatprep.subr.mxu0 0.0
      %2922 = vmatpush1.msra.mxu0 0.0
      %2923 = vmatprep.subr.mxu0 0.0
      %2924 = vmatpush1.msra.mxu0 0.0
      %2925 = vmatprep.subr.mxu0 0.0
      %2926 = vmatpush1.msra.mxu0 0.0
      %2927 = vmatprep.subr.mxu0 0.0
      %2928 = vmatpush1.msra.mxu0 0.0
      %2929 = vmatprep.subr.mxu0 0.0
      %2930 = vmatpush1.msra.mxu0 0.0
      %2931 = vmatprep.subr.mxu0 0.0
      %2932 = vmatpush1.msra.mxu0 0.0
      %2933 = vmatprep.subr.mxu0 0.0
      %2934 = vmatpush1.msra.mxu0 0.0
      %2935 = vmatprep.subr.mxu0 0.0
      %2936 = vmatpush1.msra.mxu0 0.0
      %2937 = vmatprep.subr.mxu0 0.0
      %2938 = vmatpush1.msra.mxu0 0.0
      %2939 = vmatprep.subr.mxu0 0.0
      %2940 = vmatpush1.msra.mxu0 0.0
      %2941 = vmatprep.subr.mxu0 0.0
      %2942 = vmatpush1.msra.mxu0 0.0
      %2943 = vmatprep.subr.mxu0 0.0
      %2944 = vmatpush1.msra.mxu0 0.0
      %2945 = vmatprep.subr.mxu0 0.0
      %2946 = vmatpush1.msra.mxu0 0.0
      %2947 = vmatprep.subr.mxu0 0.0
      %2948 = vmatpush1.msra.mxu0 0.0
      %2949 = vmatprep.subr.mxu0 0.0
      %2950 = vmatpush1.msra.mxu0 0.0
      %2951 = vmatprep.subr.mxu0 0.0
      %2952 = vmatpush1.msra.mxu0 0.0
      %2953 = vmatprep.subr.mxu0 0.0
      %2954 = vmatpush1.msra.mxu0 0.0
      %2955 = vmatprep.subr.mxu0 0.0
      %2956 = vmatpush1.msra.mxu0 0.0
      %2957 = vmatprep.subr.mxu0 0.0
      %2958 = vmatpush1.msra.mxu0 0.0
      %2959 = vmatprep.mubr.f32.mxu0 0.0
      %2960 = vmatmul.mubr.f32.gmra.mrb[0].mxu0 %v2881
      %v2961 = vpop.f32.mrb[0].mxu0
      %v2962 = vadd.f32 0.0, %v2961
      %v2963 = vpop.f32.mrb[0].mxu0
      %2964 = vmatprep.mubr.f32.mxu0 0.0
      %2965 = vmatmul.mubr.f32.gmra.mrb[0].mxu0 %v2884
      %v2966 = vpop.f32.mrb[0].mxu0
      %v2967 = vadd.f32 0.0, %v2966
      %v2968 = vpop.f32.mrb[0].mxu0
      %2969 = vmatprep.mubr.f32.mxu0 0.0
      %2970 = vmatmul.mubr.f32.gmra.mrb[0].mxu0 %v2887
      %v2971 = vpop.f32.mrb[0].mxu0
      %v2972 = vadd.f32 0.0, %v2971
      %v2973 = vpop.f32.mrb[0].mxu0
      %2974 = vmatprep.mubr.f32.mxu0 0.0
      %2975 = vmatmul.mubr.f32.gmra.mrb[0].mxu0 %v2890
      %v2976 = vpop.f32.mrb[0].mxu0
      %v2977 = vadd.f32 0.0, %v2976
      %v2978 = vpop.f32.mrb[0].mxu0
      %2979 = vmatprep.mubr.f32.mxu0 0.0
      %2980 = vmatmul.mubr.f32.gmra.mrb[0].mxu0 %v2893
      %v2981 = vpop.f32.mrb[0].mxu0
      %v2982 = vadd.f32 0.0, %v2981
      %v2983 = vpop.f32.mrb[0].mxu0
      %2984 = vdwg.mxu0
      %v2985 = vadd.f32 %v2869, %v2962
      %v2986 = vadd.f32 %v2870, %v2967
      %v2987 = vadd.f32 %v2871, %v2972
      %v2988 = vadd.f32 %v2872, %v2977
      %v2989 = vadd.f32 %v2873, %v2982
      %s2990 = scalar_lea.vmem %s165, 560
      %v2991 = vld [vmem:[%s2990] sm:$0xff]
      %v2992 = vld [vmem:[%s2990 + $0x8] sm:$0xff]
      %v2993 = vld [vmem:[%s2990 + $0x10] sm:$0xff]
      %v2994 = vld [vmem:[%s2990 + $0x18] sm:$0xff]
      %v2995 = vld [vmem:[%s2990 + $0x20] sm:$0xf]
      %v2997 = vsel %vm199, %v2991, 0
      %v3000 = vsel %vm199, %v2992, 0
      %v3003 = vsel %vm199, %v2993, 0
      %v3006 = vsel %vm199, %v2994, 0
      %v3009 = vsel %vm199, %v2995, 0
      %3011 = vmatprep.subr.mxu0 0.0
      %3012 = vmatpush1.msra.mxu0 %v1167
      %3013 = vmatprep.subr.mxu0 0.0
      %3014 = vmatpush1.msra.mxu0 %v1168
      %3015 = vmatprep.subr.mxu0 0.0
      %3016 = vmatpush1.msra.mxu0 %v1169
      %3017 = vmatprep.subr.mxu0 0.0
      %3018 = vmatpush1.msra.mxu0 %v1170
      %3019 = vmatprep.subr.mxu0 0.0
      %3020 = vmatpush1.msra.mxu0 %v1171
      %3021 = vmatprep.subr.mxu0 0.0
      %3022 = vmatpush1.msra.mxu0 %v1172
      %3023 = vmatprep.subr.mxu0 0.0
      %3024 = vmatpush1.msra.mxu0 %v1173
      %3025 = vmatprep.subr.mxu0 0.0
      %3026 = vmatpush1.msra.mxu0 %v1174
      %3027 = vmatprep.subr.mxu0 0.0
      %3028 = vmatpush1.msra.mxu0 0.0
      %3029 = vmatprep.subr.mxu0 0.0
      %3030 = vmatpush1.msra.mxu0 0.0
      %3031 = vmatprep.subr.mxu0 0.0
      %3032 = vmatpush1.msra.mxu0 0.0
      %3033 = vmatprep.subr.mxu0 0.0
      %3034 = vmatpush1.msra.mxu0 0.0
      %3035 = vmatprep.subr.mxu0 0.0
      %3036 = vmatpush1.msra.mxu0 0.0
      %3037 = vmatprep.subr.mxu0 0.0
      %3038 = vmatpush1.msra.mxu0 0.0
      %3039 = vmatprep.subr.mxu0 0.0
      %3040 = vmatpush1.msra.mxu0 0.0
      %3041 = vmatprep.subr.mxu0 0.0
      %3042 = vmatpush1.msra.mxu0 0.0
      %3043 = vmatprep.subr.mxu0 0.0
      %3044 = vmatpush1.msra.mxu0 0.0
      %3045 = vmatprep.subr.mxu0 0.0
      %3046 = vmatpush1.msra.mxu0 0.0
      %3047 = vmatprep.subr.mxu0 0.0
      %3048 = vmatpush1.msra.mxu0 0.0
      %3049 = vmatprep.subr.mxu0 0.0
      %3050 = vmatpush1.msra.mxu0 0.0
      %3051 = vmatprep.subr.mxu0 0.0
      %3052 = vmatpush1.msra.mxu0 0.0
      %3053 = vmatprep.subr.mxu0 0.0
      %3054 = vmatpush1.msra.mxu0 0.0
      %3055 = vmatprep.subr.mxu0 0.0
      %3056 = vmatpush1.msra.mxu0 0.0
      %3057 = vmatprep.subr.mxu0 0.0
      %3058 = vmatpush1.msra.mxu0 0.0
      %3059 = vmatprep.subr.mxu0 0.0
      %3060 = vmatpush1.msra.mxu0 0.0
      %3061 = vmatprep.subr.mxu0 0.0
      %3062 = vmatpush1.msra.mxu0 0.0
      %3063 = vmatprep.subr.mxu0 0.0
      %3064 = vmatpush1.msra.mxu0 0.0
      %3065 = vmatprep.subr.mxu0 0.0
      %3066 = vmatpush1.msra.mxu0 0.0
      %3067 = vmatprep.subr.mxu0 0.0
      %3068 = vmatpush1.msra.mxu0 0.0
      %3069 = vmatprep.subr.mxu0 0.0
      %3070 = vmatpush1.msra.mxu0 0.0
      %3071 = vmatprep.subr.mxu0 0.0
      %3072 = vmatpush1.msra.mxu0 0.0
      %3073 = vmatprep.subr.mxu0 0.0
      %3074 = vmatpush1.msra.mxu0 0.0
      %3075 = vmatprep.mubr.f32.mxu0 0.0
      %3076 = vmatmul.mubr.f32.gmra.mrb[0].mxu0 %v2997
      %v3077 = vpop.f32.mrb[0].mxu0
      %v3078 = vadd.f32 0.0, %v3077
      %v3079 = vpop.f32.mrb[0].mxu0
      %3080 = vmatprep.mubr.f32.mxu0 0.0
      %3081 = vmatmul.mubr.f32.gmra.mrb[0].mxu0 %v3000
      %v3082 = vpop.f32.mrb[0].mxu0
      %v3083 = vadd.f32 0.0, %v3082
      %v3084 = vpop.f32.mrb[0].mxu0
      %3085 = vmatprep.mubr.f32.mxu0 0.0
      %3086 = vmatmul.mubr.f32.gmra.mrb[0].mxu0 %v3003
      %v3087 = vpop.f32.mrb[0].mxu0
      %v3088 = vadd.f32 0.0, %v3087
      %v3089 = vpop.f32.mrb[0].mxu0
      %3090 = vmatprep.mubr.f32.mxu0 0.0
      %3091 = vmatmul.mubr.f32.gmra.mrb[0].mxu0 %v3006
      %v3092 = vpop.f32.mrb[0].mxu0
      %v3093 = vadd.f32 0.0, %v3092
      %v3094 = vpop.f32.mrb[0].mxu0
      %3095 = vmatprep.mubr.f32.mxu0 0.0
      %3096 = vmatmul.mubr.f32.gmra.mrb[0].mxu0 %v3009
      %v3097 = vpop.f32.mrb[0].mxu0
      %v3098 = vadd.f32 0.0, %v3097
      %v3099 = vpop.f32.mrb[0].mxu0
      %3100 = vdwg.mxu0
      %v3101 = vadd.f32 %v2985, %v3078
      %v3102 = vadd.f32 %v2986, %v3083
      %v3103 = vadd.f32 %v2987, %v3088
      %v3104 = vadd.f32 %v2988, %v3093
      %v3105 = vadd.f32 %v2989, %v3098
      %v3106 = vmax.f32 %v2193, %v3101
      %v3107 = vmax.f32 %v2194, %v3102
      %v3108 = vmax.f32 %v2195, %v3103
      %v3109 = vmax.f32 %v2196, %v3104
      %v3110 = vmax.f32 %v2197, %v3105
      %3111 = vmatprep.subr.mxu0 0.0
      %3112 = vmatpush1.msra.mxu0 %v191
      %3113 = vmatprep.subr.mxu0 0.0
      %3114 = vmatpush1.msra.mxu0 %v192
      %3115 = vmatprep.subr.mxu0 0.0
      %3116 = vmatpush1.msra.mxu0 %v193
      %3117 = vmatprep.subr.mxu0 0.0
      %3118 = vmatpush1.msra.mxu0 %v194
      %3119 = vmatprep.subr.mxu0 0.0
      %3120 = vmatpush1.msra.mxu0 %v195
      %3121 = vmatprep.subr.mxu0 0.0
      %3122 = vmatpush1.msra.mxu0 %v196
      %3123 = vmatprep.subr.mxu0 0.0
      %3124 = vmatpush1.msra.mxu0 %v197
      %3125 = vmatprep.subr.mxu0 0.0
      %3126 = vmatpush1.msra.mxu0 %v198
      %3127 = vmatprep.subr.mxu0 0.0
      %3128 = vmatpush1.msra.mxu0 0.0
      %3129 = vmatprep.subr.mxu0 0.0
      %3130 = vmatpush1.msra.mxu0 0.0
      %3131 = vmatprep.subr.mxu0 0.0
      %3132 = vmatpush1.msra.mxu0 0.0
      %3133 = vmatprep.subr.mxu0 0.0
      %3134 = vmatpush1.msra.mxu0 0.0
      %3135 = vmatprep.subr.mxu0 0.0
      %3136 = vmatpush1.msra.mxu0 0.0
      %3137 = vmatprep.subr.mxu0 0.0
      %3138 = vmatpush1.msra.mxu0 0.0
      %3139 = vmatprep.subr.mxu0 0.0
      %3140 = vmatpush1.msra.mxu0 0.0
      %3141 = vmatprep.subr.mxu0 0.0
      %3142 = vmatpush1.msra.mxu0 0.0
      %3143 = vmatprep.subr.mxu0 0.0
      %3144 = vmatpush1.msra.mxu0 0.0
      %3145 = vmatprep.subr.mxu0 0.0
      %3146 = vmatpush1.msra.mxu0 0.0
      %3147 = vmatprep.subr.mxu0 0.0
      %3148 = vmatpush1.msra.mxu0 0.0
      %3149 = vmatprep.subr.mxu0 0.0
      %3150 = vmatpush1.msra.mxu0 0.0
      %3151 = vmatprep.subr.mxu0 0.0
      %3152 = vmatpush1.msra.mxu0 0.0
      %3153 = vmatprep.subr.mxu0 0.0
      %3154 = vmatpush1.msra.mxu0 0.0
      %3155 = vmatprep.subr.mxu0 0.0
      %3156 = vmatpush1.msra.mxu0 0.0
      %3157 = vmatprep.subr.mxu0 0.0
      %3158 = vmatpush1.msra.mxu0 0.0
      %3159 = vmatprep.subr.mxu0 0.0
      %3160 = vmatpush1.msra.mxu0 0.0
      %3161 = vmatprep.subr.mxu0 0.0
      %3162 = vmatpush1.msra.mxu0 0.0
      %3163 = vmatprep.subr.mxu0 0.0
      %3164 = vmatpush1.msra.mxu0 0.0
      %3165 = vmatprep.subr.mxu0 0.0
      %3166 = vmatpush1.msra.mxu0 0.0
      %3167 = vmatprep.subr.mxu0 0.0
      %3168 = vmatpush1.msra.mxu0 0.0
      %3169 = vmatprep.subr.mxu0 0.0
      %3170 = vmatpush1.msra.mxu0 0.0
      %3171 = vmatprep.subr.mxu0 0.0
      %3172 = vmatpush1.msra.mxu0 0.0
      %3173 = vmatprep.subr.mxu0 0.0
      %3174 = vmatpush1.msra.mxu0 0.0
      %3175 = vmatprep.mubr.f32.mxu0 0.0
      %3176 = vmatmul.mubr.f32.gmra.mrb[0].mxu0 %v801
      %v3177 = vpop.f32.mrb[0].mxu0
      %v3178 = vadd.f32 0.0, %v3177
      %v3179 = vpop.f32.mrb[0].mxu0
      %3180 = vmatprep.mubr.f32.mxu0 0.0
      %3181 = vmatmul.mubr.f32.gmra.mrb[0].mxu0 %v804
      %v3182 = vpop.f32.mrb[0].mxu0
      %v3183 = vadd.f32 0.0, %v3182
      %v3184 = vpop.f32.mrb[0].mxu0
      %3185 = vmatprep.mubr.f32.mxu0 0.0
      %3186 = vmatmul.mubr.f32.gmra.mrb[0].mxu0 %v807
      %v3187 = vpop.f32.mrb[0].mxu0
      %v3188 = vadd.f32 0.0, %v3187
      %v3189 = vpop.f32.mrb[0].mxu0
      %3190 = vmatprep.mubr.f32.mxu0 0.0
      %3191 = vmatmul.mubr.f32.gmra.mrb[0].mxu0 %v810
      %v3192 = vpop.f32.mrb[0].mxu0
      %v3193 = vadd.f32 0.0, %v3192
      %v3194 = vpop.f32.mrb[0].mxu0
      %3195 = vmatprep.mubr.f32.mxu0 0.0
      %3196 = vmatmul.mubr.f32.gmra.mrb[0].mxu0 %v813
      %v3197 = vpop.f32.mrb[0].mxu0
      %v3198 = vadd.f32 0.0, %v3197
      %v3199 = vpop.f32.mrb[0].mxu0
      %3200 = vdwg.mxu0
      %3201 = vmatprep.subr.mxu0 0.0
      %3202 = vmatpush1.msra.mxu0 %v176
      %3203 = vmatprep.subr.mxu0 0.0
      %3204 = vmatpush1.msra.mxu0 %v177
      %3205 = vmatprep.subr.mxu0 0.0
      %3206 = vmatpush1.msra.mxu0 %v178
      %3207 = vmatprep.subr.mxu0 0.0
      %3208 = vmatpush1.msra.mxu0 %v179
      %3209 = vmatprep.subr.mxu0 0.0
      %3210 = vmatpush1.msra.mxu0 %v180
      %3211 = vmatprep.subr.mxu0 0.0
      %3212 = vmatpush1.msra.mxu0 %v181
      %3213 = vmatprep.subr.mxu0 0.0
      %3214 = vmatpush1.msra.mxu0 %v182
      %3215 = vmatprep.subr.mxu0 0.0
      %3216 = vmatpush1.msra.mxu0 %v183
      %3217 = vmatprep.subr.mxu0 0.0
      %3218 = vmatpush1.msra.mxu0 0.0
      %3219 = vmatprep.subr.mxu0 0.0
      %3220 = vmatpush1.msra.mxu0 0.0
      %3221 = vmatprep.subr.mxu0 0.0
      %3222 = vmatpush1.msra.mxu0 0.0
      %3223 = vmatprep.subr.mxu0 0.0
      %3224 = vmatpush1.msra.mxu0 0.0
      %3225 = vmatprep.subr.mxu0 0.0
      %3226 = vmatpush1.msra.mxu0 0.0
      %3227 = vmatprep.subr.mxu0 0.0
      %3228 = vmatpush1.msra.mxu0 0.0
      %3229 = vmatprep.subr.mxu0 0.0
      %3230 = vmatpush1.msra.mxu0 0.0
      %3231 = vmatprep.subr.mxu0 0.0
      %3232 = vmatpush1.msra.mxu0 0.0
      %3233 = vmatprep.subr.mxu0 0.0
      %3234 = vmatpush1.msra.mxu0 0.0
      %3235 = vmatprep.subr.mxu0 0.0
      %3236 = vmatpush1.msra.mxu0 0.0
      %3237 = vmatprep.subr.mxu0 0.0
      %3238 = vmatpush1.msra.mxu0 0.0
      %3239 = vmatprep.subr.mxu0 0.0
      %3240 = vmatpush1.msra.mxu0 0.0
      %3241 = vmatprep.subr.mxu0 0.0
      %3242 = vmatpush1.msra.mxu0 0.0
      %3243 = vmatprep.subr.mxu0 0.0
      %3244 = vmatpush1.msra.mxu0 0.0
      %3245 = vmatprep.subr.mxu0 0.0
      %3246 = vmatpush1.msra.mxu0 0.0
      %3247 = vmatprep.subr.mxu0 0.0
      %3248 = vmatpush1.msra.mxu0 0.0
      %3249 = vmatprep.subr.mxu0 0.0
      %3250 = vmatpush1.msra.mxu0 0.0
      %3251 = vmatprep.subr.mxu0 0.0
      %3252 = vmatpush1.msra.mxu0 0.0
      %3253 = vmatprep.subr.mxu0 0.0
      %3254 = vmatpush1.msra.mxu0 0.0
      %3255 = vmatprep.subr.mxu0 0.0
      %3256 = vmatpush1.msra.mxu0 0.0
      %3257 = vmatprep.subr.mxu0 0.0
      %3258 = vmatpush1.msra.mxu0 0.0
      %3259 = vmatprep.subr.mxu0 0.0
      %3260 = vmatpush1.msra.mxu0 0.0
      %3261 = vmatprep.subr.mxu0 0.0
      %3262 = vmatpush1.msra.mxu0 0.0
      %3263 = vmatprep.subr.mxu0 0.0
      %3264 = vmatpush1.msra.mxu0 0.0
      %3265 = vmatprep.mubr.f32.mxu0 0.0
      %3266 = vmatmul.mubr.f32.gmra.mrb[0].mxu0 %v676
      %v3267 = vpop.f32.mrb[0].mxu0
      %v3268 = vadd.f32 %v3178, %v3267
      %v3269 = vpop.f32.mrb[0].mxu0
      %3270 = vmatprep.mubr.f32.mxu0 0.0
      %3271 = vmatmul.mubr.f32.gmra.mrb[0].mxu0 %v679
      %v3272 = vpop.f32.mrb[0].mxu0
      %v3273 = vadd.f32 %v3183, %v3272
      %v3274 = vpop.f32.mrb[0].mxu0
      %3275 = vmatprep.mubr.f32.mxu0 0.0
      %3276 = vmatmul.mubr.f32.gmra.mrb[0].mxu0 %v682
      %v3277 = vpop.f32.mrb[0].mxu0
      %v3278 = vadd.f32 %v3188, %v3277
      %v3279 = vpop.f32.mrb[0].mxu0
      %3280 = vmatprep.mubr.f32.mxu0 0.0
      %3281 = vmatmul.mubr.f32.gmra.mrb[0].mxu0 %v685
      %v3282 = vpop.f32.mrb[0].mxu0
      %v3283 = vadd.f32 %v3193, %v3282
      %v3284 = vpop.f32.mrb[0].mxu0
      %3285 = vmatprep.mubr.f32.mxu0 0.0
      %3286 = vmatmul.mubr.f32.gmra.mrb[0].mxu0 %v688
      %v3287 = vpop.f32.mrb[0].mxu0
      %v3288 = vadd.f32 %v3198, %v3287
      %v3289 = vpop.f32.mrb[0].mxu0
      %3290 = vdwg.mxu0
      %3291 = vmatprep.subr.mxu0 0.0
      %3292 = vmatpush1.msra.mxu0 %v417
      %3293 = vmatprep.subr.mxu0 0.0
      %3294 = vmatpush1.msra.mxu0 %v418
      %3295 = vmatprep.subr.mxu0 0.0
      %3296 = vmatpush1.msra.mxu0 %v419
      %3297 = vmatprep.subr.mxu0 0.0
      %3298 = vmatpush1.msra.mxu0 %v420
      %3299 = vmatprep.subr.mxu0 0.0
      %3300 = vmatpush1.msra.mxu0 %v421
      %3301 = vmatprep.subr.mxu0 0.0
      %3302 = vmatpush1.msra.mxu0 %v422
      %3303 = vmatprep.subr.mxu0 0.0
      %3304 = vmatpush1.msra.mxu0 %v423
      %3305 = vmatprep.subr.mxu0 0.0
      %3306 = vmatpush1.msra.mxu0 %v424
      %3307 = vmatprep.subr.mxu0 0.0
      %3308 = vmatpush1.msra.mxu0 0.0
      %3309 = vmatprep.subr.mxu0 0.0
      %3310 = vmatpush1.msra.mxu0 0.0
      %3311 = vmatprep.subr.mxu0 0.0
      %3312 = vmatpush1.msra.mxu0 0.0
      %3313 = vmatprep.subr.mxu0 0.0
      %3314 = vmatpush1.msra.mxu0 0.0
      %3315 = vmatprep.subr.mxu0 0.0
      %3316 = vmatpush1.msra.mxu0 0.0
      %3317 = vmatprep.subr.mxu0 0.0
      %3318 = vmatpush1.msra.mxu0 0.0
      %3319 = vmatprep.subr.mxu0 0.0
      %3320 = vmatpush1.msra.mxu0 0.0
      %3321 = vmatprep.subr.mxu0 0.0
      %3322 = vmatpush1.msra.mxu0 0.0
      %3323 = vmatprep.subr.mxu0 0.0
      %3324 = vmatpush1.msra.mxu0 0.0
      %3325 = vmatprep.subr.mxu0 0.0
      %3326 = vmatpush1.msra.mxu0 0.0
      %3327 = vmatprep.subr.mxu0 0.0
      %3328 = vmatpush1.msra.mxu0 0.0
      %3329 = vmatprep.subr.mxu0 0.0
      %3330 = vmatpush1.msra.mxu0 0.0
      %3331 = vmatprep.subr.mxu0 0.0
      %3332 = vmatpush1.msra.mxu0 0.0
      %3333 = vmatprep.subr.mxu0 0.0
      %3334 = vmatpush1.msra.mxu0 0.0
      %3335 = vmatprep.subr.mxu0 0.0
      %3336 = vmatpush1.msra.mxu0 0.0
      %3337 = vmatprep.subr.mxu0 0.0
      %3338 = vmatpush1.msra.mxu0 0.0
      %3339 = vmatprep.subr.mxu0 0.0
      %3340 = vmatpush1.msra.mxu0 0.0
      %3341 = vmatprep.subr.mxu0 0.0
      %3342 = vmatpush1.msra.mxu0 0.0
      %3343 = vmatprep.subr.mxu0 0.0
      %3344 = vmatpush1.msra.mxu0 0.0
      %3345 = vmatprep.subr.mxu0 0.0
      %3346 = vmatpush1.msra.mxu0 0.0
      %3347 = vmatprep.subr.mxu0 0.0
      %3348 = vmatpush1.msra.mxu0 0.0
      %3349 = vmatprep.subr.mxu0 0.0
      %3350 = vmatpush1.msra.mxu0 0.0
      %3351 = vmatprep.subr.mxu0 0.0
      %3352 = vmatpush1.msra.mxu0 0.0
      %3353 = vmatprep.subr.mxu0 0.0
      %3354 = vmatpush1.msra.mxu0 0.0
      %3355 = vmatprep.mubr.f32.mxu0 0.0
      %3356 = vmatmul.mubr.f32.gmra.mrb[0].mxu0 %v1778
      %v3357 = vpop.f32.mrb[0].mxu0
      %v3358 = vadd.f32 0.0, %v3357
      %v3359 = vpop.f32.mrb[0].mxu0
      %3360 = vmatprep.mubr.f32.mxu0 0.0
      %3361 = vmatmul.mubr.f32.gmra.mrb[0].mxu0 %v1781
      %v3362 = vpop.f32.mrb[0].mxu0
      %v3363 = vadd.f32 0.0, %v3362
      %v3364 = vpop.f32.mrb[0].mxu0
      %3365 = vmatprep.mubr.f32.mxu0 0.0
      %3366 = vmatmul.mubr.f32.gmra.mrb[0].mxu0 %v1784
      %v3367 = vpop.f32.mrb[0].mxu0
      %v3368 = vadd.f32 0.0, %v3367
      %v3369 = vpop.f32.mrb[0].mxu0
      %3370 = vmatprep.mubr.f32.mxu0 0.0
      %3371 = vmatmul.mubr.f32.gmra.mrb[0].mxu0 %v1787
      %v3372 = vpop.f32.mrb[0].mxu0
      %v3373 = vadd.f32 0.0, %v3372
      %v3374 = vpop.f32.mrb[0].mxu0
      %3375 = vmatprep.mubr.f32.mxu0 0.0
      %3376 = vmatmul.mubr.f32.gmra.mrb[0].mxu0 %v1790
      %v3377 = vpop.f32.mrb[0].mxu0
      %v3378 = vadd.f32 0.0, %v3377
      %v3379 = vpop.f32.mrb[0].mxu0
      %3380 = vdwg.mxu0
      %v3381 = vadd.f32 %v3268, %v3358
      %v3382 = vadd.f32 %v3273, %v3363
      %v3383 = vadd.f32 %v3278, %v3368
      %v3384 = vadd.f32 %v3283, %v3373
      %v3385 = vadd.f32 %v3288, %v3378
      %3386 = vmatprep.subr.mxu0 0.0
      %3387 = vmatpush1.msra.mxu0 %v542
      %3388 = vmatprep.subr.mxu0 0.0
      %3389 = vmatpush1.msra.mxu0 %v543
      %3390 = vmatprep.subr.mxu0 0.0
      %3391 = vmatpush1.msra.mxu0 %v544
      %3392 = vmatprep.subr.mxu0 0.0
      %3393 = vmatpush1.msra.mxu0 %v545
      %3394 = vmatprep.subr.mxu0 0.0
      %3395 = vmatpush1.msra.mxu0 %v546
      %3396 = vmatprep.subr.mxu0 0.0
      %3397 = vmatpush1.msra.mxu0 %v547
      %3398 = vmatprep.subr.mxu0 0.0
      %3399 = vmatpush1.msra.mxu0 %v548
      %3400 = vmatprep.subr.mxu0 0.0
      %3401 = vmatpush1.msra.mxu0 %v549
      %3402 = vmatprep.subr.mxu0 0.0
      %3403 = vmatpush1.msra.mxu0 0.0
      %3404 = vmatprep.subr.mxu0 0.0
      %3405 = vmatpush1.msra.mxu0 0.0
      %3406 = vmatprep.subr.mxu0 0.0
      %3407 = vmatpush1.msra.mxu0 0.0
      %3408 = vmatprep.subr.mxu0 0.0
      %3409 = vmatpush1.msra.mxu0 0.0
      %3410 = vmatprep.subr.mxu0 0.0
      %3411 = vmatpush1.msra.mxu0 0.0
      %3412 = vmatprep.subr.mxu0 0.0
      %3413 = vmatpush1.msra.mxu0 0.0
      %3414 = vmatprep.subr.mxu0 0.0
      %3415 = vmatpush1.msra.mxu0 0.0
      %3416 = vmatprep.subr.mxu0 0.0
      %3417 = vmatpush1.msra.mxu0 0.0
      %3418 = vmatprep.subr.mxu0 0.0
      %3419 = vmatpush1.msra.mxu0 0.0
      %3420 = vmatprep.subr.mxu0 0.0
      %3421 = vmatpush1.msra.mxu0 0.0
      %3422 = vmatprep.subr.mxu0 0.0
      %3423 = vmatpush1.msra.mxu0 0.0
      %3424 = vmatprep.subr.mxu0 0.0
      %3425 = vmatpush1.msra.mxu0 0.0
      %3426 = vmatprep.subr.mxu0 0.0
      %3427 = vmatpush1.msra.mxu0 0.0
      %3428 = vmatprep.subr.mxu0 0.0
      %3429 = vmatpush1.msra.mxu0 0.0
      %3430 = vmatprep.subr.mxu0 0.0
      %3431 = vmatpush1.msra.mxu0 0.0
      %3432 = vmatprep.subr.mxu0 0.0
      %3433 = vmatpush1.msra.mxu0 0.0
      %3434 = vmatprep.subr.mxu0 0.0
      %3435 = vmatpush1.msra.mxu0 0.0
      %3436 = vmatprep.subr.mxu0 0.0
      %3437 = vmatpush1.msra.mxu0 0.0
      %3438 = vmatprep.subr.mxu0 0.0
      %3439 = vmatpush1.msra.mxu0 0.0
      %3440 = vmatprep.subr.mxu0 0.0
      %3441 = vmatpush1.msra.mxu0 0.0
      %3442 = vmatprep.subr.mxu0 0.0
      %3443 = vmatpush1.msra.mxu0 0.0
      %3444 = vmatprep.subr.mxu0 0.0
      %3445 = vmatpush1.msra.mxu0 0.0
      %3446 = vmatprep.subr.mxu0 0.0
      %3447 = vmatpush1.msra.mxu0 0.0
      %3448 = vmatprep.subr.mxu0 0.0
      %3449 = vmatpush1.msra.mxu0 0.0
      %3450 = vmatprep.mubr.f32.mxu0 0.0
      %3451 = vmatmul.mubr.f32.gmra.mrb[0].mxu0 %v1051
      %v3452 = vpop.f32.mrb[0].mxu0
      %v3453 = vadd.f32 0.0, %v3452
      %v3454 = vpop.f32.mrb[0].mxu0
      %3455 = vmatprep.mubr.f32.mxu0 0.0
      %3456 = vmatmul.mubr.f32.gmra.mrb[0].mxu0 %v1054
      %v3457 = vpop.f32.mrb[0].mxu0
      %v3458 = vadd.f32 0.0, %v3457
      %v3459 = vpop.f32.mrb[0].mxu0
      %3460 = vmatprep.mubr.f32.mxu0 0.0
      %3461 = vmatmul.mubr.f32.gmra.mrb[0].mxu0 %v1057
      %v3462 = vpop.f32.mrb[0].mxu0
      %v3463 = vadd.f32 0.0, %v3462
      %v3464 = vpop.f32.mrb[0].mxu0
      %3465 = vmatprep.mubr.f32.mxu0 0.0
      %3466 = vmatmul.mubr.f32.gmra.mrb[0].mxu0 %v1060
      %v3467 = vpop.f32.mrb[0].mxu0
      %v3468 = vadd.f32 0.0, %v3467
      %v3469 = vpop.f32.mrb[0].mxu0
      %3470 = vmatprep.mubr.f32.mxu0 0.0
      %3471 = vmatmul.mubr.f32.gmra.mrb[0].mxu0 %v1063
      %v3472 = vpop.f32.mrb[0].mxu0
      %v3473 = vadd.f32 0.0, %v3472
      %v3474 = vpop.f32.mrb[0].mxu0
      %3475 = vdwg.mxu0
      %v3476 = vadd.f32 %v3381, %v3453
      %v3477 = vadd.f32 %v3382, %v3458
      %v3478 = vadd.f32 %v3383, %v3463
      %v3479 = vadd.f32 %v3384, %v3468
      %v3480 = vadd.f32 %v3385, %v3473
      %3481 = vmatprep.subr.mxu0 0.0
      %3482 = vmatpush1.msra.mxu0 %v667
      %3483 = vmatprep.subr.mxu0 0.0
      %3484 = vmatpush1.msra.mxu0 %v668
      %3485 = vmatprep.subr.mxu0 0.0
      %3486 = vmatpush1.msra.mxu0 %v669
      %3487 = vmatprep.subr.mxu0 0.0
      %3488 = vmatpush1.msra.mxu0 %v670
      %3489 = vmatprep.subr.mxu0 0.0
      %3490 = vmatpush1.msra.mxu0 %v671
      %3491 = vmatprep.subr.mxu0 0.0
      %3492 = vmatpush1.msra.mxu0 %v672
      %3493 = vmatprep.subr.mxu0 0.0
      %3494 = vmatpush1.msra.mxu0 %v673
      %3495 = vmatprep.subr.mxu0 0.0
      %3496 = vmatpush1.msra.mxu0 %v674
      %3497 = vmatprep.subr.mxu0 0.0
      %3498 = vmatpush1.msra.mxu0 0.0
      %3499 = vmatprep.subr.mxu0 0.0
      %3500 = vmatpush1.msra.mxu0 0.0
      %3501 = vmatprep.subr.mxu0 0.0
      %3502 = vmatpush1.msra.mxu0 0.0
      %3503 = vmatprep.subr.mxu0 0.0
      %3504 = vmatpush1.msra.mxu0 0.0
      %3505 = vmatprep.subr.mxu0 0.0
      %3506 = vmatpush1.msra.mxu0 0.0
      %3507 = vmatprep.subr.mxu0 0.0
      %3508 = vmatpush1.msra.mxu0 0.0
      %3509 = vmatprep.subr.mxu0 0.0
      %3510 = vmatpush1.msra.mxu0 0.0
      %3511 = vmatprep.subr.mxu0 0.0
      %3512 = vmatpush1.msra.mxu0 0.0
      %3513 = vmatprep.subr.mxu0 0.0
      %3514 = vmatpush1.msra.mxu0 0.0
      %3515 = vmatprep.subr.mxu0 0.0
      %3516 = vmatpush1.msra.mxu0 0.0
      %3517 = vmatprep.subr.mxu0 0.0
      %3518 = vmatpush1.msra.mxu0 0.0
      %3519 = vmatprep.subr.mxu0 0.0
      %3520 = vmatpush1.msra.mxu0 0.0
      %3521 = vmatprep.subr.mxu0 0.0
      %3522 = vmatpush1.msra.mxu0 0.0
      %3523 = vmatprep.subr.mxu0 0.0
      %3524 = vmatpush1.msra.mxu0 0.0
      %3525 = vmatprep.subr.mxu0 0.0
      %3526 = vmatpush1.msra.mxu0 0.0
      %3527 = vmatprep.subr.mxu0 0.0
      %3528 = vmatpush1.msra.mxu0 0.0
      %3529 = vmatprep.subr.mxu0 0.0
      %3530 = vmatpush1.msra.mxu0 0.0
      %3531 = vmatprep.subr.mxu0 0.0
      %3532 = vmatpush1.msra.mxu0 0.0
      %3533 = vmatprep.subr.mxu0 0.0
      %3534 = vmatpush1.msra.mxu0 0.0
      %3535 = vmatprep.subr.mxu0 0.0
      %3536 = vmatpush1.msra.mxu0 0.0
      %3537 = vmatprep.subr.mxu0 0.0
      %3538 = vmatpush1.msra.mxu0 0.0
      %3539 = vmatprep.subr.mxu0 0.0
      %3540 = vmatpush1.msra.mxu0 0.0
      %3541 = vmatprep.subr.mxu0 0.0
      %3542 = vmatpush1.msra.mxu0 0.0
      %3543 = vmatprep.subr.mxu0 0.0
      %3544 = vmatpush1.msra.mxu0 0.0
      %3545 = vmatprep.mubr.f32.mxu0 0.0
      %3546 = vmatmul.mubr.f32.gmra.mrb[0].mxu0 %v1176
      %v3547 = vpop.f32.mrb[0].mxu0
      %v3548 = vadd.f32 0.0, %v3547
      %v3549 = vpop.f32.mrb[0].mxu0
      %3550 = vmatprep.mubr.f32.mxu0 0.0
      %3551 = vmatmul.mubr.f32.gmra.mrb[0].mxu0 %v1179
      %v3552 = vpop.f32.mrb[0].mxu0
      %v3553 = vadd.f32 0.0, %v3552
      %v3554 = vpop.f32.mrb[0].mxu0
      %3555 = vmatprep.mubr.f32.mxu0 0.0
      %3556 = vmatmul.mubr.f32.gmra.mrb[0].mxu0 %v1182
      %v3557 = vpop.f32.mrb[0].mxu0
      %v3558 = vadd.f32 0.0, %v3557
      %v3559 = vpop.f32.mrb[0].mxu0
      %3560 = vmatprep.mubr.f32.mxu0 0.0
      %3561 = vmatmul.mubr.f32.gmra.mrb[0].mxu0 %v1185
      %v3562 = vpop.f32.mrb[0].mxu0
      %v3563 = vadd.f32 0.0, %v3562
      %v3564 = vpop.f32.mrb[0].mxu0
      %3565 = vmatprep.mubr.f32.mxu0 0.0
      %3566 = vmatmul.mubr.f32.gmra.mrb[0].mxu0 %v1188
      %v3567 = vpop.f32.mrb[0].mxu0
      %v3568 = vadd.f32 0.0, %v3567
      %v3569 = vpop.f32.mrb[0].mxu0
      %3570 = vdwg.mxu0
      %v3571 = vadd.f32 %v3476, %v3548
      %v3572 = vadd.f32 %v3477, %v3553
      %v3573 = vadd.f32 %v3478, %v3558
      %v3574 = vadd.f32 %v3479, %v3563
      %v3575 = vadd.f32 %v3480, %v3568
      %3576 = vmatprep.subr.mxu0 0.0
      %3577 = vmatpush1.msra.mxu0 %v792
      %3578 = vmatprep.subr.mxu0 0.0
      %3579 = vmatpush1.msra.mxu0 %v793
      %3580 = vmatprep.subr.mxu0 0.0
      %3581 = vmatpush1.msra.mxu0 %v794
      %3582 = vmatprep.subr.mxu0 0.0
      %3583 = vmatpush1.msra.mxu0 %v795
      %3584 = vmatprep.subr.mxu0 0.0
      %3585 = vmatpush1.msra.mxu0 %v796
      %3586 = vmatprep.subr.mxu0 0.0
      %3587 = vmatpush1.msra.mxu0 %v797
      %3588 = vmatprep.subr.mxu0 0.0
      %3589 = vmatpush1.msra.mxu0 %v798
      %3590 = vmatprep.subr.mxu0 0.0
      %3591 = vmatpush1.msra.mxu0 %v799
      %3592 = vmatprep.subr.mxu0 0.0
      %3593 = vmatpush1.msra.mxu0 0.0
      %3594 = vmatprep.subr.mxu0 0.0
      %3595 = vmatpush1.msra.mxu0 0.0
      %3596 = vmatprep.subr.mxu0 0.0
      %3597 = vmatpush1.msra.mxu0 0.0
      %3598 = vmatprep.subr.mxu0 0.0
      %3599 = vmatpush1.msra.mxu0 0.0
      %3600 = vmatprep.subr.mxu0 0.0
      %3601 = vmatpush1.msra.mxu0 0.0
      %3602 = vmatprep.subr.mxu0 0.0
      %3603 = vmatpush1.msra.mxu0 0.0
      %3604 = vmatprep.subr.mxu0 0.0
      %3605 = vmatpush1.msra.mxu0 0.0
      %3606 = vmatprep.subr.mxu0 0.0
      %3607 = vmatpush1.msra.mxu0 0.0
      %3608 = vmatprep.subr.mxu0 0.0
      %3609 = vmatpush1.msra.mxu0 0.0
      %3610 = vmatprep.subr.mxu0 0.0
      %3611 = vmatpush1.msra.mxu0 0.0
      %3612 = vmatprep.subr.mxu0 0.0
      %3613 = vmatpush1.msra.mxu0 0.0
      %3614 = vmatprep.subr.mxu0 0.0
      %3615 = vmatpush1.msra.mxu0 0.0
      %3616 = vmatprep.subr.mxu0 0.0
      %3617 = vmatpush1.msra.mxu0 0.0
      %3618 = vmatprep.subr.mxu0 0.0
      %3619 = vmatpush1.msra.mxu0 0.0
      %3620 = vmatprep.subr.mxu0 0.0
      %3621 = vmatpush1.msra.mxu0 0.0
      %3622 = vmatprep.subr.mxu0 0.0
      %3623 = vmatpush1.msra.mxu0 0.0
      %3624 = vmatprep.subr.mxu0 0.0
      %3625 = vmatpush1.msra.mxu0 0.0
      %3626 = vmatprep.subr.mxu0 0.0
      %3627 = vmatpush1.msra.mxu0 0.0
      %3628 = vmatprep.subr.mxu0 0.0
      %3629 = vmatpush1.msra.mxu0 0.0
      %3630 = vmatprep.subr.mxu0 0.0
      %3631 = vmatpush1.msra.mxu0 0.0
      %3632 = vmatprep.subr.mxu0 0.0
      %3633 = vmatpush1.msra.mxu0 0.0
      %3634 = vmatprep.subr.mxu0 0.0
      %3635 = vmatpush1.msra.mxu0 0.0
      %3636 = vmatprep.subr.mxu0 0.0
      %3637 = vmatpush1.msra.mxu0 0.0
      %3638 = vmatprep.subr.mxu0 0.0
      %3639 = vmatpush1.msra.mxu0 0.0
      %3640 = vmatprep.mubr.f32.mxu0 0.0
      %3641 = vmatmul.mubr.f32.gmra.mrb[0].mxu0 %v2084
      %v3642 = vpop.f32.mrb[0].mxu0
      %v3643 = vadd.f32 0.0, %v3642
      %v3644 = vpop.f32.mrb[0].mxu0
      %3645 = vmatprep.mubr.f32.mxu0 0.0
      %3646 = vmatmul.mubr.f32.gmra.mrb[0].mxu0 %v2087
      %v3647 = vpop.f32.mrb[0].mxu0
      %v3648 = vadd.f32 0.0, %v3647
      %v3649 = vpop.f32.mrb[0].mxu0
      %3650 = vmatprep.mubr.f32.mxu0 0.0
      %3651 = vmatmul.mubr.f32.gmra.mrb[0].mxu0 %v2090
      %v3652 = vpop.f32.mrb[0].mxu0
      %v3653 = vadd.f32 0.0, %v3652
      %v3654 = vpop.f32.mrb[0].mxu0
      %3655 = vmatprep.mubr.f32.mxu0 0.0
      %3656 = vmatmul.mubr.f32.gmra.mrb[0].mxu0 %v2093
      %v3657 = vpop.f32.mrb[0].mxu0
      %v3658 = vadd.f32 0.0, %v3657
      %v3659 = vpop.f32.mrb[0].mxu0
      %3660 = vmatprep.mubr.f32.mxu0 0.0
      %3661 = vmatmul.mubr.f32.gmra.mrb[0].mxu0 %v2096
      %v3662 = vpop.f32.mrb[0].mxu0
      %v3663 = vadd.f32 0.0, %v3662
      %v3664 = vpop.f32.mrb[0].mxu0
      %3665 = vdwg.mxu0
      %v3666 = vadd.f32 %v3571, %v3643
      %v3667 = vadd.f32 %v3572, %v3648
      %v3668 = vadd.f32 %v3573, %v3653
      %v3669 = vadd.f32 %v3574, %v3658
      %v3670 = vadd.f32 %v3575, %v3663
      %3671 = vmatprep.subr.mxu0 0.0
      %3672 = vmatpush1.msra.mxu0 %v917
      %3673 = vmatprep.subr.mxu0 0.0
      %3674 = vmatpush1.msra.mxu0 %v918
      %3675 = vmatprep.subr.mxu0 0.0
      %3676 = vmatpush1.msra.mxu0 %v919
      %3677 = vmatprep.subr.mxu0 0.0
      %3678 = vmatpush1.msra.mxu0 %v920
      %3679 = vmatprep.subr.mxu0 0.0
      %3680 = vmatpush1.msra.mxu0 %v921
      %3681 = vmatprep.subr.mxu0 0.0
      %3682 = vmatpush1.msra.mxu0 %v922
      %3683 = vmatprep.subr.mxu0 0.0
      %3684 = vmatpush1.msra.mxu0 %v923
      %3685 = vmatprep.subr.mxu0 0.0
      %3686 = vmatpush1.msra.mxu0 %v924
      %3687 = vmatprep.subr.mxu0 0.0
      %3688 = vmatpush1.msra.mxu0 0.0
      %3689 = vmatprep.subr.mxu0 0.0
      %3690 = vmatpush1.msra.mxu0 0.0
      %3691 = vmatprep.subr.mxu0 0.0
      %3692 = vmatpush1.msra.mxu0 0.0
      %3693 = vmatprep.subr.mxu0 0.0
      %3694 = vmatpush1.msra.mxu0 0.0
      %3695 = vmatprep.subr.mxu0 0.0
      %3696 = vmatpush1.msra.mxu0 0.0
      %3697 = vmatprep.subr.mxu0 0.0
      %3698 = vmatpush1.msra.mxu0 0.0
      %3699 = vmatprep.subr.mxu0 0.0
      %3700 = vmatpush1.msra.mxu0 0.0
      %3701 = vmatprep.subr.mxu0 0.0
      %3702 = vmatpush1.msra.mxu0 0.0
      %3703 = vmatprep.subr.mxu0 0.0
      %3704 = vmatpush1.msra.mxu0 0.0
      %3705 = vmatprep.subr.mxu0 0.0
      %3706 = vmatpush1.msra.mxu0 0.0
      %3707 = vmatprep.subr.mxu0 0.0
      %3708 = vmatpush1.msra.mxu0 0.0
      %3709 = vmatprep.subr.mxu0 0.0
      %3710 = vmatpush1.msra.mxu0 0.0
      %3711 = vmatprep.subr.mxu0 0.0
      %3712 = vmatpush1.msra.mxu0 0.0
      %3713 = vmatprep.subr.mxu0 0.0
      %3714 = vmatpush1.msra.mxu0 0.0
      %3715 = vmatprep.subr.mxu0 0.0
      %3716 = vmatpush1.msra.mxu0 0.0
      %3717 = vmatprep.subr.mxu0 0.0
      %3718 = vmatpush1.msra.mxu0 0.0
      %3719 = vmatprep.subr.mxu0 0.0
      %3720 = vmatpush1.msra.mxu0 0.0
      %3721 = vmatprep.subr.mxu0 0.0
      %3722 = vmatpush1.msra.mxu0 0.0
      %3723 = vmatprep.subr.mxu0 0.0
      %3724 = vmatpush1.msra.mxu0 0.0
      %3725 = vmatprep.subr.mxu0 0.0
      %3726 = vmatpush1.msra.mxu0 0.0
      %3727 = vmatprep.subr.mxu0 0.0
      %3728 = vmatpush1.msra.mxu0 0.0
      %3729 = vmatprep.subr.mxu0 0.0
      %3730 = vmatpush1.msra.mxu0 0.0
      %3731 = vmatprep.subr.mxu0 0.0
      %3732 = vmatpush1.msra.mxu0 0.0
      %3733 = vmatprep.subr.mxu0 0.0
      %3734 = vmatpush1.msra.mxu0 0.0
      %3735 = vmatprep.mubr.f32.mxu0 0.0
      %3736 = vmatmul.mubr.f32.gmra.mrb[0].mxu0 %v2881
      %v3737 = vpop.f32.mrb[0].mxu0
      %v3738 = vadd.f32 0.0, %v3737
      %v3739 = vpop.f32.mrb[0].mxu0
      %3740 = vmatprep.mubr.f32.mxu0 0.0
      %3741 = vmatmul.mubr.f32.gmra.mrb[0].mxu0 %v2884
      %v3742 = vpop.f32.mrb[0].mxu0
      %v3743 = vadd.f32 0.0, %v3742
      %v3744 = vpop.f32.mrb[0].mxu0
      %3745 = vmatprep.mubr.f32.mxu0 0.0
      %3746 = vmatmul.mubr.f32.gmra.mrb[0].mxu0 %v2887
      %v3747 = vpop.f32.mrb[0].mxu0
      %v3748 = vadd.f32 0.0, %v3747
      %v3749 = vpop.f32.mrb[0].mxu0
      %3750 = vmatprep.mubr.f32.mxu0 0.0
      %3751 = vmatmul.mubr.f32.gmra.mrb[0].mxu0 %v2890
      %v3752 = vpop.f32.mrb[0].mxu0
      %v3753 = vadd.f32 0.0, %v3752
      %v3754 = vpop.f32.mrb[0].mxu0
      %3755 = vmatprep.mubr.f32.mxu0 0.0
      %3756 = vmatmul.mubr.f32.gmra.mrb[0].mxu0 %v2893
      %v3757 = vpop.f32.mrb[0].mxu0
      %v3758 = vadd.f32 0.0, %v3757
      %v3759 = vpop.f32.mrb[0].mxu0
      %3760 = vdwg.mxu0
      %v3761 = vadd.f32 %v3666, %v3738
      %v3762 = vadd.f32 %v3667, %v3743
      %v3763 = vadd.f32 %v3668, %v3748
      %v3764 = vadd.f32 %v3669, %v3753
      %v3765 = vadd.f32 %v3670, %v3758
      %3766 = vmatprep.subr.mxu0 0.0
      %3767 = vmatpush1.msra.mxu0 %v1042
      %3768 = vmatprep.subr.mxu0 0.0
      %3769 = vmatpush1.msra.mxu0 %v1043
      %3770 = vmatprep.subr.mxu0 0.0
      %3771 = vmatpush1.msra.mxu0 %v1044
      %3772 = vmatprep.subr.mxu0 0.0
      %3773 = vmatpush1.msra.mxu0 %v1045
      %3774 = vmatprep.subr.mxu0 0.0
      %3775 = vmatpush1.msra.mxu0 %v1046
      %3776 = vmatprep.subr.mxu0 0.0
      %3777 = vmatpush1.msra.mxu0 %v1047
      %3778 = vmatprep.subr.mxu0 0.0
      %3779 = vmatpush1.msra.mxu0 %v1048
      %3780 = vmatprep.subr.mxu0 0.0
      %3781 = vmatpush1.msra.mxu0 %v1049
      %3782 = vmatprep.subr.mxu0 0.0
      %3783 = vmatpush1.msra.mxu0 0.0
      %3784 = vmatprep.subr.mxu0 0.0
      %3785 = vmatpush1.msra.mxu0 0.0
      %3786 = vmatprep.subr.mxu0 0.0
      %3787 = vmatpush1.msra.mxu0 0.0
      %3788 = vmatprep.subr.mxu0 0.0
      %3789 = vmatpush1.msra.mxu0 0.0
      %3790 = vmatprep.subr.mxu0 0.0
      %3791 = vmatpush1.msra.mxu0 0.0
      %3792 = vmatprep.subr.mxu0 0.0
      %3793 = vmatpush1.msra.mxu0 0.0
      %3794 = vmatprep.subr.mxu0 0.0
      %3795 = vmatpush1.msra.mxu0 0.0
      %3796 = vmatprep.subr.mxu0 0.0
      %3797 = vmatpush1.msra.mxu0 0.0
      %3798 = vmatprep.subr.mxu0 0.0
      %3799 = vmatpush1.msra.mxu0 0.0
      %3800 = vmatprep.subr.mxu0 0.0
      %3801 = vmatpush1.msra.mxu0 0.0
      %3802 = vmatprep.subr.mxu0 0.0
      %3803 = vmatpush1.msra.mxu0 0.0
      %3804 = vmatprep.subr.mxu0 0.0
      %3805 = vmatpush1.msra.mxu0 0.0
      %3806 = vmatprep.subr.mxu0 0.0
      %3807 = vmatpush1.msra.mxu0 0.0
      %3808 = vmatprep.subr.mxu0 0.0
      %3809 = vmatpush1.msra.mxu0 0.0
      %3810 = vmatprep.subr.mxu0 0.0
      %3811 = vmatpush1.msra.mxu0 0.0
      %3812 = vmatprep.subr.mxu0 0.0
      %3813 = vmatpush1.msra.mxu0 0.0
      %3814 = vmatprep.subr.mxu0 0.0
      %3815 = vmatpush1.msra.mxu0 0.0
      %3816 = vmatprep.subr.mxu0 0.0
      %3817 = vmatpush1.msra.mxu0 0.0
      %3818 = vmatprep.subr.mxu0 0.0
      %3819 = vmatpush1.msra.mxu0 0.0
      %3820 = vmatprep.subr.mxu0 0.0
      %3821 = vmatpush1.msra.mxu0 0.0
      %3822 = vmatprep.subr.mxu0 0.0
      %3823 = vmatpush1.msra.mxu0 0.0
      %3824 = vmatprep.subr.mxu0 0.0
      %3825 = vmatpush1.msra.mxu0 0.0
      %3826 = vmatprep.subr.mxu0 0.0
      %3827 = vmatpush1.msra.mxu0 0.0
      %3828 = vmatprep.subr.mxu0 0.0
      %3829 = vmatpush1.msra.mxu0 0.0
      %3830 = vmatprep.mubr.f32.mxu0 0.0
      %3831 = vmatmul.mubr.f32.gmra.mrb[0].mxu0 %v2997
      %v3832 = vpop.f32.mrb[0].mxu0
      %v3833 = vadd.f32 0.0, %v3832
      %v3834 = vpop.f32.mrb[0].mxu0
      %3835 = vmatprep.mubr.f32.mxu0 0.0
      %3836 = vmatmul.mubr.f32.gmra.mrb[0].mxu0 %v3000
      %v3837 = vpop.f32.mrb[0].mxu0
      %v3838 = vadd.f32 0.0, %v3837
      %v3839 = vpop.f32.mrb[0].mxu0
      %3840 = vmatprep.mubr.f32.mxu0 0.0
      %3841 = vmatmul.mubr.f32.gmra.mrb[0].mxu0 %v3003
      %v3842 = vpop.f32.mrb[0].mxu0
      %v3843 = vadd.f32 0.0, %v3842
      %v3844 = vpop.f32.mrb[0].mxu0
      %3845 = vmatprep.mubr.f32.mxu0 0.0
      %3846 = vmatmul.mubr.f32.gmra.mrb[0].mxu0 %v3006
      %v3847 = vpop.f32.mrb[0].mxu0
      %v3848 = vadd.f32 0.0, %v3847
      %v3849 = vpop.f32.mrb[0].mxu0
      %3850 = vmatprep.mubr.f32.mxu0 0.0
      %3851 = vmatmul.mubr.f32.gmra.mrb[0].mxu0 %v3009
      %v3852 = vpop.f32.mrb[0].mxu0
      %v3853 = vadd.f32 0.0, %v3852
      %v3854 = vpop.f32.mrb[0].mxu0
      %3855 = vdwg.mxu0
      %v3856 = vadd.f32 %v3761, %v3833
      %v3857 = vadd.f32 %v3762, %v3838
      %v3858 = vadd.f32 %v3763, %v3843
      %v3859 = vadd.f32 %v3764, %v3848
      %v3860 = vadd.f32 %v3765, %v3853
      %s3861 = scalar_lea.vmem %s165, 600
      %v3862 = vld [vmem:[%s3861] sm:$0xff]
      %v3863 = vld [vmem:[%s3861 + $0x8] sm:$0xff]
      %v3864 = vld [vmem:[%s3861 + $0x10] sm:$0xff]
      %v3865 = vld [vmem:[%s3861 + $0x18] sm:$0xff]
      %v3866 = vld [vmem:[%s3861 + $0x20] sm:$0xf]
      %v3868 = vsel %vm199, %v3862, 0
      %v3871 = vsel %vm199, %v3863, 0
      %v3874 = vsel %vm199, %v3864, 0
      %v3877 = vsel %vm199, %v3865, 0
      %v3880 = vsel %vm199, %v3866, 0
      %3882 = vmatprep.subr.mxu0 0.0
      %3883 = vmatpush1.msra.mxu0 %v1167
      %3884 = vmatprep.subr.mxu0 0.0
      %3885 = vmatpush1.msra.mxu0 %v1168
      %3886 = vmatprep.subr.mxu0 0.0
      %3887 = vmatpush1.msra.mxu0 %v1169
      %3888 = vmatprep.subr.mxu0 0.0
      %3889 = vmatpush1.msra.mxu0 %v1170
      %3890 = vmatprep.subr.mxu0 0.0
      %3891 = vmatpush1.msra.mxu0 %v1171
      %3892 = vmatprep.subr.mxu0 0.0
      %3893 = vmatpush1.msra.mxu0 %v1172
      %3894 = vmatprep.subr.mxu0 0.0
      %3895 = vmatpush1.msra.mxu0 %v1173
      %3896 = vmatprep.subr.mxu0 0.0
      %3897 = vmatpush1.msra.mxu0 %v1174
      %3898 = vmatprep.subr.mxu0 0.0
      %3899 = vmatpush1.msra.mxu0 0.0
      %3900 = vmatprep.subr.mxu0 0.0
      %3901 = vmatpush1.msra.mxu0 0.0
      %3902 = vmatprep.subr.mxu0 0.0
      %3903 = vmatpush1.msra.mxu0 0.0
      %3904 = vmatprep.subr.mxu0 0.0
      %3905 = vmatpush1.msra.mxu0 0.0
      %3906 = vmatprep.subr.mxu0 0.0
      %3907 = vmatpush1.msra.mxu0 0.0
      %3908 = vmatprep.subr.mxu0 0.0
      %3909 = vmatpush1.msra.mxu0 0.0
      %3910 = vmatprep.subr.mxu0 0.0
      %3911 = vmatpush1.msra.mxu0 0.0
      %3912 = vmatprep.subr.mxu0 0.0
      %3913 = vmatpush1.msra.mxu0 0.0
      %3914 = vmatprep.subr.mxu0 0.0
      %3915 = vmatpush1.msra.mxu0 0.0
      %3916 = vmatprep.subr.mxu0 0.0
      %3917 = vmatpush1.msra.mxu0 0.0
      %3918 = vmatprep.subr.mxu0 0.0
      %3919 = vmatpush1.msra.mxu0 0.0
      %3920 = vmatprep.subr.mxu0 0.0
      %3921 = vmatpush1.msra.mxu0 0.0
      %3922 = vmatprep.subr.mxu0 0.0
      %3923 = vmatpush1.msra.mxu0 0.0
      %3924 = vmatprep.subr.mxu0 0.0
      %3925 = vmatpush1.msra.mxu0 0.0
      %3926 = vmatprep.subr.mxu0 0.0
      %3927 = vmatpush1.msra.mxu0 0.0
      %3928 = vmatprep.subr.mxu0 0.0
      %3929 = vmatpush1.msra.mxu0 0.0
      %3930 = vmatprep.subr.mxu0 0.0
      %3931 = vmatpush1.msra.mxu0 0.0
      %3932 = vmatprep.subr.mxu0 0.0
      %3933 = vmatpush1.msra.mxu0 0.0
      %3934 = vmatprep.subr.mxu0 0.0
      %3935 = vmatpush1.msra.mxu0 0.0
      %3936 = vmatprep.subr.mxu0 0.0
      %3937 = vmatpush1.msra.mxu0 0.0
      %3938 = vmatprep.subr.mxu0 0.0
      %3939 = vmatpush1.msra.mxu0 0.0
      %3940 = vmatprep.subr.mxu0 0.0
      %3941 = vmatpush1.msra.mxu0 0.0
      %3942 = vmatprep.subr.mxu0 0.0
      %3943 = vmatpush1.msra.mxu0 0.0
      %3944 = vmatprep.subr.mxu0 0.0
      %3945 = vmatpush1.msra.mxu0 0.0
      %3946 = vmatprep.mubr.f32.mxu0 0.0
      %3947 = vmatmul.mubr.f32.gmra.mrb[0].mxu0 %v3868
      %v3948 = vpop.f32.mrb[0].mxu0
      %v3949 = vadd.f32 0.0, %v3948
      %v3950 = vpop.f32.mrb[0].mxu0
      %3951 = vmatprep.mubr.f32.mxu0 0.0
      %3952 = vmatmul.mubr.f32.gmra.mrb[0].mxu0 %v3871
      %v3953 = vpop.f32.mrb[0].mxu0
      %v3954 = vadd.f32 0.0, %v3953
      %v3955 = vpop.f32.mrb[0].mxu0
      %3956 = vmatprep.mubr.f32.mxu0 0.0
      %3957 = vmatmul.mubr.f32.gmra.mrb[0].mxu0 %v3874
      %v3958 = vpop.f32.mrb[0].mxu0
      %v3959 = vadd.f32 0.0, %v3958
      %v3960 = vpop.f32.mrb[0].mxu0
      %3961 = vmatprep.mubr.f32.mxu0 0.0
      %3962 = vmatmul.mubr.f32.gmra.mrb[0].mxu0 %v3877
      %v3963 = vpop.f32.mrb[0].mxu0
      %v3964 = vadd.f32 0.0, %v3963
      %v3965 = vpop.f32.mrb[0].mxu0
      %3966 = vmatprep.mubr.f32.mxu0 0.0
      %3967 = vmatmul.mubr.f32.gmra.mrb[0].mxu0 %v3880
      %v3968 = vpop.f32.mrb[0].mxu0
      %v3969 = vadd.f32 0.0, %v3968
      %v3970 = vpop.f32.mrb[0].mxu0
      %3971 = vdwg.mxu0
      %v3972 = vadd.f32 %v3856, %v3949
      %v3973 = vadd.f32 %v3857, %v3954
      %v3974 = vadd.f32 %v3858, %v3959
      %v3975 = vadd.f32 %v3859, %v3964
      %v3976 = vadd.f32 %v3860, %v3969
      %v3977 = vmax.f32 %v3106, %v3972
      %v3978 = vmax.f32 %v3107, %v3973
      %v3979 = vmax.f32 %v3108, %v3974
      %v3980 = vmax.f32 %v3109, %v3975
      %v3981 = vmax.f32 %v3110, %v3976
      %v3982 = vld [vmem:[%s2] sm:$0x1]
      %v3984 = vlaneseq
      %v3985 = vshrl.u32 %v3984, 7
      %v3986 = vsub.s32 0, %v3985
      %v3987 = vrot.slane %v3982, %v3986
      %v3989 = vadd.f32 %v3977, %v3987
      %v3990 = vadd.f32 %v3978, %v3987
      %v3991 = vadd.f32 %v3979, %v3987
      %v3992 = vadd.f32 %v3980, %v3987
      %v3993 = vadd.f32 %v3981, %v3987
      %v3994 = vmax.f32 %v3989, 0.0
      %v3995 = vmax.f32 %v3990, 0.0
      %v3996 = vmax.f32 %v3991, 0.0
      %v3997 = vmax.f32 %v3992, 0.0
      %v3998 = vmax.f32 %v3993, 0.0
      %3999 = vst [vmem:[%s170] sm:$0xff] %v3994
      %4000 = vst [vmem:[%s170 + $0x8] sm:$0xff] %v3995
      %4001 = vst [vmem:[%s170 + $0x10] sm:$0xff] %v3996
      %4002 = vst [vmem:[%s170 + $0x18] sm:$0xff] %v3997
      %4003 = vst [vmem:[%s170 + $0x20] sm:$0xf] %v3998
      %p4004 = scmp.lt.s32.totalorder %s14, 1
      %s4005 = scalar_select %p4004, %s14, 1
      %s4006 = smul.addr %s4005, 5
      %s4007 = smul.addr %s4006, 8
      %s4008 = scalar_lea.vmem %s3, %s4007
      // Predicated region
      $region33: #{baseline_forward.4} parent=31 // pred_check
        %p4009 = pneg %p100
      $region34: #{baseline_forward.4} parent=31 // pred_check_branch
        %4011 = sbr.rel (%p4009) target = $region36
      $region35: #{baseline_forward.4} parent=31 // pred_region
        _
      $region36: #{baseline_forward.4} parent=31 // pred_fallthru
        _
    $region32: #{baseline_forward.4} parent=5 // pred_fallthru
      _
    %p4012 = scmp.le.s32.totalorder 2, %s9
    // Predicated region
    $region37: #{baseline_forward.4} parent=5 // pred_check
      %p4013 = pneg %p4012
    $region38: #{baseline_forward.4} parent=5 // pred_check_branch
      %4015 = sbr.rel (%p4013) target = $region40
    $region39: #{baseline_forward.4} parent=5 // pred_region
      %s4016 = ssub.s32 %s9, 2
      // Predicated region
      $region41: #{baseline_forward.4} parent=39 // pred_check
        %p4017 = pneg %p106
      $region42: #{baseline_forward.4} parent=39 // pred_check_branch
        %4019 = sbr.rel (%p4017) target = $region44
      $region43: #{baseline_forward.4} parent=39 // pred_region
        %p4020 = scmp.lt.s32.totalorder %s15, 1
        %s4021 = scalar_select %p4020, %s15, 1
        %s4022 = smul.addr %s4021, 5
        %s4023 = smul.addr %s4022, 8
        %s4024 = scalar_lea.vmem %s3, %s4023
      $region44: #{baseline_forward.4} parent=39 // pred_fallthru
        _
    $region40: #{baseline_forward.4} parent=5 // pred_fallthru
      _
  $region6: #{baseline_forward.4} parent=0 // loop_footer
    %s13 = sadd.s32 1, %s9
  $region7: #{baseline_forward.4} parent=0 // loop_footer_branch
    %8 = sbr.rel target = $region3
  $region8: #{baseline_forward.4} parent=0 // loop_exit
    _

// kernel: baseline_forward.5
$region0: #{baseline_forward.5}
  #allocation0 [shape = 'u32[]', space=smem, size = 0x4, offset = 0x4, fixed_abs, tag = 'smem constant byte address 0x4 - core index']
  #allocation1 [shape = 'u32[144,128]{1,0:T(1,128)}', space=vmem, size = 0x12000, scoped, tag = 'internal scratch']
  %s0 = inlined_call_operand.vmem [shape: f32[2,4,4,4,128], index: 0, kind: input, shape index: {}]
  %s1 = inlined_call_operand.vmem [shape: f32[9,128,64], index: 1, kind: input, shape index: {}]
  %s2 = inlined_call_operand.vmem [shape: f32[1,64], index: 2, kind: input, shape index: {}]
  %s3 = inlined_call_operand.vmem [shape: f32[4,64,256], index: 3, kind: input, shape index: {}]
  %s4 = inlined_call_operand.vmem [shape: f32[1,256], index: 4, kind: input, shape index: {}]
  %s5 = inlined_call_operand.vmem [shape: f32[256,64], index: 5, kind: input, shape index: {}]
  %s6 = inlined_call_operand.vmem [shape: f32[1,64], index: 6, kind: input, shape index: {}]
  %s7 = inlined_call_operand.vmem [shape: f32[64,10], index: 7, kind: input, shape index: {}]
  %s8 = inlined_call_operand.vmem [shape: f32[1,10], index: 8, kind: input, shape index: {}]
  %s9 = inlined_call_operand.hbm [shape: f32[2,4,64], index: 9, kind: output, shape index: {0}]
  %s10 = inlined_call_operand.hbm [shape: f32[2,1,10], index: 10, kind: output, shape index: {1}]
  %11 = xla_tuple %s9, %s10
  %s12 = sld [smem:[#allocation0]]
  $region77: #{baseline_forward.5} parent=0
    _
  %s14 = ssub.s32 1, %s12
  %s15 = scalar_select 0, %s14, %s12
  $region1: #{baseline_forward.5} parent=0
    #allocation2 [shape = 'u8[4096]{0}', space=vmem, size = 0x1000, scoped, tag = 'output window, operand 0']
    #allocation3 [shape = 's32[2]{0}', space=sflag, size = 0x8, scoped, tag = 'scoped memory for baseline_forward.5']
    #allocation4 [shape = 'u8[1024]{0}', space=vmem, size = 0x400, scoped, tag = 'output window, operand 1']
    #allocation5 [shape = 's32[2]{0}', space=sflag, size = 0x8, scoped, tag = 'scoped memory for baseline_forward.5']
    %16 = vsyncpa [#allocation3], 0
    %s17 = scalar_lea.sflag [#allocation3], 1
    %18 = vsyncpa %s17, 0
    %19 = vsyncpa [#allocation5], 0
    %s20 = scalar_lea.sflag [#allocation5], 1
    %21 = vsyncpa %s20, 0
    loop: start=0, step=1, limit=4
    $region2: #{baseline_forward.5} parent=1 // loop_pre_header
      _
    $region3: #{baseline_forward.5} parent=1 // loop_header
      %s23 = sphi 0, %s27
      %p24 = scmp.ge.s32.totalorder %s23, 4
      %s33 = sphi 0, %s35
      %s36 = sphi 0, %s33
      %s37 = sphi 0, %s36
      %s53 = sphi 0, %s37
      %s57 = sphi 0, %s57
      %s59 = sphi 0, %s57
      %s60 = sphi 0, %s59
      %s74 = sphi 0, %s60
      %s78 = sphi 0, %s78
      %s80 = sphi 0, %s78
      %s81 = sphi 0, %s80
      %s95 = sphi 0, %s81
      %s99 = sphi 0, %s99
      %s101 = sphi 0, %s99
      %s102 = sphi 0, %s101
      %s116 = sphi 0, %s102
      %s120 = sphi 0, %s120
      %s122 = sphi 0, %s120
      %s123 = sphi 0, %s122
      %s137 = sphi 0, %s123
      %s141 = sphi 0, %s141
      %s143 = sphi 0, %s141
      %s144 = sphi 0, %s143
      %s158 = sphi 0, %s144
      %s162 = sphi 0, %s162
      %s164 = sphi 0, %s162
      %s165 = sphi 0, %s164
      %s179 = sphi 0, %s165
      %s183 = sphi 0, %s183
      %s185 = sphi 0, %s183
      %s186 = sphi 0, %s185
      %s200 = sphi 0, %s186
      %s204 = sphi 0, %s204
      %s206 = sphi 0, %s204
      %s207 = sphi 0, %s206
      %s221 = sphi 0, %s207
      %s227 = sphi 0, %s229
      %s230 = sphi 0, %s227
      %s231 = sphi 0, %s230
      %s247 = sphi 0, %s231
      %s253 = sphi 0, %s255
      %s256 = sphi 0, %s253
      %s257 = sphi 0, %s256
      %s273 = sphi 0, %s257
    $region4: #{baseline_forward.5} parent=1 // loop_header_branch
      %26 = sbr.rel (%p24) target = $region8
    $region5: #{baseline_forward.5} parent=1 // loop_body
      %s28 = ssub.s32 %s23, 1
      %s29 = ssub.s32 %s23, 2
      %s30 = sadd.s32 %s23, 1
      %s31 = ssub.s32 %s23, %s30
      %p32 = scmp.eq.s32.totalorder %s31, 0
      %s34 = sadd.s32 %s33, 1
      %s35 = scalar_select %p32, %s33, %s34
      %p38 = pneg %p32
      %p39 = scmp.eq.s32.totalorder %s23, 1
      %p40 = por %p38, %p39
      %p41 = scmp.ne.s32.totalorder %s33, %s36
      %p42 = scmp.eq.s32.totalorder %s23, 0
      %p43 = por %p41, %p42
      %p44 = scmp.ne.s32.totalorder %s33, %s36
      %p45 = scmp.eq.s32.totalorder %s28, 1
      %p46 = por %p44, %p45
      %p47 = scmp.ne.s32.totalorder %s36, %s37
      %p48 = scmp.eq.s32.totalorder %s28, 0
      %p49 = por %p47, %p48
      %p50 = scmp.ne.s32.totalorder %s36, %s37
      %p51 = scmp.eq.s32.totalorder %s29, 1
      %p52 = por %p50, %p51
      %p54 = scmp.ne.s32.totalorder %s37, %s53
      %p55 = scmp.eq.s32.totalorder %s29, 0
      %p56 = por %p54, %p55
      %s58 = sadd.s32 %s57, 1
      %p61 = scmp.eq.s32.totalorder %s23, 1
      %p62 = scmp.ne.s32.totalorder %s57, %s59
      %p63 = scmp.eq.s32.totalorder %s23, 0
      %p64 = por %p62, %p63
      %p65 = scmp.ne.s32.totalorder %s57, %s59
      %p66 = scmp.eq.s32.totalorder %s28, 1
      %p67 = por %p65, %p66
      %p68 = scmp.ne.s32.totalorder %s59, %s60
      %p69 = scmp.eq.s32.totalorder %s28, 0
      %p70 = por %p68, %p69
      %p71 = scmp.ne.s32.totalorder %s59, %s60
      %p72 = scmp.eq.s32.totalorder %s29, 1
      %p73 = por %p71, %p72
      %p75 = scmp.ne.s32.totalorder %s60, %s74
      %p76 = scmp.eq.s32.totalorder %s29, 0
      %p77 = por %p75, %p76
      %s79 = sadd.s32 %s78, 1
      %p82 = scmp.eq.s32.totalorder %s23, 1
      %p83 = scmp.ne.s32.totalorder %s78, %s80
      %p84 = scmp.eq.s32.totalorder %s23, 0
      %p85 = por %p83, %p84
      %p86 = scmp.ne.s32.totalorder %s78, %s80
      %p87 = scmp.eq.s32.totalorder %s28, 1
      %p88 = por %p86, %p87
      %p89 = scmp.ne.s32.totalorder %s80, %s81
      %p90 = scmp.eq.s32.totalorder %s28, 0
      %p91 = por %p89, %p90
      %p92 = scmp.ne.s32.totalorder %s80, %s81
      %p93 = scmp.eq.s32.totalorder %s29, 1
      %p94 = por %p92, %p93
      %p96 = scmp.ne.s32.totalorder %s81, %s95
      %p97 = scmp.eq.s32.totalorder %s29, 0
      %p98 = por %p96, %p97
      %s100 = sadd.s32 %s99, 1
      %p103 = scmp.eq.s32.totalorder %s23, 1
      %p104 = scmp.ne.s32.totalorder %s99, %s101
      %p105 = scmp.eq.s32.totalorder %s23, 0
      %p106 = por %p104, %p105
      %p107 = scmp.ne.s32.totalorder %s99, %s101
      %p108 = scmp.eq.s32.totalorder %s28, 1
      %p109 = por %p107, %p108
      %p110 = scmp.ne.s32.totalorder %s101, %s102
      %p111 = scmp.eq.s32.totalorder %s28, 0
      %p112 = por %p110, %p111
      %p113 = scmp.ne.s32.totalorder %s101, %s102
      %p114 = scmp.eq.s32.totalorder %s29, 1
      %p115 = por %p113, %p114
      %p117 = scmp.ne.s32.totalorder %s102, %s116
      %p118 = scmp.eq.s32.totalorder %s29, 0
      %p119 = por %p117, %p118
      %s121 = sadd.s32 %s120, 1
      %p124 = scmp.eq.s32.totalorder %s23, 1
      %p125 = scmp.ne.s32.totalorder %s120, %s122
      %p126 = scmp.eq.s32.totalorder %s23, 0
      %p127 = por %p125, %p126
      %p128 = scmp.ne.s32.totalorder %s120, %s122
      %p129 = scmp.eq.s32.totalorder %s28, 1
      %p130 = por %p128, %p129
      %p131 = scmp.ne.s32.totalorder %s122, %s123
      %p132 = scmp.eq.s32.totalorder %s28, 0
      %p133 = por %p131, %p132
      %p134 = scmp.ne.s32.totalorder %s122, %s123
      %p135 = scmp.eq.s32.totalorder %s29, 1
      %p136 = por %p134, %p135
      %p138 = scmp.ne.s32.totalorder %s123, %s137
      %p139 = scmp.eq.s32.totalorder %s29, 0
      %p140 = por %p138, %p139
      %s142 = sadd.s32 %s141, 1
      %p145 = scmp.eq.s32.totalorder %s23, 1
      %p146 = scmp.ne.s32.totalorder %s141, %s143
      %p147 = scmp.eq.s32.totalorder %s23, 0
      %p148 = por %p146, %p147
      %p149 = scmp.ne.s32.totalorder %s141, %s143
      %p150 = scmp.eq.s32.totalorder %s28, 1
      %p151 = por %p149, %p150
      %p152 = scmp.ne.s32.totalorder %s143, %s144
      %p153 = scmp.eq.s32.totalorder %s28, 0
      %p154 = por %p152, %p153
      %p155 = scmp.ne.s32.totalorder %s143, %s144
      %p156 = scmp.eq.s32.totalorder %s29, 1
      %p157 = por %p155, %p156
      %p159 = scmp.ne.s32.totalorder %s144, %s158
      %p160 = scmp.eq.s32.totalorder %s29, 0
      %p161 = por %p159, %p160
      %s163 = sadd.s32 %s162, 1
      %p166 = scmp.eq.s32.totalorder %s23, 1
      %p167 = scmp.ne.s32.totalorder %s162, %s164
      %p168 = scmp.eq.s32.totalorder %s23, 0
      %p169 = por %p167, %p168
      %p170 = scmp.ne.s32.totalorder %s162, %s164
      %p171 = scmp.eq.s32.totalorder %s28, 1
      %p172 = por %p170, %p171
      %p173 = scmp.ne.s32.totalorder %s164, %s165
      %p174 = scmp.eq.s32.totalorder %s28, 0
      %p175 = por %p173, %p174
      %p176 = scmp.ne.s32.totalorder %s164, %s165
      %p177 = scmp.eq.s32.totalorder %s29, 1
      %p178 = por %p176, %p177
      %p180 = scmp.ne.s32.totalorder %s165, %s179
      %p181 = scmp.eq.s32.totalorder %s29, 0
      %p182 = por %p180, %p181
      %s184 = sadd.s32 %s183, 1
      %p187 = scmp.eq.s32.totalorder %s23, 1
      %p188 = scmp.ne.s32.totalorder %s183, %s185
      %p189 = scmp.eq.s32.totalorder %s23, 0
      %p190 = por %p188, %p189
      %p191 = scmp.ne.s32.totalorder %s183, %s185
      %p192 = scmp.eq.s32.totalorder %s28, 1
      %p193 = por %p191, %p192
      %p194 = scmp.ne.s32.totalorder %s185, %s186
      %p195 = scmp.eq.s32.totalorder %s28, 0
      %p196 = por %p194, %p195
      %p197 = scmp.ne.s32.totalorder %s185, %s186
      %p198 = scmp.eq.s32.totalorder %s29, 1
      %p199 = por %p197, %p198
      %p201 = scmp.ne.s32.totalorder %s186, %s200
      %p202 = scmp.eq.s32.totalorder %s29, 0
      %p203 = por %p201, %p202
      %s205 = sadd.s32 %s204, 1
      %p208 = scmp.eq.s32.totalorder %s23, 1
      %p209 = scmp.ne.s32.totalorder %s204, %s206
      %p210 = scmp.eq.s32.totalorder %s23, 0
      %p211 = por %p209, %p210
      %p212 = scmp.ne.s32.totalorder %s204, %s206
      %p213 = scmp.eq.s32.totalorder %s28, 1
      %p214 = por %p212, %p213
      %p215 = scmp.ne.s32.totalorder %s206, %s207
      %p216 = scmp.eq.s32.totalorder %s28, 0
      %p217 = por %p215, %p216
      %p218 = scmp.ne.s32.totalorder %s206, %s207
      %p219 = scmp.eq.s32.totalorder %s29, 1
      %p220 = por %p218, %p219
      %p222 = scmp.ne.s32.totalorder %s207, %s221
      %p223 = scmp.eq.s32.totalorder %s29, 0
      %p224 = por %p222, %p223
      %s225 = ssub.s32 %s23, %s30
      %p226 = scmp.eq.s32.totalorder %s225, 0
      %s228 = sadd.s32 %s227, 1
      %s229 = scalar_select %p226, %s227, %s228
      %p232 = pneg %p226
      %p233 = scmp.eq.s32.totalorder %s23, 1
      %p234 = por %p232, %p233
      %p235 = scmp.ne.s32.totalorder %s227, %s230
      %p236 = scmp.eq.s32.totalorder %s23, 0
      %p237 = por %p235, %p236
      %p238 = scmp.ne.s32.totalorder %s227, %s230
      %p239 = scmp.eq.s32.totalorder %s28, 1
      %p240 = por %p238, %p239
      %p241 = scmp.ne.s32.totalorder %s230, %s231
      %p242 = scmp.eq.s32.totalorder %s28, 0
      %p243 = por %p241, %p242
      %p244 = scmp.ne.s32.totalorder %s230, %s231
      %p245 = scmp.eq.s32.totalorder %s29, 1
      %p246 = por %p244, %p245
      %p248 = scmp.ne.s32.totalorder %s231, %s247
      %p249 = scmp.eq.s32.totalorder %s29, 0
      %p250 = por %p248, %p249
      %s251 = ssub.s32 %s23, %s30
      %p252 = scmp.eq.s32.totalorder %s251, 0
      %s254 = sadd.s32 %s253, 1
      %s255 = scalar_select %p252, %s253, %s254
      %p258 = pneg %p252
      %p259 = scmp.eq.s32.totalorder %s23, 1
      %p260 = por %p258, %p259
      %p261 = scmp.ne.s32.totalorder %s253, %s256
      %p262 = scmp.eq.s32.totalorder %s23, 0
      %p263 = por %p261, %p262
      %p264 = scmp.ne.s32.totalorder %s253, %s256
      %p265 = scmp.eq.s32.totalorder %s28, 1
      %p266 = por %p264, %p265
      %p267 = scmp.ne.s32.totalorder %s256, %s257
      %p268 = scmp.eq.s32.totalorder %s28, 0
      %p269 = por %p267, %p268
      %p270 = scmp.ne.s32.totalorder %s256, %s257
      %p271 = scmp.eq.s32.totalorder %s29, 1
      %p272 = por %p270, %p271
      %p274 = scmp.ne.s32.totalorder %s257, %s273
      %p275 = scmp.eq.s32.totalorder %s29, 0
      %p276 = por %p274, %p275
      %p277 = scmp.le.s32.totalorder 1, %s23
      %p278 = scmp.lt.s32.totalorder %s23, 3
      %p279 = pnand %p277, %p278
      %p280 = pneg %p279
      // Predicated region
      $region9: #{baseline_forward.5} parent=5 // pred_check
        _
      $region10: #{baseline_forward.5} parent=5 // pred_check_branch
        %282 = sbr.rel (%p279) target = $region12
      $region11: #{baseline_forward.5} parent=5 // pred_region
        %s283 = ssub.s32 %s23, 1
        // Predicated region
        $region13: #{baseline_forward.5} parent=11 // pred_check
          %p284 = pneg %p70
        $region14: #{baseline_forward.5} parent=11 // pred_check_branch
          %286 = sbr.rel (%p284) target = $region16
        $region15: #{baseline_forward.5} parent=11 // pred_region
          _
        $region16: #{baseline_forward.5} parent=11 // pred_fallthru
          _
        // Predicated region
        $region17: #{baseline_forward.5} parent=11 // pred_check
          %p287 = pneg %p91
        $region18: #{baseline_forward.5} parent=11 // pred_check_branch
          %289 = sbr.rel (%p287) target = $region20
        $region19: #{baseline_forward.5} parent=11 // pred_region
          _
        $region20: #{baseline_forward.5} parent=11 // pred_fallthru
          _
        // Predicated region
        $region21: #{baseline_forward.5} parent=11 // pred_check
          %p290 = pneg %p112
        $region22: #{baseline_forward.5} parent=11 // pred_check_branch
          %292 = sbr.rel (%p290) target = $region24
        $region23: #{baseline_forward.5} parent=11 // pred_region
          _
        $region24: #{baseline_forward.5} parent=11 // pred_fallthru
          _
        // Predicated region
        $region25: #{baseline_forward.5} parent=11 // pred_check
          %p293 = pneg %p133
        $region26: #{baseline_forward.5} parent=11 // pred_check_branch
          %295 = sbr.rel (%p293) target = $region28
        $region27: #{baseline_forward.5} parent=11 // pred_region
          _
        $region28: #{baseline_forward.5} parent=11 // pred_fallthru
          _
        // Predicated region
        $region29: #{baseline_forward.5} parent=11 // pred_check
          %p296 = pneg %p154
        $region30: #{baseline_forward.5} parent=11 // pred_check_branch
          %298 = sbr.rel (%p296) target = $region32
        $region31: #{baseline_forward.5} parent=11 // pred_region
          _
        $region32: #{baseline_forward.5} parent=11 // pred_fallthru
          _
        // Predicated region
        $region33: #{baseline_forward.5} parent=11 // pred_check
          %p299 = pneg %p175
        $region34: #{baseline_forward.5} parent=11 // pred_check_branch
          %301 = sbr.rel (%p299) target = $region36
        $region35: #{baseline_forward.5} parent=11 // pred_region
          _
        $region36: #{baseline_forward.5} parent=11 // pred_fallthru
          _
        // Predicated region
        $region37: #{baseline_forward.5} parent=11 // pred_check
          %p302 = pneg %p196
        $region38: #{baseline_forward.5} parent=11 // pred_check_branch
          %304 = sbr.rel (%p302) target = $region40
        $region39: #{baseline_forward.5} parent=11 // pred_region
          _
        $region40: #{baseline_forward.5} parent=11 // pred_fallthru
          _
        // Predicated region
        $region41: #{baseline_forward.5} parent=11 // pred_check
          %p305 = pneg %p217
        $region42: #{baseline_forward.5} parent=11 // pred_check_branch
          %307 = sbr.rel (%p305) target = $region44
        $region43: #{baseline_forward.5} parent=11 // pred_region
          _
        $region44: #{baseline_forward.5} parent=11 // pred_fallthru
          _
      $region12: #{baseline_forward.5} parent=5 // pred_fallthru
        _
      %p308 = scmp.lt.s32.totalorder %s23, 2
      // Predicated region
      $region45: #{baseline_forward.5} parent=5 // pred_check
        %p309 = pneg %p308
      $region46: #{baseline_forward.5} parent=5 // pred_check_branch
        %311 = sbr.rel (%p309) target = $region48
      $region47: #{baseline_forward.5} parent=5 // pred_region
        // Predicated region
        $region49: #{baseline_forward.5} parent=47 // pred_check
          %p312 = pneg %p43
        $region50: #{baseline_forward.5} parent=47 // pred_check_branch
          %314 = sbr.rel (%p312) target = $region52
        $region51: #{baseline_forward.5} parent=47 // pred_region
          %p315 = scmp.lt.s32.totalorder %s23, 1
          %s316 = scalar_select %p315, %s23, 1
          %s317 = smul.addr %s316, 16
          %s318 = smul.addr %s317, 4
          %s319 = scalar_lea.vmem %s0, %s318
        $region52: #{baseline_forward.5} parent=47 // pred_fallthru
          _
      $region48: #{baseline_forward.5} parent=5 // pred_fallthru
        _
      %p320 = scmp.le.s32.totalorder 1, %s23
      %p321 = scmp.lt.s32.totalorder %s23, 3
      %p322 = pnand %p320, %p321
      %p323 = pneg %p322
      // Predicated region
      $region53: #{baseline_forward.5} parent=5 // pred_check
        _
      $region54: #{baseline_forward.5} parent=5 // pred_check_branch
        %325 = sbr.rel (%p322) target = $region56
      $region55: #{baseline_forward.5} parent=5 // pred_region
        %s326 = ssub.s32 %s23, 1
        %p327 = scmp.lt.s32.totalorder %s28, 1
        %s328 = scalar_select %p327, %s28, 1
        %s329 = smul.addr %s328, 16
        %s330 = smul.addr %s329, 4
        %s331 = scalar_lea.vmem %s0, %s330
        %p332 = pneg %p49
        %p333 = pneg %p46
        %p334 = pneg %p70
        %p335 = pneg %p67
        %p336 = pneg %p91
        %p337 = pneg %p88
        %p338 = pneg %p112
        %p339 = pneg %p109
        %p340 = pneg %p133
        %p341 = pneg %p130
        %p342 = pneg %p154
        %p343 = pneg %p151
        %p344 = pneg %p175
        %p345 = pneg %p172
        %p346 = pneg %p196
        %p347 = pneg %p193
        %p348 = pneg %p217
        %p349 = pneg %p214
        %p350 = pneg %p243
        %p351 = pneg %p240
        %s352 = sand.u32 %s230, 1
        %s353 = scalar_lea.sflag [#allocation3], %s352
        %s354 = sand.u32 %s230, 1
        %s355 = smul.addr %s354, 4
        %s356 = scalar_lea.vmem [#allocation2], %s355
        %p357 = pneg %p269
        %p358 = pneg %p266
        %s359 = sand.u32 %s256, 1
        %s360 = scalar_lea.sflag [#allocation5], %s359
        %s361 = sand.u32 %s256, 1
        %s362 = scalar_lea.vmem [#allocation4], %s361
        %p363 = scmp.lt.s32.totalorder %s28, 1
        %s364 = scalar_select %p363, %s28, 1
        %s365 = smul.addr %s364, 16
        %s366 = smul.addr %s365, 4
        %s367 = scalar_lea.vmem %s0, %s366
        %v368 = vld [vmem:[%s367] sm:$0xf]
        %v369 = vld [vmem:[%s1] sm:$0xff]
        %v370 = vld [vmem:[%s1 + $0x8] sm:$0xff]
        %v371 = vld [vmem:[%s1 + $0x10] sm:$0xff]
        %v372 = vld [vmem:[%s1 + $0x18] sm:$0xff]
        %v373 = vld [vmem:[%s1 + $0x20] sm:$0xff]
        %v374 = vld [vmem:[%s1 + $0x28] sm:$0xff]
        %v375 = vld [vmem:[%s1 + $0x30] sm:$0xff]
        %v376 = vld [vmem:[%s1 + $0x38] sm:$0xff]
        %v377 = vld [vmem:[%s1 + $0x40] sm:$0xff]
        %v378 = vld [vmem:[%s1 + $0x48] sm:$0xff]
        %v379 = vld [vmem:[%s1 + $0x50] sm:$0xff]
        %v380 = vld [vmem:[%s1 + $0x58] sm:$0xff]
        %v381 = vld [vmem:[%s1 + $0x60] sm:$0xff]
        %v382 = vld [vmem:[%s1 + $0x68] sm:$0xff]
        %v383 = vld [vmem:[%s1 + $0x70] sm:$0xff]
        %v384 = vld [vmem:[%s1 + $0x78] sm:$0xff]
        %s385 = scalar_lea.vmem %s367, 4
        %v386 = vld [vmem:[%s385] sm:$0xf]
        %s387 = scalar_lea.vmem %s1, 128
        %v388 = vld [vmem:[%s387] sm:$0xff]
        %v389 = vld [vmem:[%s387 + $0x8] sm:$0xff]
        %v390 = vld [vmem:[%s387 + $0x10] sm:$0xff]
        %v391 = vld [vmem:[%s387 + $0x18] sm:$0xff]
        %v392 = vld [vmem:[%s387 + $0x20] sm:$0xff]
        %v393 = vld [vmem:[%s387 + $0x28] sm:$0xff]
        %v394 = vld [vmem:[%s387 + $0x30] sm:$0xff]
        %v395 = vld [vmem:[%s387 + $0x38] sm:$0xff]
        %v396 = vld [vmem:[%s387 + $0x40] sm:$0xff]
        %v397 = vld [vmem:[%s387 + $0x48] sm:$0xff]
        %v398 = vld [vmem:[%s387 + $0x50] sm:$0xff]
        %v399 = vld [vmem:[%s387 + $0x58] sm:$0xff]
        %v400 = vld [vmem:[%s387 + $0x60] sm:$0xff]
        %v401 = vld [vmem:[%s387 + $0x68] sm:$0xff]
        %v402 = vld [vmem:[%s387 + $0x70] sm:$0xff]
        %v403 = vld [vmem:[%s387 + $0x78] sm:$0xff]
        %404 = vmatprep.subr.mxu0 0.0
        %405 = vmatpush1.msra.mxu0 %v388
        %406 = vmatprep.subr.mxu0 0.0
        %407 = vmatpush1.msra.mxu0 %v389
        %408 = vmatprep.subr.mxu0 0.0
        %409 = vmatpush1.msra.mxu0 %v390
        %410 = vmatprep.subr.mxu0 0.0
        %411 = vmatpush1.msra.mxu0 %v391
        %412 = vmatprep.subr.mxu0 0.0
        %413 = vmatpush1.msra.mxu0 %v392
        %414 = vmatprep.subr.mxu0 0.0
        %415 = vmatpush1.msra.mxu0 %v393
        %416 = vmatprep.subr.mxu0 0.0
        %417 = vmatpush1.msra.mxu0 %v394
        %418 = vmatprep.subr.mxu0 0.0
        %419 = vmatpush1.msra.mxu0 %v395
        %420 = vmatprep.subr.mxu0 0.0
        %421 = vmatpush1.msra.mxu0 %v396
        %422 = vmatprep.subr.mxu0 0.0
        %423 = vmatpush1.msra.mxu0 %v397
        %424 = vmatprep.subr.mxu0 0.0
        %425 = vmatpush1.msra.mxu0 %v398
        %426 = vmatprep.subr.mxu0 0.0
        %427 = vmatpush1.msra.mxu0 %v399
        %428 = vmatprep.subr.mxu0 0.0
        %429 = vmatpush1.msra.mxu0 %v400
        %430 = vmatprep.subr.mxu0 0.0
        %431 = vmatpush1.msra.mxu0 %v401
        %432 = vmatprep.subr.mxu0 0.0
        %433 = vmatpush1.msra.mxu0 %v402
        %434 = vmatprep.subr.mxu0 0.0
        %435 = vmatpush1.msra.mxu0 %v403
        %436 = vmatprep.subr.mxu0 0.0
        %437 = vmatpush1.msra.mxu0 0.0
        %438 = vmatprep.subr.mxu0 0.0
        %439 = vmatpush1.msra.mxu0 0.0
        %440 = vmatprep.subr.mxu0 0.0
        %441 = vmatpush1.msra.mxu0 0.0
        %442 = vmatprep.subr.mxu0 0.0
        %443 = vmatpush1.msra.mxu0 0.0
        %444 = vmatprep.subr.mxu0 0.0
        %445 = vmatpush1.msra.mxu0 0.0
        %446 = vmatprep.subr.mxu0 0.0
        %447 = vmatpush1.msra.mxu0 0.0
        %448 = vmatprep.subr.mxu0 0.0
        %449 = vmatpush1.msra.mxu0 0.0
        %450 = vmatprep.subr.mxu0 0.0
        %451 = vmatpush1.msra.mxu0 0.0
        %452 = vmatprep.subr.mxu0 0.0
        %453 = vmatpush1.msra.mxu0 0.0
        %454 = vmatprep.subr.mxu0 0.0
        %455 = vmatpush1.msra.mxu0 0.0
        %456 = vmatprep.subr.mxu0 0.0
        %457 = vmatpush1.msra.mxu0 0.0
        %458 = vmatprep.subr.mxu0 0.0
        %459 = vmatpush1.msra.mxu0 0.0
        %460 = vmatprep.subr.mxu0 0.0
        %461 = vmatpush1.msra.mxu0 0.0
        %462 = vmatprep.subr.mxu0 0.0
        %463 = vmatpush1.msra.mxu0 0.0
        %464 = vmatprep.subr.mxu0 0.0
        %465 = vmatpush1.msra.mxu0 0.0
        %466 = vmatprep.subr.mxu0 0.0
        %467 = vmatpush1.msra.mxu0 0.0
        %468 = vmatprep.mubr.f32.mxu0 0.0
        %469 = vmatmul.mubr.f32.gmra.mrb[0].mxu0 %v386
        %v470 = vpop.f32.mrb[0].mxu0
        %v471 = vadd.f32 0.0, %v470
        %v472 = vpop.f32.mrb[0].mxu0
        %473 = vdwg.mxu0
        %474 = vmatprep.subr.mxu0 0.0
        %475 = vmatpush1.msra.mxu0 %v369
        %476 = vmatprep.subr.mxu0 0.0
        %477 = vmatpush1.msra.mxu0 %v370
        %478 = vmatprep.subr.mxu0 0.0
        %479 = vmatpush1.msra.mxu0 %v371
        %480 = vmatprep.subr.mxu0 0.0
        %481 = vmatpush1.msra.mxu0 %v372
        %482 = vmatprep.subr.mxu0 0.0
        %483 = vmatpush1.msra.mxu0 %v373
        %484 = vmatprep.subr.mxu0 0.0
        %485 = vmatpush1.msra.mxu0 %v374
        %486 = vmatprep.subr.mxu0 0.0
        %487 = vmatpush1.msra.mxu0 %v375
        %488 = vmatprep.subr.mxu0 0.0
        %489 = vmatpush1.msra.mxu0 %v376
        %490 = vmatprep.subr.mxu0 0.0
        %491 = vmatpush1.msra.mxu0 %v377
        %492 = vmatprep.subr.mxu0 0.0
        %493 = vmatpush1.msra.mxu0 %v378
        %494 = vmatprep.subr.mxu0 0.0
        %495 = vmatpush1.msra.mxu0 %v379
        %496 = vmatprep.subr.mxu0 0.0
        %497 = vmatpush1.msra.mxu0 %v380
        %498 = vmatprep.subr.mxu0 0.0
        %499 = vmatpush1.msra.mxu0 %v381
        %500 = vmatprep.subr.mxu0 0.0
        %501 = vmatpush1.msra.mxu0 %v382
        %502 = vmatprep.subr.mxu0 0.0
        %503 = vmatpush1.msra.mxu0 %v383
        %504 = vmatprep.subr.mxu0 0.0
        %505 = vmatpush1.msra.mxu0 %v384
        %506 = vmatprep.subr.mxu0 0.0
        %507 = vmatpush1.msra.mxu0 0.0
        %508 = vmatprep.subr.mxu0 0.0
        %509 = vmatpush1.msra.mxu0 0.0
        %510 = vmatprep.subr.mxu0 0.0
        %511 = vmatpush1.msra.mxu0 0.0
        %512 = vmatprep.subr.mxu0 0.0
        %513 = vmatpush1.msra.mxu0 0.0
        %514 = vmatprep.subr.mxu0 0.0
        %515 = vmatpush1.msra.mxu0 0.0
        %516 = vmatprep.subr.mxu0 0.0
        %517 = vmatpush1.msra.mxu0 0.0
        %518 = vmatprep.subr.mxu0 0.0
        %519 = vmatpush1.msra.mxu0 0.0
        %520 = vmatprep.subr.mxu0 0.0
        %521 = vmatpush1.msra.mxu0 0.0
        %522 = vmatprep.subr.mxu0 0.0
        %523 = vmatpush1.msra.mxu0 0.0
        %524 = vmatprep.subr.mxu0 0.0
        %525 = vmatpush1.msra.mxu0 0.0
        %526 = vmatprep.subr.mxu0 0.0
        %527 = vmatpush1.msra.mxu0 0.0
        %528 = vmatprep.subr.mxu0 0.0
        %529 = vmatpush1.msra.mxu0 0.0
        %530 = vmatprep.subr.mxu0 0.0
        %531 = vmatpush1.msra.mxu0 0.0
        %532 = vmatprep.subr.mxu0 0.0
        %533 = vmatpush1.msra.mxu0 0.0
        %534 = vmatprep.subr.mxu0 0.0
        %535 = vmatpush1.msra.mxu0 0.0
        %536 = vmatprep.subr.mxu0 0.0
        %537 = vmatpush1.msra.mxu0 0.0
        %538 = vmatprep.mubr.f32.mxu0 0.0
        %539 = vmatmul.mubr.f32.gmra.mrb[0].mxu0 %v368
        %v540 = vpop.f32.mrb[0].mxu0
        %v541 = vadd.f32 %v471, %v540
        %v542 = vpop.f32.mrb[0].mxu0
        %543 = vdwg.mxu0
        %s544 = scalar_lea.vmem %s367, 8
        %v545 = vld [vmem:[%s544] sm:$0xf]
        %s546 = scalar_lea.vmem %s1, 256
        %v547 = vld [vmem:[%s546] sm:$0xff]
        %v548 = vld [vmem:[%s546 + $0x8] sm:$0xff]
        %v549 = vld [vmem:[%s546 + $0x10] sm:$0xff]
        %v550 = vld [vmem:[%s546 + $0x18] sm:$0xff]
        %v551 = vld [vmem:[%s546 + $0x20] sm:$0xff]
        %v552 = vld [vmem:[%s546 + $0x28] sm:$0xff]
        %v553 = vld [vmem:[%s546 + $0x30] sm:$0xff]
        %v554 = vld [vmem:[%s546 + $0x38] sm:$0xff]
        %v555 = vld [vmem:[%s546 + $0x40] sm:$0xff]
        %v556 = vld [vmem:[%s546 + $0x48] sm:$0xff]
        %v557 = vld [vmem:[%s546 + $0x50] sm:$0xff]
        %v558 = vld [vmem:[%s546 + $0x58] sm:$0xff]
        %v559 = vld [vmem:[%s546 + $0x60] sm:$0xff]
        %v560 = vld [vmem:[%s546 + $0x68] sm:$0xff]
        %v561 = vld [vmem:[%s546 + $0x70] sm:$0xff]
        %v562 = vld [vmem:[%s546 + $0x78] sm:$0xff]
        %563 = vmatprep.subr.mxu0 0.0
        %564 = vmatpush1.msra.mxu0 %v547
        %565 = vmatprep.subr.mxu0 0.0
        %566 = vmatpush1.msra.mxu0 %v548
        %567 = vmatprep.subr.mxu0 0.0
        %568 = vmatpush1.msra.mxu0 %v549
        %569 = vmatprep.subr.mxu0 0.0
        %570 = vmatpush1.msra.mxu0 %v550
        %571 = vmatprep.subr.mxu0 0.0
        %572 = vmatpush1.msra.mxu0 %v551
        %573 = vmatprep.subr.mxu0 0.0
        %574 = vmatpush1.msra.mxu0 %v552
        %575 = vmatprep.subr.mxu0 0.0
        %576 = vmatpush1.msra.mxu0 %v553
        %577 = vmatprep.subr.mxu0 0.0
        %578 = vmatpush1.msra.mxu0 %v554
        %579 = vmatprep.subr.mxu0 0.0
        %580 = vmatpush1.msra.mxu0 %v555
        %581 = vmatprep.subr.mxu0 0.0
        %582 = vmatpush1.msra.mxu0 %v556
        %583 = vmatprep.subr.mxu0 0.0
        %584 = vmatpush1.msra.mxu0 %v557
        %585 = vmatprep.subr.mxu0 0.0
        %586 = vmatpush1.msra.mxu0 %v558
        %587 = vmatprep.subr.mxu0 0.0
        %588 = vmatpush1.msra.mxu0 %v559
        %589 = vmatprep.subr.mxu0 0.0
        %590 = vmatpush1.msra.mxu0 %v560
        %591 = vmatprep.subr.mxu0 0.0
        %592 = vmatpush1.msra.mxu0 %v561
        %593 = vmatprep.subr.mxu0 0.0
        %594 = vmatpush1.msra.mxu0 %v562
        %595 = vmatprep.subr.mxu0 0.0
        %596 = vmatpush1.msra.mxu0 0.0
        %597 = vmatprep.subr.mxu0 0.0
        %598 = vmatpush1.msra.mxu0 0.0
        %599 = vmatprep.subr.mxu0 0.0
        %600 = vmatpush1.msra.mxu0 0.0
        %601 = vmatprep.subr.mxu0 0.0
        %602 = vmatpush1.msra.mxu0 0.0
        %603 = vmatprep.subr.mxu0 0.0
        %604 = vmatpush1.msra.mxu0 0.0
        %605 = vmatprep.subr.mxu0 0.0
        %606 = vmatpush1.msra.mxu0 0.0
        %607 = vmatprep.subr.mxu0 0.0
        %608 = vmatpush1.msra.mxu0 0.0
        %609 = vmatprep.subr.mxu0 0.0
        %610 = vmatpush1.msra.mxu0 0.0
        %611 = vmatprep.subr.mxu0 0.0
        %612 = vmatpush1.msra.mxu0 0.0
        %613 = vmatprep.subr.mxu0 0.0
        %614 = vmatpush1.msra.mxu0 0.0
        %615 = vmatprep.subr.mxu0 0.0
        %616 = vmatpush1.msra.mxu0 0.0
        %617 = vmatprep.subr.mxu0 0.0
        %618 = vmatpush1.msra.mxu0 0.0
        %619 = vmatprep.subr.mxu0 0.0
        %620 = vmatpush1.msra.mxu0 0.0
        %621 = vmatprep.subr.mxu0 0.0
        %622 = vmatpush1.msra.mxu0 0.0
        %623 = vmatprep.subr.mxu0 0.0
        %624 = vmatpush1.msra.mxu0 0.0
        %625 = vmatprep.subr.mxu0 0.0
        %626 = vmatpush1.msra.mxu0 0.0
        %627 = vmatprep.mubr.f32.mxu0 0.0
        %628 = vmatmul.mubr.f32.gmra.mrb[0].mxu0 %v545
        %v629 = vpop.f32.mrb[0].mxu0
        %v630 = vadd.f32 0.0, %v629
        %v631 = vpop.f32.mrb[0].mxu0
        %632 = vdwg.mxu0
        %v633 = vadd.f32 %v541, %v630
        %s634 = scalar_lea.vmem %s367, 16
        %v635 = vld [vmem:[%s634] sm:$0xf]
        %s636 = scalar_lea.vmem %s1, 384
        %v637 = vld [vmem:[%s636] sm:$0xff]
        %v638 = vld [vmem:[%s636 + $0x8] sm:$0xff]
        %v639 = vld [vmem:[%s636 + $0x10] sm:$0xff]
        %v640 = vld [vmem:[%s636 + $0x18] sm:$0xff]
        %v641 = vld [vmem:[%s636 + $0x20] sm:$0xff]
        %v642 = vld [vmem:[%s636 + $0x28] sm:$0xff]
        %v643 = vld [vmem:[%s636 + $0x30] sm:$0xff]
        %v644 = vld [vmem:[%s636 + $0x38] sm:$0xff]
        %v645 = vld [vmem:[%s636 + $0x40] sm:$0xff]
        %v646 = vld [vmem:[%s636 + $0x48] sm:$0xff]
        %v647 = vld [vmem:[%s636 + $0x50] sm:$0xff]
        %v648 = vld [vmem:[%s636 + $0x58] sm:$0xff]
        %v649 = vld [vmem:[%s636 + $0x60] sm:$0xff]
        %v650 = vld [vmem:[%s636 + $0x68] sm:$0xff]
        %v651 = vld [vmem:[%s636 + $0x70] sm:$0xff]
        %v652 = vld [vmem:[%s636 + $0x78] sm:$0xff]
        %653 = vmatprep.subr.mxu0 0.0
        %654 = vmatpush1.msra.mxu0 %v637
        %655 = vmatprep.subr.mxu0 0.0
        %656 = vmatpush1.msra.mxu0 %v638
        %657 = vmatprep.subr.mxu0 0.0
        %658 = vmatpush1.msra.mxu0 %v639
        %659 = vmatprep.subr.mxu0 0.0
        %660 = vmatpush1.msra.mxu0 %v640
        %661 = vmatprep.subr.mxu0 0.0
        %662 = vmatpush1.msra.mxu0 %v641
        %663 = vmatprep.subr.mxu0 0.0
        %664 = vmatpush1.msra.mxu0 %v642
        %665 = vmatprep.subr.mxu0 0.0
        %666 = vmatpush1.msra.mxu0 %v643
        %667 = vmatprep.subr.mxu0 0.0
        %668 = vmatpush1.msra.mxu0 %v644
        %669 = vmatprep.subr.mxu0 0.0
        %670 = vmatpush1.msra.mxu0 %v645
        %671 = vmatprep.subr.mxu0 0.0
        %672 = vmatpush1.msra.mxu0 %v646
        %673 = vmatprep.subr.mxu0 0.0
        %674 = vmatpush1.msra.mxu0 %v647
        %675 = vmatprep.subr.mxu0 0.0
        %676 = vmatpush1.msra.mxu0 %v648
        %677 = vmatprep.subr.mxu0 0.0
        %678 = vmatpush1.msra.mxu0 %v649
        %679 = vmatprep.subr.mxu0 0.0
        %680 = vmatpush1.msra.mxu0 %v650
        %681 = vmatprep.subr.mxu0 0.0
        %682 = vmatpush1.msra.mxu0 %v651
        %683 = vmatprep.subr.mxu0 0.0
        %684 = vmatpush1.msra.mxu0 %v652
        %685 = vmatprep.subr.mxu0 0.0
        %686 = vmatpush1.msra.mxu0 0.0
        %687 = vmatprep.subr.mxu0 0.0
        %688 = vmatpush1.msra.mxu0 0.0
        %689 = vmatprep.subr.mxu0 0.0
        %690 = vmatpush1.msra.mxu0 0.0
        %691 = vmatprep.subr.mxu0 0.0
        %692 = vmatpush1.msra.mxu0 0.0
        %693 = vmatprep.subr.mxu0 0.0
        %694 = vmatpush1.msra.mxu0 0.0
        %695 = vmatprep.subr.mxu0 0.0
        %696 = vmatpush1.msra.mxu0 0.0
        %697 = vmatprep.subr.mxu0 0.0
        %698 = vmatpush1.msra.mxu0 0.0
        %699 = vmatprep.subr.mxu0 0.0
        %700 = vmatpush1.msra.mxu0 0.0
        %701 = vmatprep.subr.mxu0 0.0
        %702 = vmatpush1.msra.mxu0 0.0
        %703 = vmatprep.subr.mxu0 0.0
        %704 = vmatpush1.msra.mxu0 0.0
        %705 = vmatprep.subr.mxu0 0.0
        %706 = vmatpush1.msra.mxu0 0.0
        %707 = vmatprep.subr.mxu0 0.0
        %708 = vmatpush1.msra.mxu0 0.0
        %709 = vmatprep.subr.mxu0 0.0
        %710 = vmatpush1.msra.mxu0 0.0
        %711 = vmatprep.subr.mxu0 0.0
        %712 = vmatpush1.msra.mxu0 0.0
        %713 = vmatprep.subr.mxu0 0.0
        %714 = vmatpush1.msra.mxu0 0.0
        %715 = vmatprep.subr.mxu0 0.0
        %716 = vmatpush1.msra.mxu0 0.0
        %717 = vmatprep.mubr.f32.mxu0 0.0
        %718 = vmatmul.mubr.f32.gmra.mrb[0].mxu0 %v635
        %v719 = vpop.f32.mrb[0].mxu0
        %v720 = vadd.f32 0.0, %v719
        %v721 = vpop.f32.mrb[0].mxu0
        %722 = vdwg.mxu0
        %v723 = vadd.f32 %v633, %v720
        %s724 = scalar_lea.vmem %s367, 20
        %v725 = vld [vmem:[%s724] sm:$0xf]
        %s726 = scalar_lea.vmem %s1, 512
        %v727 = vld [vmem:[%s726] sm:$0xff]
        %v728 = vld [vmem:[%s726 + $0x8] sm:$0xff]
        %v729 = vld [vmem:[%s726 + $0x10] sm:$0xff]
        %v730 = vld [vmem:[%s726 + $0x18] sm:$0xff]
        %v731 = vld [vmem:[%s726 + $0x20] sm:$0xff]
        %v732 = vld [vmem:[%s726 + $0x28] sm:$0xff]
        %v733 = vld [vmem:[%s726 + $0x30] sm:$0xff]
        %v734 = vld [vmem:[%s726 + $0x38] sm:$0xff]
        %v735 = vld [vmem:[%s726 + $0x40] sm:$0xff]
        %v736 = vld [vmem:[%s726 + $0x48] sm:$0xff]
        %v737 = vld [vmem:[%s726 + $0x50] sm:$0xff]
        %v738 = vld [vmem:[%s726 + $0x58] sm:$0xff]
        %v739 = vld [vmem:[%s726 + $0x60] sm:$0xff]
        %v740 = vld [vmem:[%s726 + $0x68] sm:$0xff]
        %v741 = vld [vmem:[%s726 + $0x70] sm:$0xff]
        %v742 = vld [vmem:[%s726 + $0x78] sm:$0xff]
        %743 = vmatprep.subr.mxu0 0.0
        %744 = vmatpush1.msra.mxu0 %v727
        %745 = vmatprep.subr.mxu0 0.0
        %746 = vmatpush1.msra.mxu0 %v728
        %747 = vmatprep.subr.mxu0 0.0
        %748 = vmatpush1.msra.mxu0 %v729
        %749 = vmatprep.subr.mxu0 0.0
        %750 = vmatpush1.msra.mxu0 %v730
        %751 = vmatprep.subr.mxu0 0.0
        %752 = vmatpush1.msra.mxu0 %v731
        %753 = vmatprep.subr.mxu0 0.0
        %754 = vmatpush1.msra.mxu0 %v732
        %755 = vmatprep.subr.mxu0 0.0
        %756 = vmatpush1.msra.mxu0 %v733
        %757 = vmatprep.subr.mxu0 0.0
        %758 = vmatpush1.msra.mxu0 %v734
        %759 = vmatprep.subr.mxu0 0.0
        %760 = vmatpush1.msra.mxu0 %v735
        %761 = vmatprep.subr.mxu0 0.0
        %762 = vmatpush1.msra.mxu0 %v736
        %763 = vmatprep.subr.mxu0 0.0
        %764 = vmatpush1.msra.mxu0 %v737
        %765 = vmatprep.subr.mxu0 0.0
        %766 = vmatpush1.msra.mxu0 %v738
        %767 = vmatprep.subr.mxu0 0.0
        %768 = vmatpush1.msra.mxu0 %v739
        %769 = vmatprep.subr.mxu0 0.0
        %770 = vmatpush1.msra.mxu0 %v740
        %771 = vmatprep.subr.mxu0 0.0
        %772 = vmatpush1.msra.mxu0 %v741
        %773 = vmatprep.subr.mxu0 0.0
        %774 = vmatpush1.msra.mxu0 %v742
        %775 = vmatprep.subr.mxu0 0.0
        %776 = vmatpush1.msra.mxu0 0.0
        %777 = vmatprep.subr.mxu0 0.0
        %778 = vmatpush1.msra.mxu0 0.0
        %779 = vmatprep.subr.mxu0 0.0
        %780 = vmatpush1.msra.mxu0 0.0
        %781 = vmatprep.subr.mxu0 0.0
        %782 = vmatpush1.msra.mxu0 0.0
        %783 = vmatprep.subr.mxu0 0.0
        %784 = vmatpush1.msra.mxu0 0.0
        %785 = vmatprep.subr.mxu0 0.0
        %786 = vmatpush1.msra.mxu0 0.0
        %787 = vmatprep.subr.mxu0 0.0
        %788 = vmatpush1.msra.mxu0 0.0
        %789 = vmatprep.subr.mxu0 0.0
        %790 = vmatpush1.msra.mxu0 0.0
        %791 = vmatprep.subr.mxu0 0.0
        %792 = vmatpush1.msra.mxu0 0.0
        %793 = vmatprep.subr.mxu0 0.0
        %794 = vmatpush1.msra.mxu0 0.0
        %795 = vmatprep.subr.mxu0 0.0
        %796 = vmatpush1.msra.mxu0 0.0
        %797 = vmatprep.subr.mxu0 0.0
        %798 = vmatpush1.msra.mxu0 0.0
        %799 = vmatprep.subr.mxu0 0.0
        %800 = vmatpush1.msra.mxu0 0.0
        %801 = vmatprep.subr.mxu0 0.0
        %802 = vmatpush1.msra.mxu0 0.0
        %803 = vmatprep.subr.mxu0 0.0
        %804 = vmatpush1.msra.mxu0 0.0
        %805 = vmatprep.subr.mxu0 0.0
        %806 = vmatpush1.msra.mxu0 0.0
        %807 = vmatprep.mubr.f32.mxu0 0.0
        %808 = vmatmul.mubr.f32.gmra.mrb[0].mxu0 %v725
        %v809 = vpop.f32.mrb[0].mxu0
        %v810 = vadd.f32 0.0, %v809
        %v811 = vpop.f32.mrb[0].mxu0
        %812 = vdwg.mxu0
        %v813 = vadd.f32 %v723, %v810
        %s814 = scalar_lea.vmem %s367, 24
        %v815 = vld [vmem:[%s814] sm:$0xf]
        %s816 = scalar_lea.vmem %s1, 640
        %v817 = vld [vmem:[%s816] sm:$0xff]
        %v818 = vld [vmem:[%s816 + $0x8] sm:$0xff]
        %v819 = vld [vmem:[%s816 + $0x10] sm:$0xff]
        %v820 = vld [vmem:[%s816 + $0x18] sm:$0xff]
        %v821 = vld [vmem:[%s816 + $0x20] sm:$0xff]
        %v822 = vld [vmem:[%s816 + $0x28] sm:$0xff]
        %v823 = vld [vmem:[%s816 + $0x30] sm:$0xff]
        %v824 = vld [vmem:[%s816 + $0x38] sm:$0xff]
        %v825 = vld [vmem:[%s816 + $0x40] sm:$0xff]
        %v826 = vld [vmem:[%s816 + $0x48] sm:$0xff]
        %v827 = vld [vmem:[%s816 + $0x50] sm:$0xff]
        %v828 = vld [vmem:[%s816 + $0x58] sm:$0xff]
        %v829 = vld [vmem:[%s816 + $0x60] sm:$0xff]
        %v830 = vld [vmem:[%s816 + $0x68] sm:$0xff]
        %v831 = vld [vmem:[%s816 + $0x70] sm:$0xff]
        %v832 = vld [vmem:[%s816 + $0x78] sm:$0xff]
        %833 = vmatprep.subr.mxu0 0.0
        %834 = vmatpush1.msra.mxu0 %v817
        %835 = vmatprep.subr.mxu0 0.0
        %836 = vmatpush1.msra.mxu0 %v818
        %837 = vmatprep.subr.mxu0 0.0
        %838 = vmatpush1.msra.mxu0 %v819
        %839 = vmatprep.subr.mxu0 0.0
        %840 = vmatpush1.msra.mxu0 %v820
        %841 = vmatprep.subr.mxu0 0.0
        %842 = vmatpush1.msra.mxu0 %v821
        %843 = vmatprep.subr.mxu0 0.0
        %844 = vmatpush1.msra.mxu0 %v822
        %845 = vmatprep.subr.mxu0 0.0
        %846 = vmatpush1.msra.mxu0 %v823
        %847 = vmatprep.subr.mxu0 0.0
        %848 = vmatpush1.msra.mxu0 %v824
        %849 = vmatprep.subr.mxu0 0.0
        %850 = vmatpush1.msra.mxu0 %v825
        %851 = vmatprep.subr.mxu0 0.0
        %852 = vmatpush1.msra.mxu0 %v826
        %853 = vmatprep.subr.mxu0 0.0
        %854 = vmatpush1.msra.mxu0 %v827
        %855 = vmatprep.subr.mxu0 0.0
        %856 = vmatpush1.msra.mxu0 %v828
        %857 = vmatprep.subr.mxu0 0.0
        %858 = vmatpush1.msra.mxu0 %v829
        %859 = vmatprep.subr.mxu0 0.0
        %860 = vmatpush1.msra.mxu0 %v830
        %861 = vmatprep.subr.mxu0 0.0
        %862 = vmatpush1.msra.mxu0 %v831
        %863 = vmatprep.subr.mxu0 0.0
        %864 = vmatpush1.msra.mxu0 %v832
        %865 = vmatprep.subr.mxu0 0.0
        %866 = vmatpush1.msra.mxu0 0.0
        %867 = vmatprep.subr.mxu0 0.0
        %868 = vmatpush1.msra.mxu0 0.0
        %869 = vmatprep.subr.mxu0 0.0
        %870 = vmatpush1.msra.mxu0 0.0
        %871 = vmatprep.subr.mxu0 0.0
        %872 = vmatpush1.msra.mxu0 0.0
        %873 = vmatprep.subr.mxu0 0.0
        %874 = vmatpush1.msra.mxu0 0.0
        %875 = vmatprep.subr.mxu0 0.0
        %876 = vmatpush1.msra.mxu0 0.0
        %877 = vmatprep.subr.mxu0 0.0
        %878 = vmatpush1.msra.mxu0 0.0
        %879 = vmatprep.subr.mxu0 0.0
        %880 = vmatpush1.msra.mxu0 0.0
        %881 = vmatprep.subr.mxu0 0.0
        %882 = vmatpush1.msra.mxu0 0.0
        %883 = vmatprep.subr.mxu0 0.0
        %884 = vmatpush1.msra.mxu0 0.0
        %885 = vmatprep.subr.mxu0 0.0
        %886 = vmatpush1.msra.mxu0 0.0
        %887 = vmatprep.subr.mxu0 0.0
        %888 = vmatpush1.msra.mxu0 0.0
        %889 = vmatprep.subr.mxu0 0.0
        %890 = vmatpush1.msra.mxu0 0.0
        %891 = vmatprep.subr.mxu0 0.0
        %892 = vmatpush1.msra.mxu0 0.0
        %893 = vmatprep.subr.mxu0 0.0
        %894 = vmatpush1.msra.mxu0 0.0
        %895 = vmatprep.subr.mxu0 0.0
        %896 = vmatpush1.msra.mxu0 0.0
        %897 = vmatprep.mubr.f32.mxu0 0.0
        %898 = vmatmul.mubr.f32.gmra.mrb[0].mxu0 %v815
        %v899 = vpop.f32.mrb[0].mxu0
        %v900 = vadd.f32 0.0, %v899
        %v901 = vpop.f32.mrb[0].mxu0
        %902 = vdwg.mxu0
        %v903 = vadd.f32 %v813, %v900
        %s904 = scalar_lea.vmem %s367, 32
        %v905 = vld [vmem:[%s904] sm:$0xf]
        %s906 = scalar_lea.vmem %s1, 768
        %v907 = vld [vmem:[%s906] sm:$0xff]
        %v908 = vld [vmem:[%s906 + $0x8] sm:$0xff]
        %v909 = vld [vmem:[%s906 + $0x10] sm:$0xff]
        %v910 = vld [vmem:[%s906 + $0x18] sm:$0xff]
        %v911 = vld [vmem:[%s906 + $0x20] sm:$0xff]
        %v912 = vld [vmem:[%s906 + $0x28] sm:$0xff]
        %v913 = vld [vmem:[%s906 + $0x30] sm:$0xff]
        %v914 = vld [vmem:[%s906 + $0x38] sm:$0xff]
        %v915 = vld [vmem:[%s906 + $0x40] sm:$0xff]
        %v916 = vld [vmem:[%s906 + $0x48] sm:$0xff]
        %v917 = vld [vmem:[%s906 + $0x50] sm:$0xff]
        %v918 = vld [vmem:[%s906 + $0x58] sm:$0xff]
        %v919 = vld [vmem:[%s906 + $0x60] sm:$0xff]
        %v920 = vld [vmem:[%s906 + $0x68] sm:$0xff]
        %v921 = vld [vmem:[%s906 + $0x70] sm:$0xff]
        %v922 = vld [vmem:[%s906 + $0x78] sm:$0xff]
        %923 = vmatprep.subr.mxu0 0.0
        %924 = vmatpush1.msra.mxu0 %v907
        %925 = vmatprep.subr.mxu0 0.0
        %926 = vmatpush1.msra.mxu0 %v908
        %927 = vmatprep.subr.mxu0 0.0
        %928 = vmatpush1.msra.mxu0 %v909
        %929 = vmatprep.subr.mxu0 0.0
        %930 = vmatpush1.msra.mxu0 %v910
        %931 = vmatprep.subr.mxu0 0.0
        %932 = vmatpush1.msra.mxu0 %v911
        %933 = vmatprep.subr.mxu0 0.0
        %934 = vmatpush1.msra.mxu0 %v912
        %935 = vmatprep.subr.mxu0 0.0
        %936 = vmatpush1.msra.mxu0 %v913
        %937 = vmatprep.subr.mxu0 0.0
        %938 = vmatpush1.msra.mxu0 %v914
        %939 = vmatprep.subr.mxu0 0.0
        %940 = vmatpush1.msra.mxu0 %v915
        %941 = vmatprep.subr.mxu0 0.0
        %942 = vmatpush1.msra.mxu0 %v916
        %943 = vmatprep.subr.mxu0 0.0
        %944 = vmatpush1.msra.mxu0 %v917
        %945 = vmatprep.subr.mxu0 0.0
        %946 = vmatpush1.msra.mxu0 %v918
        %947 = vmatprep.subr.mxu0 0.0
        %948 = vmatpush1.msra.mxu0 %v919
        %949 = vmatprep.subr.mxu0 0.0
        %950 = vmatpush1.msra.mxu0 %v920
        %951 = vmatprep.subr.mxu0 0.0
        %952 = vmatpush1.msra.mxu0 %v921
        %953 = vmatprep.subr.mxu0 0.0
        %954 = vmatpush1.msra.mxu0 %v922
        %955 = vmatprep.subr.mxu0 0.0
        %956 = vmatpush1.msra.mxu0 0.0
        %957 = vmatprep.subr.mxu0 0.0
        %958 = vmatpush1.msra.mxu0 0.0
        %959 = vmatprep.subr.mxu0 0.0
        %960 = vmatpush1.msra.mxu0 0.0
        %961 = vmatprep.subr.mxu0 0.0
        %962 = vmatpush1.msra.mxu0 0.0
        %963 = vmatprep.subr.mxu0 0.0
        %964 = vmatpush1.msra.mxu0 0.0
        %965 = vmatprep.subr.mxu0 0.0
        %966 = vmatpush1.msra.mxu0 0.0
        %967 = vmatprep.subr.mxu0 0.0
        %968 = vmatpush1.msra.mxu0 0.0
        %969 = vmatprep.subr.mxu0 0.0
        %970 = vmatpush1.msra.mxu0 0.0
        %971 = vmatprep.subr.mxu0 0.0
        %972 = vmatpush1.msra.mxu0 0.0
        %973 = vmatprep.subr.mxu0 0.0
        %974 = vmatpush1.msra.mxu0 0.0
        %975 = vmatprep.subr.mxu0 0.0
        %976 = vmatpush1.msra.mxu0 0.0
        %977 = vmatprep.subr.mxu0 0.0
        %978 = vmatpush1.msra.mxu0 0.0
        %979 = vmatprep.subr.mxu0 0.0
        %980 = vmatpush1.msra.mxu0 0.0
        %981 = vmatprep.subr.mxu0 0.0
        %982 = vmatpush1.msra.mxu0 0.0
        %983 = vmatprep.subr.mxu0 0.0
        %984 = vmatpush1.msra.mxu0 0.0
        %985 = vmatprep.subr.mxu0 0.0
        %986 = vmatpush1.msra.mxu0 0.0
        %987 = vmatprep.mubr.f32.mxu0 0.0
        %988 = vmatmul.mubr.f32.gmra.mrb[0].mxu0 %v905
        %v989 = vpop.f32.mrb[0].mxu0
        %v990 = vadd.f32 0.0, %v989
        %v991 = vpop.f32.mrb[0].mxu0
        %992 = vdwg.mxu0
        %v993 = vadd.f32 %v903, %v990
        %s994 = scalar_lea.vmem %s367, 36
        %v995 = vld [vmem:[%s994] sm:$0xf]
        %s996 = scalar_lea.vmem %s1, 896
        %v997 = vld [vmem:[%s996] sm:$0xff]
        %v998 = vld [vmem:[%s996 + $0x8] sm:$0xff]
        %v999 = vld [vmem:[%s996 + $0x10] sm:$0xff]
        %v1000 = vld [vmem:[%s996 + $0x18] sm:$0xff]
        %v1001 = vld [vmem:[%s996 + $0x20] sm:$0xff]
        %v1002 = vld [vmem:[%s996 + $0x28] sm:$0xff]
        %v1003 = vld [vmem:[%s996 + $0x30] sm:$0xff]
        %v1004 = vld [vmem:[%s996 + $0x38] sm:$0xff]
        %v1005 = vld [vmem:[%s996 + $0x40] sm:$0xff]
        %v1006 = vld [vmem:[%s996 + $0x48] sm:$0xff]
        %v1007 = vld [vmem:[%s996 + $0x50] sm:$0xff]
        %v1008 = vld [vmem:[%s996 + $0x58] sm:$0xff]
        %v1009 = vld [vmem:[%s996 + $0x60] sm:$0xff]
        %v1010 = vld [vmem:[%s996 + $0x68] sm:$0xff]
        %v1011 = vld [vmem:[%s996 + $0x70] sm:$0xff]
        %v1012 = vld [vmem:[%s996 + $0x78] sm:$0xff]
        %1013 = vmatprep.subr.mxu0 0.0
        %1014 = vmatpush1.msra.mxu0 %v997
        %1015 = vmatprep.subr.mxu0 0.0
        %1016 = vmatpush1.msra.mxu0 %v998
        %1017 = vmatprep.subr.mxu0 0.0
        %1018 = vmatpush1.msra.mxu0 %v999
        %1019 = vmatprep.subr.mxu0 0.0
        %1020 = vmatpush1.msra.mxu0 %v1000
        %1021 = vmatprep.subr.mxu0 0.0
        %1022 = vmatpush1.msra.mxu0 %v1001
        %1023 = vmatprep.subr.mxu0 0.0
        %1024 = vmatpush1.msra.mxu0 %v1002
        %1025 = vmatprep.subr.mxu0 0.0
        %1026 = vmatpush1.msra.mxu0 %v1003
        %1027 = vmatprep.subr.mxu0 0.0
        %1028 = vmatpush1.msra.mxu0 %v1004
        %1029 = vmatprep.subr.mxu0 0.0
        %1030 = vmatpush1.msra.mxu0 %v1005
        %1031 = vmatprep.subr.mxu0 0.0
        %1032 = vmatpush1.msra.mxu0 %v1006
        %1033 = vmatprep.subr.mxu0 0.0
        %1034 = vmatpush1.msra.mxu0 %v1007
        %1035 = vmatprep.subr.mxu0 0.0
        %1036 = vmatpush1.msra.mxu0 %v1008
        %1037 = vmatprep.subr.mxu0 0.0
        %1038 = vmatpush1.msra.mxu0 %v1009
        %1039 = vmatprep.subr.mxu0 0.0
        %1040 = vmatpush1.msra.mxu0 %v1010
        %1041 = vmatprep.subr.mxu0 0.0
        %1042 = vmatpush1.msra.mxu0 %v1011
        %1043 = vmatprep.subr.mxu0 0.0
        %1044 = vmatpush1.msra.mxu0 %v1012
        %1045 = vmatprep.subr.mxu0 0.0
        %1046 = vmatpush1.msra.mxu0 0.0
        %1047 = vmatprep.subr.mxu0 0.0
        %1048 = vmatpush1.msra.mxu0 0.0
        %1049 = vmatprep.subr.mxu0 0.0
        %1050 = vmatpush1.msra.mxu0 0.0
        %1051 = vmatprep.subr.mxu0 0.0
        %1052 = vmatpush1.msra.mxu0 0.0
        %1053 = vmatprep.subr.mxu0 0.0
        %1054 = vmatpush1.msra.mxu0 0.0
        %1055 = vmatprep.subr.mxu0 0.0
        %1056 = vmatpush1.msra.mxu0 0.0
        %1057 = vmatprep.subr.mxu0 0.0
        %1058 = vmatpush1.msra.mxu0 0.0
        %1059 = vmatprep.subr.mxu0 0.0
        %1060 = vmatpush1.msra.mxu0 0.0
        %1061 = vmatprep.subr.mxu0 0.0
        %1062 = vmatpush1.msra.mxu0 0.0
        %1063 = vmatprep.subr.mxu0 0.0
        %1064 = vmatpush1.msra.mxu0 0.0
        %1065 = vmatprep.subr.mxu0 0.0
        %1066 = vmatpush1.msra.mxu0 0.0
        %1067 = vmatprep.subr.mxu0 0.0
        %1068 = vmatpush1.msra.mxu0 0.0
        %1069 = vmatprep.subr.mxu0 0.0
        %1070 = vmatpush1.msra.mxu0 0.0
        %1071 = vmatprep.subr.mxu0 0.0
        %1072 = vmatpush1.msra.mxu0 0.0
        %1073 = vmatprep.subr.mxu0 0.0
        %1074 = vmatpush1.msra.mxu0 0.0
        %1075 = vmatprep.subr.mxu0 0.0
        %1076 = vmatpush1.msra.mxu0 0.0
        %1077 = vmatprep.mubr.f32.mxu0 0.0
        %1078 = vmatmul.mubr.f32.gmra.mrb[0].mxu0 %v995
        %v1079 = vpop.f32.mrb[0].mxu0
        %v1080 = vadd.f32 0.0, %v1079
        %v1081 = vpop.f32.mrb[0].mxu0
        %1082 = vdwg.mxu0
        %v1083 = vadd.f32 %v993, %v1080
        %s1084 = scalar_lea.vmem %s367, 40
        %v1085 = vld [vmem:[%s1084] sm:$0xf]
        %s1086 = scalar_lea.vmem %s1, 1024
        %v1087 = vld [vmem:[%s1086] sm:$0xff]
        %v1088 = vld [vmem:[%s1086 + $0x8] sm:$0xff]
        %v1089 = vld [vmem:[%s1086 + $0x10] sm:$0xff]
        %v1090 = vld [vmem:[%s1086 + $0x18] sm:$0xff]
        %v1091 = vld [vmem:[%s1086 + $0x20] sm:$0xff]
        %v1092 = vld [vmem:[%s1086 + $0x28] sm:$0xff]
        %v1093 = vld [vmem:[%s1086 + $0x30] sm:$0xff]
        %v1094 = vld [vmem:[%s1086 + $0x38] sm:$0xff]
        %v1095 = vld [vmem:[%s1086 + $0x40] sm:$0xff]
        %v1096 = vld [vmem:[%s1086 + $0x48] sm:$0xff]
        %v1097 = vld [vmem:[%s1086 + $0x50] sm:$0xff]
        %v1098 = vld [vmem:[%s1086 + $0x58] sm:$0xff]
        %v1099 = vld [vmem:[%s1086 + $0x60] sm:$0xff]
        %v1100 = vld [vmem:[%s1086 + $0x68] sm:$0xff]
        %v1101 = vld [vmem:[%s1086 + $0x70] sm:$0xff]
        %v1102 = vld [vmem:[%s1086 + $0x78] sm:$0xff]
        %1103 = vmatprep.subr.mxu0 0.0
        %1104 = vmatpush1.msra.mxu0 %v1087
        %1105 = vmatprep.subr.mxu0 0.0
        %1106 = vmatpush1.msra.mxu0 %v1088
        %1107 = vmatprep.subr.mxu0 0.0
        %1108 = vmatpush1.msra.mxu0 %v1089
        %1109 = vmatprep.subr.mxu0 0.0
        %1110 = vmatpush1.msra.mxu0 %v1090
        %1111 = vmatprep.subr.mxu0 0.0
        %1112 = vmatpush1.msra.mxu0 %v1091
        %1113 = vmatprep.subr.mxu0 0.0
        %1114 = vmatpush1.msra.mxu0 %v1092
        %1115 = vmatprep.subr.mxu0 0.0
        %1116 = vmatpush1.msra.mxu0 %v1093
        %1117 = vmatprep.subr.mxu0 0.0
        %1118 = vmatpush1.msra.mxu0 %v1094
        %1119 = vmatprep.subr.mxu0 0.0
        %1120 = vmatpush1.msra.mxu0 %v1095
        %1121 = vmatprep.subr.mxu0 0.0
        %1122 = vmatpush1.msra.mxu0 %v1096
        %1123 = vmatprep.subr.mxu0 0.0
        %1124 = vmatpush1.msra.mxu0 %v1097
        %1125 = vmatprep.subr.mxu0 0.0
        %1126 = vmatpush1.msra.mxu0 %v1098
        %1127 = vmatprep.subr.mxu0 0.0
        %1128 = vmatpush1.msra.mxu0 %v1099
        %1129 = vmatprep.subr.mxu0 0.0
        %1130 = vmatpush1.msra.mxu0 %v1100
        %1131 = vmatprep.subr.mxu0 0.0
        %1132 = vmatpush1.msra.mxu0 %v1101
        %1133 = vmatprep.subr.mxu0 0.0
        %1134 = vmatpush1.msra.mxu0 %v1102
        %1135 = vmatprep.subr.mxu0 0.0
        %1136 = vmatpush1.msra.mxu0 0.0
        %1137 = vmatprep.subr.mxu0 0.0
        %1138 = vmatpush1.msra.mxu0 0.0
        %1139 = vmatprep.subr.mxu0 0.0
        %1140 = vmatpush1.msra.mxu0 0.0
        %1141 = vmatprep.subr.mxu0 0.0
        %1142 = vmatpush1.msra.mxu0 0.0
        %1143 = vmatprep.subr.mxu0 0.0
        %1144 = vmatpush1.msra.mxu0 0.0
        %1145 = vmatprep.subr.mxu0 0.0
        %1146 = vmatpush1.msra.mxu0 0.0
        %1147 = vmatprep.subr.mxu0 0.0
        %1148 = vmatpush1.msra.mxu0 0.0
        %1149 = vmatprep.subr.mxu0 0.0
        %1150 = vmatpush1.msra.mxu0 0.0
        %1151 = vmatprep.subr.mxu0 0.0
        %1152 = vmatpush1.msra.mxu0 0.0
        %1153 = vmatprep.subr.mxu0 0.0
        %1154 = vmatpush1.msra.mxu0 0.0
        %1155 = vmatprep.subr.mxu0 0.0
        %1156 = vmatpush1.msra.mxu0 0.0
        %1157 = vmatprep.subr.mxu0 0.0
        %1158 = vmatpush1.msra.mxu0 0.0
        %1159 = vmatprep.subr.mxu0 0.0
        %1160 = vmatpush1.msra.mxu0 0.0
        %1161 = vmatprep.subr.mxu0 0.0
        %1162 = vmatpush1.msra.mxu0 0.0
        %1163 = vmatprep.subr.mxu0 0.0
        %1164 = vmatpush1.msra.mxu0 0.0
        %1165 = vmatprep.subr.mxu0 0.0
        %1166 = vmatpush1.msra.mxu0 0.0
        %1167 = vmatprep.mubr.f32.mxu0 0.0
        %1168 = vmatmul.mubr.f32.gmra.mrb[0].mxu0 %v1085
        %v1169 = vpop.f32.mrb[0].mxu0
        %v1170 = vadd.f32 0.0, %v1169
        %v1171 = vpop.f32.mrb[0].mxu0
        %1172 = vdwg.mxu0
        %v1173 = vadd.f32 %v1083, %v1170
        %1174 = vmatprep.subr.mxu0 0.0
        %1175 = vmatpush1.msra.mxu0 %v388
        %1176 = vmatprep.subr.mxu0 0.0
        %1177 = vmatpush1.msra.mxu0 %v389
        %1178 = vmatprep.subr.mxu0 0.0
        %1179 = vmatpush1.msra.mxu0 %v390
        %1180 = vmatprep.subr.mxu0 0.0
        %1181 = vmatpush1.msra.mxu0 %v391
        %1182 = vmatprep.subr.mxu0 0.0
        %1183 = vmatpush1.msra.mxu0 %v392
        %1184 = vmatprep.subr.mxu0 0.0
        %1185 = vmatpush1.msra.mxu0 %v393
        %1186 = vmatprep.subr.mxu0 0.0
        %1187 = vmatpush1.msra.mxu0 %v394
        %1188 = vmatprep.subr.mxu0 0.0
        %1189 = vmatpush1.msra.mxu0 %v395
        %1190 = vmatprep.subr.mxu0 0.0
        %1191 = vmatpush1.msra.mxu0 %v396
        %1192 = vmatprep.subr.mxu0 0.0
        %1193 = vmatpush1.msra.mxu0 %v397
        %1194 = vmatprep.subr.mxu0 0.0
        %1195 = vmatpush1.msra.mxu0 %v398
        %1196 = vmatprep.subr.mxu0 0.0
        %1197 = vmatpush1.msra.mxu0 %v399
        %1198 = vmatprep.subr.mxu0 0.0
        %1199 = vmatpush1.msra.mxu0 %v400
        %1200 = vmatprep.subr.mxu0 0.0
        %1201 = vmatpush1.msra.mxu0 %v401
        %1202 = vmatprep.subr.mxu0 0.0
        %1203 = vmatpush1.msra.mxu0 %v402
        %1204 = vmatprep.subr.mxu0 0.0
        %1205 = vmatpush1.msra.mxu0 %v403
        %1206 = vmatprep.subr.mxu0 0.0
        %1207 = vmatpush1.msra.mxu0 0.0
        %1208 = vmatprep.subr.mxu0 0.0
        %1209 = vmatpush1.msra.mxu0 0.0
        %1210 = vmatprep.subr.mxu0 0.0
        %1211 = vmatpush1.msra.mxu0 0.0
        %1212 = vmatprep.subr.mxu0 0.0
        %1213 = vmatpush1.msra.mxu0 0.0
        %1214 = vmatprep.subr.mxu0 0.0
        %1215 = vmatpush1.msra.mxu0 0.0
        %1216 = vmatprep.subr.mxu0 0.0
        %1217 = vmatpush1.msra.mxu0 0.0
        %1218 = vmatprep.subr.mxu0 0.0
        %1219 = vmatpush1.msra.mxu0 0.0
        %1220 = vmatprep.subr.mxu0 0.0
        %1221 = vmatpush1.msra.mxu0 0.0
        %1222 = vmatprep.subr.mxu0 0.0
        %1223 = vmatpush1.msra.mxu0 0.0
        %1224 = vmatprep.subr.mxu0 0.0
        %1225 = vmatpush1.msra.mxu0 0.0
        %1226 = vmatprep.subr.mxu0 0.0
        %1227 = vmatpush1.msra.mxu0 0.0
        %1228 = vmatprep.subr.mxu0 0.0
        %1229 = vmatpush1.msra.mxu0 0.0
        %1230 = vmatprep.subr.mxu0 0.0
        %1231 = vmatpush1.msra.mxu0 0.0
        %1232 = vmatprep.subr.mxu0 0.0
        %1233 = vmatpush1.msra.mxu0 0.0
        %1234 = vmatprep.subr.mxu0 0.0
        %1235 = vmatpush1.msra.mxu0 0.0
        %1236 = vmatprep.subr.mxu0 0.0
        %1237 = vmatpush1.msra.mxu0 0.0
        %1238 = vmatprep.mubr.f32.mxu0 0.0
        %1239 = vmatmul.mubr.f32.gmra.mrb[0].mxu0 %v545
        %v1240 = vpop.f32.mrb[0].mxu0
        %v1241 = vadd.f32 0.0, %v1240
        %v1242 = vpop.f32.mrb[0].mxu0
        %1243 = vdwg.mxu0
        %1244 = vmatprep.subr.mxu0 0.0
        %1245 = vmatpush1.msra.mxu0 %v369
        %1246 = vmatprep.subr.mxu0 0.0
        %1247 = vmatpush1.msra.mxu0 %v370
        %1248 = vmatprep.subr.mxu0 0.0
        %1249 = vmatpush1.msra.mxu0 %v371
        %1250 = vmatprep.subr.mxu0 0.0
        %1251 = vmatpush1.msra.mxu0 %v372
        %1252 = vmatprep.subr.mxu0 0.0
        %1253 = vmatpush1.msra.mxu0 %v373
        %1254 = vmatprep.subr.mxu0 0.0
        %1255 = vmatpush1.msra.mxu0 %v374
        %1256 = vmatprep.subr.mxu0 0.0
        %1257 = vmatpush1.msra.mxu0 %v375
        %1258 = vmatprep.subr.mxu0 0.0
        %1259 = vmatpush1.msra.mxu0 %v376
        %1260 = vmatprep.subr.mxu0 0.0
        %1261 = vmatpush1.msra.mxu0 %v377
        %1262 = vmatprep.subr.mxu0 0.0
        %1263 = vmatpush1.msra.mxu0 %v378
        %1264 = vmatprep.subr.mxu0 0.0
        %1265 = vmatpush1.msra.mxu0 %v379
        %1266 = vmatprep.subr.mxu0 0.0
        %1267 = vmatpush1.msra.mxu0 %v380
        %1268 = vmatprep.subr.mxu0 0.0
        %1269 = vmatpush1.msra.mxu0 %v381
        %1270 = vmatprep.subr.mxu0 0.0
        %1271 = vmatpush1.msra.mxu0 %v382
        %1272 = vmatprep.subr.mxu0 0.0
        %1273 = vmatpush1.msra.mxu0 %v383
        %1274 = vmatprep.subr.mxu0 0.0
        %1275 = vmatpush1.msra.mxu0 %v384
        %1276 = vmatprep.subr.mxu0 0.0
        %1277 = vmatpush1.msra.mxu0 0.0
        %1278 = vmatprep.subr.mxu0 0.0
        %1279 = vmatpush1.msra.mxu0 0.0
        %1280 = vmatprep.subr.mxu0 0.0
        %1281 = vmatpush1.msra.mxu0 0.0
        %1282 = vmatprep.subr.mxu0 0.0
        %1283 = vmatpush1.msra.mxu0 0.0
        %1284 = vmatprep.subr.mxu0 0.0
        %1285 = vmatpush1.msra.mxu0 0.0
        %1286 = vmatprep.subr.mxu0 0.0
        %1287 = vmatpush1.msra.mxu0 0.0
        %1288 = vmatprep.subr.mxu0 0.0
        %1289 = vmatpush1.msra.mxu0 0.0
        %1290 = vmatprep.subr.mxu0 0.0
        %1291 = vmatpush1.msra.mxu0 0.0
        %1292 = vmatprep.subr.mxu0 0.0
        %1293 = vmatpush1.msra.mxu0 0.0
        %1294 = vmatprep.subr.mxu0 0.0
        %1295 = vmatpush1.msra.mxu0 0.0
        %1296 = vmatprep.subr.mxu0 0.0
        %1297 = vmatpush1.msra.mxu0 0.0
        %1298 = vmatprep.subr.mxu0 0.0
        %1299 = vmatpush1.msra.mxu0 0.0
        %1300 = vmatprep.subr.mxu0 0.0
        %1301 = vmatpush1.msra.mxu0 0.0
        %1302 = vmatprep.subr.mxu0 0.0
        %1303 = vmatpush1.msra.mxu0 0.0
        %1304 = vmatprep.subr.mxu0 0.0
        %1305 = vmatpush1.msra.mxu0 0.0
        %1306 = vmatprep.subr.mxu0 0.0
        %1307 = vmatpush1.msra.mxu0 0.0
        %1308 = vmatprep.mubr.f32.mxu0 0.0
        %1309 = vmatmul.mubr.f32.gmra.mrb[0].mxu0 %v386
        %v1310 = vpop.f32.mrb[0].mxu0
        %v1311 = vadd.f32 %v1241, %v1310
        %v1312 = vpop.f32.mrb[0].mxu0
        %1313 = vdwg.mxu0
        %s1314 = scalar_lea.vmem %s367, 12
        %v1315 = vld [vmem:[%s1314] sm:$0xf]
        %1316 = vmatprep.subr.mxu0 0.0
        %1317 = vmatpush1.msra.mxu0 %v547
        %1318 = vmatprep.subr.mxu0 0.0
        %1319 = vmatpush1.msra.mxu0 %v548
        %1320 = vmatprep.subr.mxu0 0.0
        %1321 = vmatpush1.msra.mxu0 %v549
        %1322 = vmatprep.subr.mxu0 0.0
        %1323 = vmatpush1.msra.mxu0 %v550
        %1324 = vmatprep.subr.mxu0 0.0
        %1325 = vmatpush1.msra.mxu0 %v551
        %1326 = vmatprep.subr.mxu0 0.0
        %1327 = vmatpush1.msra.mxu0 %v552
        %1328 = vmatprep.subr.mxu0 0.0
        %1329 = vmatpush1.msra.mxu0 %v553
        %1330 = vmatprep.subr.mxu0 0.0
        %1331 = vmatpush1.msra.mxu0 %v554
        %1332 = vmatprep.subr.mxu0 0.0
        %1333 = vmatpush1.msra.mxu0 %v555
        %1334 = vmatprep.subr.mxu0 0.0
        %1335 = vmatpush1.msra.mxu0 %v556
        %1336 = vmatprep.subr.mxu0 0.0
        %1337 = vmatpush1.msra.mxu0 %v557
        %1338 = vmatprep.subr.mxu0 0.0
        %1339 = vmatpush1.msra.mxu0 %v558
        %1340 = vmatprep.subr.mxu0 0.0
        %1341 = vmatpush1.msra.mxu0 %v559
        %1342 = vmatprep.subr.mxu0 0.0
        %1343 = vmatpush1.msra.mxu0 %v560
        %1344 = vmatprep.subr.mxu0 0.0
        %1345 = vmatpush1.msra.mxu0 %v561
        %1346 = vmatprep.subr.mxu0 0.0
        %1347 = vmatpush1.msra.mxu0 %v562
        %1348 = vmatprep.subr.mxu0 0.0
        %1349 = vmatpush1.msra.mxu0 0.0
        %1350 = vmatprep.subr.mxu0 0.0
        %1351 = vmatpush1.msra.mxu0 0.0
        %1352 = vmatprep.subr.mxu0 0.0
        %1353 = vmatpush1.msra.mxu0 0.0
        %1354 = vmatprep.subr.mxu0 0.0
        %1355 = vmatpush1.msra.mxu0 0.0
        %1356 = vmatprep.subr.mxu0 0.0
        %1357 = vmatpush1.msra.mxu0 0.0
        %1358 = vmatprep.subr.mxu0 0.0
        %1359 = vmatpush1.msra.mxu0 0.0
        %1360 = vmatprep.subr.mxu0 0.0
        %1361 = vmatpush1.msra.mxu0 0.0
        %1362 = vmatprep.subr.mxu0 0.0
        %1363 = vmatpush1.msra.mxu0 0.0
        %1364 = vmatprep.subr.mxu0 0.0
        %1365 = vmatpush1.msra.mxu0 0.0
        %1366 = vmatprep.subr.mxu0 0.0
        %1367 = vmatpush1.msra.mxu0 0.0
        %1368 = vmatprep.subr.mxu0 0.0
        %1369 = vmatpush1.msra.mxu0 0.0
        %1370 = vmatprep.subr.mxu0 0.0
        %1371 = vmatpush1.msra.mxu0 0.0
        %1372 = vmatprep.subr.mxu0 0.0
        %1373 = vmatpush1.msra.mxu0 0.0
        %1374 = vmatprep.subr.mxu0 0.0
        %1375 = vmatpush1.msra.mxu0 0.0
        %1376 = vmatprep.subr.mxu0 0.0
        %1377 = vmatpush1.msra.mxu0 0.0
        %1378 = vmatprep.subr.mxu0 0.0
        %1379 = vmatpush1.msra.mxu0 0.0
        %1380 = vmatprep.mubr.f32.mxu0 0.0
        %1381 = vmatmul.mubr.f32.gmra.mrb[0].mxu0 %v1315
        %v1382 = vpop.f32.mrb[0].mxu0
        %v1383 = vadd.f32 0.0, %v1382
        %v1384 = vpop.f32.mrb[0].mxu0
        %1385 = vdwg.mxu0
        %v1386 = vadd.f32 %v1311, %v1383
        %1387 = vmatprep.subr.mxu0 0.0
        %1388 = vmatpush1.msra.mxu0 %v637
        %1389 = vmatprep.subr.mxu0 0.0
        %1390 = vmatpush1.msra.mxu0 %v638
        %1391 = vmatprep.subr.mxu0 0.0
        %1392 = vmatpush1.msra.mxu0 %v639
        %1393 = vmatprep.subr.mxu0 0.0
        %1394 = vmatpush1.msra.mxu0 %v640
        %1395 = vmatprep.subr.mxu0 0.0
        %1396 = vmatpush1.msra.mxu0 %v641
        %1397 = vmatprep.subr.mxu0 0.0
        %1398 = vmatpush1.msra.mxu0 %v642
        %1399 = vmatprep.subr.mxu0 0.0
        %1400 = vmatpush1.msra.mxu0 %v643
        %1401 = vmatprep.subr.mxu0 0.0
        %1402 = vmatpush1.msra.mxu0 %v644
        %1403 = vmatprep.subr.mxu0 0.0
        %1404 = vmatpush1.msra.mxu0 %v645
        %1405 = vmatprep.subr.mxu0 0.0
        %1406 = vmatpush1.msra.mxu0 %v646
        %1407 = vmatprep.subr.mxu0 0.0
        %1408 = vmatpush1.msra.mxu0 %v647
        %1409 = vmatprep.subr.mxu0 0.0
        %1410 = vmatpush1.msra.mxu0 %v648
        %1411 = vmatprep.subr.mxu0 0.0
        %1412 = vmatpush1.msra.mxu0 %v649
        %1413 = vmatprep.subr.mxu0 0.0
        %1414 = vmatpush1.msra.mxu0 %v650
        %1415 = vmatprep.subr.mxu0 0.0
        %1416 = vmatpush1.msra.mxu0 %v651
        %1417 = vmatprep.subr.mxu0 0.0
        %1418 = vmatpush1.msra.mxu0 %v652
        %1419 = vmatprep.subr.mxu0 0.0
        %1420 = vmatpush1.msra.mxu0 0.0
        %1421 = vmatprep.subr.mxu0 0.0
        %1422 = vmatpush1.msra.mxu0 0.0
        %1423 = vmatprep.subr.mxu0 0.0
        %1424 = vmatpush1.msra.mxu0 0.0
        %1425 = vmatprep.subr.mxu0 0.0
        %1426 = vmatpush1.msra.mxu0 0.0
        %1427 = vmatprep.subr.mxu0 0.0
        %1428 = vmatpush1.msra.mxu0 0.0
        %1429 = vmatprep.subr.mxu0 0.0
        %1430 = vmatpush1.msra.mxu0 0.0
        %1431 = vmatprep.subr.mxu0 0.0
        %1432 = vmatpush1.msra.mxu0 0.0
        %1433 = vmatprep.subr.mxu0 0.0
        %1434 = vmatpush1.msra.mxu0 0.0
        %1435 = vmatprep.subr.mxu0 0.0
        %1436 = vmatpush1.msra.mxu0 0.0
        %1437 = vmatprep.subr.mxu0 0.0
        %1438 = vmatpush1.msra.mxu0 0.0
        %1439 = vmatprep.subr.mxu0 0.0
        %1440 = vmatpush1.msra.mxu0 0.0
        %1441 = vmatprep.subr.mxu0 0.0
        %1442 = vmatpush1.msra.mxu0 0.0
        %1443 = vmatprep.subr.mxu0 0.0
        %1444 = vmatpush1.msra.mxu0 0.0
        %1445 = vmatprep.subr.mxu0 0.0
        %1446 = vmatpush1.msra.mxu0 0.0
        %1447 = vmatprep.subr.mxu0 0.0
        %1448 = vmatpush1.msra.mxu0 0.0
        %1449 = vmatprep.subr.mxu0 0.0
        %1450 = vmatpush1.msra.mxu0 0.0
        %1451 = vmatprep.mubr.f32.mxu0 0.0
        %1452 = vmatmul.mubr.f32.gmra.mrb[0].mxu0 %v725
        %v1453 = vpop.f32.mrb[0].mxu0
        %v1454 = vadd.f32 0.0, %v1453
        %v1455 = vpop.f32.mrb[0].mxu0
        %1456 = vdwg.mxu0
        %v1457 = vadd.f32 %v1386, %v1454
        %1458 = vmatprep.subr.mxu0 0.0
        %1459 = vmatpush1.msra.mxu0 %v727
        %1460 = vmatprep.subr.mxu0 0.0
        %1461 = vmatpush1.msra.mxu0 %v728
        %1462 = vmatprep.subr.mxu0 0.0
        %1463 = vmatpush1.msra.mxu0 %v729
        %1464 = vmatprep.subr.mxu0 0.0
        %1465 = vmatpush1.msra.mxu0 %v730
        %1466 = vmatprep.subr.mxu0 0.0
        %1467 = vmatpush1.msra.mxu0 %v731
        %1468 = vmatprep.subr.mxu0 0.0
        %1469 = vmatpush1.msra.mxu0 %v732
        %1470 = vmatprep.subr.mxu0 0.0
        %1471 = vmatpush1.msra.mxu0 %v733
        %1472 = vmatprep.subr.mxu0 0.0
        %1473 = vmatpush1.msra.mxu0 %v734
        %1474 = vmatprep.subr.mxu0 0.0
        %1475 = vmatpush1.msra.mxu0 %v735
        %1476 = vmatprep.subr.mxu0 0.0
        %1477 = vmatpush1.msra.mxu0 %v736
        %1478 = vmatprep.subr.mxu0 0.0
        %1479 = vmatpush1.msra.mxu0 %v737
        %1480 = vmatprep.subr.mxu0 0.0
        %1481 = vmatpush1.msra.mxu0 %v738
        %1482 = vmatprep.subr.mxu0 0.0
        %1483 = vmatpush1.msra.mxu0 %v739
        %1484 = vmatprep.subr.mxu0 0.0
        %1485 = vmatpush1.msra.mxu0 %v740
        %1486 = vmatprep.subr.mxu0 0.0
        %1487 = vmatpush1.msra.mxu0 %v741
        %1488 = vmatprep.subr.mxu0 0.0
        %1489 = vmatpush1.msra.mxu0 %v742
        %1490 = vmatprep.subr.mxu0 0.0
        %1491 = vmatpush1.msra.mxu0 0.0
        %1492 = vmatprep.subr.mxu0 0.0
        %1493 = vmatpush1.msra.mxu0 0.0
        %1494 = vmatprep.subr.mxu0 0.0
        %1495 = vmatpush1.msra.mxu0 0.0
        %1496 = vmatprep.subr.mxu0 0.0
        %1497 = vmatpush1.msra.mxu0 0.0
        %1498 = vmatprep.subr.mxu0 0.0
        %1499 = vmatpush1.msra.mxu0 0.0
        %1500 = vmatprep.subr.mxu0 0.0
        %1501 = vmatpush1.msra.mxu0 0.0
        %1502 = vmatprep.subr.mxu0 0.0
        %1503 = vmatpush1.msra.mxu0 0.0
        %1504 = vmatprep.subr.mxu0 0.0
        %1505 = vmatpush1.msra.mxu0 0.0
        %1506 = vmatprep.subr.mxu0 0.0
        %1507 = vmatpush1.msra.mxu0 0.0
        %1508 = vmatprep.subr.mxu0 0.0
        %1509 = vmatpush1.msra.mxu0 0.0
        %1510 = vmatprep.subr.mxu0 0.0
        %1511 = vmatpush1.msra.mxu0 0.0
        %1512 = vmatprep.subr.mxu0 0.0
        %1513 = vmatpush1.msra.mxu0 0.0
        %1514 = vmatprep.subr.mxu0 0.0
        %1515 = vmatpush1.msra.mxu0 0.0
        %1516 = vmatprep.subr.mxu0 0.0
        %1517 = vmatpush1.msra.mxu0 0.0
        %1518 = vmatprep.subr.mxu0 0.0
        %1519 = vmatpush1.msra.mxu0 0.0
        %1520 = vmatprep.subr.mxu0 0.0
        %1521 = vmatpush1.msra.mxu0 0.0
        %1522 = vmatprep.mubr.f32.mxu0 0.0
        %1523 = vmatmul.mubr.f32.gmra.mrb[0].mxu0 %v815
        %v1524 = vpop.f32.mrb[0].mxu0
        %v1525 = vadd.f32 0.0, %v1524
        %v1526 = vpop.f32.mrb[0].mxu0
        %1527 = vdwg.mxu0
        %v1528 = vadd.f32 %v1457, %v1525
        %s1529 = scalar_lea.vmem %s367, 28
        %v1530 = vld [vmem:[%s1529] sm:$0xf]
        %1531 = vmatprep.subr.mxu0 0.0
        %1532 = vmatpush1.msra.mxu0 %v817
        %1533 = vmatprep.subr.mxu0 0.0
        %1534 = vmatpush1.msra.mxu0 %v818
        %1535 = vmatprep.subr.mxu0 0.0
        %1536 = vmatpush1.msra.mxu0 %v819
        %1537 = vmatprep.subr.mxu0 0.0
        %1538 = vmatpush1.msra.mxu0 %v820
        %1539 = vmatprep.subr.mxu0 0.0
        %1540 = vmatpush1.msra.mxu0 %v821
        %1541 = vmatprep.subr.mxu0 0.0
        %1542 = vmatpush1.msra.mxu0 %v822
        %1543 = vmatprep.subr.mxu0 0.0
        %1544 = vmatpush1.msra.mxu0 %v823
        %1545 = vmatprep.subr.mxu0 0.0
        %1546 = vmatpush1.msra.mxu0 %v824
        %1547 = vmatprep.subr.mxu0 0.0
        %1548 = vmatpush1.msra.mxu0 %v825
        %1549 = vmatprep.subr.mxu0 0.0
        %1550 = vmatpush1.msra.mxu0 %v826
        %1551 = vmatprep.subr.mxu0 0.0
        %1552 = vmatpush1.msra.mxu0 %v827
        %1553 = vmatprep.subr.mxu0 0.0
        %1554 = vmatpush1.msra.mxu0 %v828
        %1555 = vmatprep.subr.mxu0 0.0
        %1556 = vmatpush1.msra.mxu0 %v829
        %1557 = vmatprep.subr.mxu0 0.0
        %1558 = vmatpush1.msra.mxu0 %v830
        %1559 = vmatprep.subr.mxu0 0.0
        %1560 = vmatpush1.msra.mxu0 %v831
        %1561 = vmatprep.subr.mxu0 0.0
        %1562 = vmatpush1.msra.mxu0 %v832
        %1563 = vmatprep.subr.mxu0 0.0
        %1564 = vmatpush1.msra.mxu0 0.0
        %1565 = vmatprep.subr.mxu0 0.0
        %1566 = vmatpush1.msra.mxu0 0.0
        %1567 = vmatprep.subr.mxu0 0.0
        %1568 = vmatpush1.msra.mxu0 0.0
        %1569 = vmatprep.subr.mxu0 0.0
        %1570 = vmatpush1.msra.mxu0 0.0
        %1571 = vmatprep.subr.mxu0 0.0
        %1572 = vmatpush1.msra.mxu0 0.0
        %1573 = vmatprep.subr.mxu0 0.0
        %1574 = vmatpush1.msra.mxu0 0.0
        %1575 = vmatprep.subr.mxu0 0.0
        %1576 = vmatpush1.msra.mxu0 0.0
        %1577 = vmatprep.subr.mxu0 0.0
        %1578 = vmatpush1.msra.mxu0 0.0
        %1579 = vmatprep.subr.mxu0 0.0
        %1580 = vmatpush1.msra.mxu0 0.0
        %1581 = vmatprep.subr.mxu0 0.0
        %1582 = vmatpush1.msra.mxu0 0.0
        %1583 = vmatprep.subr.mxu0 0.0
        %1584 = vmatpush1.msra.mxu0 0.0
        %1585 = vmatprep.subr.mxu0 0.0
        %1586 = vmatpush1.msra.mxu0 0.0
        %1587 = vmatprep.subr.mxu0 0.0
        %1588 = vmatpush1.msra.mxu0 0.0
        %1589 = vmatprep.subr.mxu0 0.0
        %1590 = vmatpush1.msra.mxu0 0.0
        %1591 = vmatprep.subr.mxu0 0.0
        %1592 = vmatpush1.msra.mxu0 0.0
        %1593 = vmatprep.subr.mxu0 0.0
        %1594 = vmatpush1.msra.mxu0 0.0
        %1595 = vmatprep.mubr.f32.mxu0 0.0
        %1596 = vmatmul.mubr.f32.gmra.mrb[0].mxu0 %v1530
        %v1597 = vpop.f32.mrb[0].mxu0
        %v1598 = vadd.f32 0.0, %v1597
        %v1599 = vpop.f32.mrb[0].mxu0
        %1600 = vdwg.mxu0
        %v1601 = vadd.f32 %v1528, %v1598
        %1602 = vmatprep.subr.mxu0 0.0
        %1603 = vmatpush1.msra.mxu0 %v907
        %1604 = vmatprep.subr.mxu0 0.0
        %1605 = vmatpush1.msra.mxu0 %v908
        %1606 = vmatprep.subr.mxu0 0.0
        %1607 = vmatpush1.msra.mxu0 %v909
        %1608 = vmatprep.subr.mxu0 0.0
        %1609 = vmatpush1.msra.mxu0 %v910
        %1610 = vmatprep.subr.mxu0 0.0
        %1611 = vmatpush1.msra.mxu0 %v911
        %1612 = vmatprep.subr.mxu0 0.0
        %1613 = vmatpush1.msra.mxu0 %v912
        %1614 = vmatprep.subr.mxu0 0.0
        %1615 = vmatpush1.msra.mxu0 %v913
        %1616 = vmatprep.subr.mxu0 0.0
        %1617 = vmatpush1.msra.mxu0 %v914
        %1618 = vmatprep.subr.mxu0 0.0
        %1619 = vmatpush1.msra.mxu0 %v915
        %1620 = vmatprep.subr.mxu0 0.0
        %1621 = vmatpush1.msra.mxu0 %v916
        %1622 = vmatprep.subr.mxu0 0.0
        %1623 = vmatpush1.msra.mxu0 %v917
        %1624 = vmatprep.subr.mxu0 0.0
        %1625 = vmatpush1.msra.mxu0 %v918
        %1626 = vmatprep.subr.mxu0 0.0
        %1627 = vmatpush1.msra.mxu0 %v919
        %1628 = vmatprep.subr.mxu0 0.0
        %1629 = vmatpush1.msra.mxu0 %v920
        %1630 = vmatprep.subr.mxu0 0.0
        %1631 = vmatpush1.msra.mxu0 %v921
        %1632 = vmatprep.subr.mxu0 0.0
        %1633 = vmatpush1.msra.mxu0 %v922
        %1634 = vmatprep.subr.mxu0 0.0
        %1635 = vmatpush1.msra.mxu0 0.0
        %1636 = vmatprep.subr.mxu0 0.0
        %1637 = vmatpush1.msra.mxu0 0.0
        %1638 = vmatprep.subr.mxu0 0.0
        %1639 = vmatpush1.msra.mxu0 0.0
        %1640 = vmatprep.subr.mxu0 0.0
        %1641 = vmatpush1.msra.mxu0 0.0
        %1642 = vmatprep.subr.mxu0 0.0
        %1643 = vmatpush1.msra.mxu0 0.0
        %1644 = vmatprep.subr.mxu0 0.0
        %1645 = vmatpush1.msra.mxu0 0.0
        %1646 = vmatprep.subr.mxu0 0.0
        %1647 = vmatpush1.msra.mxu0 0.0
        %1648 = vmatprep.subr.mxu0 0.0
        %1649 = vmatpush1.msra.mxu0 0.0
        %1650 = vmatprep.subr.mxu0 0.0
        %1651 = vmatpush1.msra.mxu0 0.0
        %1652 = vmatprep.subr.mxu0 0.0
        %1653 = vmatpush1.msra.mxu0 0.0
        %1654 = vmatprep.subr.mxu0 0.0
        %1655 = vmatpush1.msra.mxu0 0.0
        %1656 = vmatprep.subr.mxu0 0.0
        %1657 = vmatpush1.msra.mxu0 0.0
        %1658 = vmatprep.subr.mxu0 0.0
        %1659 = vmatpush1.msra.mxu0 0.0
        %1660 = vmatprep.subr.mxu0 0.0
        %1661 = vmatpush1.msra.mxu0 0.0
        %1662 = vmatprep.subr.mxu0 0.0
        %1663 = vmatpush1.msra.mxu0 0.0
        %1664 = vmatprep.subr.mxu0 0.0
        %1665 = vmatpush1.msra.mxu0 0.0
        %1666 = vmatprep.mubr.f32.mxu0 0.0
        %1667 = vmatmul.mubr.f32.gmra.mrb[0].mxu0 %v995
        %v1668 = vpop.f32.mrb[0].mxu0
        %v1669 = vadd.f32 0.0, %v1668
        %v1670 = vpop.f32.mrb[0].mxu0
        %1671 = vdwg.mxu0
        %v1672 = vadd.f32 %v1601, %v1669
        %1673 = vmatprep.subr.mxu0 0.0
        %1674 = vmatpush1.msra.mxu0 %v997
        %1675 = vmatprep.subr.mxu0 0.0
        %1676 = vmatpush1.msra.mxu0 %v998
        %1677 = vmatprep.subr.mxu0 0.0
        %1678 = vmatpush1.msra.mxu0 %v999
        %1679 = vmatprep.subr.mxu0 0.0
        %1680 = vmatpush1.msra.mxu0 %v1000
        %1681 = vmatprep.subr.mxu0 0.0
        %1682 = vmatpush1.msra.mxu0 %v1001
        %1683 = vmatprep.subr.mxu0 0.0
        %1684 = vmatpush1.msra.mxu0 %v1002
        %1685 = vmatprep.subr.mxu0 0.0
        %1686 = vmatpush1.msra.mxu0 %v1003
        %1687 = vmatprep.subr.mxu0 0.0
        %1688 = vmatpush1.msra.mxu0 %v1004
        %1689 = vmatprep.subr.mxu0 0.0
        %1690 = vmatpush1.msra.mxu0 %v1005
        %1691 = vmatprep.subr.mxu0 0.0
        %1692 = vmatpush1.msra.mxu0 %v1006
        %1693 = vmatprep.subr.mxu0 0.0
        %1694 = vmatpush1.msra.mxu0 %v1007
        %1695 = vmatprep.subr.mxu0 0.0
        %1696 = vmatpush1.msra.mxu0 %v1008
        %1697 = vmatprep.subr.mxu0 0.0
        %1698 = vmatpush1.msra.mxu0 %v1009
        %1699 = vmatprep.subr.mxu0 0.0
        %1700 = vmatpush1.msra.mxu0 %v1010
        %1701 = vmatprep.subr.mxu0 0.0
        %1702 = vmatpush1.msra.mxu0 %v1011
        %1703 = vmatprep.subr.mxu0 0.0
        %1704 = vmatpush1.msra.mxu0 %v1012
        %1705 = vmatprep.subr.mxu0 0.0
        %1706 = vmatpush1.msra.mxu0 0.0
        %1707 = vmatprep.subr.mxu0 0.0
        %1708 = vmatpush1.msra.mxu0 0.0
        %1709 = vmatprep.subr.mxu0 0.0
        %1710 = vmatpush1.msra.mxu0 0.0
        %1711 = vmatprep.subr.mxu0 0.0
        %1712 = vmatpush1.msra.mxu0 0.0
        %1713 = vmatprep.subr.mxu0 0.0
        %1714 = vmatpush1.msra.mxu0 0.0
        %1715 = vmatprep.subr.mxu0 0.0
        %1716 = vmatpush1.msra.mxu0 0.0
        %1717 = vmatprep.subr.mxu0 0.0
        %1718 = vmatpush1.msra.mxu0 0.0
        %1719 = vmatprep.subr.mxu0 0.0
        %1720 = vmatpush1.msra.mxu0 0.0
        %1721 = vmatprep.subr.mxu0 0.0
        %1722 = vmatpush1.msra.mxu0 0.0
        %1723 = vmatprep.subr.mxu0 0.0
        %1724 = vmatpush1.msra.mxu0 0.0
        %1725 = vmatprep.subr.mxu0 0.0
        %1726 = vmatpush1.msra.mxu0 0.0
        %1727 = vmatprep.subr.mxu0 0.0
        %1728 = vmatpush1.msra.mxu0 0.0
        %1729 = vmatprep.subr.mxu0 0.0
        %1730 = vmatpush1.msra.mxu0 0.0
        %1731 = vmatprep.subr.mxu0 0.0
        %1732 = vmatpush1.msra.mxu0 0.0
        %1733 = vmatprep.subr.mxu0 0.0
        %1734 = vmatpush1.msra.mxu0 0.0
        %1735 = vmatprep.subr.mxu0 0.0
        %1736 = vmatpush1.msra.mxu0 0.0
        %1737 = vmatprep.mubr.f32.mxu0 0.0
        %1738 = vmatmul.mubr.f32.gmra.mrb[0].mxu0 %v1085
        %v1739 = vpop.f32.mrb[0].mxu0
        %v1740 = vadd.f32 0.0, %v1739
        %v1741 = vpop.f32.mrb[0].mxu0
        %1742 = vdwg.mxu0
        %v1743 = vadd.f32 %v1672, %v1740
        %s1744 = scalar_lea.vmem %s367, 44
        %v1745 = vld [vmem:[%s1744] sm:$0xf]
        %1746 = vmatprep.subr.mxu0 0.0
        %1747 = vmatpush1.msra.mxu0 %v1087
        %1748 = vmatprep.subr.mxu0 0.0
        %1749 = vmatpush1.msra.mxu0 %v1088
        %1750 = vmatprep.subr.mxu0 0.0
        %1751 = vmatpush1.msra.mxu0 %v1089
        %1752 = vmatprep.subr.mxu0 0.0
        %1753 = vmatpush1.msra.mxu0 %v1090
        %1754 = vmatprep.subr.mxu0 0.0
        %1755 = vmatpush1.msra.mxu0 %v1091
        %1756 = vmatprep.subr.mxu0 0.0
        %1757 = vmatpush1.msra.mxu0 %v1092
        %1758 = vmatprep.subr.mxu0 0.0
        %1759 = vmatpush1.msra.mxu0 %v1093
        %1760 = vmatprep.subr.mxu0 0.0
        %1761 = vmatpush1.msra.mxu0 %v1094
        %1762 = vmatprep.subr.mxu0 0.0
        %1763 = vmatpush1.msra.mxu0 %v1095
        %1764 = vmatprep.subr.mxu0 0.0
        %1765 = vmatpush1.msra.mxu0 %v1096
        %1766 = vmatprep.subr.mxu0 0.0
        %1767 = vmatpush1.msra.mxu0 %v1097
        %1768 = vmatprep.subr.mxu0 0.0
        %1769 = vmatpush1.msra.mxu0 %v1098
        %1770 = vmatprep.subr.mxu0 0.0
        %1771 = vmatpush1.msra.mxu0 %v1099
        %1772 = vmatprep.subr.mxu0 0.0
        %1773 = vmatpush1.msra.mxu0 %v1100
        %1774 = vmatprep.subr.mxu0 0.0
        %1775 = vmatpush1.msra.mxu0 %v1101
        %1776 = vmatprep.subr.mxu0 0.0
        %1777 = vmatpush1.msra.mxu0 %v1102
        %1778 = vmatprep.subr.mxu0 0.0
        %1779 = vmatpush1.msra.mxu0 0.0
        %1780 = vmatprep.subr.mxu0 0.0
        %1781 = vmatpush1.msra.mxu0 0.0
        %1782 = vmatprep.subr.mxu0 0.0
        %1783 = vmatpush1.msra.mxu0 0.0
        %1784 = vmatprep.subr.mxu0 0.0
        %1785 = vmatpush1.msra.mxu0 0.0
        %1786 = vmatprep.subr.mxu0 0.0
        %1787 = vmatpush1.msra.mxu0 0.0
        %1788 = vmatprep.subr.mxu0 0.0
        %1789 = vmatpush1.msra.mxu0 0.0
        %1790 = vmatprep.subr.mxu0 0.0
        %1791 = vmatpush1.msra.mxu0 0.0
        %1792 = vmatprep.subr.mxu0 0.0
        %1793 = vmatpush1.msra.mxu0 0.0
        %1794 = vmatprep.subr.mxu0 0.0
        %1795 = vmatpush1.msra.mxu0 0.0
        %1796 = vmatprep.subr.mxu0 0.0
        %1797 = vmatpush1.msra.mxu0 0.0
        %1798 = vmatprep.subr.mxu0 0.0
        %1799 = vmatpush1.msra.mxu0 0.0
        %1800 = vmatprep.subr.mxu0 0.0
        %1801 = vmatpush1.msra.mxu0 0.0
        %1802 = vmatprep.subr.mxu0 0.0
        %1803 = vmatpush1.msra.mxu0 0.0
        %1804 = vmatprep.subr.mxu0 0.0
        %1805 = vmatpush1.msra.mxu0 0.0
        %1806 = vmatprep.subr.mxu0 0.0
        %1807 = vmatpush1.msra.mxu0 0.0
        %1808 = vmatprep.subr.mxu0 0.0
        %1809 = vmatpush1.msra.mxu0 0.0
        %1810 = vmatprep.mubr.f32.mxu0 0.0
        %1811 = vmatmul.mubr.f32.gmra.mrb[0].mxu0 %v1745
        %v1812 = vpop.f32.mrb[0].mxu0
        %v1813 = vadd.f32 0.0, %v1812
        %v1814 = vpop.f32.mrb[0].mxu0
        %1815 = vdwg.mxu0
        %v1816 = vadd.f32 %v1743, %v1813
        %v1817 = vmax.f32 %v1173, %v1816
        %1818 = vmatprep.subr.mxu0 0.0
        %1819 = vmatpush1.msra.mxu0 %v388
        %1820 = vmatprep.subr.mxu0 0.0
        %1821 = vmatpush1.msra.mxu0 %v389
        %1822 = vmatprep.subr.mxu0 0.0
        %1823 = vmatpush1.msra.mxu0 %v390
        %1824 = vmatprep.subr.mxu0 0.0
        %1825 = vmatpush1.msra.mxu0 %v391
        %1826 = vmatprep.subr.mxu0 0.0
        %1827 = vmatpush1.msra.mxu0 %v392
        %1828 = vmatprep.subr.mxu0 0.0
        %1829 = vmatpush1.msra.mxu0 %v393
        %1830 = vmatprep.subr.mxu0 0.0
        %1831 = vmatpush1.msra.mxu0 %v394
        %1832 = vmatprep.subr.mxu0 0.0
        %1833 = vmatpush1.msra.mxu0 %v395
        %1834 = vmatprep.subr.mxu0 0.0
        %1835 = vmatpush1.msra.mxu0 %v396
        %1836 = vmatprep.subr.mxu0 0.0
        %1837 = vmatpush1.msra.mxu0 %v397
        %1838 = vmatprep.subr.mxu0 0.0
        %1839 = vmatpush1.msra.mxu0 %v398
        %1840 = vmatprep.subr.mxu0 0.0
        %1841 = vmatpush1.msra.mxu0 %v399
        %1842 = vmatprep.subr.mxu0 0.0
        %1843 = vmatpush1.msra.mxu0 %v400
        %1844 = vmatprep.subr.mxu0 0.0
        %1845 = vmatpush1.msra.mxu0 %v401
        %1846 = vmatprep.subr.mxu0 0.0
        %1847 = vmatpush1.msra.mxu0 %v402
        %1848 = vmatprep.subr.mxu0 0.0
        %1849 = vmatpush1.msra.mxu0 %v403
        %1850 = vmatprep.subr.mxu0 0.0
        %1851 = vmatpush1.msra.mxu0 0.0
        %1852 = vmatprep.subr.mxu0 0.0
        %1853 = vmatpush1.msra.mxu0 0.0
        %1854 = vmatprep.subr.mxu0 0.0
        %1855 = vmatpush1.msra.mxu0 0.0
        %1856 = vmatprep.subr.mxu0 0.0
        %1857 = vmatpush1.msra.mxu0 0.0
        %1858 = vmatprep.subr.mxu0 0.0
        %1859 = vmatpush1.msra.mxu0 0.0
        %1860 = vmatprep.subr.mxu0 0.0
        %1861 = vmatpush1.msra.mxu0 0.0
        %1862 = vmatprep.subr.mxu0 0.0
        %1863 = vmatpush1.msra.mxu0 0.0
        %1864 = vmatprep.subr.mxu0 0.0
        %1865 = vmatpush1.msra.mxu0 0.0
        %1866 = vmatprep.subr.mxu0 0.0
        %1867 = vmatpush1.msra.mxu0 0.0
        %1868 = vmatprep.subr.mxu0 0.0
        %1869 = vmatpush1.msra.mxu0 0.0
        %1870 = vmatprep.subr.mxu0 0.0
        %1871 = vmatpush1.msra.mxu0 0.0
        %1872 = vmatprep.subr.mxu0 0.0
        %1873 = vmatpush1.msra.mxu0 0.0
        %1874 = vmatprep.subr.mxu0 0.0
        %1875 = vmatpush1.msra.mxu0 0.0
        %1876 = vmatprep.subr.mxu0 0.0
        %1877 = vmatpush1.msra.mxu0 0.0
        %1878 = vmatprep.subr.mxu0 0.0
        %1879 = vmatpush1.msra.mxu0 0.0
        %1880 = vmatprep.subr.mxu0 0.0
        %1881 = vmatpush1.msra.mxu0 0.0
        %1882 = vmatprep.mubr.f32.mxu0 0.0
        %1883 = vmatmul.mubr.f32.gmra.mrb[0].mxu0 %v725
        %v1884 = vpop.f32.mrb[0].mxu0
        %v1885 = vadd.f32 0.0, %v1884
        %v1886 = vpop.f32.mrb[0].mxu0
        %1887 = vdwg.mxu0
        %1888 = vmatprep.subr.mxu0 0.0
        %1889 = vmatpush1.msra.mxu0 %v369
        %1890 = vmatprep.subr.mxu0 0.0
        %1891 = vmatpush1.msra.mxu0 %v370
        %1892 = vmatprep.subr.mxu0 0.0
        %1893 = vmatpush1.msra.mxu0 %v371
        %1894 = vmatprep.subr.mxu0 0.0
        %1895 = vmatpush1.msra.mxu0 %v372
        %1896 = vmatprep.subr.mxu0 0.0
        %1897 = vmatpush1.msra.mxu0 %v373
        %1898 = vmatprep.subr.mxu0 0.0
        %1899 = vmatpush1.msra.mxu0 %v374
        %1900 = vmatprep.subr.mxu0 0.0
        %1901 = vmatpush1.msra.mxu0 %v375
        %1902 = vmatprep.subr.mxu0 0.0
        %1903 = vmatpush1.msra.mxu0 %v376
        %1904 = vmatprep.subr.mxu0 0.0
        %1905 = vmatpush1.msra.mxu0 %v377
        %1906 = vmatprep.subr.mxu0 0.0
        %1907 = vmatpush1.msra.mxu0 %v378
        %1908 = vmatprep.subr.mxu0 0.0
        %1909 = vmatpush1.msra.mxu0 %v379
        %1910 = vmatprep.subr.mxu0 0.0
        %1911 = vmatpush1.msra.mxu0 %v380
        %1912 = vmatprep.subr.mxu0 0.0
        %1913 = vmatpush1.msra.mxu0 %v381
        %1914 = vmatprep.subr.mxu0 0.0
        %1915 = vmatpush1.msra.mxu0 %v382
        %1916 = vmatprep.subr.mxu0 0.0
        %1917 = vmatpush1.msra.mxu0 %v383
        %1918 = vmatprep.subr.mxu0 0.0
        %1919 = vmatpush1.msra.mxu0 %v384
        %1920 = vmatprep.subr.mxu0 0.0
        %1921 = vmatpush1.msra.mxu0 0.0
        %1922 = vmatprep.subr.mxu0 0.0
        %1923 = vmatpush1.msra.mxu0 0.0
        %1924 = vmatprep.subr.mxu0 0.0
        %1925 = vmatpush1.msra.mxu0 0.0
        %1926 = vmatprep.subr.mxu0 0.0
        %1927 = vmatpush1.msra.mxu0 0.0
        %1928 = vmatprep.subr.mxu0 0.0
        %1929 = vmatpush1.msra.mxu0 0.0
        %1930 = vmatprep.subr.mxu0 0.0
        %1931 = vmatpush1.msra.mxu0 0.0
        %1932 = vmatprep.subr.mxu0 0.0
        %1933 = vmatpush1.msra.mxu0 0.0
        %1934 = vmatprep.subr.mxu0 0.0
        %1935 = vmatpush1.msra.mxu0 0.0
        %1936 = vmatprep.subr.mxu0 0.0
        %1937 = vmatpush1.msra.mxu0 0.0
        %1938 = vmatprep.subr.mxu0 0.0
        %1939 = vmatpush1.msra.mxu0 0.0
        %1940 = vmatprep.subr.mxu0 0.0
        %1941 = vmatpush1.msra.mxu0 0.0
        %1942 = vmatprep.subr.mxu0 0.0
        %1943 = vmatpush1.msra.mxu0 0.0
        %1944 = vmatprep.subr.mxu0 0.0
        %1945 = vmatpush1.msra.mxu0 0.0
        %1946 = vmatprep.subr.mxu0 0.0
        %1947 = vmatpush1.msra.mxu0 0.0
        %1948 = vmatprep.subr.mxu0 0.0
        %1949 = vmatpush1.msra.mxu0 0.0
        %1950 = vmatprep.subr.mxu0 0.0
        %1951 = vmatpush1.msra.mxu0 0.0
        %1952 = vmatprep.mubr.f32.mxu0 0.0
        %1953 = vmatmul.mubr.f32.gmra.mrb[0].mxu0 %v635
        %v1954 = vpop.f32.mrb[0].mxu0
        %v1955 = vadd.f32 %v1885, %v1954
        %v1956 = vpop.f32.mrb[0].mxu0
        %1957 = vdwg.mxu0
        %1958 = vmatprep.subr.mxu0 0.0
        %1959 = vmatpush1.msra.mxu0 %v547
        %1960 = vmatprep.subr.mxu0 0.0
        %1961 = vmatpush1.msra.mxu0 %v548
        %1962 = vmatprep.subr.mxu0 0.0
        %1963 = vmatpush1.msra.mxu0 %v549
        %1964 = vmatprep.subr.mxu0 0.0
        %1965 = vmatpush1.msra.mxu0 %v550
        %1966 = vmatprep.subr.mxu0 0.0
        %1967 = vmatpush1.msra.mxu0 %v551
        %1968 = vmatprep.subr.mxu0 0.0
        %1969 = vmatpush1.msra.mxu0 %v552
        %1970 = vmatprep.subr.mxu0 0.0
        %1971 = vmatpush1.msra.mxu0 %v553
        %1972 = vmatprep.subr.mxu0 0.0
        %1973 = vmatpush1.msra.mxu0 %v554
        %1974 = vmatprep.subr.mxu0 0.0
        %1975 = vmatpush1.msra.mxu0 %v555
        %1976 = vmatprep.subr.mxu0 0.0
        %1977 = vmatpush1.msra.mxu0 %v556
        %1978 = vmatprep.subr.mxu0 0.0
        %1979 = vmatpush1.msra.mxu0 %v557
        %1980 = vmatprep.subr.mxu0 0.0
        %1981 = vmatpush1.msra.mxu0 %v558
        %1982 = vmatprep.subr.mxu0 0.0
        %1983 = vmatpush1.msra.mxu0 %v559
        %1984 = vmatprep.subr.mxu0 0.0
        %1985 = vmatpush1.msra.mxu0 %v560
        %1986 = vmatprep.subr.mxu0 0.0
        %1987 = vmatpush1.msra.mxu0 %v561
        %1988 = vmatprep.subr.mxu0 0.0
        %1989 = vmatpush1.msra.mxu0 %v562
        %1990 = vmatprep.subr.mxu0 0.0
        %1991 = vmatpush1.msra.mxu0 0.0
        %1992 = vmatprep.subr.mxu0 0.0
        %1993 = vmatpush1.msra.mxu0 0.0
        %1994 = vmatprep.subr.mxu0 0.0
        %1995 = vmatpush1.msra.mxu0 0.0
        %1996 = vmatprep.subr.mxu0 0.0
        %1997 = vmatpush1.msra.mxu0 0.0
        %1998 = vmatprep.subr.mxu0 0.0
        %1999 = vmatpush1.msra.mxu0 0.0
        %2000 = vmatprep.subr.mxu0 0.0
        %2001 = vmatpush1.msra.mxu0 0.0
        %2002 = vmatprep.subr.mxu0 0.0
        %2003 = vmatpush1.msra.mxu0 0.0
        %2004 = vmatprep.subr.mxu0 0.0
        %2005 = vmatpush1.msra.mxu0 0.0
        %2006 = vmatprep.subr.mxu0 0.0
        %2007 = vmatpush1.msra.mxu0 0.0
        %2008 = vmatprep.subr.mxu0 0.0
        %2009 = vmatpush1.msra.mxu0 0.0
        %2010 = vmatprep.subr.mxu0 0.0
        %2011 = vmatpush1.msra.mxu0 0.0
        %2012 = vmatprep.subr.mxu0 0.0
        %2013 = vmatpush1.msra.mxu0 0.0
        %2014 = vmatprep.subr.mxu0 0.0
        %2015 = vmatpush1.msra.mxu0 0.0
        %2016 = vmatprep.subr.mxu0 0.0
        %2017 = vmatpush1.msra.mxu0 0.0
        %2018 = vmatprep.subr.mxu0 0.0
        %2019 = vmatpush1.msra.mxu0 0.0
        %2020 = vmatprep.subr.mxu0 0.0
        %2021 = vmatpush1.msra.mxu0 0.0
        %2022 = vmatprep.mubr.f32.mxu0 0.0
        %2023 = vmatmul.mubr.f32.gmra.mrb[0].mxu0 %v815
        %v2024 = vpop.f32.mrb[0].mxu0
        %v2025 = vadd.f32 0.0, %v2024
        %v2026 = vpop.f32.mrb[0].mxu0
        %2027 = vdwg.mxu0
        %v2028 = vadd.f32 %v1955, %v2025
        %2029 = vmatprep.subr.mxu0 0.0
        %2030 = vmatpush1.msra.mxu0 %v637
        %2031 = vmatprep.subr.mxu0 0.0
        %2032 = vmatpush1.msra.mxu0 %v638
        %2033 = vmatprep.subr.mxu0 0.0
        %2034 = vmatpush1.msra.mxu0 %v639
        %2035 = vmatprep.subr.mxu0 0.0
        %2036 = vmatpush1.msra.mxu0 %v640
        %2037 = vmatprep.subr.mxu0 0.0
        %2038 = vmatpush1.msra.mxu0 %v641
        %2039 = vmatprep.subr.mxu0 0.0
        %2040 = vmatpush1.msra.mxu0 %v642
        %2041 = vmatprep.subr.mxu0 0.0
        %2042 = vmatpush1.msra.mxu0 %v643
        %2043 = vmatprep.subr.mxu0 0.0
        %2044 = vmatpush1.msra.mxu0 %v644
        %2045 = vmatprep.subr.mxu0 0.0
        %2046 = vmatpush1.msra.mxu0 %v645
        %2047 = vmatprep.subr.mxu0 0.0
        %2048 = vmatpush1.msra.mxu0 %v646
        %2049 = vmatprep.subr.mxu0 0.0
        %2050 = vmatpush1.msra.mxu0 %v647
        %2051 = vmatprep.subr.mxu0 0.0
        %2052 = vmatpush1.msra.mxu0 %v648
        %2053 = vmatprep.subr.mxu0 0.0
        %2054 = vmatpush1.msra.mxu0 %v649
        %2055 = vmatprep.subr.mxu0 0.0
        %2056 = vmatpush1.msra.mxu0 %v650
        %2057 = vmatprep.subr.mxu0 0.0
        %2058 = vmatpush1.msra.mxu0 %v651
        %2059 = vmatprep.subr.mxu0 0.0
        %2060 = vmatpush1.msra.mxu0 %v652
        %2061 = vmatprep.subr.mxu0 0.0
        %2062 = vmatpush1.msra.mxu0 0.0
        %2063 = vmatprep.subr.mxu0 0.0
        %2064 = vmatpush1.msra.mxu0 0.0
        %2065 = vmatprep.subr.mxu0 0.0
        %2066 = vmatpush1.msra.mxu0 0.0
        %2067 = vmatprep.subr.mxu0 0.0
        %2068 = vmatpush1.msra.mxu0 0.0
        %2069 = vmatprep.subr.mxu0 0.0
        %2070 = vmatpush1.msra.mxu0 0.0
        %2071 = vmatprep.subr.mxu0 0.0
        %2072 = vmatpush1.msra.mxu0 0.0
        %2073 = vmatprep.subr.mxu0 0.0
        %2074 = vmatpush1.msra.mxu0 0.0
        %2075 = vmatprep.subr.mxu0 0.0
        %2076 = vmatpush1.msra.mxu0 0.0
        %2077 = vmatprep.subr.mxu0 0.0
        %2078 = vmatpush1.msra.mxu0 0.0
        %2079 = vmatprep.subr.mxu0 0.0
        %2080 = vmatpush1.msra.mxu0 0.0
        %2081 = vmatprep.subr.mxu0 0.0
        %2082 = vmatpush1.msra.mxu0 0.0
        %2083 = vmatprep.subr.mxu0 0.0
        %2084 = vmatpush1.msra.mxu0 0.0
        %2085 = vmatprep.subr.mxu0 0.0
        %2086 = vmatpush1.msra.mxu0 0.0
        %2087 = vmatprep.subr.mxu0 0.0
        %2088 = vmatpush1.msra.mxu0 0.0
        %2089 = vmatprep.subr.mxu0 0.0
        %2090 = vmatpush1.msra.mxu0 0.0
        %2091 = vmatprep.subr.mxu0 0.0
        %2092 = vmatpush1.msra.mxu0 0.0
        %2093 = vmatprep.mubr.f32.mxu0 0.0
        %2094 = vmatmul.mubr.f32.gmra.mrb[0].mxu0 %v905
        %v2095 = vpop.f32.mrb[0].mxu0
        %v2096 = vadd.f32 0.0, %v2095
        %v2097 = vpop.f32.mrb[0].mxu0
        %2098 = vdwg.mxu0
        %v2099 = vadd.f32 %v2028, %v2096
        %2100 = vmatprep.subr.mxu0 0.0
        %2101 = vmatpush1.msra.mxu0 %v727
        %2102 = vmatprep.subr.mxu0 0.0
        %2103 = vmatpush1.msra.mxu0 %v728
        %2104 = vmatprep.subr.mxu0 0.0
        %2105 = vmatpush1.msra.mxu0 %v729
        %2106 = vmatprep.subr.mxu0 0.0
        %2107 = vmatpush1.msra.mxu0 %v730
        %2108 = vmatprep.subr.mxu0 0.0
        %2109 = vmatpush1.msra.mxu0 %v731
        %2110 = vmatprep.subr.mxu0 0.0
        %2111 = vmatpush1.msra.mxu0 %v732
        %2112 = vmatprep.subr.mxu0 0.0
        %2113 = vmatpush1.msra.mxu0 %v733
        %2114 = vmatprep.subr.mxu0 0.0
        %2115 = vmatpush1.msra.mxu0 %v734
        %2116 = vmatprep.subr.mxu0 0.0
        %2117 = vmatpush1.msra.mxu0 %v735
        %2118 = vmatprep.subr.mxu0 0.0
        %2119 = vmatpush1.msra.mxu0 %v736
        %2120 = vmatprep.subr.mxu0 0.0
        %2121 = vmatpush1.msra.mxu0 %v737
        %2122 = vmatprep.subr.mxu0 0.0
        %2123 = vmatpush1.msra.mxu0 %v738
        %2124 = vmatprep.subr.mxu0 0.0
        %2125 = vmatpush1.msra.mxu0 %v739
        %2126 = vmatprep.subr.mxu0 0.0
        %2127 = vmatpush1.msra.mxu0 %v740
        %2128 = vmatprep.subr.mxu0 0.0
        %2129 = vmatpush1.msra.mxu0 %v741
        %2130 = vmatprep.subr.mxu0 0.0
        %2131 = vmatpush1.msra.mxu0 %v742
        %2132 = vmatprep.subr.mxu0 0.0
        %2133 = vmatpush1.msra.mxu0 0.0
        %2134 = vmatprep.subr.mxu0 0.0
        %2135 = vmatpush1.msra.mxu0 0.0
        %2136 = vmatprep.subr.mxu0 0.0
        %2137 = vmatpush1.msra.mxu0 0.0
        %2138 = vmatprep.subr.mxu0 0.0
        %2139 = vmatpush1.msra.mxu0 0.0
        %2140 = vmatprep.subr.mxu0 0.0
        %2141 = vmatpush1.msra.mxu0 0.0
        %2142 = vmatprep.subr.mxu0 0.0
        %2143 = vmatpush1.msra.mxu0 0.0
        %2144 = vmatprep.subr.mxu0 0.0
        %2145 = vmatpush1.msra.mxu0 0.0
        %2146 = vmatprep.subr.mxu0 0.0
        %2147 = vmatpush1.msra.mxu0 0.0
        %2148 = vmatprep.subr.mxu0 0.0
        %2149 = vmatpush1.msra.mxu0 0.0
        %2150 = vmatprep.subr.mxu0 0.0
        %2151 = vmatpush1.msra.mxu0 0.0
        %2152 = vmatprep.subr.mxu0 0.0
        %2153 = vmatpush1.msra.mxu0 0.0
        %2154 = vmatprep.subr.mxu0 0.0
        %2155 = vmatpush1.msra.mxu0 0.0
        %2156 = vmatprep.subr.mxu0 0.0
        %2157 = vmatpush1.msra.mxu0 0.0
        %2158 = vmatprep.subr.mxu0 0.0
        %2159 = vmatpush1.msra.mxu0 0.0
        %2160 = vmatprep.subr.mxu0 0.0
        %2161 = vmatpush1.msra.mxu0 0.0
        %2162 = vmatprep.subr.mxu0 0.0
        %2163 = vmatpush1.msra.mxu0 0.0
        %2164 = vmatprep.mubr.f32.mxu0 0.0
        %2165 = vmatmul.mubr.f32.gmra.mrb[0].mxu0 %v995
        %v2166 = vpop.f32.mrb[0].mxu0
        %v2167 = vadd.f32 0.0, %v2166
        %v2168 = vpop.f32.mrb[0].mxu0
        %2169 = vdwg.mxu0
        %v2170 = vadd.f32 %v2099, %v2167
        %2171 = vmatprep.subr.mxu0 0.0
        %2172 = vmatpush1.msra.mxu0 %v817
        %2173 = vmatprep.subr.mxu0 0.0
        %2174 = vmatpush1.msra.mxu0 %v818
        %2175 = vmatprep.subr.mxu0 0.0
        %2176 = vmatpush1.msra.mxu0 %v819
        %2177 = vmatprep.subr.mxu0 0.0
        %2178 = vmatpush1.msra.mxu0 %v820
        %2179 = vmatprep.subr.mxu0 0.0
        %2180 = vmatpush1.msra.mxu0 %v821
        %2181 = vmatprep.subr.mxu0 0.0
        %2182 = vmatpush1.msra.mxu0 %v822
        %2183 = vmatprep.subr.mxu0 0.0
        %2184 = vmatpush1.msra.mxu0 %v823
        %2185 = vmatprep.subr.mxu0 0.0
        %2186 = vmatpush1.msra.mxu0 %v824
        %2187 = vmatprep.subr.mxu0 0.0
        %2188 = vmatpush1.msra.mxu0 %v825
        %2189 = vmatprep.subr.mxu0 0.0
        %2190 = vmatpush1.msra.mxu0 %v826
        %2191 = vmatprep.subr.mxu0 0.0
        %2192 = vmatpush1.msra.mxu0 %v827
        %2193 = vmatprep.subr.mxu0 0.0
        %2194 = vmatpush1.msra.mxu0 %v828
        %2195 = vmatprep.subr.mxu0 0.0
        %2196 = vmatpush1.msra.mxu0 %v829
        %2197 = vmatprep.subr.mxu0 0.0
        %2198 = vmatpush1.msra.mxu0 %v830
        %2199 = vmatprep.subr.mxu0 0.0
        %2200 = vmatpush1.msra.mxu0 %v831
        %2201 = vmatprep.subr.mxu0 0.0
        %2202 = vmatpush1.msra.mxu0 %v832
        %2203 = vmatprep.subr.mxu0 0.0
        %2204 = vmatpush1.msra.mxu0 0.0
        %2205 = vmatprep.subr.mxu0 0.0
        %2206 = vmatpush1.msra.mxu0 0.0
        %2207 = vmatprep.subr.mxu0 0.0
        %2208 = vmatpush1.msra.mxu0 0.0
        %2209 = vmatprep.subr.mxu0 0.0
        %2210 = vmatpush1.msra.mxu0 0.0
        %2211 = vmatprep.subr.mxu0 0.0
        %2212 = vmatpush1.msra.mxu0 0.0
        %2213 = vmatprep.subr.mxu0 0.0
        %2214 = vmatpush1.msra.mxu0 0.0
        %2215 = vmatprep.subr.mxu0 0.0
        %2216 = vmatpush1.msra.mxu0 0.0
        %2217 = vmatprep.subr.mxu0 0.0
        %2218 = vmatpush1.msra.mxu0 0.0
        %2219 = vmatprep.subr.mxu0 0.0
        %2220 = vmatpush1.msra.mxu0 0.0
        %2221 = vmatprep.subr.mxu0 0.0
        %2222 = vmatpush1.msra.mxu0 0.0
        %2223 = vmatprep.subr.mxu0 0.0
        %2224 = vmatpush1.msra.mxu0 0.0
        %2225 = vmatprep.subr.mxu0 0.0
        %2226 = vmatpush1.msra.mxu0 0.0
        %2227 = vmatprep.subr.mxu0 0.0
        %2228 = vmatpush1.msra.mxu0 0.0
        %2229 = vmatprep.subr.mxu0 0.0
        %2230 = vmatpush1.msra.mxu0 0.0
        %2231 = vmatprep.subr.mxu0 0.0
        %2232 = vmatpush1.msra.mxu0 0.0
        %2233 = vmatprep.subr.mxu0 0.0
        %2234 = vmatpush1.msra.mxu0 0.0
        %2235 = vmatprep.mubr.f32.mxu0 0.0
        %2236 = vmatmul.mubr.f32.gmra.mrb[0].mxu0 %v1085
        %v2237 = vpop.f32.mrb[0].mxu0
        %v2238 = vadd.f32 0.0, %v2237
        %v2239 = vpop.f32.mrb[0].mxu0
        %2240 = vdwg.mxu0
        %v2241 = vadd.f32 %v2170, %v2238
        %s2242 = scalar_lea.vmem %s367, 48
        %v2243 = vld [vmem:[%s2242] sm:$0xf]
        %2244 = vmatprep.subr.mxu0 0.0
        %2245 = vmatpush1.msra.mxu0 %v907
        %2246 = vmatprep.subr.mxu0 0.0
        %2247 = vmatpush1.msra.mxu0 %v908
        %2248 = vmatprep.subr.mxu0 0.0
        %2249 = vmatpush1.msra.mxu0 %v909
        %2250 = vmatprep.subr.mxu0 0.0
        %2251 = vmatpush1.msra.mxu0 %v910
        %2252 = vmatprep.subr.mxu0 0.0
        %2253 = vmatpush1.msra.mxu0 %v911
        %2254 = vmatprep.subr.mxu0 0.0
        %2255 = vmatpush1.msra.mxu0 %v912
        %2256 = vmatprep.subr.mxu0 0.0
        %2257 = vmatpush1.msra.mxu0 %v913
        %2258 = vmatprep.subr.mxu0 0.0
        %2259 = vmatpush1.msra.mxu0 %v914
        %2260 = vmatprep.subr.mxu0 0.0
        %2261 = vmatpush1.msra.mxu0 %v915
        %2262 = vmatprep.subr.mxu0 0.0
        %2263 = vmatpush1.msra.mxu0 %v916
        %2264 = vmatprep.subr.mxu0 0.0
        %2265 = vmatpush1.msra.mxu0 %v917
        %2266 = vmatprep.subr.mxu0 0.0
        %2267 = vmatpush1.msra.mxu0 %v918
        %2268 = vmatprep.subr.mxu0 0.0
        %2269 = vmatpush1.msra.mxu0 %v919
        %2270 = vmatprep.subr.mxu0 0.0
        %2271 = vmatpush1.msra.mxu0 %v920
        %2272 = vmatprep.subr.mxu0 0.0
        %2273 = vmatpush1.msra.mxu0 %v921
        %2274 = vmatprep.subr.mxu0 0.0
        %2275 = vmatpush1.msra.mxu0 %v922
        %2276 = vmatprep.subr.mxu0 0.0
        %2277 = vmatpush1.msra.mxu0 0.0
        %2278 = vmatprep.subr.mxu0 0.0
        %2279 = vmatpush1.msra.mxu0 0.0
        %2280 = vmatprep.subr.mxu0 0.0
        %2281 = vmatpush1.msra.mxu0 0.0
        %2282 = vmatprep.subr.mxu0 0.0
        %2283 = vmatpush1.msra.mxu0 0.0
        %2284 = vmatprep.subr.mxu0 0.0
        %2285 = vmatpush1.msra.mxu0 0.0
        %2286 = vmatprep.subr.mxu0 0.0
        %2287 = vmatpush1.msra.mxu0 0.0
        %2288 = vmatprep.subr.mxu0 0.0
        %2289 = vmatpush1.msra.mxu0 0.0
        %2290 = vmatprep.subr.mxu0 0.0
        %2291 = vmatpush1.msra.mxu0 0.0
        %2292 = vmatprep.subr.mxu0 0.0
        %2293 = vmatpush1.msra.mxu0 0.0
        %2294 = vmatprep.subr.mxu0 0.0
        %2295 = vmatpush1.msra.mxu0 0.0
        %2296 = vmatprep.subr.mxu0 0.0
        %2297 = vmatpush1.msra.mxu0 0.0
        %2298 = vmatprep.subr.mxu0 0.0
        %2299 = vmatpush1.msra.mxu0 0.0
        %2300 = vmatprep.subr.mxu0 0.0
        %2301 = vmatpush1.msra.mxu0 0.0
        %2302 = vmatprep.subr.mxu0 0.0
        %2303 = vmatpush1.msra.mxu0 0.0
        %2304 = vmatprep.subr.mxu0 0.0
        %2305 = vmatpush1.msra.mxu0 0.0
        %2306 = vmatprep.subr.mxu0 0.0
        %2307 = vmatpush1.msra.mxu0 0.0
        %2308 = vmatprep.mubr.f32.mxu0 0.0
        %2309 = vmatmul.mubr.f32.gmra.mrb[0].mxu0 %v2243
        %v2310 = vpop.f32.mrb[0].mxu0
        %v2311 = vadd.f32 0.0, %v2310
        %v2312 = vpop.f32.mrb[0].mxu0
        %2313 = vdwg.mxu0
        %v2314 = vadd.f32 %v2241, %v2311
        %s2315 = scalar_lea.vmem %s367, 52
        %v2316 = vld [vmem:[%s2315] sm:$0xf]
        %2317 = vmatprep.subr.mxu0 0.0
        %2318 = vmatpush1.msra.mxu0 %v997
        %2319 = vmatprep.subr.mxu0 0.0
        %2320 = vmatpush1.msra.mxu0 %v998
        %2321 = vmatprep.subr.mxu0 0.0
        %2322 = vmatpush1.msra.mxu0 %v999
        %2323 = vmatprep.subr.mxu0 0.0
        %2324 = vmatpush1.msra.mxu0 %v1000
        %2325 = vmatprep.subr.mxu0 0.0
        %2326 = vmatpush1.msra.mxu0 %v1001
        %2327 = vmatprep.subr.mxu0 0.0
        %2328 = vmatpush1.msra.mxu0 %v1002
        %2329 = vmatprep.subr.mxu0 0.0
        %2330 = vmatpush1.msra.mxu0 %v1003
        %2331 = vmatprep.subr.mxu0 0.0
        %2332 = vmatpush1.msra.mxu0 %v1004
        %2333 = vmatprep.subr.mxu0 0.0
        %2334 = vmatpush1.msra.mxu0 %v1005
        %2335 = vmatprep.subr.mxu0 0.0
        %2336 = vmatpush1.msra.mxu0 %v1006
        %2337 = vmatprep.subr.mxu0 0.0
        %2338 = vmatpush1.msra.mxu0 %v1007
        %2339 = vmatprep.subr.mxu0 0.0
        %2340 = vmatpush1.msra.mxu0 %v1008
        %2341 = vmatprep.subr.mxu0 0.0
        %2342 = vmatpush1.msra.mxu0 %v1009
        %2343 = vmatprep.subr.mxu0 0.0
        %2344 = vmatpush1.msra.mxu0 %v1010
        %2345 = vmatprep.subr.mxu0 0.0
        %2346 = vmatpush1.msra.mxu0 %v1011
        %2347 = vmatprep.subr.mxu0 0.0
        %2348 = vmatpush1.msra.mxu0 %v1012
        %2349 = vmatprep.subr.mxu0 0.0
        %2350 = vmatpush1.msra.mxu0 0.0
        %2351 = vmatprep.subr.mxu0 0.0
        %2352 = vmatpush1.msra.mxu0 0.0
        %2353 = vmatprep.subr.mxu0 0.0
        %2354 = vmatpush1.msra.mxu0 0.0
        %2355 = vmatprep.subr.mxu0 0.0
        %2356 = vmatpush1.msra.mxu0 0.0
        %2357 = vmatprep.subr.mxu0 0.0
        %2358 = vmatpush1.msra.mxu0 0.0
        %2359 = vmatprep.subr.mxu0 0.0
        %2360 = vmatpush1.msra.mxu0 0.0
        %2361 = vmatprep.subr.mxu0 0.0
        %2362 = vmatpush1.msra.mxu0 0.0
        %2363 = vmatprep.subr.mxu0 0.0
        %2364 = vmatpush1.msra.mxu0 0.0
        %2365 = vmatprep.subr.mxu0 0.0
        %2366 = vmatpush1.msra.mxu0 0.0
        %2367 = vmatprep.subr.mxu0 0.0
        %2368 = vmatpush1.msra.mxu0 0.0
        %2369 = vmatprep.subr.mxu0 0.0
        %2370 = vmatpush1.msra.mxu0 0.0
        %2371 = vmatprep.subr.mxu0 0.0
        %2372 = vmatpush1.msra.mxu0 0.0
        %2373 = vmatprep.subr.mxu0 0.0
        %2374 = vmatpush1.msra.mxu0 0.0
        %2375 = vmatprep.subr.mxu0 0.0
        %2376 = vmatpush1.msra.mxu0 0.0
        %2377 = vmatprep.subr.mxu0 0.0
        %2378 = vmatpush1.msra.mxu0 0.0
        %2379 = vmatprep.subr.mxu0 0.0
        %2380 = vmatpush1.msra.mxu0 0.0
        %2381 = vmatprep.mubr.f32.mxu0 0.0
        %2382 = vmatmul.mubr.f32.gmra.mrb[0].mxu0 %v2316
        %v2383 = vpop.f32.mrb[0].mxu0
        %v2384 = vadd.f32 0.0, %v2383
        %v2385 = vpop.f32.mrb[0].mxu0
        %2386 = vdwg.mxu0
        %v2387 = vadd.f32 %v2314, %v2384
        %s2388 = scalar_lea.vmem %s367, 56
        %v2389 = vld [vmem:[%s2388] sm:$0xf]
        %2390 = vmatprep.subr.mxu0 0.0
        %2391 = vmatpush1.msra.mxu0 %v1087
        %2392 = vmatprep.subr.mxu0 0.0
        %2393 = vmatpush1.msra.mxu0 %v1088
        %2394 = vmatprep.subr.mxu0 0.0
        %2395 = vmatpush1.msra.mxu0 %v1089
        %2396 = vmatprep.subr.mxu0 0.0
        %2397 = vmatpush1.msra.mxu0 %v1090
        %2398 = vmatprep.subr.mxu0 0.0
        %2399 = vmatpush1.msra.mxu0 %v1091
        %2400 = vmatprep.subr.mxu0 0.0
        %2401 = vmatpush1.msra.mxu0 %v1092
        %2402 = vmatprep.subr.mxu0 0.0
        %2403 = vmatpush1.msra.mxu0 %v1093
        %2404 = vmatprep.subr.mxu0 0.0
        %2405 = vmatpush1.msra.mxu0 %v1094
        %2406 = vmatprep.subr.mxu0 0.0
        %2407 = vmatpush1.msra.mxu0 %v1095
        %2408 = vmatprep.subr.mxu0 0.0
        %2409 = vmatpush1.msra.mxu0 %v1096
        %2410 = vmatprep.subr.mxu0 0.0
        %2411 = vmatpush1.msra.mxu0 %v1097
        %2412 = vmatprep.subr.mxu0 0.0
        %2413 = vmatpush1.msra.mxu0 %v1098
        %2414 = vmatprep.subr.mxu0 0.0
        %2415 = vmatpush1.msra.mxu0 %v1099
        %2416 = vmatprep.subr.mxu0 0.0
        %2417 = vmatpush1.msra.mxu0 %v1100
        %2418 = vmatprep.subr.mxu0 0.0
        %2419 = vmatpush1.msra.mxu0 %v1101
        %2420 = vmatprep.subr.mxu0 0.0
        %2421 = vmatpush1.msra.mxu0 %v1102
        %2422 = vmatprep.subr.mxu0 0.0
        %2423 = vmatpush1.msra.mxu0 0.0
        %2424 = vmatprep.subr.mxu0 0.0
        %2425 = vmatpush1.msra.mxu0 0.0
        %2426 = vmatprep.subr.mxu0 0.0
        %2427 = vmatpush1.msra.mxu0 0.0
        %2428 = vmatprep.subr.mxu0 0.0
        %2429 = vmatpush1.msra.mxu0 0.0
        %2430 = vmatprep.subr.mxu0 0.0
        %2431 = vmatpush1.msra.mxu0 0.0
        %2432 = vmatprep.subr.mxu0 0.0
        %2433 = vmatpush1.msra.mxu0 0.0
        %2434 = vmatprep.subr.mxu0 0.0
        %2435 = vmatpush1.msra.mxu0 0.0
        %2436 = vmatprep.subr.mxu0 0.0
        %2437 = vmatpush1.msra.mxu0 0.0
        %2438 = vmatprep.subr.mxu0 0.0
        %2439 = vmatpush1.msra.mxu0 0.0
        %2440 = vmatprep.subr.mxu0 0.0
        %2441 = vmatpush1.msra.mxu0 0.0
        %2442 = vmatprep.subr.mxu0 0.0
        %2443 = vmatpush1.msra.mxu0 0.0
        %2444 = vmatprep.subr.mxu0 0.0
        %2445 = vmatpush1.msra.mxu0 0.0
        %2446 = vmatprep.subr.mxu0 0.0
        %2447 = vmatpush1.msra.mxu0 0.0
        %2448 = vmatprep.subr.mxu0 0.0
        %2449 = vmatpush1.msra.mxu0 0.0
        %2450 = vmatprep.subr.mxu0 0.0
        %2451 = vmatpush1.msra.mxu0 0.0
        %2452 = vmatprep.subr.mxu0 0.0
        %2453 = vmatpush1.msra.mxu0 0.0
        %2454 = vmatprep.mubr.f32.mxu0 0.0
        %2455 = vmatmul.mubr.f32.gmra.mrb[0].mxu0 %v2389
        %v2456 = vpop.f32.mrb[0].mxu0
        %v2457 = vadd.f32 0.0, %v2456
        %v2458 = vpop.f32.mrb[0].mxu0
        %2459 = vdwg.mxu0
        %v2460 = vadd.f32 %v2387, %v2457
        %v2461 = vmax.f32 %v1817, %v2460
        %2462 = vmatprep.subr.mxu0 0.0
        %2463 = vmatpush1.msra.mxu0 %v388
        %2464 = vmatprep.subr.mxu0 0.0
        %2465 = vmatpush1.msra.mxu0 %v389
        %2466 = vmatprep.subr.mxu0 0.0
        %2467 = vmatpush1.msra.mxu0 %v390
        %2468 = vmatprep.subr.mxu0 0.0
        %2469 = vmatpush1.msra.mxu0 %v391
        %2470 = vmatprep.subr.mxu0 0.0
        %2471 = vmatpush1.msra.mxu0 %v392
        %2472 = vmatprep.subr.mxu0 0.0
        %2473 = vmatpush1.msra.mxu0 %v393
        %2474 = vmatprep.subr.mxu0 0.0
        %2475 = vmatpush1.msra.mxu0 %v394
        %2476 = vmatprep.subr.mxu0 0.0
        %2477 = vmatpush1.msra.mxu0 %v395
        %2478 = vmatprep.subr.mxu0 0.0
        %2479 = vmatpush1.msra.mxu0 %v396
        %2480 = vmatprep.subr.mxu0 0.0
        %2481 = vmatpush1.msra.mxu0 %v397
        %2482 = vmatprep.subr.mxu0 0.0
        %2483 = vmatpush1.msra.mxu0 %v398
        %2484 = vmatprep.subr.mxu0 0.0
        %2485 = vmatpush1.msra.mxu0 %v399
        %2486 = vmatprep.subr.mxu0 0.0
        %2487 = vmatpush1.msra.mxu0 %v400
        %2488 = vmatprep.subr.mxu0 0.0
        %2489 = vmatpush1.msra.mxu0 %v401
        %2490 = vmatprep.subr.mxu0 0.0
        %2491 = vmatpush1.msra.mxu0 %v402
        %2492 = vmatprep.subr.mxu0 0.0
        %2493 = vmatpush1.msra.mxu0 %v403
        %2494 = vmatprep.subr.mxu0 0.0
        %2495 = vmatpush1.msra.mxu0 0.0
        %2496 = vmatprep.subr.mxu0 0.0
        %2497 = vmatpush1.msra.mxu0 0.0
        %2498 = vmatprep.subr.mxu0 0.0
        %2499 = vmatpush1.msra.mxu0 0.0
        %2500 = vmatprep.subr.mxu0 0.0
        %2501 = vmatpush1.msra.mxu0 0.0
        %2502 = vmatprep.subr.mxu0 0.0
        %2503 = vmatpush1.msra.mxu0 0.0
        %2504 = vmatprep.subr.mxu0 0.0
        %2505 = vmatpush1.msra.mxu0 0.0
        %2506 = vmatprep.subr.mxu0 0.0
        %2507 = vmatpush1.msra.mxu0 0.0
        %2508 = vmatprep.subr.mxu0 0.0
        %2509 = vmatpush1.msra.mxu0 0.0
        %2510 = vmatprep.subr.mxu0 0.0
        %2511 = vmatpush1.msra.mxu0 0.0
        %2512 = vmatprep.subr.mxu0 0.0
        %2513 = vmatpush1.msra.mxu0 0.0
        %2514 = vmatprep.subr.mxu0 0.0
        %2515 = vmatpush1.msra.mxu0 0.0
        %2516 = vmatprep.subr.mxu0 0.0
        %2517 = vmatpush1.msra.mxu0 0.0
        %2518 = vmatprep.subr.mxu0 0.0
        %2519 = vmatpush1.msra.mxu0 0.0
        %2520 = vmatprep.subr.mxu0 0.0
        %2521 = vmatpush1.msra.mxu0 0.0
        %2522 = vmatprep.subr.mxu0 0.0
        %2523 = vmatpush1.msra.mxu0 0.0
        %2524 = vmatprep.subr.mxu0 0.0
        %2525 = vmatpush1.msra.mxu0 0.0
        %2526 = vmatprep.mubr.f32.mxu0 0.0
        %2527 = vmatmul.mubr.f32.gmra.mrb[0].mxu0 %v815
        %v2528 = vpop.f32.mrb[0].mxu0
        %v2529 = vadd.f32 0.0, %v2528
        %v2530 = vpop.f32.mrb[0].mxu0
        %2531 = vdwg.mxu0
        %2532 = vmatprep.subr.mxu0 0.0
        %2533 = vmatpush1.msra.mxu0 %v369
        %2534 = vmatprep.subr.mxu0 0.0
        %2535 = vmatpush1.msra.mxu0 %v370
        %2536 = vmatprep.subr.mxu0 0.0
        %2537 = vmatpush1.msra.mxu0 %v371
        %2538 = vmatprep.subr.mxu0 0.0
        %2539 = vmatpush1.msra.mxu0 %v372
        %2540 = vmatprep.subr.mxu0 0.0
        %2541 = vmatpush1.msra.mxu0 %v373
        %2542 = vmatprep.subr.mxu0 0.0
        %2543 = vmatpush1.msra.mxu0 %v374
        %2544 = vmatprep.subr.mxu0 0.0
        %2545 = vmatpush1.msra.mxu0 %v375
        %2546 = vmatprep.subr.mxu0 0.0
        %2547 = vmatpush1.msra.mxu0 %v376
        %2548 = vmatprep.subr.mxu0 0.0
        %2549 = vmatpush1.msra.mxu0 %v377
        %2550 = vmatprep.subr.mxu0 0.0
        %2551 = vmatpush1.msra.mxu0 %v378
        %2552 = vmatprep.subr.mxu0 0.0
        %2553 = vmatpush1.msra.mxu0 %v379
        %2554 = vmatprep.subr.mxu0 0.0
        %2555 = vmatpush1.msra.mxu0 %v380
        %2556 = vmatprep.subr.mxu0 0.0
        %2557 = vmatpush1.msra.mxu0 %v381
        %2558 = vmatprep.subr.mxu0 0.0
        %2559 = vmatpush1.msra.mxu0 %v382
        %2560 = vmatprep.subr.mxu0 0.0
        %2561 = vmatpush1.msra.mxu0 %v383
        %2562 = vmatprep.subr.mxu0 0.0
        %2563 = vmatpush1.msra.mxu0 %v384
        %2564 = vmatprep.subr.mxu0 0.0
        %2565 = vmatpush1.msra.mxu0 0.0
        %2566 = vmatprep.subr.mxu0 0.0
        %2567 = vmatpush1.msra.mxu0 0.0
        %2568 = vmatprep.subr.mxu0 0.0
        %2569 = vmatpush1.msra.mxu0 0.0
        %2570 = vmatprep.subr.mxu0 0.0
        %2571 = vmatpush1.msra.mxu0 0.0
        %2572 = vmatprep.subr.mxu0 0.0
        %2573 = vmatpush1.msra.mxu0 0.0
        %2574 = vmatprep.subr.mxu0 0.0
        %2575 = vmatpush1.msra.mxu0 0.0
        %2576 = vmatprep.subr.mxu0 0.0
        %2577 = vmatpush1.msra.mxu0 0.0
        %2578 = vmatprep.subr.mxu0 0.0
        %2579 = vmatpush1.msra.mxu0 0.0
        %2580 = vmatprep.subr.mxu0 0.0
        %2581 = vmatpush1.msra.mxu0 0.0
        %2582 = vmatprep.subr.mxu0 0.0
        %2583 = vmatpush1.msra.mxu0 0.0
        %2584 = vmatprep.subr.mxu0 0.0
        %2585 = vmatpush1.msra.mxu0 0.0
        %2586 = vmatprep.subr.mxu0 0.0
        %2587 = vmatpush1.msra.mxu0 0.0
        %2588 = vmatprep.subr.mxu0 0.0
        %2589 = vmatpush1.msra.mxu0 0.0
        %2590 = vmatprep.subr.mxu0 0.0
        %2591 = vmatpush1.msra.mxu0 0.0
        %2592 = vmatprep.subr.mxu0 0.0
        %2593 = vmatpush1.msra.mxu0 0.0
        %2594 = vmatprep.subr.mxu0 0.0
        %2595 = vmatpush1.msra.mxu0 0.0
        %2596 = vmatprep.mubr.f32.mxu0 0.0
        %2597 = vmatmul.mubr.f32.gmra.mrb[0].mxu0 %v725
        %v2598 = vpop.f32.mrb[0].mxu0
        %v2599 = vadd.f32 %v2529, %v2598
        %v2600 = vpop.f32.mrb[0].mxu0
        %2601 = vdwg.mxu0
        %2602 = vmatprep.subr.mxu0 0.0
        %2603 = vmatpush1.msra.mxu0 %v547
        %2604 = vmatprep.subr.mxu0 0.0
        %2605 = vmatpush1.msra.mxu0 %v548
        %2606 = vmatprep.subr.mxu0 0.0
        %2607 = vmatpush1.msra.mxu0 %v549
        %2608 = vmatprep.subr.mxu0 0.0
        %2609 = vmatpush1.msra.mxu0 %v550
        %2610 = vmatprep.subr.mxu0 0.0
        %2611 = vmatpush1.msra.mxu0 %v551
        %2612 = vmatprep.subr.mxu0 0.0
        %2613 = vmatpush1.msra.mxu0 %v552
        %2614 = vmatprep.subr.mxu0 0.0
        %2615 = vmatpush1.msra.mxu0 %v553
        %2616 = vmatprep.subr.mxu0 0.0
        %2617 = vmatpush1.msra.mxu0 %v554
        %2618 = vmatprep.subr.mxu0 0.0
        %2619 = vmatpush1.msra.mxu0 %v555
        %2620 = vmatprep.subr.mxu0 0.0
        %2621 = vmatpush1.msra.mxu0 %v556
        %2622 = vmatprep.subr.mxu0 0.0
        %2623 = vmatpush1.msra.mxu0 %v557
        %2624 = vmatprep.subr.mxu0 0.0
        %2625 = vmatpush1.msra.mxu0 %v558
        %2626 = vmatprep.subr.mxu0 0.0
        %2627 = vmatpush1.msra.mxu0 %v559
        %2628 = vmatprep.subr.mxu0 0.0
        %2629 = vmatpush1.msra.mxu0 %v560
        %2630 = vmatprep.subr.mxu0 0.0
        %2631 = vmatpush1.msra.mxu0 %v561
        %2632 = vmatprep.subr.mxu0 0.0
        %2633 = vmatpush1.msra.mxu0 %v562
        %2634 = vmatprep.subr.mxu0 0.0
        %2635 = vmatpush1.msra.mxu0 0.0
        %2636 = vmatprep.subr.mxu0 0.0
        %2637 = vmatpush1.msra.mxu0 0.0
        %2638 = vmatprep.subr.mxu0 0.0
        %2639 = vmatpush1.msra.mxu0 0.0
        %2640 = vmatprep.subr.mxu0 0.0
        %2641 = vmatpush1.msra.mxu0 0.0
        %2642 = vmatprep.subr.mxu0 0.0
        %2643 = vmatpush1.msra.mxu0 0.0
        %2644 = vmatprep.subr.mxu0 0.0
        %2645 = vmatpush1.msra.mxu0 0.0
        %2646 = vmatprep.subr.mxu0 0.0
        %2647 = vmatpush1.msra.mxu0 0.0
        %2648 = vmatprep.subr.mxu0 0.0
        %2649 = vmatpush1.msra.mxu0 0.0
        %2650 = vmatprep.subr.mxu0 0.0
        %2651 = vmatpush1.msra.mxu0 0.0
        %2652 = vmatprep.subr.mxu0 0.0
        %2653 = vmatpush1.msra.mxu0 0.0
        %2654 = vmatprep.subr.mxu0 0.0
        %2655 = vmatpush1.msra.mxu0 0.0
        %2656 = vmatprep.subr.mxu0 0.0
        %2657 = vmatpush1.msra.mxu0 0.0
        %2658 = vmatprep.subr.mxu0 0.0
        %2659 = vmatpush1.msra.mxu0 0.0
        %2660 = vmatprep.subr.mxu0 0.0
        %2661 = vmatpush1.msra.mxu0 0.0
        %2662 = vmatprep.subr.mxu0 0.0
        %2663 = vmatpush1.msra.mxu0 0.0
        %2664 = vmatprep.subr.mxu0 0.0
        %2665 = vmatpush1.msra.mxu0 0.0
        %2666 = vmatprep.mubr.f32.mxu0 0.0
        %2667 = vmatmul.mubr.f32.gmra.mrb[0].mxu0 %v1530
        %v2668 = vpop.f32.mrb[0].mxu0
        %v2669 = vadd.f32 0.0, %v2668
        %v2670 = vpop.f32.mrb[0].mxu0
        %2671 = vdwg.mxu0
        %v2672 = vadd.f32 %v2599, %v2669
        %2673 = vmatprep.subr.mxu0 0.0
        %2674 = vmatpush1.msra.mxu0 %v637
        %2675 = vmatprep.subr.mxu0 0.0
        %2676 = vmatpush1.msra.mxu0 %v638
        %2677 = vmatprep.subr.mxu0 0.0
        %2678 = vmatpush1.msra.mxu0 %v639
        %2679 = vmatprep.subr.mxu0 0.0
        %2680 = vmatpush1.msra.mxu0 %v640
        %2681 = vmatprep.subr.mxu0 0.0
        %2682 = vmatpush1.msra.mxu0 %v641
        %2683 = vmatprep.subr.mxu0 0.0
        %2684 = vmatpush1.msra.mxu0 %v642
        %2685 = vmatprep.subr.mxu0 0.0
        %2686 = vmatpush1.msra.mxu0 %v643
        %2687 = vmatprep.subr.mxu0 0.0
        %2688 = vmatpush1.msra.mxu0 %v644
        %2689 = vmatprep.subr.mxu0 0.0
        %2690 = vmatpush1.msra.mxu0 %v645
        %2691 = vmatprep.subr.mxu0 0.0
        %2692 = vmatpush1.msra.mxu0 %v646
        %2693 = vmatprep.subr.mxu0 0.0
        %2694 = vmatpush1.msra.mxu0 %v647
        %2695 = vmatprep.subr.mxu0 0.0
        %2696 = vmatpush1.msra.mxu0 %v648
        %2697 = vmatprep.subr.mxu0 0.0
        %2698 = vmatpush1.msra.mxu0 %v649
        %2699 = vmatprep.subr.mxu0 0.0
        %2700 = vmatpush1.msra.mxu0 %v650
        %2701 = vmatprep.subr.mxu0 0.0
        %2702 = vmatpush1.msra.mxu0 %v651
        %2703 = vmatprep.subr.mxu0 0.0
        %2704 = vmatpush1.msra.mxu0 %v652
        %2705 = vmatprep.subr.mxu0 0.0
        %2706 = vmatpush1.msra.mxu0 0.0
        %2707 = vmatprep.subr.mxu0 0.0
        %2708 = vmatpush1.msra.mxu0 0.0
        %2709 = vmatprep.subr.mxu0 0.0
        %2710 = vmatpush1.msra.mxu0 0.0
        %2711 = vmatprep.subr.mxu0 0.0
        %2712 = vmatpush1.msra.mxu0 0.0
        %2713 = vmatprep.subr.mxu0 0.0
        %2714 = vmatpush1.msra.mxu0 0.0
        %2715 = vmatprep.subr.mxu0 0.0
        %2716 = vmatpush1.msra.mxu0 0.0
        %2717 = vmatprep.subr.mxu0 0.0
        %2718 = vmatpush1.msra.mxu0 0.0
        %2719 = vmatprep.subr.mxu0 0.0
        %2720 = vmatpush1.msra.mxu0 0.0
        %2721 = vmatprep.subr.mxu0 0.0
        %2722 = vmatpush1.msra.mxu0 0.0
        %2723 = vmatprep.subr.mxu0 0.0
        %2724 = vmatpush1.msra.mxu0 0.0
        %2725 = vmatprep.subr.mxu0 0.0
        %2726 = vmatpush1.msra.mxu0 0.0
        %2727 = vmatprep.subr.mxu0 0.0
        %2728 = vmatpush1.msra.mxu0 0.0
        %2729 = vmatprep.subr.mxu0 0.0
        %2730 = vmatpush1.msra.mxu0 0.0
        %2731 = vmatprep.subr.mxu0 0.0
        %2732 = vmatpush1.msra.mxu0 0.0
        %2733 = vmatprep.subr.mxu0 0.0
        %2734 = vmatpush1.msra.mxu0 0.0
        %2735 = vmatprep.subr.mxu0 0.0
        %2736 = vmatpush1.msra.mxu0 0.0
        %2737 = vmatprep.mubr.f32.mxu0 0.0
        %2738 = vmatmul.mubr.f32.gmra.mrb[0].mxu0 %v995
        %v2739 = vpop.f32.mrb[0].mxu0
        %v2740 = vadd.f32 0.0, %v2739
        %v2741 = vpop.f32.mrb[0].mxu0
        %2742 = vdwg.mxu0
        %v2743 = vadd.f32 %v2672, %v2740
        %2744 = vmatprep.subr.mxu0 0.0
        %2745 = vmatpush1.msra.mxu0 %v727
        %2746 = vmatprep.subr.mxu0 0.0
        %2747 = vmatpush1.msra.mxu0 %v728
        %2748 = vmatprep.subr.mxu0 0.0
        %2749 = vmatpush1.msra.mxu0 %v729
        %2750 = vmatprep.subr.mxu0 0.0
        %2751 = vmatpush1.msra.mxu0 %v730
        %2752 = vmatprep.subr.mxu0 0.0
        %2753 = vmatpush1.msra.mxu0 %v731
        %2754 = vmatprep.subr.mxu0 0.0
        %2755 = vmatpush1.msra.mxu0 %v732
        %2756 = vmatprep.subr.mxu0 0.0
        %2757 = vmatpush1.msra.mxu0 %v733
        %2758 = vmatprep.subr.mxu0 0.0
        %2759 = vmatpush1.msra.mxu0 %v734
        %2760 = vmatprep.subr.mxu0 0.0
        %2761 = vmatpush1.msra.mxu0 %v735
        %2762 = vmatprep.subr.mxu0 0.0
        %2763 = vmatpush1.msra.mxu0 %v736
        %2764 = vmatprep.subr.mxu0 0.0
        %2765 = vmatpush1.msra.mxu0 %v737
        %2766 = vmatprep.subr.mxu0 0.0
        %2767 = vmatpush1.msra.mxu0 %v738
        %2768 = vmatprep.subr.mxu0 0.0
        %2769 = vmatpush1.msra.mxu0 %v739
        %2770 = vmatprep.subr.mxu0 0.0
        %2771 = vmatpush1.msra.mxu0 %v740
        %2772 = vmatprep.subr.mxu0 0.0
        %2773 = vmatpush1.msra.mxu0 %v741
        %2774 = vmatprep.subr.mxu0 0.0
        %2775 = vmatpush1.msra.mxu0 %v742
        %2776 = vmatprep.subr.mxu0 0.0
        %2777 = vmatpush1.msra.mxu0 0.0
        %2778 = vmatprep.subr.mxu0 0.0
        %2779 = vmatpush1.msra.mxu0 0.0
        %2780 = vmatprep.subr.mxu0 0.0
        %2781 = vmatpush1.msra.mxu0 0.0
        %2782 = vmatprep.subr.mxu0 0.0
        %2783 = vmatpush1.msra.mxu0 0.0
        %2784 = vmatprep.subr.mxu0 0.0
        %2785 = vmatpush1.msra.mxu0 0.0
        %2786 = vmatprep.subr.mxu0 0.0
        %2787 = vmatpush1.msra.mxu0 0.0
        %2788 = vmatprep.subr.mxu0 0.0
        %2789 = vmatpush1.msra.mxu0 0.0
        %2790 = vmatprep.subr.mxu0 0.0
        %2791 = vmatpush1.msra.mxu0 0.0
        %2792 = vmatprep.subr.mxu0 0.0
        %2793 = vmatpush1.msra.mxu0 0.0
        %2794 = vmatprep.subr.mxu0 0.0
        %2795 = vmatpush1.msra.mxu0 0.0
        %2796 = vmatprep.subr.mxu0 0.0
        %2797 = vmatpush1.msra.mxu0 0.0
        %2798 = vmatprep.subr.mxu0 0.0
        %2799 = vmatpush1.msra.mxu0 0.0
        %2800 = vmatprep.subr.mxu0 0.0
        %2801 = vmatpush1.msra.mxu0 0.0
        %2802 = vmatprep.subr.mxu0 0.0
        %2803 = vmatpush1.msra.mxu0 0.0
        %2804 = vmatprep.subr.mxu0 0.0
        %2805 = vmatpush1.msra.mxu0 0.0
        %2806 = vmatprep.subr.mxu0 0.0
        %2807 = vmatpush1.msra.mxu0 0.0
        %2808 = vmatprep.mubr.f32.mxu0 0.0
        %2809 = vmatmul.mubr.f32.gmra.mrb[0].mxu0 %v1085
        %v2810 = vpop.f32.mrb[0].mxu0
        %v2811 = vadd.f32 0.0, %v2810
        %v2812 = vpop.f32.mrb[0].mxu0
        %2813 = vdwg.mxu0
        %v2814 = vadd.f32 %v2743, %v2811
        %2815 = vmatprep.subr.mxu0 0.0
        %2816 = vmatpush1.msra.mxu0 %v817
        %2817 = vmatprep.subr.mxu0 0.0
        %2818 = vmatpush1.msra.mxu0 %v818
        %2819 = vmatprep.subr.mxu0 0.0
        %2820 = vmatpush1.msra.mxu0 %v819
        %2821 = vmatprep.subr.mxu0 0.0
        %2822 = vmatpush1.msra.mxu0 %v820
        %2823 = vmatprep.subr.mxu0 0.0
        %2824 = vmatpush1.msra.mxu0 %v821
        %2825 = vmatprep.subr.mxu0 0.0
        %2826 = vmatpush1.msra.mxu0 %v822
        %2827 = vmatprep.subr.mxu0 0.0
        %2828 = vmatpush1.msra.mxu0 %v823
        %2829 = vmatprep.subr.mxu0 0.0
        %2830 = vmatpush1.msra.mxu0 %v824
        %2831 = vmatprep.subr.mxu0 0.0
        %2832 = vmatpush1.msra.mxu0 %v825
        %2833 = vmatprep.subr.mxu0 0.0
        %2834 = vmatpush1.msra.mxu0 %v826
        %2835 = vmatprep.subr.mxu0 0.0
        %2836 = vmatpush1.msra.mxu0 %v827
        %2837 = vmatprep.subr.mxu0 0.0
        %2838 = vmatpush1.msra.mxu0 %v828
        %2839 = vmatprep.subr.mxu0 0.0
        %2840 = vmatpush1.msra.mxu0 %v829
        %2841 = vmatprep.subr.mxu0 0.0
        %2842 = vmatpush1.msra.mxu0 %v830
        %2843 = vmatprep.subr.mxu0 0.0
        %2844 = vmatpush1.msra.mxu0 %v831
        %2845 = vmatprep.subr.mxu0 0.0
        %2846 = vmatpush1.msra.mxu0 %v832
        %2847 = vmatprep.subr.mxu0 0.0
        %2848 = vmatpush1.msra.mxu0 0.0
        %2849 = vmatprep.subr.mxu0 0.0
        %2850 = vmatpush1.msra.mxu0 0.0
        %2851 = vmatprep.subr.mxu0 0.0
        %2852 = vmatpush1.msra.mxu0 0.0
        %2853 = vmatprep.subr.mxu0 0.0
        %2854 = vmatpush1.msra.mxu0 0.0
        %2855 = vmatprep.subr.mxu0 0.0
        %2856 = vmatpush1.msra.mxu0 0.0
        %2857 = vmatprep.subr.mxu0 0.0
        %2858 = vmatpush1.msra.mxu0 0.0
        %2859 = vmatprep.subr.mxu0 0.0
        %2860 = vmatpush1.msra.mxu0 0.0
        %2861 = vmatprep.subr.mxu0 0.0
        %2862 = vmatpush1.msra.mxu0 0.0
        %2863 = vmatprep.subr.mxu0 0.0
        %2864 = vmatpush1.msra.mxu0 0.0
        %2865 = vmatprep.subr.mxu0 0.0
        %2866 = vmatpush1.msra.mxu0 0.0
        %2867 = vmatprep.subr.mxu0 0.0
        %2868 = vmatpush1.msra.mxu0 0.0
        %2869 = vmatprep.subr.mxu0 0.0
        %2870 = vmatpush1.msra.mxu0 0.0
        %2871 = vmatprep.subr.mxu0 0.0
        %2872 = vmatpush1.msra.mxu0 0.0
        %2873 = vmatprep.subr.mxu0 0.0
        %2874 = vmatpush1.msra.mxu0 0.0
        %2875 = vmatprep.subr.mxu0 0.0
        %2876 = vmatpush1.msra.mxu0 0.0
        %2877 = vmatprep.subr.mxu0 0.0
        %2878 = vmatpush1.msra.mxu0 0.0
        %2879 = vmatprep.mubr.f32.mxu0 0.0
        %2880 = vmatmul.mubr.f32.gmra.mrb[0].mxu0 %v1745
        %v2881 = vpop.f32.mrb[0].mxu0
        %v2882 = vadd.f32 0.0, %v2881
        %v2883 = vpop.f32.mrb[0].mxu0
        %2884 = vdwg.mxu0
        %v2885 = vadd.f32 %v2814, %v2882
        %2886 = vmatprep.subr.mxu0 0.0
        %2887 = vmatpush1.msra.mxu0 %v907
        %2888 = vmatprep.subr.mxu0 0.0
        %2889 = vmatpush1.msra.mxu0 %v908
        %2890 = vmatprep.subr.mxu0 0.0
        %2891 = vmatpush1.msra.mxu0 %v909
        %2892 = vmatprep.subr.mxu0 0.0
        %2893 = vmatpush1.msra.mxu0 %v910
        %2894 = vmatprep.subr.mxu0 0.0
        %2895 = vmatpush1.msra.mxu0 %v911
        %2896 = vmatprep.subr.mxu0 0.0
        %2897 = vmatpush1.msra.mxu0 %v912
        %2898 = vmatprep.subr.mxu0 0.0
        %2899 = vmatpush1.msra.mxu0 %v913
        %2900 = vmatprep.subr.mxu0 0.0
        %2901 = vmatpush1.msra.mxu0 %v914
        %2902 = vmatprep.subr.mxu0 0.0
        %2903 = vmatpush1.msra.mxu0 %v915
        %2904 = vmatprep.subr.mxu0 0.0
        %2905 = vmatpush1.msra.mxu0 %v916
        %2906 = vmatprep.subr.mxu0 0.0
        %2907 = vmatpush1.msra.mxu0 %v917
        %2908 = vmatprep.subr.mxu0 0.0
        %2909 = vmatpush1.msra.mxu0 %v918
        %2910 = vmatprep.subr.mxu0 0.0
        %2911 = vmatpush1.msra.mxu0 %v919
        %2912 = vmatprep.subr.mxu0 0.0
        %2913 = vmatpush1.msra.mxu0 %v920
        %2914 = vmatprep.subr.mxu0 0.0
        %2915 = vmatpush1.msra.mxu0 %v921
        %2916 = vmatprep.subr.mxu0 0.0
        %2917 = vmatpush1.msra.mxu0 %v922
        %2918 = vmatprep.subr.mxu0 0.0
        %2919 = vmatpush1.msra.mxu0 0.0
        %2920 = vmatprep.subr.mxu0 0.0
        %2921 = vmatpush1.msra.mxu0 0.0
        %2922 = vmatprep.subr.mxu0 0.0
        %2923 = vmatpush1.msra.mxu0 0.0
        %2924 = vmatprep.subr.mxu0 0.0
        %2925 = vmatpush1.msra.mxu0 0.0
        %2926 = vmatprep.subr.mxu0 0.0
        %2927 = vmatpush1.msra.mxu0 0.0
        %2928 = vmatprep.subr.mxu0 0.0
        %2929 = vmatpush1.msra.mxu0 0.0
        %2930 = vmatprep.subr.mxu0 0.0
        %2931 = vmatpush1.msra.mxu0 0.0
        %2932 = vmatprep.subr.mxu0 0.0
        %2933 = vmatpush1.msra.mxu0 0.0
        %2934 = vmatprep.subr.mxu0 0.0
        %2935 = vmatpush1.msra.mxu0 0.0
        %2936 = vmatprep.subr.mxu0 0.0
        %2937 = vmatpush1.msra.mxu0 0.0
        %2938 = vmatprep.subr.mxu0 0.0
        %2939 = vmatpush1.msra.mxu0 0.0
        %2940 = vmatprep.subr.mxu0 0.0
        %2941 = vmatpush1.msra.mxu0 0.0
        %2942 = vmatprep.subr.mxu0 0.0
        %2943 = vmatpush1.msra.mxu0 0.0
        %2944 = vmatprep.subr.mxu0 0.0
        %2945 = vmatpush1.msra.mxu0 0.0
        %2946 = vmatprep.subr.mxu0 0.0
        %2947 = vmatpush1.msra.mxu0 0.0
        %2948 = vmatprep.subr.mxu0 0.0
        %2949 = vmatpush1.msra.mxu0 0.0
        %2950 = vmatprep.mubr.f32.mxu0 0.0
        %2951 = vmatmul.mubr.f32.gmra.mrb[0].mxu0 %v2316
        %v2952 = vpop.f32.mrb[0].mxu0
        %v2953 = vadd.f32 0.0, %v2952
        %v2954 = vpop.f32.mrb[0].mxu0
        %2955 = vdwg.mxu0
        %v2956 = vadd.f32 %v2885, %v2953
        %2957 = vmatprep.subr.mxu0 0.0
        %2958 = vmatpush1.msra.mxu0 %v997
        %2959 = vmatprep.subr.mxu0 0.0
        %2960 = vmatpush1.msra.mxu0 %v998
        %2961 = vmatprep.subr.mxu0 0.0
        %2962 = vmatpush1.msra.mxu0 %v999
        %2963 = vmatprep.subr.mxu0 0.0
        %2964 = vmatpush1.msra.mxu0 %v1000
        %2965 = vmatprep.subr.mxu0 0.0
        %2966 = vmatpush1.msra.mxu0 %v1001
        %2967 = vmatprep.subr.mxu0 0.0
        %2968 = vmatpush1.msra.mxu0 %v1002
        %2969 = vmatprep.subr.mxu0 0.0
        %2970 = vmatpush1.msra.mxu0 %v1003
        %2971 = vmatprep.subr.mxu0 0.0
        %2972 = vmatpush1.msra.mxu0 %v1004
        %2973 = vmatprep.subr.mxu0 0.0
        %2974 = vmatpush1.msra.mxu0 %v1005
        %2975 = vmatprep.subr.mxu0 0.0
        %2976 = vmatpush1.msra.mxu0 %v1006
        %2977 = vmatprep.subr.mxu0 0.0
        %2978 = vmatpush1.msra.mxu0 %v1007
        %2979 = vmatprep.subr.mxu0 0.0
        %2980 = vmatpush1.msra.mxu0 %v1008
        %2981 = vmatprep.subr.mxu0 0.0
        %2982 = vmatpush1.msra.mxu0 %v1009
        %2983 = vmatprep.subr.mxu0 0.0
        %2984 = vmatpush1.msra.mxu0 %v1010
        %2985 = vmatprep.subr.mxu0 0.0
        %2986 = vmatpush1.msra.mxu0 %v1011
        %2987 = vmatprep.subr.mxu0 0.0
        %2988 = vmatpush1.msra.mxu0 %v1012
        %2989 = vmatprep.subr.mxu0 0.0
        %2990 = vmatpush1.msra.mxu0 0.0
        %2991 = vmatprep.subr.mxu0 0.0
        %2992 = vmatpush1.msra.mxu0 0.0
        %2993 = vmatprep.subr.mxu0 0.0
        %2994 = vmatpush1.msra.mxu0 0.0
        %2995 = vmatprep.subr.mxu0 0.0
        %2996 = vmatpush1.msra.mxu0 0.0
        %2997 = vmatprep.subr.mxu0 0.0
        %2998 = vmatpush1.msra.mxu0 0.0
        %2999 = vmatprep.subr.mxu0 0.0
        %3000 = vmatpush1.msra.mxu0 0.0
        %3001 = vmatprep.subr.mxu0 0.0
        %3002 = vmatpush1.msra.mxu0 0.0
        %3003 = vmatprep.subr.mxu0 0.0
        %3004 = vmatpush1.msra.mxu0 0.0
        %3005 = vmatprep.subr.mxu0 0.0
        %3006 = vmatpush1.msra.mxu0 0.0
        %3007 = vmatprep.subr.mxu0 0.0
        %3008 = vmatpush1.msra.mxu0 0.0
        %3009 = vmatprep.subr.mxu0 0.0
        %3010 = vmatpush1.msra.mxu0 0.0
        %3011 = vmatprep.subr.mxu0 0.0
        %3012 = vmatpush1.msra.mxu0 0.0
        %3013 = vmatprep.subr.mxu0 0.0
        %3014 = vmatpush1.msra.mxu0 0.0
        %3015 = vmatprep.subr.mxu0 0.0
        %3016 = vmatpush1.msra.mxu0 0.0
        %3017 = vmatprep.subr.mxu0 0.0
        %3018 = vmatpush1.msra.mxu0 0.0
        %3019 = vmatprep.subr.mxu0 0.0
        %3020 = vmatpush1.msra.mxu0 0.0
        %3021 = vmatprep.mubr.f32.mxu0 0.0
        %3022 = vmatmul.mubr.f32.gmra.mrb[0].mxu0 %v2389
        %v3023 = vpop.f32.mrb[0].mxu0
        %v3024 = vadd.f32 0.0, %v3023
        %v3025 = vpop.f32.mrb[0].mxu0
        %3026 = vdwg.mxu0
        %v3027 = vadd.f32 %v2956, %v3024
        %s3028 = scalar_lea.vmem %s367, 60
        %v3029 = vld [vmem:[%s3028] sm:$0xf]
        %3030 = vmatprep.subr.mxu0 0.0
        %3031 = vmatpush1.msra.mxu0 %v1087
        %3032 = vmatprep.subr.mxu0 0.0
        %3033 = vmatpush1.msra.mxu0 %v1088
        %3034 = vmatprep.subr.mxu0 0.0
        %3035 = vmatpush1.msra.mxu0 %v1089
        %3036 = vmatprep.subr.mxu0 0.0
        %3037 = vmatpush1.msra.mxu0 %v1090
        %3038 = vmatprep.subr.mxu0 0.0
        %3039 = vmatpush1.msra.mxu0 %v1091
        %3040 = vmatprep.subr.mxu0 0.0
        %3041 = vmatpush1.msra.mxu0 %v1092
        %3042 = vmatprep.subr.mxu0 0.0
        %3043 = vmatpush1.msra.mxu0 %v1093
        %3044 = vmatprep.subr.mxu0 0.0
        %3045 = vmatpush1.msra.mxu0 %v1094
        %3046 = vmatprep.subr.mxu0 0.0
        %3047 = vmatpush1.msra.mxu0 %v1095
        %3048 = vmatprep.subr.mxu0 0.0
        %3049 = vmatpush1.msra.mxu0 %v1096
        %3050 = vmatprep.subr.mxu0 0.0
        %3051 = vmatpush1.msra.mxu0 %v1097
        %3052 = vmatprep.subr.mxu0 0.0
        %3053 = vmatpush1.msra.mxu0 %v1098
        %3054 = vmatprep.subr.mxu0 0.0
        %3055 = vmatpush1.msra.mxu0 %v1099
        %3056 = vmatprep.subr.mxu0 0.0
        %3057 = vmatpush1.msra.mxu0 %v1100
        %3058 = vmatprep.subr.mxu0 0.0
        %3059 = vmatpush1.msra.mxu0 %v1101
        %3060 = vmatprep.subr.mxu0 0.0
        %3061 = vmatpush1.msra.mxu0 %v1102
        %3062 = vmatprep.subr.mxu0 0.0
        %3063 = vmatpush1.msra.mxu0 0.0
        %3064 = vmatprep.subr.mxu0 0.0
        %3065 = vmatpush1.msra.mxu0 0.0
        %3066 = vmatprep.subr.mxu0 0.0
        %3067 = vmatpush1.msra.mxu0 0.0
        %3068 = vmatprep.subr.mxu0 0.0
        %3069 = vmatpush1.msra.mxu0 0.0
        %3070 = vmatprep.subr.mxu0 0.0
        %3071 = vmatpush1.msra.mxu0 0.0
        %3072 = vmatprep.subr.mxu0 0.0
        %3073 = vmatpush1.msra.mxu0 0.0
        %3074 = vmatprep.subr.mxu0 0.0
        %3075 = vmatpush1.msra.mxu0 0.0
        %3076 = vmatprep.subr.mxu0 0.0
        %3077 = vmatpush1.msra.mxu0 0.0
        %3078 = vmatprep.subr.mxu0 0.0
        %3079 = vmatpush1.msra.mxu0 0.0
        %3080 = vmatprep.subr.mxu0 0.0
        %3081 = vmatpush1.msra.mxu0 0.0
        %3082 = vmatprep.subr.mxu0 0.0
        %3083 = vmatpush1.msra.mxu0 0.0
        %3084 = vmatprep.subr.mxu0 0.0
        %3085 = vmatpush1.msra.mxu0 0.0
        %3086 = vmatprep.subr.mxu0 0.0
        %3087 = vmatpush1.msra.mxu0 0.0
        %3088 = vmatprep.subr.mxu0 0.0
        %3089 = vmatpush1.msra.mxu0 0.0
        %3090 = vmatprep.subr.mxu0 0.0
        %3091 = vmatpush1.msra.mxu0 0.0
        %3092 = vmatprep.subr.mxu0 0.0
        %3093 = vmatpush1.msra.mxu0 0.0
        %3094 = vmatprep.mubr.f32.mxu0 0.0
        %3095 = vmatmul.mubr.f32.gmra.mrb[0].mxu0 %v3029
        %v3096 = vpop.f32.mrb[0].mxu0
        %v3097 = vadd.f32 0.0, %v3096
        %v3098 = vpop.f32.mrb[0].mxu0
        %3099 = vdwg.mxu0
        %v3100 = vadd.f32 %v3027, %v3097
        %v3101 = vmax.f32 %v2461, %v3100
        %v3102 = vld [vmem:[%s2] sm:$0x1]
        %v3104 = vlaneseq
        %v3105 = vshrl.u32 %v3104, 7
        %v3106 = vsub.s32 0, %v3105
        %v3107 = vrot.slane %v3102, %v3106
        %v3109 = vadd.f32 %v3101, %v3107
        %v3110 = vmax.f32 %v3109, 0.0
        %vm3111 = vcmask 519168
        %3112 = vst.msk [vmem:[%s356] sm:$0xf] %vm3111, %v3110
        %v3113 = vlaneseq
        %v3114 = vshrl.u32 %v3113, 7
        %v3115 = vld [vmem:[%s4] sm:$0x3]
        %vm3116 = vcmp.eq.s32.totalorder %v3114, 0
        %v3117 = vsel %vm3116, %v3110, 0.0
        %v3118 = vsel %vm3111, %v3117, 0.0
        %v3119 = vrot.slane %v3118, 4
        %v3120 = vadd.f32 %v3118, %v3119
        %v3121 = vrot.slane %v3120, 2
        %v3122 = vadd.f32 %v3120, %v3121
        %v3123 = vrot.slane %v3122, 1
        %v3124 = vadd.f32 %v3122, %v3123
        %v3125 = vld [vmem:[%s3] sm:$0xff]
        %v3126 = vld [vmem:[%s3 + $0x8] sm:$0xff]
        %v3127 = vld [vmem:[%s3 + $0x10] sm:$0xff]
        %v3128 = vld [vmem:[%s3 + $0x18] sm:$0xff]
        %v3129 = vld [vmem:[%s3 + $0x20] sm:$0xff]
        %v3130 = vld [vmem:[%s3 + $0x28] sm:$0xff]
        %v3131 = vld [vmem:[%s3 + $0x30] sm:$0xff]
        %v3132 = vld [vmem:[%s3 + $0x38] sm:$0xff]
        %v3133 = vld [vmem:[%s3 + $0x40] sm:$0xff]
        %v3134 = vld [vmem:[%s3 + $0x48] sm:$0xff]
        %v3135 = vld [vmem:[%s3 + $0x50] sm:$0xff]
        %v3136 = vld [vmem:[%s3 + $0x58] sm:$0xff]
        %v3137 = vld [vmem:[%s3 + $0x60] sm:$0xff]
        %v3138 = vld [vmem:[%s3 + $0x68] sm:$0xff]
        %v3139 = vld [vmem:[%s3 + $0x70] sm:$0xff]
        %v3140 = vld [vmem:[%s3 + $0x78] sm:$0xff]
        %vm3141 = vcmask 523264
        %v3143 = vsel %vm3141, %v3124, 0
        %3145 = vmatprep.subr.mxu0 %v3126
        %3146 = vmatpush1.msra.mxu0 %v3125
        %3147 = vmatprep.subr.mxu0 %v3128
        %3148 = vmatpush1.msra.mxu0 %v3127
        %3149 = vmatprep.subr.mxu0 %v3130
        %3150 = vmatpush1.msra.mxu0 %v3129
        %3151 = vmatprep.subr.mxu0 %v3132
        %3152 = vmatpush1.msra.mxu0 %v3131
        %3153 = vmatprep.subr.mxu0 %v3134
        %3154 = vmatpush1.msra.mxu0 %v3133
        %3155 = vmatprep.subr.mxu0 %v3136
        %3156 = vmatpush1.msra.mxu0 %v3135
        %3157 = vmatprep.subr.mxu0 %v3138
        %3158 = vmatpush1.msra.mxu0 %v3137
        %3159 = vmatprep.subr.mxu0 %v3140
        %3160 = vmatpush1.msra.mxu0 %v3139
        %3161 = vmatprep.subr.mxu0 0.0
        %3162 = vmatpush1.msra.mxu0 0.0
        %3163 = vmatprep.subr.mxu0 0.0
        %3164 = vmatpush1.msra.mxu0 0.0
        %3165 = vmatprep.subr.mxu0 0.0
        %3166 = vmatpush1.msra.mxu0 0.0
        %3167 = vmatprep.subr.mxu0 0.0
        %3168 = vmatpush1.msra.mxu0 0.0
        %3169 = vmatprep.subr.mxu0 0.0
        %3170 = vmatpush1.msra.mxu0 0.0
        %3171 = vmatprep.subr.mxu0 0.0
        %3172 = vmatpush1.msra.mxu0 0.0
        %3173 = vmatprep.subr.mxu0 0.0
        %3174 = vmatpush1.msra.mxu0 0.0
        %3175 = vmatprep.subr.mxu0 0.0
        %3176 = vmatpush1.msra.mxu0 0.0
        %3177 = vmatprep.subr.mxu0 0.0
        %3178 = vmatpush1.msra.mxu0 0.0
        %3179 = vmatprep.subr.mxu0 0.0
        %3180 = vmatpush1.msra.mxu0 0.0
        %3181 = vmatprep.subr.mxu0 0.0
        %3182 = vmatpush1.msra.mxu0 0.0
        %3183 = vmatprep.subr.mxu0 0.0
        %3184 = vmatpush1.msra.mxu0 0.0
        %3185 = vmatprep.subr.mxu0 0.0
        %3186 = vmatpush1.msra.mxu0 0.0
        %3187 = vmatprep.subr.mxu0 0.0
        %3188 = vmatpush1.msra.mxu0 0.0
        %3189 = vmatprep.subr.mxu0 0.0
        %3190 = vmatpush1.msra.mxu0 0.0
        %3191 = vmatprep.subr.mxu0 0.0
        %3192 = vmatpush1.msra.mxu0 0.0
        %3193 = vmatprep.subr.mxu0 0.0
        %3194 = vmatpush1.msra.mxu0 0.0
        %3195 = vmatprep.subr.mxu0 0.0
        %3196 = vmatpush1.msra.mxu0 0.0
        %3197 = vmatprep.subr.mxu0 0.0
        %3198 = vmatpush1.msra.mxu0 0.0
        %3199 = vmatprep.subr.mxu0 0.0
        %3200 = vmatpush1.msra.mxu0 0.0
        %3201 = vmatprep.subr.mxu0 0.0
        %3202 = vmatpush1.msra.mxu0 0.0
        %3203 = vmatprep.subr.mxu0 0.0
        %3204 = vmatpush1.msra.mxu0 0.0
        %3205 = vmatprep.subr.mxu0 0.0
        %3206 = vmatpush1.msra.mxu0 0.0
        %3207 = vmatprep.subr.mxu0 0.0
        %3208 = vmatpush1.msra.mxu0 0.0
        %3209 = vmatprep.mubr.f32.mxu0 0.0
        %3210 = vmatmul.mubr.f32.gmra.mrb[0].mxu0 %v3143
        %v3211 = vpop.f32.mrb[0].mxu0
        %v3212 = vadd.f32 0.0, %v3211
        %v3213 = vpop.f32.mrb[0].mxu0
        %v3214 = vadd.f32 0.0, %v3213
        %3215 = vdwg.mxu0
        %v3218 = vcombine.low %v3212, %v3214
        %v3220 = vunpack.c.l.s4 1966171168
        %v3221 = vunpack.c.0.s8 %v3220
        %v3222 = vlaneseq
        %v3223 = vshrl.u32 %v3222, 7
        %v3224 = vsub.s32 %v3221, %v3223
        %v3225 = vrot.slane %v3218, %v3224
        %v3227 = vunpack.c.l.s4 1966171168
        %v3228 = vunpack.c.0.s8 %v3227
        %v3229 = vlaneseq
        %v3230 = vshrl.u32 %v3229, 7
        %v3231 = vsub.s32 %v3228, %v3230
        %v3232 = vrot.slane %v3225, %v3231
        %v3234 = vadd.f32 %v3115, %v3232
        %vm3235 = vcmp.eq.s32.totalorder %v3114, 1
        %v3236 = vsel %vm3235, %v3110, 0.0
        %v3237 = vsel %vm3111, %v3236, 0.0
        %v3238 = vrot.slane %v3237, 4
        %v3239 = vadd.f32 %v3237, %v3238
        %v3240 = vrot.slane %v3239, 2
        %v3241 = vadd.f32 %v3239, %v3240
        %v3242 = vrot.slane %v3241, 1
        %v3243 = vadd.f32 %v3241, %v3242
        %s3244 = scalar_lea.vmem %s3, 128
        %v3245 = vld [vmem:[%s3244] sm:$0xff]
        %v3246 = vld [vmem:[%s3244 + $0x8] sm:$0xff]
        %v3247 = vld [vmem:[%s3244 + $0x10] sm:$0xff]
        %v3248 = vld [vmem:[%s3244 + $0x18] sm:$0xff]
        %v3249 = vld [vmem:[%s3244 + $0x20] sm:$0xff]
        %v3250 = vld [vmem:[%s3244 + $0x28] sm:$0xff]
        %v3251 = vld [vmem:[%s3244 + $0x30] sm:$0xff]
        %v3252 = vld [vmem:[%s3244 + $0x38] sm:$0xff]
        %v3253 = vld [vmem:[%s3244 + $0x40] sm:$0xff]
        %v3254 = vld [vmem:[%s3244 + $0x48] sm:$0xff]
        %v3255 = vld [vmem:[%s3244 + $0x50] sm:$0xff]
        %v3256 = vld [vmem:[%s3244 + $0x58] sm:$0xff]
        %v3257 = vld [vmem:[%s3244 + $0x60] sm:$0xff]
        %v3258 = vld [vmem:[%s3244 + $0x68] sm:$0xff]
        %v3259 = vld [vmem:[%s3244 + $0x70] sm:$0xff]
        %v3260 = vld [vmem:[%s3244 + $0x78] sm:$0xff]
        %v3262 = vsel %vm3141, %v3243, 0
        %3264 = vmatprep.subr.mxu0 %v3246
        %3265 = vmatpush1.msra.mxu0 %v3245
        %3266 = vmatprep.subr.mxu0 %v3248
        %3267 = vmatpush1.msra.mxu0 %v3247
        %3268 = vmatprep.subr.mxu0 %v3250
        %3269 = vmatpush1.msra.mxu0 %v3249
        %3270 = vmatprep.subr.mxu0 %v3252
        %3271 = vmatpush1.msra.mxu0 %v3251
        %3272 = vmatprep.subr.mxu0 %v3254
        %3273 = vmatpush1.msra.mxu0 %v3253
        %3274 = vmatprep.subr.mxu0 %v3256
        %3275 = vmatpush1.msra.mxu0 %v3255
        %3276 = vmatprep.subr.mxu0 %v3258
        %3277 = vmatpush1.msra.mxu0 %v3257
        %3278 = vmatprep.subr.mxu0 %v3260
        %3279 = vmatpush1.msra.mxu0 %v3259
        %3280 = vmatprep.subr.mxu0 0.0
        %3281 = vmatpush1.msra.mxu0 0.0
        %3282 = vmatprep.subr.mxu0 0.0
        %3283 = vmatpush1.msra.mxu0 0.0
        %3284 = vmatprep.subr.mxu0 0.0
        %3285 = vmatpush1.msra.mxu0 0.0
        %3286 = vmatprep.subr.mxu0 0.0
        %3287 = vmatpush1.msra.mxu0 0.0
        %3288 = vmatprep.subr.mxu0 0.0
        %3289 = vmatpush1.msra.mxu0 0.0
        %3290 = vmatprep.subr.mxu0 0.0
        %3291 = vmatpush1.msra.mxu0 0.0
        %3292 = vmatprep.subr.mxu0 0.0
        %3293 = vmatpush1.msra.mxu0 0.0
        %3294 = vmatprep.subr.mxu0 0.0
        %3295 = vmatpush1.msra.mxu0 0.0
        %3296 = vmatprep.subr.mxu0 0.0
        %3297 = vmatpush1.msra.mxu0 0.0
        %3298 = vmatprep.subr.mxu0 0.0
        %3299 = vmatpush1.msra.mxu0 0.0
        %3300 = vmatprep.subr.mxu0 0.0
        %3301 = vmatpush1.msra.mxu0 0.0
        %3302 = vmatprep.subr.mxu0 0.0
        %3303 = vmatpush1.msra.mxu0 0.0
        %3304 = vmatprep.subr.mxu0 0.0
        %3305 = vmatpush1.msra.mxu0 0.0
        %3306 = vmatprep.subr.mxu0 0.0
        %3307 = vmatpush1.msra.mxu0 0.0
        %3308 = vmatprep.subr.mxu0 0.0
        %3309 = vmatpush1.msra.mxu0 0.0
        %3310 = vmatprep.subr.mxu0 0.0
        %3311 = vmatpush1.msra.mxu0 0.0
        %3312 = vmatprep.subr.mxu0 0.0
        %3313 = vmatpush1.msra.mxu0 0.0
        %3314 = vmatprep.subr.mxu0 0.0
        %3315 = vmatpush1.msra.mxu0 0.0
        %3316 = vmatprep.subr.mxu0 0.0
        %3317 = vmatpush1.msra.mxu0 0.0
        %3318 = vmatprep.subr.mxu0 0.0
        %3319 = vmatpush1.msra.mxu0 0.0
        %3320 = vmatprep.subr.mxu0 0.0
        %3321 = vmatpush1.msra.mxu0 0.0
        %3322 = vmatprep.subr.mxu0 0.0
        %3323 = vmatpush1.msra.mxu0 0.0
        %3324 = vmatprep.subr.mxu0 0.0
        %3325 = vmatpush1.msra.mxu0 0.0
        %3326 = vmatprep.subr.mxu0 0.0
        %3327 = vmatpush1.msra.mxu0 0.0
        %3328 = vmatprep.mubr.f32.mxu0 0.0
        %3329 = vmatmul.mubr.f32.gmra.mrb[0].mxu0 %v3262
        %v3330 = vpop.f32.mrb[0].mxu0
        %v3331 = vadd.f32 0.0, %v3330
        %v3332 = vpop.f32.mrb[0].mxu0
        %v3333 = vadd.f32 0.0, %v3332
        %3334 = vdwg.mxu0
        %v3337 = vcombine.low %v3331, %v3333
        %v3339 = vunpack.c.l.s4 1966171168
        %v3340 = vunpack.c.0.s8 %v3339
        %v3341 = vlaneseq
        %v3342 = vshrl.u32 %v3341, 7
        %v3343 = vsub.s32 %v3340, %v3342
        %v3344 = vrot.slane %v3337, %v3343
        %v3346 = vunpack.c.l.s4 1966171168
        %v3347 = vunpack.c.0.s8 %v3346
        %v3348 = vlaneseq
        %v3349 = vshrl.u32 %v3348, 7
        %v3350 = vsub.s32 %v3347, %v3349
        %v3351 = vrot.slane %v3344, %v3350
        %v3353 = vadd.f32 %v3234, %v3351
        %vm3354 = vcmp.eq.s32.totalorder %v3114, 2
        %v3355 = vsel %vm3354, %v3110, 0.0
        %v3356 = vsel %vm3111, %v3355, 0.0
        %v3357 = vrot.slane %v3356, 4
        %v3358 = vadd.f32 %v3356, %v3357
        %v3359 = vrot.slane %v3358, 2
        %v3360 = vadd.f32 %v3358, %v3359
        %v3361 = vrot.slane %v3360, 1
        %v3362 = vadd.f32 %v3360, %v3361
        %s3363 = scalar_lea.vmem %s3, 256
        %v3364 = vld [vmem:[%s3363] sm:$0xff]
        %v3365 = vld [vmem:[%s3363 + $0x8] sm:$0xff]
        %v3366 = vld [vmem:[%s3363 + $0x10] sm:$0xff]
        %v3367 = vld [vmem:[%s3363 + $0x18] sm:$0xff]
        %v3368 = vld [vmem:[%s3363 + $0x20] sm:$0xff]
        %v3369 = vld [vmem:[%s3363 + $0x28] sm:$0xff]
        %v3370 = vld [vmem:[%s3363 + $0x30] sm:$0xff]
        %v3371 = vld [vmem:[%s3363 + $0x38] sm:$0xff]
        %v3372 = vld [vmem:[%s3363 + $0x40] sm:$0xff]
        %v3373 = vld [vmem:[%s3363 + $0x48] sm:$0xff]
        %v3374 = vld [vmem:[%s3363 + $0x50] sm:$0xff]
        %v3375 = vld [vmem:[%s3363 + $0x58] sm:$0xff]
        %v3376 = vld [vmem:[%s3363 + $0x60] sm:$0xff]
        %v3377 = vld [vmem:[%s3363 + $0x68] sm:$0xff]
        %v3378 = vld [vmem:[%s3363 + $0x70] sm:$0xff]
        %v3379 = vld [vmem:[%s3363 + $0x78] sm:$0xff]
        %v3381 = vsel %vm3141, %v3362, 0
        %3383 = vmatprep.subr.mxu0 %v3365
        %3384 = vmatpush1.msra.mxu0 %v3364
        %3385 = vmatprep.subr.mxu0 %v3367
        %3386 = vmatpush1.msra.mxu0 %v3366
        %3387 = vmatprep.subr.mxu0 %v3369
        %3388 = vmatpush1.msra.mxu0 %v3368
        %3389 = vmatprep.subr.mxu0 %v3371
        %3390 = vmatpush1.msra.mxu0 %v3370
        %3391 = vmatprep.subr.mxu0 %v3373
        %3392 = vmatpush1.msra.mxu0 %v3372
        %3393 = vmatprep.subr.mxu0 %v3375
        %3394 = vmatpush1.msra.mxu0 %v3374
        %3395 = vmatprep.subr.mxu0 %v3377
        %3396 = vmatpush1.msra.mxu0 %v3376
        %3397 = vmatprep.subr.mxu0 %v3379
        %3398 = vmatpush1.msra.mxu0 %v3378
        %3399 = vmatprep.subr.mxu0 0.0
        %3400 = vmatpush1.msra.mxu0 0.0
        %3401 = vmatprep.subr.mxu0 0.0
        %3402 = vmatpush1.msra.mxu0 0.0
        %3403 = vmatprep.subr.mxu0 0.0
        %3404 = vmatpush1.msra.mxu0 0.0
        %3405 = vmatprep.subr.mxu0 0.0
        %3406 = vmatpush1.msra.mxu0 0.0
        %3407 = vmatprep.subr.mxu0 0.0
        %3408 = vmatpush1.msra.mxu0 0.0
        %3409 = vmatprep.subr.mxu0 0.0
        %3410 = vmatpush1.msra.mxu0 0.0
        %3411 = vmatprep.subr.mxu0 0.0
        %3412 = vmatpush1.msra.mxu0 0.0
        %3413 = vmatprep.subr.mxu0 0.0
        %3414 = vmatpush1.msra.mxu0 0.0
        %3415 = vmatprep.subr.mxu0 0.0
        %3416 = vmatpush1.msra.mxu0 0.0
        %3417 = vmatprep.subr.mxu0 0.0
        %3418 = vmatpush1.msra.mxu0 0.0
        %3419 = vmatprep.subr.mxu0 0.0
        %3420 = vmatpush1.msra.mxu0 0.0
        %3421 = vmatprep.subr.mxu0 0.0
        %3422 = vmatpush1.msra.mxu0 0.0
        %3423 = vmatprep.subr.mxu0 0.0
        %3424 = vmatpush1.msra.mxu0 0.0
        %3425 = vmatprep.subr.mxu0 0.0
        %3426 = vmatpush1.msra.mxu0 0.0
        %3427 = vmatprep.subr.mxu0 0.0
        %3428 = vmatpush1.msra.mxu0 0.0
        %3429 = vmatprep.subr.mxu0 0.0
        %3430 = vmatpush1.msra.mxu0 0.0
        %3431 = vmatprep.subr.mxu0 0.0
        %3432 = vmatpush1.msra.mxu0 0.0
        %3433 = vmatprep.subr.mxu0 0.0
        %3434 = vmatpush1.msra.mxu0 0.0
        %3435 = vmatprep.subr.mxu0 0.0
        %3436 = vmatpush1.msra.mxu0 0.0
        %3437 = vmatprep.subr.mxu0 0.0
        %3438 = vmatpush1.msra.mxu0 0.0
        %3439 = vmatprep.subr.mxu0 0.0
        %3440 = vmatpush1.msra.mxu0 0.0
        %3441 = vmatprep.subr.mxu0 0.0
        %3442 = vmatpush1.msra.mxu0 0.0
        %3443 = vmatprep.subr.mxu0 0.0
        %3444 = vmatpush1.msra.mxu0 0.0
        %3445 = vmatprep.subr.mxu0 0.0
        %3446 = vmatpush1.msra.mxu0 0.0
        %3447 = vmatprep.mubr.f32.mxu0 0.0
        %3448 = vmatmul.mubr.f32.gmra.mrb[0].mxu0 %v3381
        %v3449 = vpop.f32.mrb[0].mxu0
        %v3450 = vadd.f32 0.0, %v3449
        %v3451 = vpop.f32.mrb[0].mxu0
        %v3452 = vadd.f32 0.0, %v3451
        %3453 = vdwg.mxu0
        %v3456 = vcombine.low %v3450, %v3452
        %v3458 = vunpack.c.l.s4 1966171168
        %v3459 = vunpack.c.0.s8 %v3458
        %v3460 = vlaneseq
        %v3461 = vshrl.u32 %v3460, 7
        %v3462 = vsub.s32 %v3459, %v3461
        %v3463 = vrot.slane %v3456, %v3462
        %v3465 = vunpack.c.l.s4 1966171168
        %v3466 = vunpack.c.0.s8 %v3465
        %v3467 = vlaneseq
        %v3468 = vshrl.u32 %v3467, 7
        %v3469 = vsub.s32 %v3466, %v3468
        %v3470 = vrot.slane %v3463, %v3469
        %v3472 = vadd.f32 %v3353, %v3470
        %vm3473 = vcmp.eq.s32.totalorder %v3114, 3
        %v3474 = vsel %vm3473, %v3110, 0.0
        %v3475 = vsel %vm3111, %v3474, 0.0
        %v3476 = vrot.slane %v3475, 4
        %v3477 = vadd.f32 %v3475, %v3476
        %v3478 = vrot.slane %v3477, 2
        %v3479 = vadd.f32 %v3477, %v3478
        %v3480 = vrot.slane %v3479, 1
        %v3481 = vadd.f32 %v3479, %v3480
        %s3482 = scalar_lea.vmem %s3, 384
        %v3483 = vld [vmem:[%s3482] sm:$0xff]
        %v3484 = vld [vmem:[%s3482 + $0x8] sm:$0xff]
        %v3485 = vld [vmem:[%s3482 + $0x10] sm:$0xff]
        %v3486 = vld [vmem:[%s3482 + $0x18] sm:$0xff]
        %v3487 = vld [vmem:[%s3482 + $0x20] sm:$0xff]
        %v3488 = vld [vmem:[%s3482 + $0x28] sm:$0xff]
        %v3489 = vld [vmem:[%s3482 + $0x30] sm:$0xff]
        %v3490 = vld [vmem:[%s3482 + $0x38] sm:$0xff]
        %v3491 = vld [vmem:[%s3482 + $0x40] sm:$0xff]
        %v3492 = vld [vmem:[%s3482 + $0x48] sm:$0xff]
        %v3493 = vld [vmem:[%s3482 + $0x50] sm:$0xff]
        %v3494 = vld [vmem:[%s3482 + $0x58] sm:$0xff]
        %v3495 = vld [vmem:[%s3482 + $0x60] sm:$0xff]
        %v3496 = vld [vmem:[%s3482 + $0x68] sm:$0xff]
        %v3497 = vld [vmem:[%s3482 + $0x70] sm:$0xff]
        %v3498 = vld [vmem:[%s3482 + $0x78] sm:$0xff]
        %v3500 = vsel %vm3141, %v3481, 0
        %3502 = vmatprep.subr.mxu0 %v3484
        %3503 = vmatpush1.msra.mxu0 %v3483
        %3504 = vmatprep.subr.mxu0 %v3486
        %3505 = vmatpush1.msra.mxu0 %v3485
        %3506 = vmatprep.subr.mxu0 %v3488
        %3507 = vmatpush1.msra.mxu0 %v3487
        %3508 = vmatprep.subr.mxu0 %v3490
        %3509 = vmatpush1.msra.mxu0 %v3489
        %3510 = vmatprep.subr.mxu0 %v3492
        %3511 = vmatpush1.msra.mxu0 %v3491
        %3512 = vmatprep.subr.mxu0 %v3494
        %3513 = vmatpush1.msra.mxu0 %v3493
        %3514 = vmatprep.subr.mxu0 %v3496
        %3515 = vmatpush1.msra.mxu0 %v3495
        %3516 = vmatprep.subr.mxu0 %v3498
        %3517 = vmatpush1.msra.mxu0 %v3497
        %3518 = vmatprep.subr.mxu0 0.0
        %3519 = vmatpush1.msra.mxu0 0.0
        %3520 = vmatprep.subr.mxu0 0.0
        %3521 = vmatpush1.msra.mxu0 0.0
        %3522 = vmatprep.subr.mxu0 0.0
        %3523 = vmatpush1.msra.mxu0 0.0
        %3524 = vmatprep.subr.mxu0 0.0
        %3525 = vmatpush1.msra.mxu0 0.0
        %3526 = vmatprep.subr.mxu0 0.0
        %3527 = vmatpush1.msra.mxu0 0.0
        %3528 = vmatprep.subr.mxu0 0.0
        %3529 = vmatpush1.msra.mxu0 0.0
        %3530 = vmatprep.subr.mxu0 0.0
        %3531 = vmatpush1.msra.mxu0 0.0
        %3532 = vmatprep.subr.mxu0 0.0
        %3533 = vmatpush1.msra.mxu0 0.0
        %3534 = vmatprep.subr.mxu0 0.0
        %3535 = vmatpush1.msra.mxu0 0.0
        %3536 = vmatprep.subr.mxu0 0.0
        %3537 = vmatpush1.msra.mxu0 0.0
        %3538 = vmatprep.subr.mxu0 0.0
        %3539 = vmatpush1.msra.mxu0 0.0
        %3540 = vmatprep.subr.mxu0 0.0
        %3541 = vmatpush1.msra.mxu0 0.0
        %3542 = vmatprep.subr.mxu0 0.0
        %3543 = vmatpush1.msra.mxu0 0.0
        %3544 = vmatprep.subr.mxu0 0.0
        %3545 = vmatpush1.msra.mxu0 0.0
        %3546 = vmatprep.subr.mxu0 0.0
        %3547 = vmatpush1.msra.mxu0 0.0
        %3548 = vmatprep.subr.mxu0 0.0
        %3549 = vmatpush1.msra.mxu0 0.0
        %3550 = vmatprep.subr.mxu0 0.0
        %3551 = vmatpush1.msra.mxu0 0.0
        %3552 = vmatprep.subr.mxu0 0.0
        %3553 = vmatpush1.msra.mxu0 0.0
        %3554 = vmatprep.subr.mxu0 0.0
        %3555 = vmatpush1.msra.mxu0 0.0
        %3556 = vmatprep.subr.mxu0 0.0
        %3557 = vmatpush1.msra.mxu0 0.0
        %3558 = vmatprep.subr.mxu0 0.0
        %3559 = vmatpush1.msra.mxu0 0.0
        %3560 = vmatprep.subr.mxu0 0.0
        %3561 = vmatpush1.msra.mxu0 0.0
        %3562 = vmatprep.subr.mxu0 0.0
        %3563 = vmatpush1.msra.mxu0 0.0
        %3564 = vmatprep.subr.mxu0 0.0
        %3565 = vmatpush1.msra.mxu0 0.0
        %3566 = vmatprep.mubr.f32.mxu0 0.0
        %3567 = vmatmul.mubr.f32.gmra.mrb[0].mxu0 %v3500
        %v3568 = vpop.f32.mrb[0].mxu0
        %v3569 = vadd.f32 0.0, %v3568
        %v3570 = vpop.f32.mrb[0].mxu0
        %v3571 = vadd.f32 0.0, %v3570
        %3572 = vdwg.mxu0
        %v3575 = vcombine.low %v3569, %v3571
        %v3577 = vunpack.c.l.s4 1966171168
        %v3578 = vunpack.c.0.s8 %v3577
        %v3579 = vlaneseq
        %v3580 = vshrl.u32 %v3579, 7
        %v3581 = vsub.s32 %v3578, %v3580
        %v3582 = vrot.slane %v3575, %v3581
        %v3584 = vunpack.c.l.s4 1966171168
        %v3585 = vunpack.c.0.s8 %v3584
        %v3586 = vlaneseq
        %v3587 = vshrl.u32 %v3586, 7
        %v3588 = vsub.s32 %v3585, %v3587
        %v3589 = vrot.slane %v3582, %v3588
        %v3591 = vadd.f32 %v3472, %v3589
        %v3592 = vld [vmem:[%s5] sm:$0xff]
        %v3593 = vld [vmem:[%s5 + $0x8] sm:$0xff]
        %v3594 = vld [vmem:[%s5 + $0x10] sm:$0xff]
        %v3595 = vld [vmem:[%s5 + $0x18] sm:$0xff]
        %v3596 = vld [vmem:[%s5 + $0x20] sm:$0xff]
        %v3597 = vld [vmem:[%s5 + $0x28] sm:$0xff]
        %v3598 = vld [vmem:[%s5 + $0x30] sm:$0xff]
        %v3599 = vld [vmem:[%s5 + $0x38] sm:$0xff]
        %v3600 = vld [vmem:[%s5 + $0x40] sm:$0xff]
        %v3601 = vld [vmem:[%s5 + $0x48] sm:$0xff]
        %v3602 = vld [vmem:[%s5 + $0x50] sm:$0xff]
        %v3603 = vld [vmem:[%s5 + $0x58] sm:$0xff]
        %v3604 = vld [vmem:[%s5 + $0x60] sm:$0xff]
        %v3605 = vld [vmem:[%s5 + $0x68] sm:$0xff]
        %v3606 = vld [vmem:[%s5 + $0x70] sm:$0xff]
        %v3607 = vld [vmem:[%s5 + $0x78] sm:$0xff]
        %v3608 = vld [vmem:[%s5 + $0x80] sm:$0xff]
        %v3609 = vld [vmem:[%s5 + $0x88] sm:$0xff]
        %v3610 = vld [vmem:[%s5 + $0x90] sm:$0xff]
        %v3611 = vld [vmem:[%s5 + $0x98] sm:$0xff]
        %v3612 = vld [vmem:[%s5 + $0xa0] sm:$0xff]
        %v3613 = vld [vmem:[%s5 + $0xa8] sm:$0xff]
        %v3614 = vld [vmem:[%s5 + $0xb0] sm:$0xff]
        %v3615 = vld [vmem:[%s5 + $0xb8] sm:$0xff]
        %v3616 = vld [vmem:[%s5 + $0xc0] sm:$0xff]
        %v3617 = vld [vmem:[%s5 + $0xc8] sm:$0xff]
        %v3618 = vld [vmem:[%s5 + $0xd0] sm:$0xff]
        %v3619 = vld [vmem:[%s5 + $0xd8] sm:$0xff]
        %v3620 = vld [vmem:[%s5 + $0xe0] sm:$0xff]
        %v3621 = vld [vmem:[%s5 + $0xe8] sm:$0xff]
        %v3622 = vld [vmem:[%s5 + $0xf0] sm:$0xff]
        %v3623 = vld [vmem:[%s5 + $0xf8] sm:$0xff]
        %v3624 = vld [vmem:[%s6] sm:$0x1]
        %v3626 = vlaneseq
        %v3627 = vshrl.u32 %v3626, 7
        %v3628 = vsub.s32 0, %v3627
        %v3629 = vrot.slane %v3591, %v3628
        %v3630 = vlaneseq
        %v3631 = vshrl.u32 %v3630, 7
        %v3632 = vsub.s32 1, %v3631
        %v3633 = vrot.slane %v3591, %v3632
        %3636 = vmatprep.subr.mxu0 0.0
        %3637 = vmatpush1.msra.mxu0 %v3592
        %3638 = vmatprep.subr.mxu0 0.0
        %3639 = vmatpush1.msra.mxu0 %v3593
        %3640 = vmatprep.subr.mxu0 0.0
        %3641 = vmatpush1.msra.mxu0 %v3594
        %3642 = vmatprep.subr.mxu0 0.0
        %3643 = vmatpush1.msra.mxu0 %v3595
        %3644 = vmatprep.subr.mxu0 0.0
        %3645 = vmatpush1.msra.mxu0 %v3596
        %3646 = vmatprep.subr.mxu0 0.0
        %3647 = vmatpush1.msra.mxu0 %v3597
        %3648 = vmatprep.subr.mxu0 0.0
        %3649 = vmatpush1.msra.mxu0 %v3598
        %3650 = vmatprep.subr.mxu0 0.0
        %3651 = vmatpush1.msra.mxu0 %v3599
        %3652 = vmatprep.subr.mxu0 0.0
        %3653 = vmatpush1.msra.mxu0 %v3600
        %3654 = vmatprep.subr.mxu0 0.0
        %3655 = vmatpush1.msra.mxu0 %v3601
        %3656 = vmatprep.subr.mxu0 0.0
        %3657 = vmatpush1.msra.mxu0 %v3602
        %3658 = vmatprep.subr.mxu0 0.0
        %3659 = vmatpush1.msra.mxu0 %v3603
        %3660 = vmatprep.subr.mxu0 0.0
        %3661 = vmatpush1.msra.mxu0 %v3604
        %3662 = vmatprep.subr.mxu0 0.0
        %3663 = vmatpush1.msra.mxu0 %v3605
        %3664 = vmatprep.subr.mxu0 0.0
        %3665 = vmatpush1.msra.mxu0 %v3606
        %3666 = vmatprep.subr.mxu0 0.0
        %3667 = vmatpush1.msra.mxu0 %v3607
        %3668 = vmatprep.subr.mxu0 0.0
        %3669 = vmatpush1.msra.mxu0 %v3608
        %3670 = vmatprep.subr.mxu0 0.0
        %3671 = vmatpush1.msra.mxu0 %v3609
        %3672 = vmatprep.subr.mxu0 0.0
        %3673 = vmatpush1.msra.mxu0 %v3610
        %3674 = vmatprep.subr.mxu0 0.0
        %3675 = vmatpush1.msra.mxu0 %v3611
        %3676 = vmatprep.subr.mxu0 0.0
        %3677 = vmatpush1.msra.mxu0 %v3612
        %3678 = vmatprep.subr.mxu0 0.0
        %3679 = vmatpush1.msra.mxu0 %v3613
        %3680 = vmatprep.subr.mxu0 0.0
        %3681 = vmatpush1.msra.mxu0 %v3614
        %3682 = vmatprep.subr.mxu0 0.0
        %3683 = vmatpush1.msra.mxu0 %v3615
        %3684 = vmatprep.subr.mxu0 0.0
        %3685 = vmatpush1.msra.mxu0 %v3616
        %3686 = vmatprep.subr.mxu0 0.0
        %3687 = vmatpush1.msra.mxu0 %v3617
        %3688 = vmatprep.subr.mxu0 0.0
        %3689 = vmatpush1.msra.mxu0 %v3618
        %3690 = vmatprep.subr.mxu0 0.0
        %3691 = vmatpush1.msra.mxu0 %v3619
        %3692 = vmatprep.subr.mxu0 0.0
        %3693 = vmatpush1.msra.mxu0 %v3620
        %3694 = vmatprep.subr.mxu0 0.0
        %3695 = vmatpush1.msra.mxu0 %v3621
        %3696 = vmatprep.subr.mxu0 0.0
        %3697 = vmatpush1.msra.mxu0 %v3622
        %3698 = vmatprep.subr.mxu0 0.0
        %3699 = vmatpush1.msra.mxu0 %v3623
        %3700 = vmatprep.mubr.f32.mxu0 %v3633
        %3701 = vmatmul.mubr.f32.gmra.mrb[0].mxu0 %v3629
        %v3702 = vpop.f32.mrb[0].mxu0
        %v3703 = vadd.f32 %v3624, %v3702
        %v3704 = vpop.f32.mrb[0].mxu0
        %3705 = vdwg.mxu0
        %v3706 = vld [vmem:[%s7] sm:$0xff]
        %v3707 = vld [vmem:[%s7 + $0x8] sm:$0xff]
        %v3708 = vld [vmem:[%s7 + $0x10] sm:$0xff]
        %v3709 = vld [vmem:[%s7 + $0x18] sm:$0xff]
        %v3710 = vld [vmem:[%s7 + $0x20] sm:$0xff]
        %v3711 = vld [vmem:[%s7 + $0x28] sm:$0xff]
        %v3712 = vld [vmem:[%s7 + $0x30] sm:$0xff]
        %v3713 = vld [vmem:[%s7 + $0x38] sm:$0xff]
        %v3714 = vld [vmem:[%s8] sm:$0x1]
        %v3716 = vsel %vm3141, %v3703, 0
        %3718 = vmatprep.subr.mxu0 0.0
        %3719 = vmatpush1.msra.mxu0 %v3706
        %3720 = vmatprep.subr.mxu0 0.0
        %3721 = vmatpush1.msra.mxu0 %v3707
        %3722 = vmatprep.subr.mxu0 0.0
        %3723 = vmatpush1.msra.mxu0 %v3708
        %3724 = vmatprep.subr.mxu0 0.0
        %3725 = vmatpush1.msra.mxu0 %v3709
        %3726 = vmatprep.subr.mxu0 0.0
        %3727 = vmatpush1.msra.mxu0 %v3710
        %3728 = vmatprep.subr.mxu0 0.0
        %3729 = vmatpush1.msra.mxu0 %v3711
        %3730 = vmatprep.subr.mxu0 0.0
        %3731 = vmatpush1.msra.mxu0 %v3712
        %3732 = vmatprep.subr.mxu0 0.0
        %3733 = vmatpush1.msra.mxu0 %v3713
        %3734 = vmatprep.subr.mxu0 0.0
        %3735 = vmatpush1.msra.mxu0 0.0
        %3736 = vmatprep.subr.mxu0 0.0
        %3737 = vmatpush1.msra.mxu0 0.0
        %3738 = vmatprep.subr.mxu0 0.0
        %3739 = vmatpush1.msra.mxu0 0.0
        %3740 = vmatprep.subr.mxu0 0.0
        %3741 = vmatpush1.msra.mxu0 0.0
        %3742 = vmatprep.subr.mxu0 0.0
        %3743 = vmatpush1.msra.mxu0 0.0
        %3744 = vmatprep.subr.mxu0 0.0
        %3745 = vmatpush1.msra.mxu0 0.0
        %3746 = vmatprep.subr.mxu0 0.0
        %3747 = vmatpush1.msra.mxu0 0.0
        %3748 = vmatprep.subr.mxu0 0.0
        %3749 = vmatpush1.msra.mxu0 0.0
        %3750 = vmatprep.subr.mxu0 0.0
        %3751 = vmatpush1.msra.mxu0 0.0
        %3752 = vmatprep.subr.mxu0 0.0
        %3753 = vmatpush1.msra.mxu0 0.0
        %3754 = vmatprep.subr.mxu0 0.0
        %3755 = vmatpush1.msra.mxu0 0.0
        %3756 = vmatprep.subr.mxu0 0.0
        %3757 = vmatpush1.msra.mxu0 0.0
        %3758 = vmatprep.subr.mxu0 0.0
        %3759 = vmatpush1.msra.mxu0 0.0
        %3760 = vmatprep.subr.mxu0 0.0
        %3761 = vmatpush1.msra.mxu0 0.0
        %3762 = vmatprep.subr.mxu0 0.0
        %3763 = vmatpush1.msra.mxu0 0.0
        %3764 = vmatprep.subr.mxu0 0.0
        %3765 = vmatpush1.msra.mxu0 0.0
        %3766 = vmatprep.subr.mxu0 0.0
        %3767 = vmatpush1.msra.mxu0 0.0
        %3768 = vmatprep.subr.mxu0 0.0
        %3769 = vmatpush1.msra.mxu0 0.0
        %3770 = vmatprep.subr.mxu0 0.0
        %3771 = vmatpush1.msra.mxu0 0.0
        %3772 = vmatprep.subr.mxu0 0.0
        %3773 = vmatpush1.msra.mxu0 0.0
        %3774 = vmatprep.subr.mxu0 0.0
        %3775 = vmatpush1.msra.mxu0 0.0
        %3776 = vmatprep.subr.mxu0 0.0
        %3777 = vmatpush1.msra.mxu0 0.0
        %3778 = vmatprep.subr.mxu0 0.0
        %3779 = vmatpush1.msra.mxu0 0.0
        %3780 = vmatprep.subr.mxu0 0.0
        %3781 = vmatpush1.msra.mxu0 0.0
        %3782 = vmatprep.mubr.f32.mxu0 0.0
        %3783 = vmatmul.mubr.f32.gmra.mrb[0].mxu0 %v3716
        %v3784 = vpop.f32.mrb[0].mxu0
        %v3785 = vadd.f32 %v3714, %v3784
        %v3786 = vpop.f32.mrb[0].mxu0
        %3787 = vdwg.mxu0
        %vm3788 = vcmask 73728
        %3789 = vst.msk [vmem:[%s362] sm:$0x1] %vm3788, %v3785
        %s3790 = sand.u32 %s230, 1
        %s3791 = scalar_lea.sflag [#allocation3], %s3790
        %s3792 = sand.u32 %s230, 1
        %s3793 = smul.addr %s3792, 4
        %s3794 = scalar_lea.vmem [#allocation2], %s3793
        %s3795 = sand.u32 %s256, 1
        %s3796 = scalar_lea.sflag [#allocation5], %s3795
        %s3797 = sand.u32 %s256, 1
        %s3798 = scalar_lea.vmem [#allocation4], %s3797
        // Predicated region
        $region57: #{baseline_forward.5} parent=55 // pred_check
          %p3799 = pneg %p240
        $region58: #{baseline_forward.5} parent=55 // pred_check_branch
          %3801 = sbr.rel (%p3799) target = $region60
        $region59: #{baseline_forward.5} parent=55 // pred_region
          %s3803 = ssub.s32 64, 64
          %3804 = vsyncadd %s3791, %s3803
          %s3805 = smul.addr %s28, 64
          %s3806 = scalar_lea.hbm %s9, %s3805
          %s3808 = sshll.u32 %s3794, 4
          %s3809 = int_to_ptr.vmem [resolvable:$true] %s3808
          %3811 = dma.vmem_to_hbm [thread:$0]  %s3809, 64, %s3806, %s3791
        $region60: #{baseline_forward.5} parent=55 // pred_fallthru
          _
        // Predicated region
        $region61: #{baseline_forward.5} parent=55 // pred_check
          %p3812 = pneg %p266
        $region62: #{baseline_forward.5} parent=55 // pred_check_branch
          %3814 = sbr.rel (%p3812) target = $region64
        $region63: #{baseline_forward.5} parent=55 // pred_region
          %s3816 = ssub.s32 16, 16
          %3817 = vsyncadd %s3796, %s3816
          %s3818 = smul.addr %s28, 16
          %s3819 = scalar_lea.hbm %s10, %s3818
          %s3821 = sshll.u32 %s3798, 4
          %s3822 = int_to_ptr.vmem [resolvable:$true] %s3821
          %3824 = dma.vmem_to_hbm [thread:$0]  %s3822, 16, %s3819, %s3796
        $region64: #{baseline_forward.5} parent=55 // pred_fallthru
          _
      $region56: #{baseline_forward.5} parent=5 // pred_fallthru
        _
      %p3825 = scmp.le.s32.totalorder 2, %s23
      // Predicated region
      $region65: #{baseline_forward.5} parent=5 // pred_check
        %p3826 = pneg %p3825
      $region66: #{baseline_forward.5} parent=5 // pred_check_branch
        %3828 = sbr.rel (%p3826) target = $region68
      $region67: #{baseline_forward.5} parent=5 // pred_region
        %s3829 = ssub.s32 %s23, 2
        // Predicated region
        $region69: #{baseline_forward.5} parent=67 // pred_check
          %p3830 = pneg %p246
        $region70: #{baseline_forward.5} parent=67 // pred_check_branch
          %3832 = sbr.rel (%p3830) target = $region72
        $region71: #{baseline_forward.5} parent=67 // pred_region
          %s3833 = sand.u32 %s231, 1
          %s3834 = scalar_lea.sflag [#allocation3], %s3833
          %s3835 = sand.u32 %s231, 1
          %s3836 = smul.addr %s3835, 4
          %s3837 = scalar_lea.vmem [#allocation2], %s3836
          %3838 = dma.done %s3834, 64
        $region72: #{baseline_forward.5} parent=67 // pred_fallthru
          _
        // Predicated region
        $region73: #{baseline_forward.5} parent=67 // pred_check
          %p3839 = pneg %p272
        $region74: #{baseline_forward.5} parent=67 // pred_check_branch
          %3841 = sbr.rel (%p3839) target = $region76
        $region75: #{baseline_forward.5} parent=67 // pred_region
          %s3842 = sand.u32 %s257, 1
          %s3843 = scalar_lea.sflag [#allocation5], %s3842
          %s3844 = sand.u32 %s257, 1
          %s3845 = scalar_lea.vmem [#allocation4], %s3844
          %3846 = dma.done %s3843, 16
        $region76: #{baseline_forward.5} parent=67 // pred_fallthru
          _
      $region68: #{baseline_forward.5} parent=5 // pred_fallthru
        _
    $region6: #{baseline_forward.5} parent=1 // loop_footer
      %s27 = sadd.s32 1, %s23
    $region7: #{baseline_forward.5} parent=1 // loop_footer_branch
      %22 = sbr.rel target = $region3
    $region8: #{baseline_forward.5} parent=1 // loop_exit
      _
    %3847 = vsyncpa [#allocation3], 1
    %s3848 = scalar_lea.sflag [#allocation3], 1
    %3849 = vsyncpa %s3848, 1
    %3850 = vsyncpa [#allocation5], 1
    %s3851 = scalar_lea.sflag [#allocation5], 1
    %3852 = vsyncpa %s3851, 1

</llo_original>
